<compile_context>
chip_gen: v5e
topology: v5e:2x2
jax: 0.10.0
libtpu: 0.0.40
codegen_flags: <defaults>
</compile_context>

<pallas_src>
import math

import numpy as np
import jax
import jax.numpy as jnp
from jax import lax
from jax.experimental import pallas as pl
from jax.experimental.pallas import tpu as pltpu

NEG_SLOPE = 0.3    # LeakyReLU(negative_slope=0.3)
BN_EPS = 1e-5      # BatchNorm2d default eps
KSIZE = 5
BASE_CH = 15
LANE = 128         # lane padding unit


def _leaky(x):
    return jnp.where(x >= 0, x, NEG_SLOPE * x)


def _round_up(v, m):
    return ((v + m - 1) // m) * m


def _choose_block(n):
    """Batch-block size: multiple of 16 (bf16 sublane packing); ~32 targets
    the 256-row MXU on v6e/v7x, 16 still fills >=128 rows for v5e."""
    n_pad = _round_up(max(n, 1), 16)
    b = 32 if n_pad % 32 == 0 else 16
    return b, n_pad


# ----------------------------------------------------------------------------
# Fused Pallas kernel (one grid step == one block of B images, all on-chip)
# ----------------------------------------------------------------------------
def _conv_lrelu(x_bf, w_ref, b_ref):
    """x_bf: (H_in, B, K_pad) bf16; w_ref: (KH, K_pad, N_pad) bf16;
    b_ref: (1, N_pad) f32.  Returns (H_out, B, N_pad) f32."""
    kh, k_pad, n_pad = w_ref.shape
    h_in, bb = x_bf.shape[0], x_bf.shape[1]
    ho = h_in - kh + 1
    # Banded 5x5 VALID conv: 5 full-width 2-D MXU matmuls (M = ho*B rows).
    acc = jnp.dot(x_bf[0:ho].reshape(ho * bb, k_pad), w_ref[0],
                  preferred_element_type=jnp.float32)
    for ky in range(1, kh):                                     # static unroll
        acc = acc + jnp.dot(x_bf[ky:ky + ho].reshape(ho * bb, k_pad),
                            w_ref[ky],
                            preferred_element_type=jnp.float32)
    y = _leaky(acc + b_ref[...])
    return y.reshape(ho, bb, n_pad)


def fused_kernel(x_ref, s_ref, t_ref,
                 w1_ref, b1_ref, w2_ref, b2_ref, w3_ref, b3_ref, w4_ref, b4_ref,
                 wl1_ref, bl1_ref, wl2_ref, bl2_ref, wl3_ref, bl3_ref,
                 o_ref):
    """x_ref: (H, B, W*Cin) f32; s/t: (1, W*Cin) BN affine; conv weights are
    banded bf16 (KH, K_pad, N_pad); head weights lane-padded f32 (128, 128);
    o_ref: (B, 128) f32 (only lane 0 meaningful)."""
    # BatchNorm affine applied once to the input; later layers need no affine.
    x = x_ref[...] * s_ref[...] + t_ref[...]                     # (H, B, W*C) f32

    # One bf16 cast per layer (hoisted out of the ky loop).
    x = _conv_lrelu(x.astype(jnp.bfloat16), w1_ref, b1_ref)      # (H-4, B, 384)
    x = _conv_lrelu(x.astype(jnp.bfloat16), w2_ref, b2_ref)      # (..., B, 256)
    x = _conv_lrelu(x.astype(jnp.bfloat16), w3_ref, b3_ref)      # (..., B, 256)
    x = _conv_lrelu(x.astype(jnp.bfloat16), w4_ref, b4_ref)      # (Ho4, B, 128)

    # Spatial mean + Linear1 folded into one matmul: reduce over the H rows
    # (major axis, cheap), then multiply by wl1 which carries the 1/(Ho*Wo)
    # factor replicated per w-position.  Padded lanes stay exactly zero.
    xm = jnp.sum(x, axis=0)                                      # (B, 128) f32
    h = _leaky(jnp.dot(xm, wl1_ref[...],
                       preferred_element_type=jnp.float32) + bl1_ref[...])
    h = _leaky(jnp.dot(h, wl2_ref[...],
                       preferred_element_type=jnp.float32) + bl2_ref[...])
    o_ref[...] = jnp.dot(h, wl3_ref[...],
                         preferred_element_type=jnp.float32) + bl3_ref[...]


# ----------------------------------------------------------------------------
# pallas_call wrapper
# ----------------------------------------------------------------------------
def fused_forward(x_hbw, s, t, params, block_b):
    h, n_pad, wc = x_hbw.shape

    def const_spec(a):
        nd = a.ndim
        return pl.BlockSpec(a.shape, lambda i, _nd=nd: (0,) * _nd)

    consts = (s, t) + tuple(params)
    return pl.pallas_call(
        fused_kernel,
        out_shape=jax.ShapeDtypeStruct((n_pad, LANE), jnp.float32),
        grid=(n_pad // block_b,),
        in_specs=[pl.BlockSpec((h, block_b, wc), lambda i: (0, i, 0))]
                 + [const_spec(a) for a in consts],
        out_specs=pl.BlockSpec((block_b, LANE), lambda i: (i, 0)),
        compiler_params=pltpu.CompilerParams(
            dimension_semantics=("parallel",)),
    )(x_hbw, *consts)


# ----------------------------------------------------------------------------
# Deterministic parameter init (xavier uniform + spectral norm, zero bias)
# ----------------------------------------------------------------------------
def _xavier_uniform(key, shape, fan_in, fan_out):
    bound = math.sqrt(6.0 / (fan_in + fan_out))
    return jax.random.uniform(key, shape, jnp.float32, minval=-bound, maxval=bound)


def _spectral_normalize(w_np, n_iter=100):
    # TODO(synk): PyTorch spectral_norm does ONE power-iteration step per forward
    # with a randomly-initialized u vector; here we use the converged top singular
    # value (deterministic) instead.
    mat = w_np.astype(np.float64).reshape(w_np.shape[0], -1)
    u = np.ones((mat.shape[0],), np.float64)
    v = np.ones((mat.shape[1],), np.float64)
    for _ in range(n_iter):
        v = mat.T @ u
        v /= (np.linalg.norm(v) + 1e-12)
        u = mat @ v
        u /= (np.linalg.norm(u) + 1e-12)
    sigma = float(u @ (mat @ v))
    return (w_np.astype(np.float64) / sigma).astype(np.float32)


def _build_banded_conv(w_hwio, w_in, k_pad, n_pad):
    """Expand (KH, KW, Ci, Co) conv weight into (KH, k_pad, n_pad) banded mats.
    Real K rows are [0, w_in*Ci); real N cols are [0, Wo*Co); the rest is zero."""
    kh, kw, ci, co = w_hwio.shape
    wo = w_in - kw + 1
    big = np.zeros((kh, k_pad, n_pad), np.float32)
    for ky in range(kh):
        for kx in range(kw):
            for w_out in range(wo):
                big[ky,
                    (w_out + kx) * ci:(w_out + kx + 1) * ci,
                    w_out * co:(w_out + 1) * co] = w_hwio[ky, kx]
    return big


def init_raw_params(key, base_channels=BASE_CH, ksize=KSIZE):
    keys = jax.random.split(key, 7)
    convs = []
    cins = [2, base_channels, base_channels, base_channels]
    for i, ci in enumerate(cins):
        co = base_channels
        fan_in, fan_out = ci * ksize * ksize, co * ksize * ksize
        w = np.asarray(_xavier_uniform(keys[i], (co, ci, ksize, ksize), fan_in, fan_out))
        w = _spectral_normalize(w)                       # (Co, Ci, KH, KW)
        w_hwio = np.transpose(w, (2, 3, 1, 0)).copy()    # (KH, KW, Ci, Co)
        convs.append((w_hwio, np.zeros((co,), np.float32)))
    lins = []
    for j, (din, dout) in enumerate([(base_channels, 50), (50, 10), (10, 1)]):
        w = np.asarray(_xavier_uniform(keys[4 + j], (dout, din), din, dout))
        w = _spectral_normalize(w)                       # (out, in)
        lins.append((np.transpose(w).copy(), np.zeros((dout,), np.float32)))  # (in, out)
    return convs, lins


def prepare_kernel_params(convs, lins, h_in, w_in):
    """Banded bf16 conv matrices (K/N lane-padded to 128 multiples), tiled and
    padded biases, mean-folded Linear1, lane-padded head weights."""
    conv_args = []
    cur_w, cur_h = w_in, h_in
    k_pad = w_in * convs[0][0].shape[2]                  # input lane width W*Cin
    for (w_hwio, b) in convs:
        kh, kw, ci, co = w_hwio.shape
        wo = cur_w - kw + 1
        n_real = wo * co
        n_pad = _round_up(n_real, LANE)
        w_banded = _build_banded_conv(w_hwio, cur_w, k_pad, n_pad)
        conv_args.append(jnp.asarray(w_banded, jnp.bfloat16))
        b_pad = np.zeros((1, n_pad), np.float32)
        b_pad[0, :n_real] = np.tile(b, wo)               # bias[co] at lane w*Co+co
        conv_args.append(jnp.asarray(b_pad))
        cur_w, cur_h, k_pad = wo, cur_h - kh + 1, n_pad
    ho4, wo4 = cur_h, cur_w
    co4 = convs[-1][0].shape[3]

    (w1, b1), (w2, b2), (w3, b3) = lins                  # each w: (in, out)
    # Linear1 with the spatial mean folded in: row (w*C + c) -> w1[c,:]/(Ho4*Wo4).
    wl1 = np.zeros((k_pad, LANE), np.float32)
    rep = np.repeat(w1[None, :, :] / float(ho4 * wo4), wo4, axis=0)
    wl1[:wo4 * co4, :w1.shape[1]] = rep.reshape(wo4 * co4, w1.shape[1])
    bl1 = np.zeros((1, LANE), np.float32); bl1[0, :b1.shape[0]] = b1
    wl2 = np.zeros((LANE, LANE), np.float32); wl2[:w2.shape[0], :w2.shape[1]] = w2
    bl2 = np.zeros((1, LANE), np.float32); bl2[0, :b2.shape[0]] = b2
    wl3 = np.zeros((LANE, LANE), np.float32); wl3[:w3.shape[0], :w3.shape[1]] = w3
    bl3 = np.zeros((1, LANE), np.float32); bl3[0, :b3.shape[0]] = b3
    lin_args = [jnp.asarray(a) for a in (wl1, bl1, wl2, bl2, wl3, bl3)]
    return tuple(conv_args + lin_args)


# ----------------------------------------------------------------------------
# Forward pass (Pallas) and pure-JAX high-precision reference
# ----------------------------------------------------------------------------
def metric_discriminator_forward(x_nchw, params):
    n, c, h, w = x_nchw.shape
    # BatchNorm2d(2) in training mode (batch stats, biased var, gamma=1, beta=0),
    # computed in one fused pass: var = E[x^2] - mean^2.
    # TODO(synk): eval-mode running stats / momentum buffer update are not modeled.
    m1 = jnp.mean(x_nchw, axis=(0, 2, 3))
    m2 = jnp.mean(jnp.square(x_nchw), axis=(0, 2, 3))
    scale = lax.rsqrt(m2 - jnp.square(m1) + BN_EPS)
    shift = -m1 * scale
    s = jnp.tile(scale, w)[None, :]                      # scale[c] at lane w*C + c
    t = jnp.tile(shift, w)[None, :]

    block_b, n_pad = _choose_block(n)
    # (N,C,H,W) -> (H, N, W*C): batch lives on the sublane axis inside the kernel.
    x_hbw = jnp.transpose(x_nchw, (2, 0, 3, 1)).reshape(h, n, w * c)
    if n_pad != n:                                       # pad batch; sliced off below
        x_hbw = jnp.pad(x_hbw, ((0, 0), (0, n_pad - n), (0, 0)))
    out = fused_forward(x_hbw, s, t, params, block_b)    # (n_pad, 128)
    return out[:n, :1]                                   # (N, 1)


def reference_forward(x_nchw, convs, lins):
    mean = jnp.mean(x_nchw, axis=(0, 2, 3), keepdims=True)
    var = jnp.mean((x_nchw - mean) ** 2, axis=(0, 2, 3), keepdims=True)
    out = (x_nchw - mean) / jnp.sqrt(var + BN_EPS)
    out = jnp.transpose(out, (0, 2, 3, 1))               # NHWC
    for (w_hwio, b) in convs:
        out = lax.conv_general_dilated(
            out, jnp.asarray(w_hwio), (1, 1), "VALID",
            dimension_numbers=("NHWC", "HWIO", "NHWC"),
            precision=jax.lax.Precision.HIGHEST)
        out = _leaky(out + jnp.asarray(b))
    feat = jnp.mean(out, axis=(1, 2))
    for i, (w, b) in enumerate(lins):                    # w is (in, out)
        feat = jnp.dot(feat, jnp.asarray(w),
                       precision=jax.lax.Precision.HIGHEST) + jnp.asarray(b)[None, :]
        if i < 2:
            feat = _leaky(feat)
    return feat


# ----------------------------------------------------------------------------
if __name__ == "__main__":
    key = jax.random.PRNGKey(0)
    pkey, xkey = jax.random.split(key)

    N, C, H, W = 2, 2, 24, 24                            # four valid 5x5 convs: 24 -> 8
    x = jax.random.normal(xkey, (N, C, H, W), jnp.float32)

    convs, lins = init_raw_params(pkey)
    params = prepare_kernel_params(convs, lins, H, W)

    fwd = jax.jit(metric_discriminator_forward)
    out = jax.block_until_ready(fwd(x, params))

    ref = jax.block_until_ready(reference_forward(x, convs, lins))
    assert out.shape == (N, 1) and out.dtype == jnp.float32
    # Tolerance reflects bf16 MXU operands (f32 accumulation) vs. a float32
    # HIGHEST-precision reference.
    np.testing.assert_allclose(np.asarray(out), np.asarray(ref),
                               rtol=2e-2, atol=1e-2)

    print("KERNEL_OK")
</pallas_src>

<mosaic_0001>
module attributes {stable_mosaic.version = 11 : i64} {
  func.func @fused_kernel(%arg0: i32, %arg1: memref<24x16x48xf32, #tpu.memory_space<vmem>>, %arg2: memref<1x48xf32, #tpu.memory_space<vmem>>, %arg3: memref<1x48xf32, #tpu.memory_space<vmem>>, %arg4: memref<5x48x384xbf16, #tpu.memory_space<vmem>>, %arg5: memref<1x384xf32, #tpu.memory_space<vmem>>, %arg6: memref<5x384x256xbf16, #tpu.memory_space<vmem>>, %arg7: memref<1x256xf32, #tpu.memory_space<vmem>>, %arg8: memref<5x256x256xbf16, #tpu.memory_space<vmem>>, %arg9: memref<1x256xf32, #tpu.memory_space<vmem>>, %arg10: memref<5x256x128xbf16, #tpu.memory_space<vmem>>, %arg11: memref<1x128xf32, #tpu.memory_space<vmem>>, %arg12: memref<128x128xf32, #tpu.memory_space<vmem>>, %arg13: memref<1x128xf32, #tpu.memory_space<vmem>>, %arg14: memref<128x128xf32, #tpu.memory_space<vmem>>, %arg15: memref<1x128xf32, #tpu.memory_space<vmem>>, %arg16: memref<128x128xf32, #tpu.memory_space<vmem>>, %arg17: memref<1x128xf32, #tpu.memory_space<vmem>>, %arg18: memref<16x128xf32, #tpu.memory_space<vmem>>) attributes {dimension_semantics = [#tpu.dimension_semantics<parallel>], iteration_bounds = array<i64: 1>, scalar_prefetch = 0 : i64, scratch_operands = 0 : i64, tpu.core_type = #tpu.core_type<tc>, window_params = [{transform_indices = @transform_0, window_bounds = array<i64: 24, 16, 48>}, {pipeline_mode = #tpu.pipeline_mode<synchronous>, transform_indices = @transform_1, window_bounds = array<i64: 1, 48>}, {pipeline_mode = #tpu.pipeline_mode<synchronous>, transform_indices = @transform_2, window_bounds = array<i64: 1, 48>}, {pipeline_mode = #tpu.pipeline_mode<synchronous>, transform_indices = @transform_3, window_bounds = array<i64: 5, 48, 384>}, {pipeline_mode = #tpu.pipeline_mode<synchronous>, transform_indices = @transform_4, window_bounds = array<i64: 1, 384>}, {pipeline_mode = #tpu.pipeline_mode<synchronous>, transform_indices = @transform_5, window_bounds = array<i64: 5, 384, 256>}, {pipeline_mode = #tpu.pipeline_mode<synchronous>, transform_indices = @transform_6, window_bounds = array<i64: 1, 256>}, {pipeline_mode = #tpu.pipeline_mode<synchronous>, transform_indices = @transform_7, window_bounds = array<i64: 5, 256, 256>}, {pipeline_mode = #tpu.pipeline_mode<synchronous>, transform_indices = @transform_8, window_bounds = array<i64: 1, 256>}, {pipeline_mode = #tpu.pipeline_mode<synchronous>, transform_indices = @transform_9, window_bounds = array<i64: 5, 256, 128>}, {pipeline_mode = #tpu.pipeline_mode<synchronous>, transform_indices = @transform_10, window_bounds = array<i64: 1, 128>}, {pipeline_mode = #tpu.pipeline_mode<synchronous>, transform_indices = @transform_11, window_bounds = array<i64: 128, 128>}, {pipeline_mode = #tpu.pipeline_mode<synchronous>, transform_indices = @transform_12, window_bounds = array<i64: 1, 128>}, {pipeline_mode = #tpu.pipeline_mode<synchronous>, transform_indices = @transform_13, window_bounds = array<i64: 128, 128>}, {pipeline_mode = #tpu.pipeline_mode<synchronous>, transform_indices = @transform_14, window_bounds = array<i64: 1, 128>}, {pipeline_mode = #tpu.pipeline_mode<synchronous>, transform_indices = @transform_15, window_bounds = array<i64: 128, 128>}, {pipeline_mode = #tpu.pipeline_mode<synchronous>, transform_indices = @transform_16, window_bounds = array<i64: 1, 128>}, {transform_indices = @transform_17, window_bounds = array<i64: 16, 128>}]} {
    %c0 = arith.constant 0 : index
    %c0_0 = arith.constant 0 : index
    %c0_1 = arith.constant 0 : index
    %0 = vector.load %arg1[%c0, %c0_0, %c0_1] : memref<24x16x48xf32, #tpu.memory_space<vmem>>, vector<24x16x48xf32>
    %c0_2 = arith.constant 0 : index
    %c0_3 = arith.constant 0 : index
    %1 = vector.load %arg2[%c0_2, %c0_3] : memref<1x48xf32, #tpu.memory_space<vmem>>, vector<1x48xf32>
    %2 = vector.shape_cast %1 : vector<1x48xf32> to vector<1x1x48xf32>
    %3 = vector.broadcast %2 : vector<1x1x48xf32> to vector<24x16x48xf32>
    %4 = arith.mulf %0, %3 : vector<24x16x48xf32>
    %c0_4 = arith.constant 0 : index
    %c0_5 = arith.constant 0 : index
    %5 = vector.load %arg3[%c0_4, %c0_5] : memref<1x48xf32, #tpu.memory_space<vmem>>, vector<1x48xf32>
    %6 = vector.shape_cast %5 : vector<1x48xf32> to vector<1x1x48xf32>
    %7 = vector.broadcast %6 : vector<1x1x48xf32> to vector<24x16x48xf32>
    %8 = arith.addf %4, %7 : vector<24x16x48xf32>
    %9 = arith.truncf %8 : vector<24x16x48xf32> to vector<24x16x48xbf16>
    %10 = vector.extract_strided_slice %9 {offsets = [0, 0, 0], sizes = [20, 16, 48], strides = [1, 1, 1]} : vector<24x16x48xbf16> to vector<20x16x48xbf16>
    %11 = vector.shape_cast %10 : vector<20x16x48xbf16> to vector<320x48xbf16>
    %c0_6 = arith.constant 0 : index
    %c0_7 = arith.constant 0 : index
    %c0_8 = arith.constant 0 : index
    %12 = vector.load %arg4[%c0_6, %c0_7, %c0_8] : memref<5x48x384xbf16, #tpu.memory_space<vmem>>, vector<1x48x384xbf16>
    %13 = vector.shape_cast %12 : vector<1x48x384xbf16> to vector<48x384xbf16>
    %cst = arith.constant dense<0.000000e+00> : vector<320x384xf32>
    %14 = tpu.matmul %11, %13, %cst {dimension_numbers = #tpu.dot_dimension_numbers<[1], [0], [0], [1], [0, 0, 1, 1], [], []>} : vector<320x48xbf16>, vector<48x384xbf16>, vector<320x384xf32> -> vector<320x384xf32>
    %15 = vector.extract_strided_slice %9 {offsets = [1, 0, 0], sizes = [20, 16, 48], strides = [1, 1, 1]} : vector<24x16x48xbf16> to vector<20x16x48xbf16>
    %16 = vector.shape_cast %15 : vector<20x16x48xbf16> to vector<320x48xbf16>
    %c1 = arith.constant 1 : index
    %c0_9 = arith.constant 0 : index
    %c0_10 = arith.constant 0 : index
    %17 = vector.load %arg4[%c1, %c0_9, %c0_10] : memref<5x48x384xbf16, #tpu.memory_space<vmem>>, vector<1x48x384xbf16>
    %18 = vector.shape_cast %17 : vector<1x48x384xbf16> to vector<48x384xbf16>
    %cst_11 = arith.constant dense<0.000000e+00> : vector<320x384xf32>
    %19 = tpu.matmul %16, %18, %cst_11 {dimension_numbers = #tpu.dot_dimension_numbers<[1], [0], [0], [1], [0, 0, 1, 1], [], []>} : vector<320x48xbf16>, vector<48x384xbf16>, vector<320x384xf32> -> vector<320x384xf32>
    %20 = arith.addf %14, %19 : vector<320x384xf32>
    %21 = vector.extract_strided_slice %9 {offsets = [2, 0, 0], sizes = [20, 16, 48], strides = [1, 1, 1]} : vector<24x16x48xbf16> to vector<20x16x48xbf16>
    %22 = vector.shape_cast %21 : vector<20x16x48xbf16> to vector<320x48xbf16>
    %c2 = arith.constant 2 : index
    %c0_12 = arith.constant 0 : index
    %c0_13 = arith.constant 0 : index
    %23 = vector.load %arg4[%c2, %c0_12, %c0_13] : memref<5x48x384xbf16, #tpu.memory_space<vmem>>, vector<1x48x384xbf16>
    %24 = vector.shape_cast %23 : vector<1x48x384xbf16> to vector<48x384xbf16>
    %cst_14 = arith.constant dense<0.000000e+00> : vector<320x384xf32>
    %25 = tpu.matmul %22, %24, %cst_14 {dimension_numbers = #tpu.dot_dimension_numbers<[1], [0], [0], [1], [0, 0, 1, 1], [], []>} : vector<320x48xbf16>, vector<48x384xbf16>, vector<320x384xf32> -> vector<320x384xf32>
    %26 = arith.addf %20, %25 : vector<320x384xf32>
    %27 = vector.extract_strided_slice %9 {offsets = [3, 0, 0], sizes = [20, 16, 48], strides = [1, 1, 1]} : vector<24x16x48xbf16> to vector<20x16x48xbf16>
    %28 = vector.shape_cast %27 : vector<20x16x48xbf16> to vector<320x48xbf16>
    %c3 = arith.constant 3 : index
    %c0_15 = arith.constant 0 : index
    %c0_16 = arith.constant 0 : index
    %29 = vector.load %arg4[%c3, %c0_15, %c0_16] : memref<5x48x384xbf16, #tpu.memory_space<vmem>>, vector<1x48x384xbf16>
    %30 = vector.shape_cast %29 : vector<1x48x384xbf16> to vector<48x384xbf16>
    %cst_17 = arith.constant dense<0.000000e+00> : vector<320x384xf32>
    %31 = tpu.matmul %28, %30, %cst_17 {dimension_numbers = #tpu.dot_dimension_numbers<[1], [0], [0], [1], [0, 0, 1, 1], [], []>} : vector<320x48xbf16>, vector<48x384xbf16>, vector<320x384xf32> -> vector<320x384xf32>
    %32 = arith.addf %26, %31 : vector<320x384xf32>
    %33 = vector.extract_strided_slice %9 {offsets = [4, 0, 0], sizes = [20, 16, 48], strides = [1, 1, 1]} : vector<24x16x48xbf16> to vector<20x16x48xbf16>
    %34 = vector.shape_cast %33 : vector<20x16x48xbf16> to vector<320x48xbf16>
    %c4 = arith.constant 4 : index
    %c0_18 = arith.constant 0 : index
    %c0_19 = arith.constant 0 : index
    %35 = vector.load %arg4[%c4, %c0_18, %c0_19] : memref<5x48x384xbf16, #tpu.memory_space<vmem>>, vector<1x48x384xbf16>
    %36 = vector.shape_cast %35 : vector<1x48x384xbf16> to vector<48x384xbf16>
    %cst_20 = arith.constant dense<0.000000e+00> : vector<320x384xf32>
    %37 = tpu.matmul %34, %36, %cst_20 {dimension_numbers = #tpu.dot_dimension_numbers<[1], [0], [0], [1], [0, 0, 1, 1], [], []>} : vector<320x48xbf16>, vector<48x384xbf16>, vector<320x384xf32> -> vector<320x384xf32>
    %38 = arith.addf %32, %37 : vector<320x384xf32>
    %c0_21 = arith.constant 0 : index
    %c0_22 = arith.constant 0 : index
    %39 = vector.load %arg5[%c0_21, %c0_22] : memref<1x384xf32, #tpu.memory_space<vmem>>, vector<1x384xf32>
    %40 = vector.broadcast %39 : vector<1x384xf32> to vector<320x384xf32>
    %41 = arith.addf %38, %40 : vector<320x384xf32>
    %cst_23 = arith.constant 0.000000e+00 : f32
    %42 = vector.broadcast %cst_23 : f32 to vector<320x384xf32>
    %43 = arith.cmpf oge, %41, %42 : vector<320x384xf32>
    %cst_24 = arith.constant 3.000000e-01 : f32
    %44 = vector.broadcast %cst_24 : f32 to vector<320x384xf32>
    %45 = arith.mulf %44, %41 : vector<320x384xf32>
    %46 = arith.select %43, %41, %45 : vector<320x384xi1>, vector<320x384xf32>
    %47 = vector.shape_cast %46 : vector<320x384xf32> to vector<20x16x384xf32>
    %48 = arith.truncf %47 : vector<20x16x384xf32> to vector<20x16x384xbf16>
    %49 = vector.extract_strided_slice %48 {offsets = [0, 0, 0], sizes = [16, 16, 384], strides = [1, 1, 1]} : vector<20x16x384xbf16> to vector<16x16x384xbf16>
    %50 = vector.shape_cast %49 : vector<16x16x384xbf16> to vector<256x384xbf16>
    %c0_25 = arith.constant 0 : index
    %c0_26 = arith.constant 0 : index
    %c0_27 = arith.constant 0 : index
    %51 = vector.load %arg6[%c0_25, %c0_26, %c0_27] : memref<5x384x256xbf16, #tpu.memory_space<vmem>>, vector<1x384x256xbf16>
    %52 = vector.shape_cast %51 : vector<1x384x256xbf16> to vector<384x256xbf16>
    %cst_28 = arith.constant dense<0.000000e+00> : vector<256x256xf32>
    %53 = tpu.matmul %50, %52, %cst_28 {dimension_numbers = #tpu.dot_dimension_numbers<[1], [0], [0], [1], [0, 0, 1, 1], [], []>} : vector<256x384xbf16>, vector<384x256xbf16>, vector<256x256xf32> -> vector<256x256xf32>
    %54 = vector.extract_strided_slice %48 {offsets = [1, 0, 0], sizes = [16, 16, 384], strides = [1, 1, 1]} : vector<20x16x384xbf16> to vector<16x16x384xbf16>
    %55 = vector.shape_cast %54 : vector<16x16x384xbf16> to vector<256x384xbf16>
    %c1_29 = arith.constant 1 : index
    %c0_30 = arith.constant 0 : index
    %c0_31 = arith.constant 0 : index
    %56 = vector.load %arg6[%c1_29, %c0_30, %c0_31] : memref<5x384x256xbf16, #tpu.memory_space<vmem>>, vector<1x384x256xbf16>
    %57 = vector.shape_cast %56 : vector<1x384x256xbf16> to vector<384x256xbf16>
    %cst_32 = arith.constant dense<0.000000e+00> : vector<256x256xf32>
    %58 = tpu.matmul %55, %57, %cst_32 {dimension_numbers = #tpu.dot_dimension_numbers<[1], [0], [0], [1], [0, 0, 1, 1], [], []>} : vector<256x384xbf16>, vector<384x256xbf16>, vector<256x256xf32> -> vector<256x256xf32>
    %59 = arith.addf %53, %58 : vector<256x256xf32>
    %60 = vector.extract_strided_slice %48 {offsets = [2, 0, 0], sizes = [16, 16, 384], strides = [1, 1, 1]} : vector<20x16x384xbf16> to vector<16x16x384xbf16>
    %61 = vector.shape_cast %60 : vector<16x16x384xbf16> to vector<256x384xbf16>
    %c2_33 = arith.constant 2 : index
    %c0_34 = arith.constant 0 : index
    %c0_35 = arith.constant 0 : index
    %62 = vector.load %arg6[%c2_33, %c0_34, %c0_35] : memref<5x384x256xbf16, #tpu.memory_space<vmem>>, vector<1x384x256xbf16>
    %63 = vector.shape_cast %62 : vector<1x384x256xbf16> to vector<384x256xbf16>
    %cst_36 = arith.constant dense<0.000000e+00> : vector<256x256xf32>
    %64 = tpu.matmul %61, %63, %cst_36 {dimension_numbers = #tpu.dot_dimension_numbers<[1], [0], [0], [1], [0, 0, 1, 1], [], []>} : vector<256x384xbf16>, vector<384x256xbf16>, vector<256x256xf32> -> vector<256x256xf32>
    %65 = arith.addf %59, %64 : vector<256x256xf32>
    %66 = vector.extract_strided_slice %48 {offsets = [3, 0, 0], sizes = [16, 16, 384], strides = [1, 1, 1]} : vector<20x16x384xbf16> to vector<16x16x384xbf16>
    %67 = vector.shape_cast %66 : vector<16x16x384xbf16> to vector<256x384xbf16>
    %c3_37 = arith.constant 3 : index
    %c0_38 = arith.constant 0 : index
    %c0_39 = arith.constant 0 : index
    %68 = vector.load %arg6[%c3_37, %c0_38, %c0_39] : memref<5x384x256xbf16, #tpu.memory_space<vmem>>, vector<1x384x256xbf16>
    %69 = vector.shape_cast %68 : vector<1x384x256xbf16> to vector<384x256xbf16>
    %cst_40 = arith.constant dense<0.000000e+00> : vector<256x256xf32>
    %70 = tpu.matmul %67, %69, %cst_40 {dimension_numbers = #tpu.dot_dimension_numbers<[1], [0], [0], [1], [0, 0, 1, 1], [], []>} : vector<256x384xbf16>, vector<384x256xbf16>, vector<256x256xf32> -> vector<256x256xf32>
    %71 = arith.addf %65, %70 : vector<256x256xf32>
    %72 = vector.extract_strided_slice %48 {offsets = [4, 0, 0], sizes = [16, 16, 384], strides = [1, 1, 1]} : vector<20x16x384xbf16> to vector<16x16x384xbf16>
    %73 = vector.shape_cast %72 : vector<16x16x384xbf16> to vector<256x384xbf16>
    %c4_41 = arith.constant 4 : index
    %c0_42 = arith.constant 0 : index
    %c0_43 = arith.constant 0 : index
    %74 = vector.load %arg6[%c4_41, %c0_42, %c0_43] : memref<5x384x256xbf16, #tpu.memory_space<vmem>>, vector<1x384x256xbf16>
    %75 = vector.shape_cast %74 : vector<1x384x256xbf16> to vector<384x256xbf16>
    %cst_44 = arith.constant dense<0.000000e+00> : vector<256x256xf32>
    %76 = tpu.matmul %73, %75, %cst_44 {dimension_numbers = #tpu.dot_dimension_numbers<[1], [0], [0], [1], [0, 0, 1, 1], [], []>} : vector<256x384xbf16>, vector<384x256xbf16>, vector<256x256xf32> -> vector<256x256xf32>
    %77 = arith.addf %71, %76 : vector<256x256xf32>
    %c0_45 = arith.constant 0 : index
    %c0_46 = arith.constant 0 : index
    %78 = vector.load %arg7[%c0_45, %c0_46] : memref<1x256xf32, #tpu.memory_space<vmem>>, vector<1x256xf32>
    %79 = vector.broadcast %78 : vector<1x256xf32> to vector<256x256xf32>
    %80 = arith.addf %77, %79 : vector<256x256xf32>
    %cst_47 = arith.constant 0.000000e+00 : f32
    %81 = vector.broadcast %cst_47 : f32 to vector<256x256xf32>
    %82 = arith.cmpf oge, %80, %81 : vector<256x256xf32>
    %cst_48 = arith.constant 3.000000e-01 : f32
    %83 = vector.broadcast %cst_48 : f32 to vector<256x256xf32>
    %84 = arith.mulf %83, %80 : vector<256x256xf32>
    %85 = arith.select %82, %80, %84 : vector<256x256xi1>, vector<256x256xf32>
    %86 = vector.shape_cast %85 : vector<256x256xf32> to vector<16x16x256xf32>
    %87 = arith.truncf %86 : vector<16x16x256xf32> to vector<16x16x256xbf16>
    %88 = vector.extract_strided_slice %87 {offsets = [0, 0, 0], sizes = [12, 16, 256], strides = [1, 1, 1]} : vector<16x16x256xbf16> to vector<12x16x256xbf16>
    %89 = vector.shape_cast %88 : vector<12x16x256xbf16> to vector<192x256xbf16>
    %c0_49 = arith.constant 0 : index
    %c0_50 = arith.constant 0 : index
    %c0_51 = arith.constant 0 : index
    %90 = vector.load %arg8[%c0_49, %c0_50, %c0_51] : memref<5x256x256xbf16, #tpu.memory_space<vmem>>, vector<1x256x256xbf16>
    %91 = vector.shape_cast %90 : vector<1x256x256xbf16> to vector<256x256xbf16>
    %cst_52 = arith.constant dense<0.000000e+00> : vector<192x256xf32>
    %92 = tpu.matmul %89, %91, %cst_52 {dimension_numbers = #tpu.dot_dimension_numbers<[1], [0], [0], [1], [0, 0, 1, 1], [], []>} : vector<192x256xbf16>, vector<256x256xbf16>, vector<192x256xf32> -> vector<192x256xf32>
    %93 = vector.extract_strided_slice %87 {offsets = [1, 0, 0], sizes = [12, 16, 256], strides = [1, 1, 1]} : vector<16x16x256xbf16> to vector<12x16x256xbf16>
    %94 = vector.shape_cast %93 : vector<12x16x256xbf16> to vector<192x256xbf16>
    %c1_53 = arith.constant 1 : index
    %c0_54 = arith.constant 0 : index
    %c0_55 = arith.constant 0 : index
    %95 = vector.load %arg8[%c1_53, %c0_54, %c0_55] : memref<5x256x256xbf16, #tpu.memory_space<vmem>>, vector<1x256x256xbf16>
    %96 = vector.shape_cast %95 : vector<1x256x256xbf16> to vector<256x256xbf16>
    %cst_56 = arith.constant dense<0.000000e+00> : vector<192x256xf32>
    %97 = tpu.matmul %94, %96, %cst_56 {dimension_numbers = #tpu.dot_dimension_numbers<[1], [0], [0], [1], [0, 0, 1, 1], [], []>} : vector<192x256xbf16>, vector<256x256xbf16>, vector<192x256xf32> -> vector<192x256xf32>
    %98 = arith.addf %92, %97 : vector<192x256xf32>
    %99 = vector.extract_strided_slice %87 {offsets = [2, 0, 0], sizes = [12, 16, 256], strides = [1, 1, 1]} : vector<16x16x256xbf16> to vector<12x16x256xbf16>
    %100 = vector.shape_cast %99 : vector<12x16x256xbf16> to vector<192x256xbf16>
    %c2_57 = arith.constant 2 : index
    %c0_58 = arith.constant 0 : index
    %c0_59 = arith.constant 0 : index
    %101 = vector.load %arg8[%c2_57, %c0_58, %c0_59] : memref<5x256x256xbf16, #tpu.memory_space<vmem>>, vector<1x256x256xbf16>
    %102 = vector.shape_cast %101 : vector<1x256x256xbf16> to vector<256x256xbf16>
    %cst_60 = arith.constant dense<0.000000e+00> : vector<192x256xf32>
    %103 = tpu.matmul %100, %102, %cst_60 {dimension_numbers = #tpu.dot_dimension_numbers<[1], [0], [0], [1], [0, 0, 1, 1], [], []>} : vector<192x256xbf16>, vector<256x256xbf16>, vector<192x256xf32> -> vector<192x256xf32>
    %104 = arith.addf %98, %103 : vector<192x256xf32>
    %105 = vector.extract_strided_slice %87 {offsets = [3, 0, 0], sizes = [12, 16, 256], strides = [1, 1, 1]} : vector<16x16x256xbf16> to vector<12x16x256xbf16>
    %106 = vector.shape_cast %105 : vector<12x16x256xbf16> to vector<192x256xbf16>
    %c3_61 = arith.constant 3 : index
    %c0_62 = arith.constant 0 : index
    %c0_63 = arith.constant 0 : index
    %107 = vector.load %arg8[%c3_61, %c0_62, %c0_63] : memref<5x256x256xbf16, #tpu.memory_space<vmem>>, vector<1x256x256xbf16>
    %108 = vector.shape_cast %107 : vector<1x256x256xbf16> to vector<256x256xbf16>
    %cst_64 = arith.constant dense<0.000000e+00> : vector<192x256xf32>
    %109 = tpu.matmul %106, %108, %cst_64 {dimension_numbers = #tpu.dot_dimension_numbers<[1], [0], [0], [1], [0, 0, 1, 1], [], []>} : vector<192x256xbf16>, vector<256x256xbf16>, vector<192x256xf32> -> vector<192x256xf32>
    %110 = arith.addf %104, %109 : vector<192x256xf32>
    %111 = vector.extract_strided_slice %87 {offsets = [4, 0, 0], sizes = [12, 16, 256], strides = [1, 1, 1]} : vector<16x16x256xbf16> to vector<12x16x256xbf16>
    %112 = vector.shape_cast %111 : vector<12x16x256xbf16> to vector<192x256xbf16>
    %c4_65 = arith.constant 4 : index
    %c0_66 = arith.constant 0 : index
    %c0_67 = arith.constant 0 : index
    %113 = vector.load %arg8[%c4_65, %c0_66, %c0_67] : memref<5x256x256xbf16, #tpu.memory_space<vmem>>, vector<1x256x256xbf16>
    %114 = vector.shape_cast %113 : vector<1x256x256xbf16> to vector<256x256xbf16>
    %cst_68 = arith.constant dense<0.000000e+00> : vector<192x256xf32>
    %115 = tpu.matmul %112, %114, %cst_68 {dimension_numbers = #tpu.dot_dimension_numbers<[1], [0], [0], [1], [0, 0, 1, 1], [], []>} : vector<192x256xbf16>, vector<256x256xbf16>, vector<192x256xf32> -> vector<192x256xf32>
    %116 = arith.addf %110, %115 : vector<192x256xf32>
    %c0_69 = arith.constant 0 : index
    %c0_70 = arith.constant 0 : index
    %117 = vector.load %arg9[%c0_69, %c0_70] : memref<1x256xf32, #tpu.memory_space<vmem>>, vector<1x256xf32>
    %118 = vector.broadcast %117 : vector<1x256xf32> to vector<192x256xf32>
    %119 = arith.addf %116, %118 : vector<192x256xf32>
    %cst_71 = arith.constant 0.000000e+00 : f32
    %120 = vector.broadcast %cst_71 : f32 to vector<192x256xf32>
    %121 = arith.cmpf oge, %119, %120 : vector<192x256xf32>
    %cst_72 = arith.constant 3.000000e-01 : f32
    %122 = vector.broadcast %cst_72 : f32 to vector<192x256xf32>
    %123 = arith.mulf %122, %119 : vector<192x256xf32>
    %124 = arith.select %121, %119, %123 : vector<192x256xi1>, vector<192x256xf32>
    %125 = vector.shape_cast %124 : vector<192x256xf32> to vector<12x16x256xf32>
    %126 = arith.truncf %125 : vector<12x16x256xf32> to vector<12x16x256xbf16>
    %127 = vector.extract_strided_slice %126 {offsets = [0, 0, 0], sizes = [8, 16, 256], strides = [1, 1, 1]} : vector<12x16x256xbf16> to vector<8x16x256xbf16>
    %128 = vector.shape_cast %127 : vector<8x16x256xbf16> to vector<128x256xbf16>
    %c0_73 = arith.constant 0 : index
    %c0_74 = arith.constant 0 : index
    %c0_75 = arith.constant 0 : index
    %129 = vector.load %arg10[%c0_73, %c0_74, %c0_75] : memref<5x256x128xbf16, #tpu.memory_space<vmem>>, vector<1x256x128xbf16>
    %130 = vector.shape_cast %129 : vector<1x256x128xbf16> to vector<256x128xbf16>
    %cst_76 = arith.constant dense<0.000000e+00> : vector<128x128xf32>
    %131 = tpu.matmul %128, %130, %cst_76 {dimension_numbers = #tpu.dot_dimension_numbers<[1], [0], [0], [1], [0, 0, 1, 1], [], []>} : vector<128x256xbf16>, vector<256x128xbf16>, vector<128x128xf32> -> vector<128x128xf32>
    %132 = vector.extract_strided_slice %126 {offsets = [1, 0, 0], sizes = [8, 16, 256], strides = [1, 1, 1]} : vector<12x16x256xbf16> to vector<8x16x256xbf16>
    %133 = vector.shape_cast %132 : vector<8x16x256xbf16> to vector<128x256xbf16>
    %c1_77 = arith.constant 1 : index
    %c0_78 = arith.constant 0 : index
    %c0_79 = arith.constant 0 : index
    %134 = vector.load %arg10[%c1_77, %c0_78, %c0_79] : memref<5x256x128xbf16, #tpu.memory_space<vmem>>, vector<1x256x128xbf16>
    %135 = vector.shape_cast %134 : vector<1x256x128xbf16> to vector<256x128xbf16>
    %cst_80 = arith.constant dense<0.000000e+00> : vector<128x128xf32>
    %136 = tpu.matmul %133, %135, %cst_80 {dimension_numbers = #tpu.dot_dimension_numbers<[1], [0], [0], [1], [0, 0, 1, 1], [], []>} : vector<128x256xbf16>, vector<256x128xbf16>, vector<128x128xf32> -> vector<128x128xf32>
    %137 = arith.addf %131, %136 : vector<128x128xf32>
    %138 = vector.extract_strided_slice %126 {offsets = [2, 0, 0], sizes = [8, 16, 256], strides = [1, 1, 1]} : vector<12x16x256xbf16> to vector<8x16x256xbf16>
    %139 = vector.shape_cast %138 : vector<8x16x256xbf16> to vector<128x256xbf16>
    %c2_81 = arith.constant 2 : index
    %c0_82 = arith.constant 0 : index
    %c0_83 = arith.constant 0 : index
    %140 = vector.load %arg10[%c2_81, %c0_82, %c0_83] : memref<5x256x128xbf16, #tpu.memory_space<vmem>>, vector<1x256x128xbf16>
    %141 = vector.shape_cast %140 : vector<1x256x128xbf16> to vector<256x128xbf16>
    %cst_84 = arith.constant dense<0.000000e+00> : vector<128x128xf32>
    %142 = tpu.matmul %139, %141, %cst_84 {dimension_numbers = #tpu.dot_dimension_numbers<[1], [0], [0], [1], [0, 0, 1, 1], [], []>} : vector<128x256xbf16>, vector<256x128xbf16>, vector<128x128xf32> -> vector<128x128xf32>
    %143 = arith.addf %137, %142 : vector<128x128xf32>
    %144 = vector.extract_strided_slice %126 {offsets = [3, 0, 0], sizes = [8, 16, 256], strides = [1, 1, 1]} : vector<12x16x256xbf16> to vector<8x16x256xbf16>
    %145 = vector.shape_cast %144 : vector<8x16x256xbf16> to vector<128x256xbf16>
    %c3_85 = arith.constant 3 : index
    %c0_86 = arith.constant 0 : index
    %c0_87 = arith.constant 0 : index
    %146 = vector.load %arg10[%c3_85, %c0_86, %c0_87] : memref<5x256x128xbf16, #tpu.memory_space<vmem>>, vector<1x256x128xbf16>
    %147 = vector.shape_cast %146 : vector<1x256x128xbf16> to vector<256x128xbf16>
    %cst_88 = arith.constant dense<0.000000e+00> : vector<128x128xf32>
    %148 = tpu.matmul %145, %147, %cst_88 {dimension_numbers = #tpu.dot_dimension_numbers<[1], [0], [0], [1], [0, 0, 1, 1], [], []>} : vector<128x256xbf16>, vector<256x128xbf16>, vector<128x128xf32> -> vector<128x128xf32>
    %149 = arith.addf %143, %148 : vector<128x128xf32>
    %150 = vector.extract_strided_slice %126 {offsets = [4, 0, 0], sizes = [8, 16, 256], strides = [1, 1, 1]} : vector<12x16x256xbf16> to vector<8x16x256xbf16>
    %151 = vector.shape_cast %150 : vector<8x16x256xbf16> to vector<128x256xbf16>
    %c4_89 = arith.constant 4 : index
    %c0_90 = arith.constant 0 : index
    %c0_91 = arith.constant 0 : index
    %152 = vector.load %arg10[%c4_89, %c0_90, %c0_91] : memref<5x256x128xbf16, #tpu.memory_space<vmem>>, vector<1x256x128xbf16>
    %153 = vector.shape_cast %152 : vector<1x256x128xbf16> to vector<256x128xbf16>
    %cst_92 = arith.constant dense<0.000000e+00> : vector<128x128xf32>
    %154 = tpu.matmul %151, %153, %cst_92 {dimension_numbers = #tpu.dot_dimension_numbers<[1], [0], [0], [1], [0, 0, 1, 1], [], []>} : vector<128x256xbf16>, vector<256x128xbf16>, vector<128x128xf32> -> vector<128x128xf32>
    %155 = arith.addf %149, %154 : vector<128x128xf32>
    %c0_93 = arith.constant 0 : index
    %c0_94 = arith.constant 0 : index
    %156 = vector.load %arg11[%c0_93, %c0_94] : memref<1x128xf32, #tpu.memory_space<vmem>>, vector<1x128xf32>
    %157 = vector.broadcast %156 : vector<1x128xf32> to vector<128x128xf32>
    %158 = arith.addf %155, %157 : vector<128x128xf32>
    %cst_95 = arith.constant 0.000000e+00 : f32
    %159 = vector.broadcast %cst_95 : f32 to vector<128x128xf32>
    %160 = arith.cmpf oge, %158, %159 : vector<128x128xf32>
    %cst_96 = arith.constant 3.000000e-01 : f32
    %161 = vector.broadcast %cst_96 : f32 to vector<128x128xf32>
    %162 = arith.mulf %161, %158 : vector<128x128xf32>
    %163 = arith.select %160, %158, %162 : vector<128x128xi1>, vector<128x128xf32>
    %164 = vector.shape_cast %163 : vector<128x128xf32> to vector<8x16x128xf32>
    %cst_97 = arith.constant dense<0.000000e+00> : vector<16x128xf32>
    %165 = vector.multi_reduction <add>, %164, %cst_97 [0] : vector<8x16x128xf32> to vector<16x128xf32>
    %c0_98 = arith.constant 0 : index
    %c0_99 = arith.constant 0 : index
    %166 = vector.load %arg12[%c0_98, %c0_99] : memref<128x128xf32, #tpu.memory_space<vmem>>, vector<128x128xf32>
    %cst_100 = arith.constant dense<0.000000e+00> : vector<16x128xf32>
    %167 = tpu.matmul %165, %166, %cst_100 {dimension_numbers = #tpu.dot_dimension_numbers<[1], [0], [0], [1], [0, 0, 1, 1], [], []>} : vector<16x128xf32>, vector<128x128xf32>, vector<16x128xf32> -> vector<16x128xf32>
    %c0_101 = arith.constant 0 : index
    %c0_102 = arith.constant 0 : index
    %168 = vector.load %arg13[%c0_101, %c0_102] : memref<1x128xf32, #tpu.memory_space<vmem>>, vector<1x128xf32>
    %169 = vector.broadcast %168 : vector<1x128xf32> to vector<16x128xf32>
    %170 = arith.addf %167, %169 : vector<16x128xf32>
    %cst_103 = arith.constant 0.000000e+00 : f32
    %171 = vector.broadcast %cst_103 : f32 to vector<16x128xf32>
    %172 = arith.cmpf oge, %170, %171 : vector<16x128xf32>
    %cst_104 = arith.constant 3.000000e-01 : f32
    %173 = vector.broadcast %cst_104 : f32 to vector<16x128xf32>
    %174 = arith.mulf %173, %170 : vector<16x128xf32>
    %175 = arith.select %172, %170, %174 : vector<16x128xi1>, vector<16x128xf32>
    %c0_105 = arith.constant 0 : index
    %c0_106 = arith.constant 0 : index
    %176 = vector.load %arg14[%c0_105, %c0_106] : memref<128x128xf32, #tpu.memory_space<vmem>>, vector<128x128xf32>
    %cst_107 = arith.constant dense<0.000000e+00> : vector<16x128xf32>
    %177 = tpu.matmul %175, %176, %cst_107 {dimension_numbers = #tpu.dot_dimension_numbers<[1], [0], [0], [1], [0, 0, 1, 1], [], []>} : vector<16x128xf32>, vector<128x128xf32>, vector<16x128xf32> -> vector<16x128xf32>
    %c0_108 = arith.constant 0 : index
    %c0_109 = arith.constant 0 : index
    %178 = vector.load %arg15[%c0_108, %c0_109] : memref<1x128xf32, #tpu.memory_space<vmem>>, vector<1x128xf32>
    %179 = vector.broadcast %178 : vector<1x128xf32> to vector<16x128xf32>
    %180 = arith.addf %177, %179 : vector<16x128xf32>
    %cst_110 = arith.constant 0.000000e+00 : f32
    %181 = vector.broadcast %cst_110 : f32 to vector<16x128xf32>
    %182 = arith.cmpf oge, %180, %181 : vector<16x128xf32>
    %cst_111 = arith.constant 3.000000e-01 : f32
    %183 = vector.broadcast %cst_111 : f32 to vector<16x128xf32>
    %184 = arith.mulf %183, %180 : vector<16x128xf32>
    %185 = arith.select %182, %180, %184 : vector<16x128xi1>, vector<16x128xf32>
    %c0_112 = arith.constant 0 : index
    %c0_113 = arith.constant 0 : index
    %186 = vector.load %arg16[%c0_112, %c0_113] : memref<128x128xf32, #tpu.memory_space<vmem>>, vector<128x128xf32>
    %cst_114 = arith.constant dense<0.000000e+00> : vector<16x128xf32>
    %187 = tpu.matmul %185, %186, %cst_114 {dimension_numbers = #tpu.dot_dimension_numbers<[1], [0], [0], [1], [0, 0, 1, 1], [], []>} : vector<16x128xf32>, vector<128x128xf32>, vector<16x128xf32> -> vector<16x128xf32>
    %c0_115 = arith.constant 0 : index
    %c0_116 = arith.constant 0 : index
    %188 = vector.load %arg17[%c0_115, %c0_116] : memref<1x128xf32, #tpu.memory_space<vmem>>, vector<1x128xf32>
    %189 = vector.broadcast %188 : vector<1x128xf32> to vector<16x128xf32>
    %190 = arith.addf %187, %189 : vector<16x128xf32>
    %c0_117 = arith.constant 0 : index
    %c0_118 = arith.constant 0 : index
    %191 = vector.load %arg18[%c0_117, %c0_118] : memref<16x128xf32, #tpu.memory_space<vmem>>, vector<16x128xf32>
    tpu.vector_store %arg18[%c0_117, %c0_118], %190 {strides = array<i32>} : memref<16x128xf32, #tpu.memory_space<vmem>>, vector<16x128xf32>,
    return
  }
  func.func @transform_0(%arg0: i32) -> (i32, i32, i32) {
    %c0_i32 = arith.constant 0 : i32
    %c0_i32_0 = arith.constant 0 : i32
    %c0_i32_1 = arith.constant 0 : i32
    return %c0_i32, %arg0, %c0_i32_0 : i32, i32, i32
  }
  func.func @transform_1(%arg0: i32) -> (i32, i32) {
    %c0_i32 = arith.constant 0 : i32
    %c0_i32_0 = arith.constant 0 : i32
    %c0_i32_1 = arith.constant 0 : i32
    return %c0_i32, %c0_i32_0 : i32, i32
  }
  func.func @transform_2(%arg0: i32) -> (i32, i32) {
    %c0_i32 = arith.constant 0 : i32
    %c0_i32_0 = arith.constant 0 : i32
    %c0_i32_1 = arith.constant 0 : i32
    return %c0_i32, %c0_i32_0 : i32, i32
  }
  func.func @transform_3(%arg0: i32) -> (i32, i32, i32) {
    %c0_i32 = arith.constant 0 : i32
    %c0_i32_0 = arith.constant 0 : i32
    %c0_i32_1 = arith.constant 0 : i32
    %c0_i32_2 = arith.constant 0 : i32
    return %c0_i32, %c0_i32_0, %c0_i32_1 : i32, i32, i32
  }
  func.func @transform_4(%arg0: i32) -> (i32, i32) {
    %c0_i32 = arith.constant 0 : i32
    %c0_i32_0 = arith.constant 0 : i32
    %c0_i32_1 = arith.constant 0 : i32
    return %c0_i32, %c0_i32_0 : i32, i32
  }
  func.func @transform_5(%arg0: i32) -> (i32, i32, i32) {
    %c0_i32 = arith.constant 0 : i32
    %c0_i32_0 = arith.constant 0 : i32
    %c0_i32_1 = arith.constant 0 : i32
    %c0_i32_2 = arith.constant 0 : i32
    return %c0_i32, %c0_i32_0, %c0_i32_1 : i32, i32, i32
  }
  func.func @transform_6(%arg0: i32) -> (i32, i32) {
    %c0_i32 = arith.constant 0 : i32
    %c0_i32_0 = arith.constant 0 : i32
    %c0_i32_1 = arith.constant 0 : i32
    return %c0_i32, %c0_i32_0 : i32, i32
  }
  func.func @transform_7(%arg0: i32) -> (i32, i32, i32) {
    %c0_i32 = arith.constant 0 : i32
    %c0_i32_0 = arith.constant 0 : i32
    %c0_i32_1 = arith.constant 0 : i32
    %c0_i32_2 = arith.constant 0 : i32
    return %c0_i32, %c0_i32_0, %c0_i32_1 : i32, i32, i32
  }
  func.func @transform_8(%arg0: i32) -> (i32, i32) {
    %c0_i32 = arith.constant 0 : i32
    %c0_i32_0 = arith.constant 0 : i32
    %c0_i32_1 = arith.constant 0 : i32
    return %c0_i32, %c0_i32_0 : i32, i32
  }
  func.func @transform_9(%arg0: i32) -> (i32, i32, i32) {
    %c0_i32 = arith.constant 0 : i32
    %c0_i32_0 = arith.constant 0 : i32
    %c0_i32_1 = arith.constant 0 : i32
    %c0_i32_2 = arith.constant 0 : i32
    return %c0_i32, %c0_i32_0, %c0_i32_1 : i32, i32, i32
  }
  func.func @transform_10(%arg0: i32) -> (i32, i32) {
    %c0_i32 = arith.constant 0 : i32
    %c0_i32_0 = arith.constant 0 : i32
    %c0_i32_1 = arith.constant 0 : i32
    return %c0_i32, %c0_i32_0 : i32, i32
  }
  func.func @transform_11(%arg0: i32) -> (i32, i32) {
    %c0_i32 = arith.constant 0 : i32
    %c0_i32_0 = arith.constant 0 : i32
    %c0_i32_1 = arith.constant 0 : i32
    return %c0_i32, %c0_i32_0 : i32, i32
  }
  func.func @transform_12(%arg0: i32) -> (i32, i32) {
    %c0_i32 = arith.constant 0 : i32
    %c0_i32_0 = arith.constant 0 : i32
    %c0_i32_1 = arith.constant 0 : i32
    return %c0_i32, %c0_i32_0 : i32, i32
  }
  func.func @transform_13(%arg0: i32) -> (i32, i32) {
    %c0_i32 = arith.constant 0 : i32
    %c0_i32_0 = arith.constant 0 : i32
    %c0_i32_1 = arith.constant 0 : i32
    return %c0_i32, %c0_i32_0 : i32, i32
  }
  func.func @transform_14(%arg0: i32) -> (i32, i32) {
    %c0_i32 = arith.constant 0 : i32
    %c0_i32_0 = arith.constant 0 : i32
    %c0_i32_1 = arith.constant 0 : i32
    return %c0_i32, %c0_i32_0 : i32, i32
  }
  func.func @transform_15(%arg0: i32) -> (i32, i32) {
    %c0_i32 = arith.constant 0 : i32
    %c0_i32_0 = arith.constant 0 : i32
    %c0_i32_1 = arith.constant 0 : i32
    return %c0_i32, %c0_i32_0 : i32, i32
  }
  func.func @transform_16(%arg0: i32) -> (i32, i32) {
    %c0_i32 = arith.constant 0 : i32
    %c0_i32_0 = arith.constant 0 : i32
    %c0_i32_1 = arith.constant 0 : i32
    return %c0_i32, %c0_i32_0 : i32, i32
  }
  func.func @transform_17(%arg0: i32) -> (i32, i32) {
    %c0_i32 = arith.constant 0 : i32
    %c0_i32_0 = arith.constant 0 : i32
    return %arg0, %c0_i32 : i32, i32
  }
}

</mosaic_0001>

<llo_original>
// kernel: tile.13
$region0: #{tile.13}
  #allocation0 [shape = 's32[1]{0}', space=sflag, size = 0x4, scoped, tag = 'scoped memory for tile.13']
  %s0 = inlined_call_operand.vmem [shape: f32[2], index: 0, kind: input, shape index: {}]
  %s1 = inlined_call_operand.vmem [shape: f32[24,2], index: 1, kind: output, shape index: {}]
  // Predicated region
  $region2: #{tile.13} parent=0 // pred_check
    _
  $region3: #{tile.13} parent=0 // pred_check_branch
    %3 = sbr.rel (0) target = $region5
  $region4: #{tile.13} parent=0 // pred_region
    _
  $region5: #{tile.13} parent=0 // pred_fallthru
    _
  %v4 = vld [vmem:[%s0] ss:$0 sm:$0xff]
  %5 = vst [vmem:[%s1] sm:$0xff] %v4
  %s6 = scalar_lea.vmem %s1, 8
  %7 = vst [vmem:[%s6] sm:$0xff] %v4
  %s8 = scalar_lea.vmem %s1, 16
  %9 = vst [vmem:[%s8] sm:$0xff] %v4

// kernel: tile.14
$region0: #{tile.14}
  %s0 = inlined_call_operand.vmem [shape: f32[24,2], index: 0, kind: input, shape index: {}]
  %s1 = inlined_call_operand.vmem [shape: f32[1,48], index: 1, kind: output, shape index: {}]
  $region1: #{tile.14} parent=0
    #allocation0 [shape = 'u8[4096]{0}', space=vmem, size = 0x1000, scoped, tag = 'scoped mem for output reshape']
    %v2 = vld [vmem:[%s0] sm:$0x1]
    %vm3 = vcmask 15360
    %4 = vst.msk [vmem:[#allocation0] sm:$0x1] %vm3, %v2
    %s5 = scalar_lea.vmem %s0, 23
    %v6 = vld [vmem:[%s5] sm:$0x1]
    %7 = vrot.lane.b32.xlu0 %v6, 46
    %v8 = vpop.permute.xlu0 %7
    %vm9 = vcmask 392560
    %10 = vst.msk [vmem:[#allocation0] sm:$0x1] %vm9, %v8
    %s11 = scalar_lea.vmem %s0, 22
    %v12 = vld [vmem:[%s11] sm:$0x1]
    %13 = vrot.lane.b32.xlu0 %v12, 44
    %v14 = vpop.permute.xlu0 %13
    %vm15 = vcmask 376160
    %16 = vst.msk [vmem:[#allocation0] sm:$0x1] %vm15, %v14
    %s17 = scalar_lea.vmem %s0, 21
    %v18 = vld [vmem:[%s17] sm:$0x1]
    %19 = vrot.lane.b32.xlu0 %v18, 42
    %v20 = vpop.permute.xlu0 %19
    %vm21 = vcmask 359760
    %22 = vst.msk [vmem:[#allocation0] sm:$0x1] %vm21, %v20
    %s23 = scalar_lea.vmem %s0, 20
    %v24 = vld [vmem:[%s23] sm:$0x1]
    %25 = vrot.lane.b32.xlu0 %v24, 40
    %v26 = vpop.permute.xlu0 %25
    %vm27 = vcmask 343360
    %28 = vst.msk [vmem:[#allocation0] sm:$0x1] %vm27, %v26
    %s29 = scalar_lea.vmem %s0, 19
    %v30 = vld [vmem:[%s29] sm:$0x1]
    %31 = vrot.lane.b32.xlu0 %v30, 38
    %v32 = vpop.permute.xlu0 %31
    %vm33 = vcmask 326960
    %34 = vst.msk [vmem:[#allocation0] sm:$0x1] %vm33, %v32
    %s35 = scalar_lea.vmem %s0, 18
    %v36 = vld [vmem:[%s35] sm:$0x1]
    %37 = vrot.lane.b32.xlu0 %v36, 36
    %v38 = vpop.permute.xlu0 %37
    %vm39 = vcmask 310560
    %40 = vst.msk [vmem:[#allocation0] sm:$0x1] %vm39, %v38
    %s41 = scalar_lea.vmem %s0, 17
    %v42 = vld [vmem:[%s41] sm:$0x1]
    %43 = vrot.lane.b32.xlu0 %v42, 34
    %v44 = vpop.permute.xlu0 %43
    %vm45 = vcmask 294160
    %46 = vst.msk [vmem:[#allocation0] sm:$0x1] %vm45, %v44
    %s47 = scalar_lea.vmem %s0, 16
    %v48 = vld [vmem:[%s47] sm:$0x1]
    %49 = vrot.lane.b32.xlu0 %v48, 32
    %v50 = vpop.permute.xlu0 %49
    %vm51 = vcmask 277760
    %52 = vst.msk [vmem:[#allocation0] sm:$0x1] %vm51, %v50
    %s53 = scalar_lea.vmem %s0, 15
    %v54 = vld [vmem:[%s53] sm:$0x1]
    %55 = vrot.lane.b32.xlu0 %v54, 30
    %v56 = vpop.permute.xlu0 %55
    %vm57 = vcmask 261360
    %58 = vst.msk [vmem:[#allocation0] sm:$0x1] %vm57, %v56
    %s59 = scalar_lea.vmem %s0, 14
    %v60 = vld [vmem:[%s59] sm:$0x1]
    %61 = vrot.lane.b32.xlu0 %v60, 28
    %v62 = vpop.permute.xlu0 %61
    %vm63 = vcmask 244960
    %64 = vst.msk [vmem:[#allocation0] sm:$0x1] %vm63, %v62
    %s65 = scalar_lea.vmem %s0, 13
    %v66 = vld [vmem:[%s65] sm:$0x1]
    %67 = vrot.lane.b32.xlu0 %v66, 26
    %v68 = vpop.permute.xlu0 %67
    %vm69 = vcmask 228560
    %70 = vst.msk [vmem:[#allocation0] sm:$0x1] %vm69, %v68
    %s71 = scalar_lea.vmem %s0, 12
    %v72 = vld [vmem:[%s71] sm:$0x1]
    %73 = vrot.lane.b32.xlu0 %v72, 24
    %v74 = vpop.permute.xlu0 %73
    %vm75 = vcmask 212160
    %76 = vst.msk [vmem:[#allocation0] sm:$0x1] %vm75, %v74
    %s77 = scalar_lea.vmem %s0, 11
    %v78 = vld [vmem:[%s77] sm:$0x1]
    %79 = vrot.lane.b32.xlu0 %v78, 22
    %v80 = vpop.permute.xlu0 %79
    %vm81 = vcmask 195760
    %82 = vst.msk [vmem:[#allocation0] sm:$0x1] %vm81, %v80
    %s83 = scalar_lea.vmem %s0, 10
    %v84 = vld [vmem:[%s83] sm:$0x1]
    %85 = vrot.lane.b32.xlu0 %v84, 20
    %v86 = vpop.permute.xlu0 %85
    %vm87 = vcmask 179360
    %88 = vst.msk [vmem:[#allocation0] sm:$0x1] %vm87, %v86
    %s89 = scalar_lea.vmem %s0, 9
    %v90 = vld [vmem:[%s89] sm:$0x1]
    %91 = vrot.lane.b32.xlu0 %v90, 18
    %v92 = vpop.permute.xlu0 %91
    %vm93 = vcmask 162960
    %94 = vst.msk [vmem:[#allocation0] sm:$0x1] %vm93, %v92
    %s95 = scalar_lea.vmem %s0, 8
    %v96 = vld [vmem:[%s95] sm:$0x1]
    %97 = vrot.lane.b32.xlu0 %v96, 16
    %v98 = vpop.permute.xlu0 %97
    %vm99 = vcmask 146560
    %100 = vst.msk [vmem:[#allocation0] sm:$0x1] %vm99, %v98
    %s101 = scalar_lea.vmem %s0, 7
    %v102 = vld [vmem:[%s101] sm:$0x1]
    %103 = vrot.lane.b32.xlu0 %v102, 14
    %v104 = vpop.permute.xlu0 %103
    %vm105 = vcmask 130160
    %106 = vst.msk [vmem:[#allocation0] sm:$0x1] %vm105, %v104
    %s107 = scalar_lea.vmem %s0, 6
    %v108 = vld [vmem:[%s107] sm:$0x1]
    %109 = vrot.lane.b32.xlu0 %v108, 12
    %v110 = vpop.permute.xlu0 %109
    %vm111 = vcmask 113760
    %112 = vst.msk [vmem:[#allocation0] sm:$0x1] %vm111, %v110
    %s113 = scalar_lea.vmem %s0, 5
    %v114 = vld [vmem:[%s113] sm:$0x1]
    %115 = vrot.lane.b32.xlu0 %v114, 10
    %v116 = vpop.permute.xlu0 %115
    %vm117 = vcmask 97360
    %118 = vst.msk [vmem:[#allocation0] sm:$0x1] %vm117, %v116
    %s119 = scalar_lea.vmem %s0, 4
    %v120 = vld [vmem:[%s119] sm:$0x1]
    %121 = vrot.lane.b32.xlu0 %v120, 8
    %v122 = vpop.permute.xlu0 %121
    %vm123 = vcmask 80960
    %124 = vst.msk [vmem:[#allocation0] sm:$0x1] %vm123, %v122
    %s125 = scalar_lea.vmem %s0, 3
    %v126 = vld [vmem:[%s125] sm:$0x1]
    %127 = vrot.lane.b32.xlu0 %v126, 6
    %v128 = vpop.permute.xlu0 %127
    %vm129 = vcmask 64560
    %130 = vst.msk [vmem:[#allocation0] sm:$0x1] %vm129, %v128
    %s131 = scalar_lea.vmem %s0, 2
    %v132 = vld [vmem:[%s131] sm:$0x1]
    %133 = vrot.lane.b32.xlu0 %v132, 4
    %v134 = vpop.permute.xlu0 %133
    %vm135 = vcmask 48160
    %136 = vst.msk [vmem:[#allocation0] sm:$0x1] %vm135, %v134
    %s137 = scalar_lea.vmem %s0, 1
    %v138 = vld [vmem:[%s137] sm:$0x1]
    %139 = vrot.lane.b32.xlu0 %v138, 2
    %v140 = vpop.permute.xlu0 %139
    %vm141 = vcmask 31760
    %142 = vst.msk [vmem:[#allocation0] sm:$0x1] %vm141, %v140
    %s144 = ssub.s32 2, 1
    %v145 = vld [vmem:[#allocation0] sm:%s144]
    %s147 = ssub.s32 2, 1
    %148 = vst [vmem:[%s1] sm:%s147] %v145

// kernel: metric_discriminator_forward.1
$region0: #{metric_discriminator_forward.1}
  #allocation0 [shape = 'u32[]', space=smem, size = 0x4, offset = 0x4, fixed_abs, tag = 'smem constant byte address 0x4 - core index']
  #allocation1 [shape = 'u32[72,128]{1,0:T(1,128)}', space=vmem, size = 0x9000, scoped, tag = 'internal scratch']
  %s0 = inlined_call_operand.vmem [shape: f32[24,16,48], index: 0, kind: input, shape index: {}]
  %s1 = inlined_call_operand.vmem [shape: f32[1,48], index: 1, kind: input, shape index: {}]
  %s2 = inlined_call_operand.vmem [shape: f32[1,48], index: 2, kind: input, shape index: {}]
  %s3 = inlined_call_operand.hbm [shape: bf16[5,48,384], index: 3, kind: input, shape index: {}]
  %s4 = inlined_call_operand.vmem [shape: f32[1,384], index: 4, kind: input, shape index: {}]
  %s5 = inlined_call_operand.hbm [shape: bf16[5,384,256], index: 5, kind: input, shape index: {}]
  %s6 = inlined_call_operand.vmem [shape: f32[1,256], index: 6, kind: input, shape index: {}]
  %s7 = inlined_call_operand.hbm [shape: bf16[5,256,256], index: 7, kind: input, shape index: {}]
  %s8 = inlined_call_operand.vmem [shape: f32[1,256], index: 8, kind: input, shape index: {}]
  %s9 = inlined_call_operand.vmem [shape: bf16[5,256,128], index: 9, kind: input, shape index: {}]
  %s10 = inlined_call_operand.vmem [shape: f32[1,128], index: 10, kind: input, shape index: {}]
  %s11 = inlined_call_operand.vmem [shape: f32[128,128], index: 11, kind: input, shape index: {}]
  %s12 = inlined_call_operand.vmem [shape: f32[1,128], index: 12, kind: input, shape index: {}]
  %s13 = inlined_call_operand.hbm [shape: f32[128,128], index: 13, kind: input, shape index: {}]
  %s14 = inlined_call_operand.vmem [shape: f32[1,128], index: 14, kind: input, shape index: {}]
  %s15 = inlined_call_operand.hbm [shape: f32[128,128], index: 15, kind: input, shape index: {}]
  %s16 = inlined_call_operand.vmem [shape: f32[1,128], index: 16, kind: input, shape index: {}]
  %s17 = inlined_call_operand.vmem [shape: f32[16,128], index: 17, kind: output, shape index: {}]
  %s18 = sld [smem:[#allocation0]]
  $region98: #{metric_discriminator_forward.1} parent=0
    _
  %s20 = ssub.s32 1, %s18
  %s21 = scalar_select 0, %s20, %s18
  $region1: #{metric_discriminator_forward.1} parent=0
    #allocation2 [shape = 'u8[184320]{0}', space=vmem, size = 0x2d000, scoped, tag = 'input window, operand 3, single buffered']
    #allocation3 [shape = 's32[1]{0}', space=sflag, size = 0x4, scoped, tag = 'scoped memory for metric_discriminator_forward.1']
    #allocation4 [shape = 'u8[983040]{0}', space=vmem, size = 0xf0000, scoped, tag = 'input window, operand 5, single buffered']
    #allocation5 [shape = 's32[1]{0}', space=sflag, size = 0x4, scoped, tag = 'scoped memory for metric_discriminator_forward.1']
    #allocation6 [shape = 'u8[655360]{0}', space=vmem, size = 0xa0000, scoped, tag = 'input window, operand 7, single buffered']
    #allocation7 [shape = 'u8[65536]{0}', space=vmem, size = 0x10000, scoped, tag = 'input window, operand 13, single buffered']
    #allocation8 [shape = 's32[1]{0}', space=sflag, size = 0x4, scoped, tag = 'scoped memory for metric_discriminator_forward.1']
    #allocation9 [shape = 'u8[65536]{0}', space=vmem, size = 0x10000, scoped, tag = 'input window, operand 15, single buffered']
    %22 = vsyncpa [#allocation3], 0
    %23 = vsyncpa [#allocation5], 0
    %24 = vsyncpa [#allocation8], 0
    // Predicated region
    $region2: #{metric_discriminator_forward.1} parent=1 // pred_check
      _
    $region3: #{metric_discriminator_forward.1} parent=1 // pred_check_branch
      %26 = sbr.rel (0) target = $region5
    $region4: #{metric_discriminator_forward.1} parent=1 // pred_region
      _
    $region5: #{metric_discriminator_forward.1} parent=1 // pred_fallthru
      _
    // Predicated region
    $region6: #{metric_discriminator_forward.1} parent=1 // pred_check
      _
    $region7: #{metric_discriminator_forward.1} parent=1 // pred_check_branch
      %28 = sbr.rel (0) target = $region9
    $region8: #{metric_discriminator_forward.1} parent=1 // pred_region
      _
    $region9: #{metric_discriminator_forward.1} parent=1 // pred_fallthru
      _
    // Predicated region
    $region10: #{metric_discriminator_forward.1} parent=1 // pred_check
      _
    $region11: #{metric_discriminator_forward.1} parent=1 // pred_check_branch
      %30 = sbr.rel (0) target = $region13
    $region12: #{metric_discriminator_forward.1} parent=1 // pred_region
      _
    $region13: #{metric_discriminator_forward.1} parent=1 // pred_fallthru
      _
    // Predicated region
    $region14: #{metric_discriminator_forward.1} parent=1 // pred_check
      _
    $region15: #{metric_discriminator_forward.1} parent=1 // pred_check_branch
      %32 = sbr.rel (0) target = $region17
    $region16: #{metric_discriminator_forward.1} parent=1 // pred_region
      %34 = vsyncadd [#allocation3], 0
      %s35 = sshll.u32 %s3, 4
      %s36 = int_to_ptr.hbm [resolvable:$true] %s35
      %s37 = sshll.u32 [#allocation2], 4
      %s38 = int_to_ptr.vmem [resolvable:$true] %s37
      %43 = dma.hbm_to_vmem [thread:$0]  %s36, 5760, %s38, [#allocation3], 192, 192, 12
    $region17: #{metric_discriminator_forward.1} parent=1 // pred_fallthru
      _
    // Predicated region
    $region18: #{metric_discriminator_forward.1} parent=1 // pred_check
      _
    $region19: #{metric_discriminator_forward.1} parent=1 // pred_check_branch
      %45 = sbr.rel (0) target = $region21
    $region20: #{metric_discriminator_forward.1} parent=1 // pred_region
      _
    $region21: #{metric_discriminator_forward.1} parent=1 // pred_fallthru
      _
    // Predicated region
    $region22: #{metric_discriminator_forward.1} parent=1 // pred_check
      _
    $region23: #{metric_discriminator_forward.1} parent=1 // pred_check_branch
      %47 = sbr.rel (0) target = $region25
    $region24: #{metric_discriminator_forward.1} parent=1 // pred_region
      %49 = vsyncadd [#allocation5], 0
      %s50 = sshll.u32 %s5, 4
      %s51 = int_to_ptr.hbm [resolvable:$true] %s50
      %s52 = sshll.u32 [#allocation4], 4
      %s53 = int_to_ptr.vmem [resolvable:$true] %s52
      %58 = dma.hbm_to_vmem [thread:$0]  %s51, 30720, %s53, [#allocation5], 128, 128, 8
    $region25: #{metric_discriminator_forward.1} parent=1 // pred_fallthru
      _
    // Predicated region
    $region26: #{metric_discriminator_forward.1} parent=1 // pred_check
      _
    $region27: #{metric_discriminator_forward.1} parent=1 // pred_check_branch
      %60 = sbr.rel (0) target = $region29
    $region28: #{metric_discriminator_forward.1} parent=1 // pred_region
      _
    $region29: #{metric_discriminator_forward.1} parent=1 // pred_fallthru
      _
    // Predicated region
    $region30: #{metric_discriminator_forward.1} parent=1 // pred_check
      _
    $region31: #{metric_discriminator_forward.1} parent=1 // pred_check_branch
      %62 = sbr.rel (0) target = $region33
    $region32: #{metric_discriminator_forward.1} parent=1 // pred_region
      %64 = vsyncadd [#allocation5], 0
      %s65 = sshll.u32 %s7, 4
      %s66 = int_to_ptr.hbm [resolvable:$true] %s65
      %s67 = sshll.u32 [#allocation6], 4
      %s68 = int_to_ptr.vmem [resolvable:$true] %s67
      %73 = dma.hbm_to_vmem [thread:$0]  %s66, 20480, %s68, [#allocation5], 128, 128, 8
    $region33: #{metric_discriminator_forward.1} parent=1 // pred_fallthru
      _
    // Predicated region
    $region34: #{metric_discriminator_forward.1} parent=1 // pred_check
      _
    $region35: #{metric_discriminator_forward.1} parent=1 // pred_check_branch
      %75 = sbr.rel (0) target = $region37
    $region36: #{metric_discriminator_forward.1} parent=1 // pred_region
      _
    $region37: #{metric_discriminator_forward.1} parent=1 // pred_fallthru
      _
    // Predicated region
    $region38: #{metric_discriminator_forward.1} parent=1 // pred_check
      _
    $region39: #{metric_discriminator_forward.1} parent=1 // pred_check_branch
      %77 = sbr.rel (0) target = $region41
    $region40: #{metric_discriminator_forward.1} parent=1 // pred_region
      _
    $region41: #{metric_discriminator_forward.1} parent=1 // pred_fallthru
      _
    // Predicated region
    $region42: #{metric_discriminator_forward.1} parent=1 // pred_check
      _
    $region43: #{metric_discriminator_forward.1} parent=1 // pred_check_branch
      %79 = sbr.rel (0) target = $region45
    $region44: #{metric_discriminator_forward.1} parent=1 // pred_region
      _
    $region45: #{metric_discriminator_forward.1} parent=1 // pred_fallthru
      _
    // Predicated region
    $region46: #{metric_discriminator_forward.1} parent=1 // pred_check
      _
    $region47: #{metric_discriminator_forward.1} parent=1 // pred_check_branch
      %81 = sbr.rel (0) target = $region49
    $region48: #{metric_discriminator_forward.1} parent=1 // pred_region
      _
    $region49: #{metric_discriminator_forward.1} parent=1 // pred_fallthru
      _
    // Predicated region
    $region50: #{metric_discriminator_forward.1} parent=1 // pred_check
      _
    $region51: #{metric_discriminator_forward.1} parent=1 // pred_check_branch
      %83 = sbr.rel (0) target = $region53
    $region52: #{metric_discriminator_forward.1} parent=1 // pred_region
      _
    $region53: #{metric_discriminator_forward.1} parent=1 // pred_fallthru
      _
    // Predicated region
    $region54: #{metric_discriminator_forward.1} parent=1 // pred_check
      _
    $region55: #{metric_discriminator_forward.1} parent=1 // pred_check_branch
      %85 = sbr.rel (0) target = $region57
    $region56: #{metric_discriminator_forward.1} parent=1 // pred_region
      %87 = vsyncadd [#allocation8], 0
      %s88 = sshll.u32 %s13, 4
      %s89 = int_to_ptr.hbm [resolvable:$true] %s88
      %s90 = sshll.u32 [#allocation7], 4
      %s91 = int_to_ptr.vmem [resolvable:$true] %s90
      %96 = dma.hbm_to_vmem [thread:$0]  %s89, 2048, %s91, [#allocation8], 128, 128, 8
    $region57: #{metric_discriminator_forward.1} parent=1 // pred_fallthru
      _
    // Predicated region
    $region58: #{metric_discriminator_forward.1} parent=1 // pred_check
      _
    $region59: #{metric_discriminator_forward.1} parent=1 // pred_check_branch
      %98 = sbr.rel (0) target = $region61
    $region60: #{metric_discriminator_forward.1} parent=1 // pred_region
      _
    $region61: #{metric_discriminator_forward.1} parent=1 // pred_fallthru
      _
    // Predicated region
    $region62: #{metric_discriminator_forward.1} parent=1 // pred_check
      _
    $region63: #{metric_discriminator_forward.1} parent=1 // pred_check_branch
      %100 = sbr.rel (0) target = $region65
    $region64: #{metric_discriminator_forward.1} parent=1 // pred_region
      %102 = vsyncadd [#allocation8], 0
      %s103 = sshll.u32 %s15, 4
      %s104 = int_to_ptr.hbm [resolvable:$true] %s103
      %s105 = sshll.u32 [#allocation9], 4
      %s106 = int_to_ptr.vmem [resolvable:$true] %s105
      %111 = dma.hbm_to_vmem [thread:$0]  %s104, 2048, %s106, [#allocation8], 128, 128, 8
    $region65: #{metric_discriminator_forward.1} parent=1 // pred_fallthru
      _
    // Predicated region
    $region66: #{metric_discriminator_forward.1} parent=1 // pred_check
      _
    $region67: #{metric_discriminator_forward.1} parent=1 // pred_check_branch
      %113 = sbr.rel (0) target = $region69
    $region68: #{metric_discriminator_forward.1} parent=1 // pred_region
      _
    $region69: #{metric_discriminator_forward.1} parent=1 // pred_fallthru
      _
    // Predicated region
    $region70: #{metric_discriminator_forward.1} parent=1 // pred_check
      _
    $region71: #{metric_discriminator_forward.1} parent=1 // pred_check_branch
      %115 = sbr.rel (0) target = $region73
    $region72: #{metric_discriminator_forward.1} parent=1 // pred_region
      %117 = dma.done [#allocation3], 5760
    $region73: #{metric_discriminator_forward.1} parent=1 // pred_fallthru
      _
    // Predicated region
    $region74: #{metric_discriminator_forward.1} parent=1 // pred_check
      _
    $region75: #{metric_discriminator_forward.1} parent=1 // pred_check_branch
      %119 = sbr.rel (0) target = $region77
    $region76: #{metric_discriminator_forward.1} parent=1 // pred_region
      %121 = dma.done [#allocation5], 30720
    $region77: #{metric_discriminator_forward.1} parent=1 // pred_fallthru
      _
    // Predicated region
    $region78: #{metric_discriminator_forward.1} parent=1 // pred_check
      _
    $region79: #{metric_discriminator_forward.1} parent=1 // pred_check_branch
      %123 = sbr.rel (0) target = $region81
    $region80: #{metric_discriminator_forward.1} parent=1 // pred_region
      %125 = dma.done [#allocation5], 20480
    $region81: #{metric_discriminator_forward.1} parent=1 // pred_fallthru
      _
    // Predicated region
    $region82: #{metric_discriminator_forward.1} parent=1 // pred_check
      _
    $region83: #{metric_discriminator_forward.1} parent=1 // pred_check_branch
      %127 = sbr.rel (0) target = $region85
    $region84: #{metric_discriminator_forward.1} parent=1 // pred_region
      %129 = dma.done [#allocation8], 2048
    $region85: #{metric_discriminator_forward.1} parent=1 // pred_fallthru
      _
    // Predicated region
    $region86: #{metric_discriminator_forward.1} parent=1 // pred_check
      _
    $region87: #{metric_discriminator_forward.1} parent=1 // pred_check_branch
      %131 = sbr.rel (0) target = $region89
    $region88: #{metric_discriminator_forward.1} parent=1 // pred_region
      %133 = dma.done [#allocation8], 2048
    $region89: #{metric_discriminator_forward.1} parent=1 // pred_fallthru
      _
    %v135 = vld [vmem:[%s0] sm:$0xff]
    %v136 = vld [vmem:[%s0 + $0x8] sm:$0xff]
    %v137 = vld [vmem:[%s0 + $0x10] sm:$0xff]
    %v138 = vld [vmem:[%s0 + $0x18] sm:$0xff]
    %v139 = vld [vmem:[%s0 + $0x20] sm:$0xff]
    %v140 = vld [vmem:[%s0 + $0x28] sm:$0xff]
    %v141 = vld [vmem:[%s0 + $0x30] sm:$0xff]
    %v142 = vld [vmem:[%s0 + $0x38] sm:$0xff]
    %v143 = vld [vmem:[%s0 + $0x40] sm:$0xff]
    %v144 = vld [vmem:[%s0 + $0x48] sm:$0xff]
    %v145 = vld [vmem:[%s0 + $0x50] sm:$0xff]
    %v146 = vld [vmem:[%s0 + $0x58] sm:$0xff]
    %v147 = vld [vmem:[%s0 + $0x60] sm:$0xff]
    %v148 = vld [vmem:[%s0 + $0x68] sm:$0xff]
    %v149 = vld [vmem:[%s0 + $0x70] sm:$0xff]
    %v150 = vld [vmem:[%s0 + $0x78] sm:$0xff]
    %v151 = vld [vmem:[%s0 + $0x80] sm:$0xff]
    %v152 = vld [vmem:[%s0 + $0x88] sm:$0xff]
    %v153 = vld [vmem:[%s0 + $0x90] sm:$0xff]
    %v154 = vld [vmem:[%s0 + $0x98] sm:$0xff]
    %v155 = vld [vmem:[%s0 + $0xa0] sm:$0xff]
    %v156 = vld [vmem:[%s0 + $0xa8] sm:$0xff]
    %v157 = vld [vmem:[%s0 + $0xb0] sm:$0xff]
    %v158 = vld [vmem:[%s0 + $0xb8] sm:$0xff]
    %v159 = vld [vmem:[%s0 + $0xc0] sm:$0xff]
    %v160 = vld [vmem:[%s0 + $0xc8] sm:$0xff]
    %v161 = vld [vmem:[%s0 + $0xd0] sm:$0xff]
    %v162 = vld [vmem:[%s0 + $0xd8] sm:$0xff]
    %v163 = vld [vmem:[%s0 + $0xe0] sm:$0xff]
    %v164 = vld [vmem:[%s0 + $0xe8] sm:$0xff]
    %v165 = vld [vmem:[%s0 + $0xf0] sm:$0xff]
    %v166 = vld [vmem:[%s0 + $0xf8] sm:$0xff]
    %v167 = vld [vmem:[%s0 + $0x100] sm:$0xff]
    %v168 = vld [vmem:[%s0 + $0x108] sm:$0xff]
    %v169 = vld [vmem:[%s0 + $0x110] sm:$0xff]
    %v170 = vld [vmem:[%s0 + $0x118] sm:$0xff]
    %v171 = vld [vmem:[%s0 + $0x120] sm:$0xff]
    %v172 = vld [vmem:[%s0 + $0x128] sm:$0xff]
    %v173 = vld [vmem:[%s0 + $0x130] sm:$0xff]
    %v174 = vld [vmem:[%s0 + $0x138] sm:$0xff]
    %v175 = vld [vmem:[%s0 + $0x140] sm:$0xff]
    %v176 = vld [vmem:[%s0 + $0x148] sm:$0xff]
    %v177 = vld [vmem:[%s0 + $0x150] sm:$0xff]
    %v178 = vld [vmem:[%s0 + $0x158] sm:$0xff]
    %v179 = vld [vmem:[%s0 + $0x160] sm:$0xff]
    %v180 = vld [vmem:[%s0 + $0x168] sm:$0xff]
    %v181 = vld [vmem:[%s0 + $0x170] sm:$0xff]
    %v182 = vld [vmem:[%s0 + $0x178] sm:$0xff]
    %v183 = vld [vmem:[%s1] sm:$0x1]
    %v185 = vperm.slane %v183, 0
    %v187 = vmul.f32 %v135, %v185
    %v188 = vmul.f32 %v136, %v185
    %v189 = vmul.f32 %v137, %v185
    %v190 = vmul.f32 %v138, %v185
    %v191 = vmul.f32 %v139, %v185
    %v192 = vmul.f32 %v140, %v185
    %v193 = vmul.f32 %v141, %v185
    %v194 = vmul.f32 %v142, %v185
    %v195 = vmul.f32 %v143, %v185
    %v196 = vmul.f32 %v144, %v185
    %v197 = vmul.f32 %v145, %v185
    %v198 = vmul.f32 %v146, %v185
    %v199 = vmul.f32 %v147, %v185
    %v200 = vmul.f32 %v148, %v185
    %v201 = vmul.f32 %v149, %v185
    %v202 = vmul.f32 %v150, %v185
    %v203 = vmul.f32 %v151, %v185
    %v204 = vmul.f32 %v152, %v185
    %v205 = vmul.f32 %v153, %v185
    %v206 = vmul.f32 %v154, %v185
    %v207 = vmul.f32 %v155, %v185
    %v208 = vmul.f32 %v156, %v185
    %v209 = vmul.f32 %v157, %v185
    %v210 = vmul.f32 %v158, %v185
    %v211 = vmul.f32 %v159, %v185
    %v212 = vmul.f32 %v160, %v185
    %v213 = vmul.f32 %v161, %v185
    %v214 = vmul.f32 %v162, %v185
    %v215 = vmul.f32 %v163, %v185
    %v216 = vmul.f32 %v164, %v185
    %v217 = vmul.f32 %v165, %v185
    %v218 = vmul.f32 %v166, %v185
    %v219 = vmul.f32 %v167, %v185
    %v220 = vmul.f32 %v168, %v185
    %v221 = vmul.f32 %v169, %v185
    %v222 = vmul.f32 %v170, %v185
    %v223 = vmul.f32 %v171, %v185
    %v224 = vmul.f32 %v172, %v185
    %v225 = vmul.f32 %v173, %v185
    %v226 = vmul.f32 %v174, %v185
    %v227 = vmul.f32 %v175, %v185
    %v228 = vmul.f32 %v176, %v185
    %v229 = vmul.f32 %v177, %v185
    %v230 = vmul.f32 %v178, %v185
    %v231 = vmul.f32 %v179, %v185
    %v232 = vmul.f32 %v180, %v185
    %v233 = vmul.f32 %v181, %v185
    %v234 = vmul.f32 %v182, %v185
    %v235 = vld [vmem:[%s2] sm:$0x1]
    %v237 = vperm.slane %v235, 0
    %v239 = vadd.f32 %v187, %v237
    %v240 = vadd.f32 %v188, %v237
    %v241 = vadd.f32 %v189, %v237
    %v242 = vadd.f32 %v190, %v237
    %v243 = vadd.f32 %v191, %v237
    %v244 = vadd.f32 %v192, %v237
    %v245 = vadd.f32 %v193, %v237
    %v246 = vadd.f32 %v194, %v237
    %v247 = vadd.f32 %v195, %v237
    %v248 = vadd.f32 %v196, %v237
    %v249 = vadd.f32 %v197, %v237
    %v250 = vadd.f32 %v198, %v237
    %v251 = vadd.f32 %v199, %v237
    %v252 = vadd.f32 %v200, %v237
    %v253 = vadd.f32 %v201, %v237
    %v254 = vadd.f32 %v202, %v237
    %v255 = vadd.f32 %v203, %v237
    %v256 = vadd.f32 %v204, %v237
    %v257 = vadd.f32 %v205, %v237
    %v258 = vadd.f32 %v206, %v237
    %v259 = vadd.f32 %v207, %v237
    %v260 = vadd.f32 %v208, %v237
    %v261 = vadd.f32 %v209, %v237
    %v262 = vadd.f32 %v210, %v237
    %v263 = vadd.f32 %v211, %v237
    %v264 = vadd.f32 %v212, %v237
    %v265 = vadd.f32 %v213, %v237
    %v266 = vadd.f32 %v214, %v237
    %v267 = vadd.f32 %v215, %v237
    %v268 = vadd.f32 %v216, %v237
    %v269 = vadd.f32 %v217, %v237
    %v270 = vadd.f32 %v218, %v237
    %v271 = vadd.f32 %v219, %v237
    %v272 = vadd.f32 %v220, %v237
    %v273 = vadd.f32 %v221, %v237
    %v274 = vadd.f32 %v222, %v237
    %v275 = vadd.f32 %v223, %v237
    %v276 = vadd.f32 %v224, %v237
    %v277 = vadd.f32 %v225, %v237
    %v278 = vadd.f32 %v226, %v237
    %v279 = vadd.f32 %v227, %v237
    %v280 = vadd.f32 %v228, %v237
    %v281 = vadd.f32 %v229, %v237
    %v282 = vadd.f32 %v230, %v237
    %v283 = vadd.f32 %v231, %v237
    %v284 = vadd.f32 %v232, %v237
    %v285 = vadd.f32 %v233, %v237
    %v286 = vadd.f32 %v234, %v237
    %v287 = vpack.c.bf16 %v239, %v239
    %v288 = vpack.c.bf16 %v240, %v240
    %v289 = vpack.c.bf16 %v241, %v241
    %v290 = vpack.c.bf16 %v242, %v242
    %v291 = vpack.c.bf16 %v243, %v243
    %v292 = vpack.c.bf16 %v244, %v244
    %v293 = vpack.c.bf16 %v245, %v245
    %v294 = vpack.c.bf16 %v246, %v246
    %v295 = vpack.c.bf16 %v247, %v247
    %v296 = vpack.c.bf16 %v248, %v248
    %v297 = vpack.c.bf16 %v249, %v249
    %v298 = vpack.c.bf16 %v250, %v250
    %v299 = vpack.c.bf16 %v251, %v251
    %v300 = vpack.c.bf16 %v252, %v252
    %v301 = vpack.c.bf16 %v253, %v253
    %v302 = vpack.c.bf16 %v254, %v254
    %v303 = vpack.c.bf16 %v255, %v255
    %v304 = vpack.c.bf16 %v256, %v256
    %v305 = vpack.c.bf16 %v257, %v257
    %v306 = vpack.c.bf16 %v258, %v258
    %v307 = vpack.c.bf16 %v259, %v259
    %v308 = vpack.c.bf16 %v260, %v260
    %v309 = vpack.c.bf16 %v261, %v261
    %v310 = vpack.c.bf16 %v262, %v262
    %v311 = vpack.c.bf16 %v263, %v263
    %v312 = vpack.c.bf16 %v264, %v264
    %v313 = vpack.c.bf16 %v265, %v265
    %v314 = vpack.c.bf16 %v266, %v266
    %v315 = vpack.c.bf16 %v267, %v267
    %v316 = vpack.c.bf16 %v268, %v268
    %v317 = vpack.c.bf16 %v269, %v269
    %v318 = vpack.c.bf16 %v270, %v270
    %v319 = vpack.c.bf16 %v271, %v271
    %v320 = vpack.c.bf16 %v272, %v272
    %v321 = vpack.c.bf16 %v273, %v273
    %v322 = vpack.c.bf16 %v274, %v274
    %v323 = vpack.c.bf16 %v275, %v275
    %v324 = vpack.c.bf16 %v276, %v276
    %v325 = vpack.c.bf16 %v277, %v277
    %v326 = vpack.c.bf16 %v278, %v278
    %v327 = vpack.c.bf16 %v279, %v279
    %v328 = vpack.c.bf16 %v280, %v280
    %v329 = vpack.c.bf16 %v281, %v281
    %v330 = vpack.c.bf16 %v282, %v282
    %v331 = vpack.c.bf16 %v283, %v283
    %v332 = vpack.c.bf16 %v284, %v284
    %v333 = vpack.c.bf16 %v285, %v285
    %v334 = vpack.c.bf16 %v286, %v286
    %v335 = vld [vmem:[#allocation2] sm:$0xff]
    %v336 = vld [vmem:[#allocation2 + $0x8] sm:$0xf]
    %v337 = vld [vmem:[#allocation2 + $0xc] sm:$0xff]
    %v338 = vld [vmem:[#allocation2 + $0x14] sm:$0xf]
    %v339 = vld [vmem:[#allocation2 + $0x18] sm:$0xff]
    %v340 = vld [vmem:[#allocation2 + $0x20] sm:$0xf]
    %v341 = vld [vmem:[#allocation2 + $0x24] sm:$0xff]
    %v342 = vld [vmem:[#allocation2 + $0x2c] sm:$0xf]
    %v343 = vld [vmem:[#allocation2 + $0x30] sm:$0xff]
    %v344 = vld [vmem:[#allocation2 + $0x38] sm:$0xf]
    %v345 = vld [vmem:[#allocation2 + $0x3c] sm:$0xff]
    %v346 = vld [vmem:[#allocation2 + $0x44] sm:$0xf]
    %s347 = scalar_lea.vmem [#allocation2], 72
    %v348 = vld [vmem:[%s347] sm:$0xff]
    %v349 = vld [vmem:[%s347 + $0x8] sm:$0xf]
    %v350 = vld [vmem:[%s347 + $0xc] sm:$0xff]
    %v351 = vld [vmem:[%s347 + $0x14] sm:$0xf]
    %v352 = vld [vmem:[%s347 + $0x18] sm:$0xff]
    %v353 = vld [vmem:[%s347 + $0x20] sm:$0xf]
    %v354 = vld [vmem:[%s347 + $0x24] sm:$0xff]
    %v355 = vld [vmem:[%s347 + $0x2c] sm:$0xf]
    %v356 = vld [vmem:[%s347 + $0x30] sm:$0xff]
    %v357 = vld [vmem:[%s347 + $0x38] sm:$0xf]
    %v358 = vld [vmem:[%s347 + $0x3c] sm:$0xff]
    %v359 = vld [vmem:[%s347 + $0x44] sm:$0xf]
    %v400 = vunpack.c.l.b16 %v289
    %v401 = vunpack.c.l.b16 %v290
    %v402 = vunpack.c.l.b16 %v291
    %v403 = vunpack.c.l.b16 %v292
    %v404 = vunpack.c.l.b16 %v293
    %v405 = vunpack.c.l.b16 %v294
    %v406 = vunpack.c.l.b16 %v295
    %v407 = vunpack.c.l.b16 %v296
    %v408 = vunpack.c.l.b16 %v297
    %v409 = vunpack.c.l.b16 %v298
    %v410 = vunpack.c.l.b16 %v299
    %v411 = vunpack.c.l.b16 %v300
    %v412 = vunpack.c.l.b16 %v301
    %v413 = vunpack.c.l.b16 %v302
    %v414 = vunpack.c.l.b16 %v303
    %v415 = vunpack.c.l.b16 %v304
    %v416 = vunpack.c.l.b16 %v305
    %v417 = vunpack.c.l.b16 %v306
    %v418 = vunpack.c.l.b16 %v307
    %v419 = vunpack.c.l.b16 %v308
    %v420 = vunpack.c.l.b16 %v309
    %v421 = vunpack.c.l.b16 %v310
    %v422 = vunpack.c.l.b16 %v311
    %v423 = vunpack.c.l.b16 %v312
    %v424 = vunpack.c.l.b16 %v313
    %v425 = vunpack.c.l.b16 %v314
    %v426 = vunpack.c.l.b16 %v315
    %v427 = vunpack.c.l.b16 %v316
    %v428 = vunpack.c.l.b16 %v317
    %v429 = vunpack.c.l.b16 %v318
    %v430 = vunpack.c.l.b16 %v319
    %v431 = vunpack.c.l.b16 %v320
    %v432 = vunpack.c.l.b16 %v321
    %v433 = vunpack.c.l.b16 %v322
    %v434 = vunpack.c.l.b16 %v323
    %v435 = vunpack.c.l.b16 %v324
    %v436 = vunpack.c.l.b16 %v325
    %v437 = vunpack.c.l.b16 %v326
    %v438 = vunpack.c.l.b16 %v327
    %v439 = vunpack.c.l.b16 %v328
    %v440 = vpack.c.b16 %v401, %v400
    %v441 = vpack.c.b16 %v403, %v402
    %v442 = vpack.c.b16 %v405, %v404
    %v443 = vpack.c.b16 %v407, %v406
    %v444 = vpack.c.b16 %v409, %v408
    %v445 = vpack.c.b16 %v411, %v410
    %v446 = vpack.c.b16 %v413, %v412
    %v447 = vpack.c.b16 %v415, %v414
    %v448 = vpack.c.b16 %v417, %v416
    %v449 = vpack.c.b16 %v419, %v418
    %v450 = vpack.c.b16 %v421, %v420
    %v451 = vpack.c.b16 %v423, %v422
    %v452 = vpack.c.b16 %v425, %v424
    %v453 = vpack.c.b16 %v427, %v426
    %v454 = vpack.c.b16 %v429, %v428
    %v455 = vpack.c.b16 %v431, %v430
    %v456 = vpack.c.b16 %v433, %v432
    %v457 = vpack.c.b16 %v435, %v434
    %v458 = vpack.c.b16 %v437, %v436
    %v459 = vpack.c.b16 %v439, %v438
    %v472 = vunpack.c.l.b16 %v348
    %v473 = vunpack.c.h.b16 %v348
    %v474 = vunpack.c.l.b16 %v349
    %v475 = vunpack.c.l.b16 %v350
    %v476 = vunpack.c.h.b16 %v350
    %v477 = vunpack.c.l.b16 %v351
    %v478 = vunpack.c.l.b16 %v352
    %v479 = vunpack.c.h.b16 %v352
    %v480 = vunpack.c.l.b16 %v353
    %v481 = vunpack.c.l.b16 %v354
    %v482 = vunpack.c.h.b16 %v354
    %v483 = vunpack.c.l.b16 %v355
    %v484 = vunpack.c.l.b16 %v356
    %v485 = vunpack.c.h.b16 %v356
    %v486 = vunpack.c.l.b16 %v357
    %v487 = vunpack.c.l.b16 %v358
    %v488 = vunpack.c.h.b16 %v358
    %v489 = vunpack.c.l.b16 %v359
    %v490 = vpack.c.b16 %v475, %v472
    %v491 = vpack.c.b16 %v476, %v473
    %v492 = vpack.c.b16 %v477, %v474
    %v493 = vpack.c.b16 %v481, %v478
    %v494 = vpack.c.b16 %v482, %v479
    %v495 = vpack.c.b16 %v483, %v480
    %v496 = vpack.c.b16 %v487, %v484
    %v497 = vpack.c.b16 %v488, %v485
    %v498 = vpack.c.b16 %v489, %v486
    %vm508 = vcmask 392192
    %v510 = vsel %vm508, %v440, 0
    %v513 = vsel %vm508, %v441, 0
    %v516 = vsel %vm508, %v442, 0
    %v519 = vsel %vm508, %v443, 0
    %v522 = vsel %vm508, %v444, 0
    %v525 = vsel %vm508, %v445, 0
    %v528 = vsel %vm508, %v446, 0
    %v531 = vsel %vm508, %v447, 0
    %v534 = vsel %vm508, %v448, 0
    %v537 = vsel %vm508, %v449, 0
    %v540 = vsel %vm508, %v450, 0
    %v543 = vsel %vm508, %v451, 0
    %v546 = vsel %vm508, %v452, 0
    %v549 = vsel %vm508, %v453, 0
    %v552 = vsel %vm508, %v454, 0
    %v555 = vsel %vm508, %v455, 0
    %v558 = vsel %vm508, %v456, 0
    %v561 = vsel %vm508, %v457, 0
    %v564 = vsel %vm508, %v458, 0
    %v567 = vsel %vm508, %v459, 0
    %569 = vmatpush.bf16.msra.mxu0 0
    %570 = vmatpush.bf16.msra.mxu0 0
    %571 = vmatpush.bf16.msra.mxu0 0
    %572 = vmatpush.bf16.msra.mxu0 0
    %573 = vmatpush.bf16.msra.mxu0 0
    %574 = vmatpush.bf16.msra.mxu0 %v496
    %575 = vmatpush.bf16.msra.mxu0 %v493
    %576 = vmatpush.bf16.msra.mxu0 %v490
    %577 = vmatmul.bf16.gmra.mxu0 %v510
    %v578 = vpop.f32.mrf.mxu0
    %v579 = vadd.f32 0.0, %v578
    %v580 = vpop.f32.mrf.mxu0
    %v581 = vadd.f32 0.0, %v580
    %582 = vmatmul.bf16.gmra.mxu0 %v513
    %v583 = vpop.f32.mrf.mxu0
    %v584 = vadd.f32 0.0, %v583
    %v585 = vpop.f32.mrf.mxu0
    %v586 = vadd.f32 0.0, %v585
    %587 = vmatmul.bf16.gmra.mxu0 %v516
    %v588 = vpop.f32.mrf.mxu0
    %v589 = vadd.f32 0.0, %v588
    %v590 = vpop.f32.mrf.mxu0
    %v591 = vadd.f32 0.0, %v590
    %592 = vmatmul.bf16.gmra.mxu0 %v519
    %v593 = vpop.f32.mrf.mxu0
    %v594 = vadd.f32 0.0, %v593
    %v595 = vpop.f32.mrf.mxu0
    %v596 = vadd.f32 0.0, %v595
    %597 = vmatmul.bf16.gmra.mxu0 %v522
    %v598 = vpop.f32.mrf.mxu0
    %v599 = vadd.f32 0.0, %v598
    %v600 = vpop.f32.mrf.mxu0
    %v601 = vadd.f32 0.0, %v600
    %602 = vmatmul.bf16.gmra.mxu0 %v525
    %v603 = vpop.f32.mrf.mxu0
    %v604 = vadd.f32 0.0, %v603
    %v605 = vpop.f32.mrf.mxu0
    %v606 = vadd.f32 0.0, %v605
    %607 = vmatmul.bf16.gmra.mxu0 %v528
    %v608 = vpop.f32.mrf.mxu0
    %v609 = vadd.f32 0.0, %v608
    %v610 = vpop.f32.mrf.mxu0
    %v611 = vadd.f32 0.0, %v610
    %612 = vmatmul.bf16.gmra.mxu0 %v531
    %v613 = vpop.f32.mrf.mxu0
    %v614 = vadd.f32 0.0, %v613
    %v615 = vpop.f32.mrf.mxu0
    %v616 = vadd.f32 0.0, %v615
    %617 = vmatmul.bf16.gmra.mxu0 %v534
    %v618 = vpop.f32.mrf.mxu0
    %v619 = vadd.f32 0.0, %v618
    %v620 = vpop.f32.mrf.mxu0
    %v621 = vadd.f32 0.0, %v620
    %622 = vmatmul.bf16.gmra.mxu0 %v537
    %v623 = vpop.f32.mrf.mxu0
    %v624 = vadd.f32 0.0, %v623
    %v625 = vpop.f32.mrf.mxu0
    %v626 = vadd.f32 0.0, %v625
    %627 = vmatmul.bf16.gmra.mxu0 %v540
    %v628 = vpop.f32.mrf.mxu0
    %v629 = vadd.f32 0.0, %v628
    %v630 = vpop.f32.mrf.mxu0
    %v631 = vadd.f32 0.0, %v630
    %632 = vmatmul.bf16.gmra.mxu0 %v543
    %v633 = vpop.f32.mrf.mxu0
    %v634 = vadd.f32 0.0, %v633
    %v635 = vpop.f32.mrf.mxu0
    %v636 = vadd.f32 0.0, %v635
    %637 = vmatmul.bf16.gmra.mxu0 %v546
    %v638 = vpop.f32.mrf.mxu0
    %v639 = vadd.f32 0.0, %v638
    %v640 = vpop.f32.mrf.mxu0
    %v641 = vadd.f32 0.0, %v640
    %642 = vmatmul.bf16.gmra.mxu0 %v549
    %v643 = vpop.f32.mrf.mxu0
    %v644 = vadd.f32 0.0, %v643
    %v645 = vpop.f32.mrf.mxu0
    %v646 = vadd.f32 0.0, %v645
    %647 = vmatmul.bf16.gmra.mxu0 %v552
    %v648 = vpop.f32.mrf.mxu0
    %v649 = vadd.f32 0.0, %v648
    %v650 = vpop.f32.mrf.mxu0
    %v651 = vadd.f32 0.0, %v650
    %652 = vmatmul.bf16.gmra.mxu0 %v555
    %v653 = vpop.f32.mrf.mxu0
    %v654 = vadd.f32 0.0, %v653
    %v655 = vpop.f32.mrf.mxu0
    %v656 = vadd.f32 0.0, %v655
    %657 = vmatmul.bf16.gmra.mxu0 %v558
    %v658 = vpop.f32.mrf.mxu0
    %v659 = vadd.f32 0.0, %v658
    %v660 = vpop.f32.mrf.mxu0
    %v661 = vadd.f32 0.0, %v660
    %662 = vmatmul.bf16.gmra.mxu0 %v561
    %v663 = vpop.f32.mrf.mxu0
    %v664 = vadd.f32 0.0, %v663
    %v665 = vpop.f32.mrf.mxu0
    %v666 = vadd.f32 0.0, %v665
    %667 = vmatmul.bf16.gmra.mxu0 %v564
    %v668 = vpop.f32.mrf.mxu0
    %v669 = vadd.f32 0.0, %v668
    %v670 = vpop.f32.mrf.mxu0
    %v671 = vadd.f32 0.0, %v670
    %672 = vmatmul.bf16.gmra.mxu0 %v567
    %v673 = vpop.f32.mrf.mxu0
    %v674 = vadd.f32 0.0, %v673
    %v675 = vpop.f32.mrf.mxu0
    %v676 = vadd.f32 0.0, %v675
    %677 = vdwg.mxu0
    %678 = vmatpush.bf16.msra.mxu0 0
    %679 = vmatpush.bf16.msra.mxu0 0
    %680 = vmatpush.bf16.msra.mxu0 0
    %681 = vmatpush.bf16.msra.mxu0 0
    %682 = vmatpush.bf16.msra.mxu0 0
    %683 = vmatpush.bf16.msra.mxu0 %v497
    %684 = vmatpush.bf16.msra.mxu0 %v494
    %685 = vmatpush.bf16.msra.mxu0 %v491
    %686 = vmatmul.bf16.gmra.mxu0 %v510
    %v687 = vpop.f32.mrf.mxu0
    %v688 = vadd.f32 0.0, %v687
    %v689 = vpop.f32.mrf.mxu0
    %v690 = vadd.f32 0.0, %v689
    %691 = vmatmul.bf16.gmra.mxu0 %v513
    %v692 = vpop.f32.mrf.mxu0
    %v693 = vadd.f32 0.0, %v692
    %v694 = vpop.f32.mrf.mxu0
    %v695 = vadd.f32 0.0, %v694
    %696 = vmatmul.bf16.gmra.mxu0 %v516
    %v697 = vpop.f32.mrf.mxu0
    %v698 = vadd.f32 0.0, %v697
    %v699 = vpop.f32.mrf.mxu0
    %v700 = vadd.f32 0.0, %v699
    %701 = vmatmul.bf16.gmra.mxu0 %v519
    %v702 = vpop.f32.mrf.mxu0
    %v703 = vadd.f32 0.0, %v702
    %v704 = vpop.f32.mrf.mxu0
    %v705 = vadd.f32 0.0, %v704
    %706 = vmatmul.bf16.gmra.mxu0 %v522
    %v707 = vpop.f32.mrf.mxu0
    %v708 = vadd.f32 0.0, %v707
    %v709 = vpop.f32.mrf.mxu0
    %v710 = vadd.f32 0.0, %v709
    %711 = vmatmul.bf16.gmra.mxu0 %v525
    %v712 = vpop.f32.mrf.mxu0
    %v713 = vadd.f32 0.0, %v712
    %v714 = vpop.f32.mrf.mxu0
    %v715 = vadd.f32 0.0, %v714
    %716 = vmatmul.bf16.gmra.mxu0 %v528
    %v717 = vpop.f32.mrf.mxu0
    %v718 = vadd.f32 0.0, %v717
    %v719 = vpop.f32.mrf.mxu0
    %v720 = vadd.f32 0.0, %v719
    %721 = vmatmul.bf16.gmra.mxu0 %v531
    %v722 = vpop.f32.mrf.mxu0
    %v723 = vadd.f32 0.0, %v722
    %v724 = vpop.f32.mrf.mxu0
    %v725 = vadd.f32 0.0, %v724
    %726 = vmatmul.bf16.gmra.mxu0 %v534
    %v727 = vpop.f32.mrf.mxu0
    %v728 = vadd.f32 0.0, %v727
    %v729 = vpop.f32.mrf.mxu0
    %v730 = vadd.f32 0.0, %v729
    %731 = vmatmul.bf16.gmra.mxu0 %v537
    %v732 = vpop.f32.mrf.mxu0
    %v733 = vadd.f32 0.0, %v732
    %v734 = vpop.f32.mrf.mxu0
    %v735 = vadd.f32 0.0, %v734
    %736 = vmatmul.bf16.gmra.mxu0 %v540
    %v737 = vpop.f32.mrf.mxu0
    %v738 = vadd.f32 0.0, %v737
    %v739 = vpop.f32.mrf.mxu0
    %v740 = vadd.f32 0.0, %v739
    %741 = vmatmul.bf16.gmra.mxu0 %v543
    %v742 = vpop.f32.mrf.mxu0
    %v743 = vadd.f32 0.0, %v742
    %v744 = vpop.f32.mrf.mxu0
    %v745 = vadd.f32 0.0, %v744
    %746 = vmatmul.bf16.gmra.mxu0 %v546
    %v747 = vpop.f32.mrf.mxu0
    %v748 = vadd.f32 0.0, %v747
    %v749 = vpop.f32.mrf.mxu0
    %v750 = vadd.f32 0.0, %v749
    %751 = vmatmul.bf16.gmra.mxu0 %v549
    %v752 = vpop.f32.mrf.mxu0
    %v753 = vadd.f32 0.0, %v752
    %v754 = vpop.f32.mrf.mxu0
    %v755 = vadd.f32 0.0, %v754
    %756 = vmatmul.bf16.gmra.mxu0 %v552
    %v757 = vpop.f32.mrf.mxu0
    %v758 = vadd.f32 0.0, %v757
    %v759 = vpop.f32.mrf.mxu0
    %v760 = vadd.f32 0.0, %v759
    %761 = vmatmul.bf16.gmra.mxu0 %v555
    %v762 = vpop.f32.mrf.mxu0
    %v763 = vadd.f32 0.0, %v762
    %v764 = vpop.f32.mrf.mxu0
    %v765 = vadd.f32 0.0, %v764
    %766 = vmatmul.bf16.gmra.mxu0 %v558
    %v767 = vpop.f32.mrf.mxu0
    %v768 = vadd.f32 0.0, %v767
    %v769 = vpop.f32.mrf.mxu0
    %v770 = vadd.f32 0.0, %v769
    %771 = vmatmul.bf16.gmra.mxu0 %v561
    %v772 = vpop.f32.mrf.mxu0
    %v773 = vadd.f32 0.0, %v772
    %v774 = vpop.f32.mrf.mxu0
    %v775 = vadd.f32 0.0, %v774
    %776 = vmatmul.bf16.gmra.mxu0 %v564
    %v777 = vpop.f32.mrf.mxu0
    %v778 = vadd.f32 0.0, %v777
    %v779 = vpop.f32.mrf.mxu0
    %v780 = vadd.f32 0.0, %v779
    %781 = vmatmul.bf16.gmra.mxu0 %v567
    %v782 = vpop.f32.mrf.mxu0
    %v783 = vadd.f32 0.0, %v782
    %v784 = vpop.f32.mrf.mxu0
    %v785 = vadd.f32 0.0, %v784
    %786 = vdwg.mxu0
    %787 = vmatpush.bf16.msra.mxu0 0
    %788 = vmatpush.bf16.msra.mxu0 0
    %789 = vmatpush.bf16.msra.mxu0 0
    %790 = vmatpush.bf16.msra.mxu0 0
    %791 = vmatpush.bf16.msra.mxu0 0
    %792 = vmatpush.bf16.msra.mxu0 %v498
    %793 = vmatpush.bf16.msra.mxu0 %v495
    %794 = vmatpush.bf16.msra.mxu0 %v492
    %795 = vmatmul.bf16.gmra.mxu0 %v510
    %v796 = vpop.f32.mrf.mxu0
    %v797 = vadd.f32 0.0, %v796
    %v798 = vpop.f32.mrf.mxu0
    %v799 = vadd.f32 0.0, %v798
    %800 = vmatmul.bf16.gmra.mxu0 %v513
    %v801 = vpop.f32.mrf.mxu0
    %v802 = vadd.f32 0.0, %v801
    %v803 = vpop.f32.mrf.mxu0
    %v804 = vadd.f32 0.0, %v803
    %805 = vmatmul.bf16.gmra.mxu0 %v516
    %v806 = vpop.f32.mrf.mxu0
    %v807 = vadd.f32 0.0, %v806
    %v808 = vpop.f32.mrf.mxu0
    %v809 = vadd.f32 0.0, %v808
    %810 = vmatmul.bf16.gmra.mxu0 %v519
    %v811 = vpop.f32.mrf.mxu0
    %v812 = vadd.f32 0.0, %v811
    %v813 = vpop.f32.mrf.mxu0
    %v814 = vadd.f32 0.0, %v813
    %815 = vmatmul.bf16.gmra.mxu0 %v522
    %v816 = vpop.f32.mrf.mxu0
    %v817 = vadd.f32 0.0, %v816
    %v818 = vpop.f32.mrf.mxu0
    %v819 = vadd.f32 0.0, %v818
    %820 = vmatmul.bf16.gmra.mxu0 %v525
    %v821 = vpop.f32.mrf.mxu0
    %v822 = vadd.f32 0.0, %v821
    %v823 = vpop.f32.mrf.mxu0
    %v824 = vadd.f32 0.0, %v823
    %825 = vmatmul.bf16.gmra.mxu0 %v528
    %v826 = vpop.f32.mrf.mxu0
    %v827 = vadd.f32 0.0, %v826
    %v828 = vpop.f32.mrf.mxu0
    %v829 = vadd.f32 0.0, %v828
    %830 = vmatmul.bf16.gmra.mxu0 %v531
    %v831 = vpop.f32.mrf.mxu0
    %v832 = vadd.f32 0.0, %v831
    %v833 = vpop.f32.mrf.mxu0
    %v834 = vadd.f32 0.0, %v833
    %835 = vmatmul.bf16.gmra.mxu0 %v534
    %v836 = vpop.f32.mrf.mxu0
    %v837 = vadd.f32 0.0, %v836
    %v838 = vpop.f32.mrf.mxu0
    %v839 = vadd.f32 0.0, %v838
    %840 = vmatmul.bf16.gmra.mxu0 %v537
    %v841 = vpop.f32.mrf.mxu0
    %v842 = vadd.f32 0.0, %v841
    %v843 = vpop.f32.mrf.mxu0
    %v844 = vadd.f32 0.0, %v843
    %845 = vmatmul.bf16.gmra.mxu0 %v540
    %v846 = vpop.f32.mrf.mxu0
    %v847 = vadd.f32 0.0, %v846
    %v848 = vpop.f32.mrf.mxu0
    %v849 = vadd.f32 0.0, %v848
    %850 = vmatmul.bf16.gmra.mxu0 %v543
    %v851 = vpop.f32.mrf.mxu0
    %v852 = vadd.f32 0.0, %v851
    %v853 = vpop.f32.mrf.mxu0
    %v854 = vadd.f32 0.0, %v853
    %855 = vmatmul.bf16.gmra.mxu0 %v546
    %v856 = vpop.f32.mrf.mxu0
    %v857 = vadd.f32 0.0, %v856
    %v858 = vpop.f32.mrf.mxu0
    %v859 = vadd.f32 0.0, %v858
    %860 = vmatmul.bf16.gmra.mxu0 %v549
    %v861 = vpop.f32.mrf.mxu0
    %v862 = vadd.f32 0.0, %v861
    %v863 = vpop.f32.mrf.mxu0
    %v864 = vadd.f32 0.0, %v863
    %865 = vmatmul.bf16.gmra.mxu0 %v552
    %v866 = vpop.f32.mrf.mxu0
    %v867 = vadd.f32 0.0, %v866
    %v868 = vpop.f32.mrf.mxu0
    %v869 = vadd.f32 0.0, %v868
    %870 = vmatmul.bf16.gmra.mxu0 %v555
    %v871 = vpop.f32.mrf.mxu0
    %v872 = vadd.f32 0.0, %v871
    %v873 = vpop.f32.mrf.mxu0
    %v874 = vadd.f32 0.0, %v873
    %875 = vmatmul.bf16.gmra.mxu0 %v558
    %v876 = vpop.f32.mrf.mxu0
    %v877 = vadd.f32 0.0, %v876
    %v878 = vpop.f32.mrf.mxu0
    %v879 = vadd.f32 0.0, %v878
    %880 = vmatmul.bf16.gmra.mxu0 %v561
    %v881 = vpop.f32.mrf.mxu0
    %v882 = vadd.f32 0.0, %v881
    %v883 = vpop.f32.mrf.mxu0
    %v884 = vadd.f32 0.0, %v883
    %885 = vmatmul.bf16.gmra.mxu0 %v564
    %v886 = vpop.f32.mrf.mxu0
    %v887 = vadd.f32 0.0, %v886
    %v888 = vpop.f32.mrf.mxu0
    %v889 = vadd.f32 0.0, %v888
    %890 = vmatmul.bf16.gmra.mxu0 %v567
    %v891 = vpop.f32.mrf.mxu0
    %v892 = vadd.f32 0.0, %v891
    %v893 = vpop.f32.mrf.mxu0
    %v894 = vadd.f32 0.0, %v893
    %895 = vdwg.mxu0
    %v898 = vunpack.c.l.b16 %v287
    %v899 = vunpack.c.l.b16 %v288
    %v900 = vpack.c.b16 %v899, %v898
    %v913 = vunpack.c.l.b16 %v335
    %v914 = vunpack.c.h.b16 %v335
    %v915 = vunpack.c.l.b16 %v336
    %v916 = vunpack.c.l.b16 %v337
    %v917 = vunpack.c.h.b16 %v337
    %v918 = vunpack.c.l.b16 %v338
    %v919 = vunpack.c.l.b16 %v339
    %v920 = vunpack.c.h.b16 %v339
    %v921 = vunpack.c.l.b16 %v340
    %v922 = vunpack.c.l.b16 %v341
    %v923 = vunpack.c.h.b16 %v341
    %v924 = vunpack.c.l.b16 %v342
    %v925 = vunpack.c.l.b16 %v343
    %v926 = vunpack.c.h.b16 %v343
    %v927 = vunpack.c.l.b16 %v344
    %v928 = vunpack.c.l.b16 %v345
    %v929 = vunpack.c.h.b16 %v345
    %v930 = vunpack.c.l.b16 %v346
    %v931 = vpack.c.b16 %v916, %v913
    %v932 = vpack.c.b16 %v917, %v914
    %v933 = vpack.c.b16 %v918, %v915
    %v934 = vpack.c.b16 %v922, %v919
    %v935 = vpack.c.b16 %v923, %v920
    %v936 = vpack.c.b16 %v924, %v921
    %v937 = vpack.c.b16 %v928, %v925
    %v938 = vpack.c.b16 %v929, %v926
    %v939 = vpack.c.b16 %v930, %v927
    %v950 = vsel %vm508, %v900, 0
    %952 = vmatpush.bf16.msra.mxu0 0
    %953 = vmatpush.bf16.msra.mxu0 0
    %954 = vmatpush.bf16.msra.mxu0 0
    %955 = vmatpush.bf16.msra.mxu0 0
    %956 = vmatpush.bf16.msra.mxu0 0
    %957 = vmatpush.bf16.msra.mxu0 %v937
    %958 = vmatpush.bf16.msra.mxu0 %v934
    %959 = vmatpush.bf16.msra.mxu0 %v931
    %960 = vmatmul.bf16.gmra.mxu0 %v950
    %v961 = vpop.f32.mrf.mxu0
    %v962 = vadd.f32 %v579, %v961
    %v963 = vpop.f32.mrf.mxu0
    %v964 = vadd.f32 %v581, %v963
    %965 = vmatmul.bf16.gmra.mxu0 %v510
    %v966 = vpop.f32.mrf.mxu0
    %v967 = vadd.f32 %v584, %v966
    %v968 = vpop.f32.mrf.mxu0
    %v969 = vadd.f32 %v586, %v968
    %970 = vmatmul.bf16.gmra.mxu0 %v513
    %v971 = vpop.f32.mrf.mxu0
    %v972 = vadd.f32 %v589, %v971
    %v973 = vpop.f32.mrf.mxu0
    %v974 = vadd.f32 %v591, %v973
    %975 = vmatmul.bf16.gmra.mxu0 %v516
    %v976 = vpop.f32.mrf.mxu0
    %v977 = vadd.f32 %v594, %v976
    %v978 = vpop.f32.mrf.mxu0
    %v979 = vadd.f32 %v596, %v978
    %980 = vmatmul.bf16.gmra.mxu0 %v519
    %v981 = vpop.f32.mrf.mxu0
    %v982 = vadd.f32 %v599, %v981
    %v983 = vpop.f32.mrf.mxu0
    %v984 = vadd.f32 %v601, %v983
    %985 = vmatmul.bf16.gmra.mxu0 %v522
    %v986 = vpop.f32.mrf.mxu0
    %v987 = vadd.f32 %v604, %v986
    %v988 = vpop.f32.mrf.mxu0
    %v989 = vadd.f32 %v606, %v988
    %990 = vmatmul.bf16.gmra.mxu0 %v525
    %v991 = vpop.f32.mrf.mxu0
    %v992 = vadd.f32 %v609, %v991
    %v993 = vpop.f32.mrf.mxu0
    %v994 = vadd.f32 %v611, %v993
    %995 = vmatmul.bf16.gmra.mxu0 %v528
    %v996 = vpop.f32.mrf.mxu0
    %v997 = vadd.f32 %v614, %v996
    %v998 = vpop.f32.mrf.mxu0
    %v999 = vadd.f32 %v616, %v998
    %1000 = vmatmul.bf16.gmra.mxu0 %v531
    %v1001 = vpop.f32.mrf.mxu0
    %v1002 = vadd.f32 %v619, %v1001
    %v1003 = vpop.f32.mrf.mxu0
    %v1004 = vadd.f32 %v621, %v1003
    %1005 = vmatmul.bf16.gmra.mxu0 %v534
    %v1006 = vpop.f32.mrf.mxu0
    %v1007 = vadd.f32 %v624, %v1006
    %v1008 = vpop.f32.mrf.mxu0
    %v1009 = vadd.f32 %v626, %v1008
    %1010 = vmatmul.bf16.gmra.mxu0 %v537
    %v1011 = vpop.f32.mrf.mxu0
    %v1012 = vadd.f32 %v629, %v1011
    %v1013 = vpop.f32.mrf.mxu0
    %v1014 = vadd.f32 %v631, %v1013
    %1015 = vmatmul.bf16.gmra.mxu0 %v540
    %v1016 = vpop.f32.mrf.mxu0
    %v1017 = vadd.f32 %v634, %v1016
    %v1018 = vpop.f32.mrf.mxu0
    %v1019 = vadd.f32 %v636, %v1018
    %1020 = vmatmul.bf16.gmra.mxu0 %v543
    %v1021 = vpop.f32.mrf.mxu0
    %v1022 = vadd.f32 %v639, %v1021
    %v1023 = vpop.f32.mrf.mxu0
    %v1024 = vadd.f32 %v641, %v1023
    %1025 = vmatmul.bf16.gmra.mxu0 %v546
    %v1026 = vpop.f32.mrf.mxu0
    %v1027 = vadd.f32 %v644, %v1026
    %v1028 = vpop.f32.mrf.mxu0
    %v1029 = vadd.f32 %v646, %v1028
    %1030 = vmatmul.bf16.gmra.mxu0 %v549
    %v1031 = vpop.f32.mrf.mxu0
    %v1032 = vadd.f32 %v649, %v1031
    %v1033 = vpop.f32.mrf.mxu0
    %v1034 = vadd.f32 %v651, %v1033
    %1035 = vmatmul.bf16.gmra.mxu0 %v552
    %v1036 = vpop.f32.mrf.mxu0
    %v1037 = vadd.f32 %v654, %v1036
    %v1038 = vpop.f32.mrf.mxu0
    %v1039 = vadd.f32 %v656, %v1038
    %1040 = vmatmul.bf16.gmra.mxu0 %v555
    %v1041 = vpop.f32.mrf.mxu0
    %v1042 = vadd.f32 %v659, %v1041
    %v1043 = vpop.f32.mrf.mxu0
    %v1044 = vadd.f32 %v661, %v1043
    %1045 = vmatmul.bf16.gmra.mxu0 %v558
    %v1046 = vpop.f32.mrf.mxu0
    %v1047 = vadd.f32 %v664, %v1046
    %v1048 = vpop.f32.mrf.mxu0
    %v1049 = vadd.f32 %v666, %v1048
    %1050 = vmatmul.bf16.gmra.mxu0 %v561
    %v1051 = vpop.f32.mrf.mxu0
    %v1052 = vadd.f32 %v669, %v1051
    %v1053 = vpop.f32.mrf.mxu0
    %v1054 = vadd.f32 %v671, %v1053
    %1055 = vmatmul.bf16.gmra.mxu0 %v564
    %v1056 = vpop.f32.mrf.mxu0
    %v1057 = vadd.f32 %v674, %v1056
    %v1058 = vpop.f32.mrf.mxu0
    %v1059 = vadd.f32 %v676, %v1058
    %1060 = vdwg.mxu0
    %1061 = vmatpush.bf16.msra.mxu0 0
    %1062 = vmatpush.bf16.msra.mxu0 0
    %1063 = vmatpush.bf16.msra.mxu0 0
    %1064 = vmatpush.bf16.msra.mxu0 0
    %1065 = vmatpush.bf16.msra.mxu0 0
    %1066 = vmatpush.bf16.msra.mxu0 %v938
    %1067 = vmatpush.bf16.msra.mxu0 %v935
    %1068 = vmatpush.bf16.msra.mxu0 %v932
    %1069 = vmatmul.bf16.gmra.mxu0 %v950
    %v1070 = vpop.f32.mrf.mxu0
    %v1071 = vadd.f32 %v688, %v1070
    %v1072 = vpop.f32.mrf.mxu0
    %v1073 = vadd.f32 %v690, %v1072
    %1074 = vmatmul.bf16.gmra.mxu0 %v510
    %v1075 = vpop.f32.mrf.mxu0
    %v1076 = vadd.f32 %v693, %v1075
    %v1077 = vpop.f32.mrf.mxu0
    %v1078 = vadd.f32 %v695, %v1077
    %1079 = vmatmul.bf16.gmra.mxu0 %v513
    %v1080 = vpop.f32.mrf.mxu0
    %v1081 = vadd.f32 %v698, %v1080
    %v1082 = vpop.f32.mrf.mxu0
    %v1083 = vadd.f32 %v700, %v1082
    %1084 = vmatmul.bf16.gmra.mxu0 %v516
    %v1085 = vpop.f32.mrf.mxu0
    %v1086 = vadd.f32 %v703, %v1085
    %v1087 = vpop.f32.mrf.mxu0
    %v1088 = vadd.f32 %v705, %v1087
    %1089 = vmatmul.bf16.gmra.mxu0 %v519
    %v1090 = vpop.f32.mrf.mxu0
    %v1091 = vadd.f32 %v708, %v1090
    %v1092 = vpop.f32.mrf.mxu0
    %v1093 = vadd.f32 %v710, %v1092
    %1094 = vmatmul.bf16.gmra.mxu0 %v522
    %v1095 = vpop.f32.mrf.mxu0
    %v1096 = vadd.f32 %v713, %v1095
    %v1097 = vpop.f32.mrf.mxu0
    %v1098 = vadd.f32 %v715, %v1097
    %1099 = vmatmul.bf16.gmra.mxu0 %v525
    %v1100 = vpop.f32.mrf.mxu0
    %v1101 = vadd.f32 %v718, %v1100
    %v1102 = vpop.f32.mrf.mxu0
    %v1103 = vadd.f32 %v720, %v1102
    %1104 = vmatmul.bf16.gmra.mxu0 %v528
    %v1105 = vpop.f32.mrf.mxu0
    %v1106 = vadd.f32 %v723, %v1105
    %v1107 = vpop.f32.mrf.mxu0
    %v1108 = vadd.f32 %v725, %v1107
    %1109 = vmatmul.bf16.gmra.mxu0 %v531
    %v1110 = vpop.f32.mrf.mxu0
    %v1111 = vadd.f32 %v728, %v1110
    %v1112 = vpop.f32.mrf.mxu0
    %v1113 = vadd.f32 %v730, %v1112
    %1114 = vmatmul.bf16.gmra.mxu0 %v534
    %v1115 = vpop.f32.mrf.mxu0
    %v1116 = vadd.f32 %v733, %v1115
    %v1117 = vpop.f32.mrf.mxu0
    %v1118 = vadd.f32 %v735, %v1117
    %1119 = vmatmul.bf16.gmra.mxu0 %v537
    %v1120 = vpop.f32.mrf.mxu0
    %v1121 = vadd.f32 %v738, %v1120
    %v1122 = vpop.f32.mrf.mxu0
    %v1123 = vadd.f32 %v740, %v1122
    %1124 = vmatmul.bf16.gmra.mxu0 %v540
    %v1125 = vpop.f32.mrf.mxu0
    %v1126 = vadd.f32 %v743, %v1125
    %v1127 = vpop.f32.mrf.mxu0
    %v1128 = vadd.f32 %v745, %v1127
    %1129 = vmatmul.bf16.gmra.mxu0 %v543
    %v1130 = vpop.f32.mrf.mxu0
    %v1131 = vadd.f32 %v748, %v1130
    %v1132 = vpop.f32.mrf.mxu0
    %v1133 = vadd.f32 %v750, %v1132
    %1134 = vmatmul.bf16.gmra.mxu0 %v546
    %v1135 = vpop.f32.mrf.mxu0
    %v1136 = vadd.f32 %v753, %v1135
    %v1137 = vpop.f32.mrf.mxu0
    %v1138 = vadd.f32 %v755, %v1137
    %1139 = vmatmul.bf16.gmra.mxu0 %v549
    %v1140 = vpop.f32.mrf.mxu0
    %v1141 = vadd.f32 %v758, %v1140
    %v1142 = vpop.f32.mrf.mxu0
    %v1143 = vadd.f32 %v760, %v1142
    %1144 = vmatmul.bf16.gmra.mxu0 %v552
    %v1145 = vpop.f32.mrf.mxu0
    %v1146 = vadd.f32 %v763, %v1145
    %v1147 = vpop.f32.mrf.mxu0
    %v1148 = vadd.f32 %v765, %v1147
    %1149 = vmatmul.bf16.gmra.mxu0 %v555
    %v1150 = vpop.f32.mrf.mxu0
    %v1151 = vadd.f32 %v768, %v1150
    %v1152 = vpop.f32.mrf.mxu0
    %v1153 = vadd.f32 %v770, %v1152
    %1154 = vmatmul.bf16.gmra.mxu0 %v558
    %v1155 = vpop.f32.mrf.mxu0
    %v1156 = vadd.f32 %v773, %v1155
    %v1157 = vpop.f32.mrf.mxu0
    %v1158 = vadd.f32 %v775, %v1157
    %1159 = vmatmul.bf16.gmra.mxu0 %v561
    %v1160 = vpop.f32.mrf.mxu0
    %v1161 = vadd.f32 %v778, %v1160
    %v1162 = vpop.f32.mrf.mxu0
    %v1163 = vadd.f32 %v780, %v1162
    %1164 = vmatmul.bf16.gmra.mxu0 %v564
    %v1165 = vpop.f32.mrf.mxu0
    %v1166 = vadd.f32 %v783, %v1165
    %v1167 = vpop.f32.mrf.mxu0
    %v1168 = vadd.f32 %v785, %v1167
    %1169 = vdwg.mxu0
    %1170 = vmatpush.bf16.msra.mxu0 0
    %1171 = vmatpush.bf16.msra.mxu0 0
    %1172 = vmatpush.bf16.msra.mxu0 0
    %1173 = vmatpush.bf16.msra.mxu0 0
    %1174 = vmatpush.bf16.msra.mxu0 0
    %1175 = vmatpush.bf16.msra.mxu0 %v939
    %1176 = vmatpush.bf16.msra.mxu0 %v936
    %1177 = vmatpush.bf16.msra.mxu0 %v933
    %1178 = vmatmul.bf16.gmra.mxu0 %v950
    %v1179 = vpop.f32.mrf.mxu0
    %v1180 = vadd.f32 %v797, %v1179
    %v1181 = vpop.f32.mrf.mxu0
    %v1182 = vadd.f32 %v799, %v1181
    %1183 = vmatmul.bf16.gmra.mxu0 %v510
    %v1184 = vpop.f32.mrf.mxu0
    %v1185 = vadd.f32 %v802, %v1184
    %v1186 = vpop.f32.mrf.mxu0
    %v1187 = vadd.f32 %v804, %v1186
    %1188 = vmatmul.bf16.gmra.mxu0 %v513
    %v1189 = vpop.f32.mrf.mxu0
    %v1190 = vadd.f32 %v807, %v1189
    %v1191 = vpop.f32.mrf.mxu0
    %v1192 = vadd.f32 %v809, %v1191
    %1193 = vmatmul.bf16.gmra.mxu0 %v516
    %v1194 = vpop.f32.mrf.mxu0
    %v1195 = vadd.f32 %v812, %v1194
    %v1196 = vpop.f32.mrf.mxu0
    %v1197 = vadd.f32 %v814, %v1196
    %1198 = vmatmul.bf16.gmra.mxu0 %v519
    %v1199 = vpop.f32.mrf.mxu0
    %v1200 = vadd.f32 %v817, %v1199
    %v1201 = vpop.f32.mrf.mxu0
    %v1202 = vadd.f32 %v819, %v1201
    %1203 = vmatmul.bf16.gmra.mxu0 %v522
    %v1204 = vpop.f32.mrf.mxu0
    %v1205 = vadd.f32 %v822, %v1204
    %v1206 = vpop.f32.mrf.mxu0
    %v1207 = vadd.f32 %v824, %v1206
    %1208 = vmatmul.bf16.gmra.mxu0 %v525
    %v1209 = vpop.f32.mrf.mxu0
    %v1210 = vadd.f32 %v827, %v1209
    %v1211 = vpop.f32.mrf.mxu0
    %v1212 = vadd.f32 %v829, %v1211
    %1213 = vmatmul.bf16.gmra.mxu0 %v528
    %v1214 = vpop.f32.mrf.mxu0
    %v1215 = vadd.f32 %v832, %v1214
    %v1216 = vpop.f32.mrf.mxu0
    %v1217 = vadd.f32 %v834, %v1216
    %1218 = vmatmul.bf16.gmra.mxu0 %v531
    %v1219 = vpop.f32.mrf.mxu0
    %v1220 = vadd.f32 %v837, %v1219
    %v1221 = vpop.f32.mrf.mxu0
    %v1222 = vadd.f32 %v839, %v1221
    %1223 = vmatmul.bf16.gmra.mxu0 %v534
    %v1224 = vpop.f32.mrf.mxu0
    %v1225 = vadd.f32 %v842, %v1224
    %v1226 = vpop.f32.mrf.mxu0
    %v1227 = vadd.f32 %v844, %v1226
    %1228 = vmatmul.bf16.gmra.mxu0 %v537
    %v1229 = vpop.f32.mrf.mxu0
    %v1230 = vadd.f32 %v847, %v1229
    %v1231 = vpop.f32.mrf.mxu0
    %v1232 = vadd.f32 %v849, %v1231
    %1233 = vmatmul.bf16.gmra.mxu0 %v540
    %v1234 = vpop.f32.mrf.mxu0
    %v1235 = vadd.f32 %v852, %v1234
    %v1236 = vpop.f32.mrf.mxu0
    %v1237 = vadd.f32 %v854, %v1236
    %1238 = vmatmul.bf16.gmra.mxu0 %v543
    %v1239 = vpop.f32.mrf.mxu0
    %v1240 = vadd.f32 %v857, %v1239
    %v1241 = vpop.f32.mrf.mxu0
    %v1242 = vadd.f32 %v859, %v1241
    %1243 = vmatmul.bf16.gmra.mxu0 %v546
    %v1244 = vpop.f32.mrf.mxu0
    %v1245 = vadd.f32 %v862, %v1244
    %v1246 = vpop.f32.mrf.mxu0
    %v1247 = vadd.f32 %v864, %v1246
    %1248 = vmatmul.bf16.gmra.mxu0 %v549
    %v1249 = vpop.f32.mrf.mxu0
    %v1250 = vadd.f32 %v867, %v1249
    %v1251 = vpop.f32.mrf.mxu0
    %v1252 = vadd.f32 %v869, %v1251
    %1253 = vmatmul.bf16.gmra.mxu0 %v552
    %v1254 = vpop.f32.mrf.mxu0
    %v1255 = vadd.f32 %v872, %v1254
    %v1256 = vpop.f32.mrf.mxu0
    %v1257 = vadd.f32 %v874, %v1256
    %1258 = vmatmul.bf16.gmra.mxu0 %v555
    %v1259 = vpop.f32.mrf.mxu0
    %v1260 = vadd.f32 %v877, %v1259
    %v1261 = vpop.f32.mrf.mxu0
    %v1262 = vadd.f32 %v879, %v1261
    %1263 = vmatmul.bf16.gmra.mxu0 %v558
    %v1264 = vpop.f32.mrf.mxu0
    %v1265 = vadd.f32 %v882, %v1264
    %v1266 = vpop.f32.mrf.mxu0
    %v1267 = vadd.f32 %v884, %v1266
    %1268 = vmatmul.bf16.gmra.mxu0 %v561
    %v1269 = vpop.f32.mrf.mxu0
    %v1270 = vadd.f32 %v887, %v1269
    %v1271 = vpop.f32.mrf.mxu0
    %v1272 = vadd.f32 %v889, %v1271
    %1273 = vmatmul.bf16.gmra.mxu0 %v564
    %v1274 = vpop.f32.mrf.mxu0
    %v1275 = vadd.f32 %v892, %v1274
    %v1276 = vpop.f32.mrf.mxu0
    %v1277 = vadd.f32 %v894, %v1276
    %1278 = vdwg.mxu0
    %s1279 = scalar_lea.vmem [#allocation2], 144
    %v1280 = vld [vmem:[%s1279] sm:$0xff]
    %v1281 = vld [vmem:[%s1279 + $0x8] sm:$0xf]
    %v1282 = vld [vmem:[%s1279 + $0xc] sm:$0xff]
    %v1283 = vld [vmem:[%s1279 + $0x14] sm:$0xf]
    %v1284 = vld [vmem:[%s1279 + $0x18] sm:$0xff]
    %v1285 = vld [vmem:[%s1279 + $0x20] sm:$0xf]
    %v1286 = vld [vmem:[%s1279 + $0x24] sm:$0xff]
    %v1287 = vld [vmem:[%s1279 + $0x2c] sm:$0xf]
    %v1288 = vld [vmem:[%s1279 + $0x30] sm:$0xff]
    %v1289 = vld [vmem:[%s1279 + $0x38] sm:$0xf]
    %v1290 = vld [vmem:[%s1279 + $0x3c] sm:$0xff]
    %v1291 = vld [vmem:[%s1279 + $0x44] sm:$0xf]
    %v1294 = vunpack.c.l.b16 %v329
    %v1295 = vunpack.c.l.b16 %v330
    %v1296 = vpack.c.b16 %v1295, %v1294
    %v1309 = vunpack.c.l.b16 %v1280
    %v1310 = vunpack.c.h.b16 %v1280
    %v1311 = vunpack.c.l.b16 %v1281
    %v1312 = vunpack.c.l.b16 %v1282
    %v1313 = vunpack.c.h.b16 %v1282
    %v1314 = vunpack.c.l.b16 %v1283
    %v1315 = vunpack.c.l.b16 %v1284
    %v1316 = vunpack.c.h.b16 %v1284
    %v1317 = vunpack.c.l.b16 %v1285
    %v1318 = vunpack.c.l.b16 %v1286
    %v1319 = vunpack.c.h.b16 %v1286
    %v1320 = vunpack.c.l.b16 %v1287
    %v1321 = vunpack.c.l.b16 %v1288
    %v1322 = vunpack.c.h.b16 %v1288
    %v1323 = vunpack.c.l.b16 %v1289
    %v1324 = vunpack.c.l.b16 %v1290
    %v1325 = vunpack.c.h.b16 %v1290
    %v1326 = vunpack.c.l.b16 %v1291
    %v1327 = vpack.c.b16 %v1312, %v1309
    %v1328 = vpack.c.b16 %v1313, %v1310
    %v1329 = vpack.c.b16 %v1314, %v1311
    %v1330 = vpack.c.b16 %v1318, %v1315
    %v1331 = vpack.c.b16 %v1319, %v1316
    %v1332 = vpack.c.b16 %v1320, %v1317
    %v1333 = vpack.c.b16 %v1324, %v1321
    %v1334 = vpack.c.b16 %v1325, %v1322
    %v1335 = vpack.c.b16 %v1326, %v1323
    %v1346 = vsel %vm508, %v1296, 0
    %1348 = vmatpush.bf16.msra.mxu0 0
    %1349 = vmatpush.bf16.msra.mxu0 0
    %1350 = vmatpush.bf16.msra.mxu0 0
    %1351 = vmatpush.bf16.msra.mxu0 0
    %1352 = vmatpush.bf16.msra.mxu0 0
    %1353 = vmatpush.bf16.msra.mxu0 %v1333
    %1354 = vmatpush.bf16.msra.mxu0 %v1330
    %1355 = vmatpush.bf16.msra.mxu0 %v1327
    %1356 = vmatmul.bf16.gmra.mxu0 %v513
    %v1357 = vpop.f32.mrf.mxu0
    %v1358 = vadd.f32 0.0, %v1357
    %v1359 = vpop.f32.mrf.mxu0
    %v1360 = vadd.f32 0.0, %v1359
    %1361 = vmatmul.bf16.gmra.mxu0 %v516
    %v1362 = vpop.f32.mrf.mxu0
    %v1363 = vadd.f32 0.0, %v1362
    %v1364 = vpop.f32.mrf.mxu0
    %v1365 = vadd.f32 0.0, %v1364
    %1366 = vmatmul.bf16.gmra.mxu0 %v519
    %v1367 = vpop.f32.mrf.mxu0
    %v1368 = vadd.f32 0.0, %v1367
    %v1369 = vpop.f32.mrf.mxu0
    %v1370 = vadd.f32 0.0, %v1369
    %1371 = vmatmul.bf16.gmra.mxu0 %v522
    %v1372 = vpop.f32.mrf.mxu0
    %v1373 = vadd.f32 0.0, %v1372
    %v1374 = vpop.f32.mrf.mxu0
    %v1375 = vadd.f32 0.0, %v1374
    %1376 = vmatmul.bf16.gmra.mxu0 %v525
    %v1377 = vpop.f32.mrf.mxu0
    %v1378 = vadd.f32 0.0, %v1377
    %v1379 = vpop.f32.mrf.mxu0
    %v1380 = vadd.f32 0.0, %v1379
    %1381 = vmatmul.bf16.gmra.mxu0 %v528
    %v1382 = vpop.f32.mrf.mxu0
    %v1383 = vadd.f32 0.0, %v1382
    %v1384 = vpop.f32.mrf.mxu0
    %v1385 = vadd.f32 0.0, %v1384
    %1386 = vmatmul.bf16.gmra.mxu0 %v531
    %v1387 = vpop.f32.mrf.mxu0
    %v1388 = vadd.f32 0.0, %v1387
    %v1389 = vpop.f32.mrf.mxu0
    %v1390 = vadd.f32 0.0, %v1389
    %1391 = vmatmul.bf16.gmra.mxu0 %v534
    %v1392 = vpop.f32.mrf.mxu0
    %v1393 = vadd.f32 0.0, %v1392
    %v1394 = vpop.f32.mrf.mxu0
    %v1395 = vadd.f32 0.0, %v1394
    %1396 = vmatmul.bf16.gmra.mxu0 %v537
    %v1397 = vpop.f32.mrf.mxu0
    %v1398 = vadd.f32 0.0, %v1397
    %v1399 = vpop.f32.mrf.mxu0
    %v1400 = vadd.f32 0.0, %v1399
    %1401 = vmatmul.bf16.gmra.mxu0 %v540
    %v1402 = vpop.f32.mrf.mxu0
    %v1403 = vadd.f32 0.0, %v1402
    %v1404 = vpop.f32.mrf.mxu0
    %v1405 = vadd.f32 0.0, %v1404
    %1406 = vmatmul.bf16.gmra.mxu0 %v543
    %v1407 = vpop.f32.mrf.mxu0
    %v1408 = vadd.f32 0.0, %v1407
    %v1409 = vpop.f32.mrf.mxu0
    %v1410 = vadd.f32 0.0, %v1409
    %1411 = vmatmul.bf16.gmra.mxu0 %v546
    %v1412 = vpop.f32.mrf.mxu0
    %v1413 = vadd.f32 0.0, %v1412
    %v1414 = vpop.f32.mrf.mxu0
    %v1415 = vadd.f32 0.0, %v1414
    %1416 = vmatmul.bf16.gmra.mxu0 %v549
    %v1417 = vpop.f32.mrf.mxu0
    %v1418 = vadd.f32 0.0, %v1417
    %v1419 = vpop.f32.mrf.mxu0
    %v1420 = vadd.f32 0.0, %v1419
    %1421 = vmatmul.bf16.gmra.mxu0 %v552
    %v1422 = vpop.f32.mrf.mxu0
    %v1423 = vadd.f32 0.0, %v1422
    %v1424 = vpop.f32.mrf.mxu0
    %v1425 = vadd.f32 0.0, %v1424
    %1426 = vmatmul.bf16.gmra.mxu0 %v555
    %v1427 = vpop.f32.mrf.mxu0
    %v1428 = vadd.f32 0.0, %v1427
    %v1429 = vpop.f32.mrf.mxu0
    %v1430 = vadd.f32 0.0, %v1429
    %1431 = vmatmul.bf16.gmra.mxu0 %v558
    %v1432 = vpop.f32.mrf.mxu0
    %v1433 = vadd.f32 0.0, %v1432
    %v1434 = vpop.f32.mrf.mxu0
    %v1435 = vadd.f32 0.0, %v1434
    %1436 = vmatmul.bf16.gmra.mxu0 %v561
    %v1437 = vpop.f32.mrf.mxu0
    %v1438 = vadd.f32 0.0, %v1437
    %v1439 = vpop.f32.mrf.mxu0
    %v1440 = vadd.f32 0.0, %v1439
    %1441 = vmatmul.bf16.gmra.mxu0 %v564
    %v1442 = vpop.f32.mrf.mxu0
    %v1443 = vadd.f32 0.0, %v1442
    %v1444 = vpop.f32.mrf.mxu0
    %v1445 = vadd.f32 0.0, %v1444
    %1446 = vmatmul.bf16.gmra.mxu0 %v567
    %v1447 = vpop.f32.mrf.mxu0
    %v1448 = vadd.f32 0.0, %v1447
    %v1449 = vpop.f32.mrf.mxu0
    %v1450 = vadd.f32 0.0, %v1449
    %1451 = vmatmul.bf16.gmra.mxu0 %v1346
    %v1452 = vpop.f32.mrf.mxu0
    %v1453 = vadd.f32 0.0, %v1452
    %v1454 = vpop.f32.mrf.mxu0
    %v1455 = vadd.f32 0.0, %v1454
    %1456 = vdwg.mxu0
    %1457 = vmatpush.bf16.msra.mxu0 0
    %1458 = vmatpush.bf16.msra.mxu0 0
    %1459 = vmatpush.bf16.msra.mxu0 0
    %1460 = vmatpush.bf16.msra.mxu0 0
    %1461 = vmatpush.bf16.msra.mxu0 0
    %1462 = vmatpush.bf16.msra.mxu0 %v1334
    %1463 = vmatpush.bf16.msra.mxu0 %v1331
    %1464 = vmatpush.bf16.msra.mxu0 %v1328
    %1465 = vmatmul.bf16.gmra.mxu0 %v513
    %v1466 = vpop.f32.mrf.mxu0
    %v1467 = vadd.f32 0.0, %v1466
    %v1468 = vpop.f32.mrf.mxu0
    %v1469 = vadd.f32 0.0, %v1468
    %1470 = vmatmul.bf16.gmra.mxu0 %v516
    %v1471 = vpop.f32.mrf.mxu0
    %v1472 = vadd.f32 0.0, %v1471
    %v1473 = vpop.f32.mrf.mxu0
    %v1474 = vadd.f32 0.0, %v1473
    %1475 = vmatmul.bf16.gmra.mxu0 %v519
    %v1476 = vpop.f32.mrf.mxu0
    %v1477 = vadd.f32 0.0, %v1476
    %v1478 = vpop.f32.mrf.mxu0
    %v1479 = vadd.f32 0.0, %v1478
    %1480 = vmatmul.bf16.gmra.mxu0 %v522
    %v1481 = vpop.f32.mrf.mxu0
    %v1482 = vadd.f32 0.0, %v1481
    %v1483 = vpop.f32.mrf.mxu0
    %v1484 = vadd.f32 0.0, %v1483
    %1485 = vmatmul.bf16.gmra.mxu0 %v525
    %v1486 = vpop.f32.mrf.mxu0
    %v1487 = vadd.f32 0.0, %v1486
    %v1488 = vpop.f32.mrf.mxu0
    %v1489 = vadd.f32 0.0, %v1488
    %1490 = vmatmul.bf16.gmra.mxu0 %v528
    %v1491 = vpop.f32.mrf.mxu0
    %v1492 = vadd.f32 0.0, %v1491
    %v1493 = vpop.f32.mrf.mxu0
    %v1494 = vadd.f32 0.0, %v1493
    %1495 = vmatmul.bf16.gmra.mxu0 %v531
    %v1496 = vpop.f32.mrf.mxu0
    %v1497 = vadd.f32 0.0, %v1496
    %v1498 = vpop.f32.mrf.mxu0
    %v1499 = vadd.f32 0.0, %v1498
    %1500 = vmatmul.bf16.gmra.mxu0 %v534
    %v1501 = vpop.f32.mrf.mxu0
    %v1502 = vadd.f32 0.0, %v1501
    %v1503 = vpop.f32.mrf.mxu0
    %v1504 = vadd.f32 0.0, %v1503
    %1505 = vmatmul.bf16.gmra.mxu0 %v537
    %v1506 = vpop.f32.mrf.mxu0
    %v1507 = vadd.f32 0.0, %v1506
    %v1508 = vpop.f32.mrf.mxu0
    %v1509 = vadd.f32 0.0, %v1508
    %1510 = vmatmul.bf16.gmra.mxu0 %v540
    %v1511 = vpop.f32.mrf.mxu0
    %v1512 = vadd.f32 0.0, %v1511
    %v1513 = vpop.f32.mrf.mxu0
    %v1514 = vadd.f32 0.0, %v1513
    %1515 = vmatmul.bf16.gmra.mxu0 %v543
    %v1516 = vpop.f32.mrf.mxu0
    %v1517 = vadd.f32 0.0, %v1516
    %v1518 = vpop.f32.mrf.mxu0
    %v1519 = vadd.f32 0.0, %v1518
    %1520 = vmatmul.bf16.gmra.mxu0 %v546
    %v1521 = vpop.f32.mrf.mxu0
    %v1522 = vadd.f32 0.0, %v1521
    %v1523 = vpop.f32.mrf.mxu0
    %v1524 = vadd.f32 0.0, %v1523
    %1525 = vmatmul.bf16.gmra.mxu0 %v549
    %v1526 = vpop.f32.mrf.mxu0
    %v1527 = vadd.f32 0.0, %v1526
    %v1528 = vpop.f32.mrf.mxu0
    %v1529 = vadd.f32 0.0, %v1528
    %1530 = vmatmul.bf16.gmra.mxu0 %v552
    %v1531 = vpop.f32.mrf.mxu0
    %v1532 = vadd.f32 0.0, %v1531
    %v1533 = vpop.f32.mrf.mxu0
    %v1534 = vadd.f32 0.0, %v1533
    %1535 = vmatmul.bf16.gmra.mxu0 %v555
    %v1536 = vpop.f32.mrf.mxu0
    %v1537 = vadd.f32 0.0, %v1536
    %v1538 = vpop.f32.mrf.mxu0
    %v1539 = vadd.f32 0.0, %v1538
    %1540 = vmatmul.bf16.gmra.mxu0 %v558
    %v1541 = vpop.f32.mrf.mxu0
    %v1542 = vadd.f32 0.0, %v1541
    %v1543 = vpop.f32.mrf.mxu0
    %v1544 = vadd.f32 0.0, %v1543
    %1545 = vmatmul.bf16.gmra.mxu0 %v561
    %v1546 = vpop.f32.mrf.mxu0
    %v1547 = vadd.f32 0.0, %v1546
    %v1548 = vpop.f32.mrf.mxu0
    %v1549 = vadd.f32 0.0, %v1548
    %1550 = vmatmul.bf16.gmra.mxu0 %v564
    %v1551 = vpop.f32.mrf.mxu0
    %v1552 = vadd.f32 0.0, %v1551
    %v1553 = vpop.f32.mrf.mxu0
    %v1554 = vadd.f32 0.0, %v1553
    %1555 = vmatmul.bf16.gmra.mxu0 %v567
    %v1556 = vpop.f32.mrf.mxu0
    %v1557 = vadd.f32 0.0, %v1556
    %v1558 = vpop.f32.mrf.mxu0
    %v1559 = vadd.f32 0.0, %v1558
    %1560 = vmatmul.bf16.gmra.mxu0 %v1346
    %v1561 = vpop.f32.mrf.mxu0
    %v1562 = vadd.f32 0.0, %v1561
    %v1563 = vpop.f32.mrf.mxu0
    %v1564 = vadd.f32 0.0, %v1563
    %1565 = vdwg.mxu0
    %1566 = vmatpush.bf16.msra.mxu0 0
    %1567 = vmatpush.bf16.msra.mxu0 0
    %1568 = vmatpush.bf16.msra.mxu0 0
    %1569 = vmatpush.bf16.msra.mxu0 0
    %1570 = vmatpush.bf16.msra.mxu0 0
    %1571 = vmatpush.bf16.msra.mxu0 %v1335
    %1572 = vmatpush.bf16.msra.mxu0 %v1332
    %1573 = vmatpush.bf16.msra.mxu0 %v1329
    %1574 = vmatmul.bf16.gmra.mxu0 %v513
    %v1575 = vpop.f32.mrf.mxu0
    %v1576 = vadd.f32 0.0, %v1575
    %v1577 = vpop.f32.mrf.mxu0
    %v1578 = vadd.f32 0.0, %v1577
    %1579 = vmatmul.bf16.gmra.mxu0 %v516
    %v1580 = vpop.f32.mrf.mxu0
    %v1581 = vadd.f32 0.0, %v1580
    %v1582 = vpop.f32.mrf.mxu0
    %v1583 = vadd.f32 0.0, %v1582
    %1584 = vmatmul.bf16.gmra.mxu0 %v519
    %v1585 = vpop.f32.mrf.mxu0
    %v1586 = vadd.f32 0.0, %v1585
    %v1587 = vpop.f32.mrf.mxu0
    %v1588 = vadd.f32 0.0, %v1587
    %1589 = vmatmul.bf16.gmra.mxu0 %v522
    %v1590 = vpop.f32.mrf.mxu0
    %v1591 = vadd.f32 0.0, %v1590
    %v1592 = vpop.f32.mrf.mxu0
    %v1593 = vadd.f32 0.0, %v1592
    %1594 = vmatmul.bf16.gmra.mxu0 %v525
    %v1595 = vpop.f32.mrf.mxu0
    %v1596 = vadd.f32 0.0, %v1595
    %v1597 = vpop.f32.mrf.mxu0
    %v1598 = vadd.f32 0.0, %v1597
    %1599 = vmatmul.bf16.gmra.mxu0 %v528
    %v1600 = vpop.f32.mrf.mxu0
    %v1601 = vadd.f32 0.0, %v1600
    %v1602 = vpop.f32.mrf.mxu0
    %v1603 = vadd.f32 0.0, %v1602
    %1604 = vmatmul.bf16.gmra.mxu0 %v531
    %v1605 = vpop.f32.mrf.mxu0
    %v1606 = vadd.f32 0.0, %v1605
    %v1607 = vpop.f32.mrf.mxu0
    %v1608 = vadd.f32 0.0, %v1607
    %1609 = vmatmul.bf16.gmra.mxu0 %v534
    %v1610 = vpop.f32.mrf.mxu0
    %v1611 = vadd.f32 0.0, %v1610
    %v1612 = vpop.f32.mrf.mxu0
    %v1613 = vadd.f32 0.0, %v1612
    %1614 = vmatmul.bf16.gmra.mxu0 %v537
    %v1615 = vpop.f32.mrf.mxu0
    %v1616 = vadd.f32 0.0, %v1615
    %v1617 = vpop.f32.mrf.mxu0
    %v1618 = vadd.f32 0.0, %v1617
    %1619 = vmatmul.bf16.gmra.mxu0 %v540
    %v1620 = vpop.f32.mrf.mxu0
    %v1621 = vadd.f32 0.0, %v1620
    %v1622 = vpop.f32.mrf.mxu0
    %v1623 = vadd.f32 0.0, %v1622
    %1624 = vmatmul.bf16.gmra.mxu0 %v543
    %v1625 = vpop.f32.mrf.mxu0
    %v1626 = vadd.f32 0.0, %v1625
    %v1627 = vpop.f32.mrf.mxu0
    %v1628 = vadd.f32 0.0, %v1627
    %1629 = vmatmul.bf16.gmra.mxu0 %v546
    %v1630 = vpop.f32.mrf.mxu0
    %v1631 = vadd.f32 0.0, %v1630
    %v1632 = vpop.f32.mrf.mxu0
    %v1633 = vadd.f32 0.0, %v1632
    %1634 = vmatmul.bf16.gmra.mxu0 %v549
    %v1635 = vpop.f32.mrf.mxu0
    %v1636 = vadd.f32 0.0, %v1635
    %v1637 = vpop.f32.mrf.mxu0
    %v1638 = vadd.f32 0.0, %v1637
    %1639 = vmatmul.bf16.gmra.mxu0 %v552
    %v1640 = vpop.f32.mrf.mxu0
    %v1641 = vadd.f32 0.0, %v1640
    %v1642 = vpop.f32.mrf.mxu0
    %v1643 = vadd.f32 0.0, %v1642
    %1644 = vmatmul.bf16.gmra.mxu0 %v555
    %v1645 = vpop.f32.mrf.mxu0
    %v1646 = vadd.f32 0.0, %v1645
    %v1647 = vpop.f32.mrf.mxu0
    %v1648 = vadd.f32 0.0, %v1647
    %1649 = vmatmul.bf16.gmra.mxu0 %v558
    %v1650 = vpop.f32.mrf.mxu0
    %v1651 = vadd.f32 0.0, %v1650
    %v1652 = vpop.f32.mrf.mxu0
    %v1653 = vadd.f32 0.0, %v1652
    %1654 = vmatmul.bf16.gmra.mxu0 %v561
    %v1655 = vpop.f32.mrf.mxu0
    %v1656 = vadd.f32 0.0, %v1655
    %v1657 = vpop.f32.mrf.mxu0
    %v1658 = vadd.f32 0.0, %v1657
    %1659 = vmatmul.bf16.gmra.mxu0 %v564
    %v1660 = vpop.f32.mrf.mxu0
    %v1661 = vadd.f32 0.0, %v1660
    %v1662 = vpop.f32.mrf.mxu0
    %v1663 = vadd.f32 0.0, %v1662
    %1664 = vmatmul.bf16.gmra.mxu0 %v567
    %v1665 = vpop.f32.mrf.mxu0
    %v1666 = vadd.f32 0.0, %v1665
    %v1667 = vpop.f32.mrf.mxu0
    %v1668 = vadd.f32 0.0, %v1667
    %1669 = vmatmul.bf16.gmra.mxu0 %v1346
    %v1670 = vpop.f32.mrf.mxu0
    %v1671 = vadd.f32 0.0, %v1670
    %v1672 = vpop.f32.mrf.mxu0
    %v1673 = vadd.f32 0.0, %v1672
    %1674 = vdwg.mxu0
    %v1675 = vadd.f32 %v962, %v1358
    %v1676 = vadd.f32 %v1071, %v1467
    %v1677 = vadd.f32 %v1180, %v1576
    %v1678 = vadd.f32 %v964, %v1360
    %v1679 = vadd.f32 %v1073, %v1469
    %v1680 = vadd.f32 %v1182, %v1578
    %v1681 = vadd.f32 %v967, %v1363
    %v1682 = vadd.f32 %v1076, %v1472
    %v1683 = vadd.f32 %v1185, %v1581
    %v1684 = vadd.f32 %v969, %v1365
    %v1685 = vadd.f32 %v1078, %v1474
    %v1686 = vadd.f32 %v1187, %v1583
    %v1687 = vadd.f32 %v972, %v1368
    %v1688 = vadd.f32 %v1081, %v1477
    %v1689 = vadd.f32 %v1190, %v1586
    %v1690 = vadd.f32 %v974, %v1370
    %v1691 = vadd.f32 %v1083, %v1479
    %v1692 = vadd.f32 %v1192, %v1588
    %v1693 = vadd.f32 %v977, %v1373
    %v1694 = vadd.f32 %v1086, %v1482
    %v1695 = vadd.f32 %v1195, %v1591
    %v1696 = vadd.f32 %v979, %v1375
    %v1697 = vadd.f32 %v1088, %v1484
    %v1698 = vadd.f32 %v1197, %v1593
    %v1699 = vadd.f32 %v982, %v1378
    %v1700 = vadd.f32 %v1091, %v1487
    %v1701 = vadd.f32 %v1200, %v1596
    %v1702 = vadd.f32 %v984, %v1380
    %v1703 = vadd.f32 %v1093, %v1489
    %v1704 = vadd.f32 %v1202, %v1598
    %v1705 = vadd.f32 %v987, %v1383
    %v1706 = vadd.f32 %v1096, %v1492
    %v1707 = vadd.f32 %v1205, %v1601
    %v1708 = vadd.f32 %v989, %v1385
    %v1709 = vadd.f32 %v1098, %v1494
    %v1710 = vadd.f32 %v1207, %v1603
    %v1711 = vadd.f32 %v992, %v1388
    %v1712 = vadd.f32 %v1101, %v1497
    %v1713 = vadd.f32 %v1210, %v1606
    %v1714 = vadd.f32 %v994, %v1390
    %v1715 = vadd.f32 %v1103, %v1499
    %v1716 = vadd.f32 %v1212, %v1608
    %v1717 = vadd.f32 %v997, %v1393
    %v1718 = vadd.f32 %v1106, %v1502
    %v1719 = vadd.f32 %v1215, %v1611
    %v1720 = vadd.f32 %v999, %v1395
    %v1721 = vadd.f32 %v1108, %v1504
    %v1722 = vadd.f32 %v1217, %v1613
    %v1723 = vadd.f32 %v1002, %v1398
    %v1724 = vadd.f32 %v1111, %v1507
    %v1725 = vadd.f32 %v1220, %v1616
    %v1726 = vadd.f32 %v1004, %v1400
    %v1727 = vadd.f32 %v1113, %v1509
    %v1728 = vadd.f32 %v1222, %v1618
    %v1729 = vadd.f32 %v1007, %v1403
    %v1730 = vadd.f32 %v1116, %v1512
    %v1731 = vadd.f32 %v1225, %v1621
    %v1732 = vadd.f32 %v1009, %v1405
    %v1733 = vadd.f32 %v1118, %v1514
    %v1734 = vadd.f32 %v1227, %v1623
    %v1735 = vadd.f32 %v1012, %v1408
    %v1736 = vadd.f32 %v1121, %v1517
    %v1737 = vadd.f32 %v1230, %v1626
    %v1738 = vadd.f32 %v1014, %v1410
    %v1739 = vadd.f32 %v1123, %v1519
    %v1740 = vadd.f32 %v1232, %v1628
    %v1741 = vadd.f32 %v1017, %v1413
    %v1742 = vadd.f32 %v1126, %v1522
    %v1743 = vadd.f32 %v1235, %v1631
    %v1744 = vadd.f32 %v1019, %v1415
    %v1745 = vadd.f32 %v1128, %v1524
    %v1746 = vadd.f32 %v1237, %v1633
    %v1747 = vadd.f32 %v1022, %v1418
    %v1748 = vadd.f32 %v1131, %v1527
    %v1749 = vadd.f32 %v1240, %v1636
    %v1750 = vadd.f32 %v1024, %v1420
    %v1751 = vadd.f32 %v1133, %v1529
    %v1752 = vadd.f32 %v1242, %v1638
    %v1753 = vadd.f32 %v1027, %v1423
    %v1754 = vadd.f32 %v1136, %v1532
    %v1755 = vadd.f32 %v1245, %v1641
    %v1756 = vadd.f32 %v1029, %v1425
    %v1757 = vadd.f32 %v1138, %v1534
    %v1758 = vadd.f32 %v1247, %v1643
    %v1759 = vadd.f32 %v1032, %v1428
    %v1760 = vadd.f32 %v1141, %v1537
    %v1761 = vadd.f32 %v1250, %v1646
    %v1762 = vadd.f32 %v1034, %v1430
    %v1763 = vadd.f32 %v1143, %v1539
    %v1764 = vadd.f32 %v1252, %v1648
    %v1765 = vadd.f32 %v1037, %v1433
    %v1766 = vadd.f32 %v1146, %v1542
    %v1767 = vadd.f32 %v1255, %v1651
    %v1768 = vadd.f32 %v1039, %v1435
    %v1769 = vadd.f32 %v1148, %v1544
    %v1770 = vadd.f32 %v1257, %v1653
    %v1771 = vadd.f32 %v1042, %v1438
    %v1772 = vadd.f32 %v1151, %v1547
    %v1773 = vadd.f32 %v1260, %v1656
    %v1774 = vadd.f32 %v1044, %v1440
    %v1775 = vadd.f32 %v1153, %v1549
    %v1776 = vadd.f32 %v1262, %v1658
    %v1777 = vadd.f32 %v1047, %v1443
    %v1778 = vadd.f32 %v1156, %v1552
    %v1779 = vadd.f32 %v1265, %v1661
    %v1780 = vadd.f32 %v1049, %v1445
    %v1781 = vadd.f32 %v1158, %v1554
    %v1782 = vadd.f32 %v1267, %v1663
    %v1783 = vadd.f32 %v1052, %v1448
    %v1784 = vadd.f32 %v1161, %v1557
    %v1785 = vadd.f32 %v1270, %v1666
    %v1786 = vadd.f32 %v1054, %v1450
    %v1787 = vadd.f32 %v1163, %v1559
    %v1788 = vadd.f32 %v1272, %v1668
    %v1789 = vadd.f32 %v1057, %v1453
    %v1790 = vadd.f32 %v1166, %v1562
    %v1791 = vadd.f32 %v1275, %v1671
    %v1792 = vadd.f32 %v1059, %v1455
    %v1793 = vadd.f32 %v1168, %v1564
    %v1794 = vadd.f32 %v1277, %v1673
    %s1795 = scalar_lea.vmem [#allocation2], 216
    %v1796 = vld [vmem:[%s1795] sm:$0xff]
    %v1797 = vld [vmem:[%s1795 + $0x8] sm:$0xf]
    %v1798 = vld [vmem:[%s1795 + $0xc] sm:$0xff]
    %v1799 = vld [vmem:[%s1795 + $0x14] sm:$0xf]
    %v1800 = vld [vmem:[%s1795 + $0x18] sm:$0xff]
    %v1801 = vld [vmem:[%s1795 + $0x20] sm:$0xf]
    %v1802 = vld [vmem:[%s1795 + $0x24] sm:$0xff]
    %v1803 = vld [vmem:[%s1795 + $0x2c] sm:$0xf]
    %v1804 = vld [vmem:[%s1795 + $0x30] sm:$0xff]
    %v1805 = vld [vmem:[%s1795 + $0x38] sm:$0xf]
    %v1806 = vld [vmem:[%s1795 + $0x3c] sm:$0xff]
    %v1807 = vld [vmem:[%s1795 + $0x44] sm:$0xf]
    %v1810 = vunpack.c.l.b16 %v331
    %v1811 = vunpack.c.l.b16 %v332
    %v1812 = vpack.c.b16 %v1811, %v1810
    %v1825 = vunpack.c.l.b16 %v1796
    %v1826 = vunpack.c.h.b16 %v1796
    %v1827 = vunpack.c.l.b16 %v1797
    %v1828 = vunpack.c.l.b16 %v1798
    %v1829 = vunpack.c.h.b16 %v1798
    %v1830 = vunpack.c.l.b16 %v1799
    %v1831 = vunpack.c.l.b16 %v1800
    %v1832 = vunpack.c.h.b16 %v1800
    %v1833 = vunpack.c.l.b16 %v1801
    %v1834 = vunpack.c.l.b16 %v1802
    %v1835 = vunpack.c.h.b16 %v1802
    %v1836 = vunpack.c.l.b16 %v1803
    %v1837 = vunpack.c.l.b16 %v1804
    %v1838 = vunpack.c.h.b16 %v1804
    %v1839 = vunpack.c.l.b16 %v1805
    %v1840 = vunpack.c.l.b16 %v1806
    %v1841 = vunpack.c.h.b16 %v1806
    %v1842 = vunpack.c.l.b16 %v1807
    %v1843 = vpack.c.b16 %v1828, %v1825
    %v1844 = vpack.c.b16 %v1829, %v1826
    %v1845 = vpack.c.b16 %v1830, %v1827
    %v1846 = vpack.c.b16 %v1834, %v1831
    %v1847 = vpack.c.b16 %v1835, %v1832
    %v1848 = vpack.c.b16 %v1836, %v1833
    %v1849 = vpack.c.b16 %v1840, %v1837
    %v1850 = vpack.c.b16 %v1841, %v1838
    %v1851 = vpack.c.b16 %v1842, %v1839
    %v1862 = vsel %vm508, %v1812, 0
    %1864 = vmatpush.bf16.msra.mxu0 0
    %1865 = vmatpush.bf16.msra.mxu0 0
    %1866 = vmatpush.bf16.msra.mxu0 0
    %1867 = vmatpush.bf16.msra.mxu0 0
    %1868 = vmatpush.bf16.msra.mxu0 0
    %1869 = vmatpush.bf16.msra.mxu0 %v1849
    %1870 = vmatpush.bf16.msra.mxu0 %v1846
    %1871 = vmatpush.bf16.msra.mxu0 %v1843
    %1872 = vmatmul.bf16.gmra.mxu0 %v516
    %v1873 = vpop.f32.mrf.mxu0
    %v1874 = vadd.f32 0.0, %v1873
    %v1875 = vpop.f32.mrf.mxu0
    %v1876 = vadd.f32 0.0, %v1875
    %1877 = vmatmul.bf16.gmra.mxu0 %v519
    %v1878 = vpop.f32.mrf.mxu0
    %v1879 = vadd.f32 0.0, %v1878
    %v1880 = vpop.f32.mrf.mxu0
    %v1881 = vadd.f32 0.0, %v1880
    %1882 = vmatmul.bf16.gmra.mxu0 %v522
    %v1883 = vpop.f32.mrf.mxu0
    %v1884 = vadd.f32 0.0, %v1883
    %v1885 = vpop.f32.mrf.mxu0
    %v1886 = vadd.f32 0.0, %v1885
    %1887 = vmatmul.bf16.gmra.mxu0 %v525
    %v1888 = vpop.f32.mrf.mxu0
    %v1889 = vadd.f32 0.0, %v1888
    %v1890 = vpop.f32.mrf.mxu0
    %v1891 = vadd.f32 0.0, %v1890
    %1892 = vmatmul.bf16.gmra.mxu0 %v528
    %v1893 = vpop.f32.mrf.mxu0
    %v1894 = vadd.f32 0.0, %v1893
    %v1895 = vpop.f32.mrf.mxu0
    %v1896 = vadd.f32 0.0, %v1895
    %1897 = vmatmul.bf16.gmra.mxu0 %v531
    %v1898 = vpop.f32.mrf.mxu0
    %v1899 = vadd.f32 0.0, %v1898
    %v1900 = vpop.f32.mrf.mxu0
    %v1901 = vadd.f32 0.0, %v1900
    %1902 = vmatmul.bf16.gmra.mxu0 %v534
    %v1903 = vpop.f32.mrf.mxu0
    %v1904 = vadd.f32 0.0, %v1903
    %v1905 = vpop.f32.mrf.mxu0
    %v1906 = vadd.f32 0.0, %v1905
    %1907 = vmatmul.bf16.gmra.mxu0 %v537
    %v1908 = vpop.f32.mrf.mxu0
    %v1909 = vadd.f32 0.0, %v1908
    %v1910 = vpop.f32.mrf.mxu0
    %v1911 = vadd.f32 0.0, %v1910
    %1912 = vmatmul.bf16.gmra.mxu0 %v540
    %v1913 = vpop.f32.mrf.mxu0
    %v1914 = vadd.f32 0.0, %v1913
    %v1915 = vpop.f32.mrf.mxu0
    %v1916 = vadd.f32 0.0, %v1915
    %1917 = vmatmul.bf16.gmra.mxu0 %v543
    %v1918 = vpop.f32.mrf.mxu0
    %v1919 = vadd.f32 0.0, %v1918
    %v1920 = vpop.f32.mrf.mxu0
    %v1921 = vadd.f32 0.0, %v1920
    %1922 = vmatmul.bf16.gmra.mxu0 %v546
    %v1923 = vpop.f32.mrf.mxu0
    %v1924 = vadd.f32 0.0, %v1923
    %v1925 = vpop.f32.mrf.mxu0
    %v1926 = vadd.f32 0.0, %v1925
    %1927 = vmatmul.bf16.gmra.mxu0 %v549
    %v1928 = vpop.f32.mrf.mxu0
    %v1929 = vadd.f32 0.0, %v1928
    %v1930 = vpop.f32.mrf.mxu0
    %v1931 = vadd.f32 0.0, %v1930
    %1932 = vmatmul.bf16.gmra.mxu0 %v552
    %v1933 = vpop.f32.mrf.mxu0
    %v1934 = vadd.f32 0.0, %v1933
    %v1935 = vpop.f32.mrf.mxu0
    %v1936 = vadd.f32 0.0, %v1935
    %1937 = vmatmul.bf16.gmra.mxu0 %v555
    %v1938 = vpop.f32.mrf.mxu0
    %v1939 = vadd.f32 0.0, %v1938
    %v1940 = vpop.f32.mrf.mxu0
    %v1941 = vadd.f32 0.0, %v1940
    %1942 = vmatmul.bf16.gmra.mxu0 %v558
    %v1943 = vpop.f32.mrf.mxu0
    %v1944 = vadd.f32 0.0, %v1943
    %v1945 = vpop.f32.mrf.mxu0
    %v1946 = vadd.f32 0.0, %v1945
    %1947 = vmatmul.bf16.gmra.mxu0 %v561
    %v1948 = vpop.f32.mrf.mxu0
    %v1949 = vadd.f32 0.0, %v1948
    %v1950 = vpop.f32.mrf.mxu0
    %v1951 = vadd.f32 0.0, %v1950
    %1952 = vmatmul.bf16.gmra.mxu0 %v564
    %v1953 = vpop.f32.mrf.mxu0
    %v1954 = vadd.f32 0.0, %v1953
    %v1955 = vpop.f32.mrf.mxu0
    %v1956 = vadd.f32 0.0, %v1955
    %1957 = vmatmul.bf16.gmra.mxu0 %v567
    %v1958 = vpop.f32.mrf.mxu0
    %v1959 = vadd.f32 0.0, %v1958
    %v1960 = vpop.f32.mrf.mxu0
    %v1961 = vadd.f32 0.0, %v1960
    %1962 = vmatmul.bf16.gmra.mxu0 %v1346
    %v1963 = vpop.f32.mrf.mxu0
    %v1964 = vadd.f32 0.0, %v1963
    %v1965 = vpop.f32.mrf.mxu0
    %v1966 = vadd.f32 0.0, %v1965
    %1967 = vmatmul.bf16.gmra.mxu0 %v1862
    %v1968 = vpop.f32.mrf.mxu0
    %v1969 = vadd.f32 0.0, %v1968
    %v1970 = vpop.f32.mrf.mxu0
    %v1971 = vadd.f32 0.0, %v1970
    %1972 = vdwg.mxu0
    %1973 = vmatpush.bf16.msra.mxu0 0
    %1974 = vmatpush.bf16.msra.mxu0 0
    %1975 = vmatpush.bf16.msra.mxu0 0
    %1976 = vmatpush.bf16.msra.mxu0 0
    %1977 = vmatpush.bf16.msra.mxu0 0
    %1978 = vmatpush.bf16.msra.mxu0 %v1850
    %1979 = vmatpush.bf16.msra.mxu0 %v1847
    %1980 = vmatpush.bf16.msra.mxu0 %v1844
    %1981 = vmatmul.bf16.gmra.mxu0 %v516
    %v1982 = vpop.f32.mrf.mxu0
    %v1983 = vadd.f32 0.0, %v1982
    %v1984 = vpop.f32.mrf.mxu0
    %v1985 = vadd.f32 0.0, %v1984
    %1986 = vmatmul.bf16.gmra.mxu0 %v519
    %v1987 = vpop.f32.mrf.mxu0
    %v1988 = vadd.f32 0.0, %v1987
    %v1989 = vpop.f32.mrf.mxu0
    %v1990 = vadd.f32 0.0, %v1989
    %1991 = vmatmul.bf16.gmra.mxu0 %v522
    %v1992 = vpop.f32.mrf.mxu0
    %v1993 = vadd.f32 0.0, %v1992
    %v1994 = vpop.f32.mrf.mxu0
    %v1995 = vadd.f32 0.0, %v1994
    %1996 = vmatmul.bf16.gmra.mxu0 %v525
    %v1997 = vpop.f32.mrf.mxu0
    %v1998 = vadd.f32 0.0, %v1997
    %v1999 = vpop.f32.mrf.mxu0
    %v2000 = vadd.f32 0.0, %v1999
    %2001 = vmatmul.bf16.gmra.mxu0 %v528
    %v2002 = vpop.f32.mrf.mxu0
    %v2003 = vadd.f32 0.0, %v2002
    %v2004 = vpop.f32.mrf.mxu0
    %v2005 = vadd.f32 0.0, %v2004
    %2006 = vmatmul.bf16.gmra.mxu0 %v531
    %v2007 = vpop.f32.mrf.mxu0
    %v2008 = vadd.f32 0.0, %v2007
    %v2009 = vpop.f32.mrf.mxu0
    %v2010 = vadd.f32 0.0, %v2009
    %2011 = vmatmul.bf16.gmra.mxu0 %v534
    %v2012 = vpop.f32.mrf.mxu0
    %v2013 = vadd.f32 0.0, %v2012
    %v2014 = vpop.f32.mrf.mxu0
    %v2015 = vadd.f32 0.0, %v2014
    %2016 = vmatmul.bf16.gmra.mxu0 %v537
    %v2017 = vpop.f32.mrf.mxu0
    %v2018 = vadd.f32 0.0, %v2017
    %v2019 = vpop.f32.mrf.mxu0
    %v2020 = vadd.f32 0.0, %v2019
    %2021 = vmatmul.bf16.gmra.mxu0 %v540
    %v2022 = vpop.f32.mrf.mxu0
    %v2023 = vadd.f32 0.0, %v2022
    %v2024 = vpop.f32.mrf.mxu0
    %v2025 = vadd.f32 0.0, %v2024
    %2026 = vmatmul.bf16.gmra.mxu0 %v543
    %v2027 = vpop.f32.mrf.mxu0
    %v2028 = vadd.f32 0.0, %v2027
    %v2029 = vpop.f32.mrf.mxu0
    %v2030 = vadd.f32 0.0, %v2029
    %2031 = vmatmul.bf16.gmra.mxu0 %v546
    %v2032 = vpop.f32.mrf.mxu0
    %v2033 = vadd.f32 0.0, %v2032
    %v2034 = vpop.f32.mrf.mxu0
    %v2035 = vadd.f32 0.0, %v2034
    %2036 = vmatmul.bf16.gmra.mxu0 %v549
    %v2037 = vpop.f32.mrf.mxu0
    %v2038 = vadd.f32 0.0, %v2037
    %v2039 = vpop.f32.mrf.mxu0
    %v2040 = vadd.f32 0.0, %v2039
    %2041 = vmatmul.bf16.gmra.mxu0 %v552
    %v2042 = vpop.f32.mrf.mxu0
    %v2043 = vadd.f32 0.0, %v2042
    %v2044 = vpop.f32.mrf.mxu0
    %v2045 = vadd.f32 0.0, %v2044
    %2046 = vmatmul.bf16.gmra.mxu0 %v555
    %v2047 = vpop.f32.mrf.mxu0
    %v2048 = vadd.f32 0.0, %v2047
    %v2049 = vpop.f32.mrf.mxu0
    %v2050 = vadd.f32 0.0, %v2049
    %2051 = vmatmul.bf16.gmra.mxu0 %v558
    %v2052 = vpop.f32.mrf.mxu0
    %v2053 = vadd.f32 0.0, %v2052
    %v2054 = vpop.f32.mrf.mxu0
    %v2055 = vadd.f32 0.0, %v2054
    %2056 = vmatmul.bf16.gmra.mxu0 %v561
    %v2057 = vpop.f32.mrf.mxu0
    %v2058 = vadd.f32 0.0, %v2057
    %v2059 = vpop.f32.mrf.mxu0
    %v2060 = vadd.f32 0.0, %v2059
    %2061 = vmatmul.bf16.gmra.mxu0 %v564
    %v2062 = vpop.f32.mrf.mxu0
    %v2063 = vadd.f32 0.0, %v2062
    %v2064 = vpop.f32.mrf.mxu0
    %v2065 = vadd.f32 0.0, %v2064
    %2066 = vmatmul.bf16.gmra.mxu0 %v567
    %v2067 = vpop.f32.mrf.mxu0
    %v2068 = vadd.f32 0.0, %v2067
    %v2069 = vpop.f32.mrf.mxu0
    %v2070 = vadd.f32 0.0, %v2069
    %2071 = vmatmul.bf16.gmra.mxu0 %v1346
    %v2072 = vpop.f32.mrf.mxu0
    %v2073 = vadd.f32 0.0, %v2072
    %v2074 = vpop.f32.mrf.mxu0
    %v2075 = vadd.f32 0.0, %v2074
    %2076 = vmatmul.bf16.gmra.mxu0 %v1862
    %v2077 = vpop.f32.mrf.mxu0
    %v2078 = vadd.f32 0.0, %v2077
    %v2079 = vpop.f32.mrf.mxu0
    %v2080 = vadd.f32 0.0, %v2079
    %2081 = vdwg.mxu0
    %2082 = vmatpush.bf16.msra.mxu0 0
    %2083 = vmatpush.bf16.msra.mxu0 0
    %2084 = vmatpush.bf16.msra.mxu0 0
    %2085 = vmatpush.bf16.msra.mxu0 0
    %2086 = vmatpush.bf16.msra.mxu0 0
    %2087 = vmatpush.bf16.msra.mxu0 %v1851
    %2088 = vmatpush.bf16.msra.mxu0 %v1848
    %2089 = vmatpush.bf16.msra.mxu0 %v1845
    %2090 = vmatmul.bf16.gmra.mxu0 %v516
    %v2091 = vpop.f32.mrf.mxu0
    %v2092 = vadd.f32 0.0, %v2091
    %v2093 = vpop.f32.mrf.mxu0
    %v2094 = vadd.f32 0.0, %v2093
    %2095 = vmatmul.bf16.gmra.mxu0 %v519
    %v2096 = vpop.f32.mrf.mxu0
    %v2097 = vadd.f32 0.0, %v2096
    %v2098 = vpop.f32.mrf.mxu0
    %v2099 = vadd.f32 0.0, %v2098
    %2100 = vmatmul.bf16.gmra.mxu0 %v522
    %v2101 = vpop.f32.mrf.mxu0
    %v2102 = vadd.f32 0.0, %v2101
    %v2103 = vpop.f32.mrf.mxu0
    %v2104 = vadd.f32 0.0, %v2103
    %2105 = vmatmul.bf16.gmra.mxu0 %v525
    %v2106 = vpop.f32.mrf.mxu0
    %v2107 = vadd.f32 0.0, %v2106
    %v2108 = vpop.f32.mrf.mxu0
    %v2109 = vadd.f32 0.0, %v2108
    %2110 = vmatmul.bf16.gmra.mxu0 %v528
    %v2111 = vpop.f32.mrf.mxu0
    %v2112 = vadd.f32 0.0, %v2111
    %v2113 = vpop.f32.mrf.mxu0
    %v2114 = vadd.f32 0.0, %v2113
    %2115 = vmatmul.bf16.gmra.mxu0 %v531
    %v2116 = vpop.f32.mrf.mxu0
    %v2117 = vadd.f32 0.0, %v2116
    %v2118 = vpop.f32.mrf.mxu0
    %v2119 = vadd.f32 0.0, %v2118
    %2120 = vmatmul.bf16.gmra.mxu0 %v534
    %v2121 = vpop.f32.mrf.mxu0
    %v2122 = vadd.f32 0.0, %v2121
    %v2123 = vpop.f32.mrf.mxu0
    %v2124 = vadd.f32 0.0, %v2123
    %2125 = vmatmul.bf16.gmra.mxu0 %v537
    %v2126 = vpop.f32.mrf.mxu0
    %v2127 = vadd.f32 0.0, %v2126
    %v2128 = vpop.f32.mrf.mxu0
    %v2129 = vadd.f32 0.0, %v2128
    %2130 = vmatmul.bf16.gmra.mxu0 %v540
    %v2131 = vpop.f32.mrf.mxu0
    %v2132 = vadd.f32 0.0, %v2131
    %v2133 = vpop.f32.mrf.mxu0
    %v2134 = vadd.f32 0.0, %v2133
    %2135 = vmatmul.bf16.gmra.mxu0 %v543
    %v2136 = vpop.f32.mrf.mxu0
    %v2137 = vadd.f32 0.0, %v2136
    %v2138 = vpop.f32.mrf.mxu0
    %v2139 = vadd.f32 0.0, %v2138
    %2140 = vmatmul.bf16.gmra.mxu0 %v546
    %v2141 = vpop.f32.mrf.mxu0
    %v2142 = vadd.f32 0.0, %v2141
    %v2143 = vpop.f32.mrf.mxu0
    %v2144 = vadd.f32 0.0, %v2143
    %2145 = vmatmul.bf16.gmra.mxu0 %v549
    %v2146 = vpop.f32.mrf.mxu0
    %v2147 = vadd.f32 0.0, %v2146
    %v2148 = vpop.f32.mrf.mxu0
    %v2149 = vadd.f32 0.0, %v2148
    %2150 = vmatmul.bf16.gmra.mxu0 %v552
    %v2151 = vpop.f32.mrf.mxu0
    %v2152 = vadd.f32 0.0, %v2151
    %v2153 = vpop.f32.mrf.mxu0
    %v2154 = vadd.f32 0.0, %v2153
    %2155 = vmatmul.bf16.gmra.mxu0 %v555
    %v2156 = vpop.f32.mrf.mxu0
    %v2157 = vadd.f32 0.0, %v2156
    %v2158 = vpop.f32.mrf.mxu0
    %v2159 = vadd.f32 0.0, %v2158
    %2160 = vmatmul.bf16.gmra.mxu0 %v558
    %v2161 = vpop.f32.mrf.mxu0
    %v2162 = vadd.f32 0.0, %v2161
    %v2163 = vpop.f32.mrf.mxu0
    %v2164 = vadd.f32 0.0, %v2163
    %2165 = vmatmul.bf16.gmra.mxu0 %v561
    %v2166 = vpop.f32.mrf.mxu0
    %v2167 = vadd.f32 0.0, %v2166
    %v2168 = vpop.f32.mrf.mxu0
    %v2169 = vadd.f32 0.0, %v2168
    %2170 = vmatmul.bf16.gmra.mxu0 %v564
    %v2171 = vpop.f32.mrf.mxu0
    %v2172 = vadd.f32 0.0, %v2171
    %v2173 = vpop.f32.mrf.mxu0
    %v2174 = vadd.f32 0.0, %v2173
    %2175 = vmatmul.bf16.gmra.mxu0 %v567
    %v2176 = vpop.f32.mrf.mxu0
    %v2177 = vadd.f32 0.0, %v2176
    %v2178 = vpop.f32.mrf.mxu0
    %v2179 = vadd.f32 0.0, %v2178
    %2180 = vmatmul.bf16.gmra.mxu0 %v1346
    %v2181 = vpop.f32.mrf.mxu0
    %v2182 = vadd.f32 0.0, %v2181
    %v2183 = vpop.f32.mrf.mxu0
    %v2184 = vadd.f32 0.0, %v2183
    %2185 = vmatmul.bf16.gmra.mxu0 %v1862
    %v2186 = vpop.f32.mrf.mxu0
    %v2187 = vadd.f32 0.0, %v2186
    %v2188 = vpop.f32.mrf.mxu0
    %v2189 = vadd.f32 0.0, %v2188
    %2190 = vdwg.mxu0
    %v2191 = vadd.f32 %v1675, %v1874
    %v2192 = vadd.f32 %v1676, %v1983
    %v2193 = vadd.f32 %v1677, %v2092
    %v2194 = vadd.f32 %v1678, %v1876
    %v2195 = vadd.f32 %v1679, %v1985
    %v2196 = vadd.f32 %v1680, %v2094
    %v2197 = vadd.f32 %v1681, %v1879
    %v2198 = vadd.f32 %v1682, %v1988
    %v2199 = vadd.f32 %v1683, %v2097
    %v2200 = vadd.f32 %v1684, %v1881
    %v2201 = vadd.f32 %v1685, %v1990
    %v2202 = vadd.f32 %v1686, %v2099
    %v2203 = vadd.f32 %v1687, %v1884
    %v2204 = vadd.f32 %v1688, %v1993
    %v2205 = vadd.f32 %v1689, %v2102
    %v2206 = vadd.f32 %v1690, %v1886
    %v2207 = vadd.f32 %v1691, %v1995
    %v2208 = vadd.f32 %v1692, %v2104
    %v2209 = vadd.f32 %v1693, %v1889
    %v2210 = vadd.f32 %v1694, %v1998
    %v2211 = vadd.f32 %v1695, %v2107
    %v2212 = vadd.f32 %v1696, %v1891
    %v2213 = vadd.f32 %v1697, %v2000
    %v2214 = vadd.f32 %v1698, %v2109
    %v2215 = vadd.f32 %v1699, %v1894
    %v2216 = vadd.f32 %v1700, %v2003
    %v2217 = vadd.f32 %v1701, %v2112
    %v2218 = vadd.f32 %v1702, %v1896
    %v2219 = vadd.f32 %v1703, %v2005
    %v2220 = vadd.f32 %v1704, %v2114
    %v2221 = vadd.f32 %v1705, %v1899
    %v2222 = vadd.f32 %v1706, %v2008
    %v2223 = vadd.f32 %v1707, %v2117
    %v2224 = vadd.f32 %v1708, %v1901
    %v2225 = vadd.f32 %v1709, %v2010
    %v2226 = vadd.f32 %v1710, %v2119
    %v2227 = vadd.f32 %v1711, %v1904
    %v2228 = vadd.f32 %v1712, %v2013
    %v2229 = vadd.f32 %v1713, %v2122
    %v2230 = vadd.f32 %v1714, %v1906
    %v2231 = vadd.f32 %v1715, %v2015
    %v2232 = vadd.f32 %v1716, %v2124
    %v2233 = vadd.f32 %v1717, %v1909
    %v2234 = vadd.f32 %v1718, %v2018
    %v2235 = vadd.f32 %v1719, %v2127
    %v2236 = vadd.f32 %v1720, %v1911
    %v2237 = vadd.f32 %v1721, %v2020
    %v2238 = vadd.f32 %v1722, %v2129
    %v2239 = vadd.f32 %v1723, %v1914
    %v2240 = vadd.f32 %v1724, %v2023
    %v2241 = vadd.f32 %v1725, %v2132
    %v2242 = vadd.f32 %v1726, %v1916
    %v2243 = vadd.f32 %v1727, %v2025
    %v2244 = vadd.f32 %v1728, %v2134
    %v2245 = vadd.f32 %v1729, %v1919
    %v2246 = vadd.f32 %v1730, %v2028
    %v2247 = vadd.f32 %v1731, %v2137
    %v2248 = vadd.f32 %v1732, %v1921
    %v2249 = vadd.f32 %v1733, %v2030
    %v2250 = vadd.f32 %v1734, %v2139
    %v2251 = vadd.f32 %v1735, %v1924
    %v2252 = vadd.f32 %v1736, %v2033
    %v2253 = vadd.f32 %v1737, %v2142
    %v2254 = vadd.f32 %v1738, %v1926
    %v2255 = vadd.f32 %v1739, %v2035
    %v2256 = vadd.f32 %v1740, %v2144
    %v2257 = vadd.f32 %v1741, %v1929
    %v2258 = vadd.f32 %v1742, %v2038
    %v2259 = vadd.f32 %v1743, %v2147
    %v2260 = vadd.f32 %v1744, %v1931
    %v2261 = vadd.f32 %v1745, %v2040
    %v2262 = vadd.f32 %v1746, %v2149
    %v2263 = vadd.f32 %v1747, %v1934
    %v2264 = vadd.f32 %v1748, %v2043
    %v2265 = vadd.f32 %v1749, %v2152
    %v2266 = vadd.f32 %v1750, %v1936
    %v2267 = vadd.f32 %v1751, %v2045
    %v2268 = vadd.f32 %v1752, %v2154
    %v2269 = vadd.f32 %v1753, %v1939
    %v2270 = vadd.f32 %v1754, %v2048
    %v2271 = vadd.f32 %v1755, %v2157
    %v2272 = vadd.f32 %v1756, %v1941
    %v2273 = vadd.f32 %v1757, %v2050
    %v2274 = vadd.f32 %v1758, %v2159
    %v2275 = vadd.f32 %v1759, %v1944
    %v2276 = vadd.f32 %v1760, %v2053
    %v2277 = vadd.f32 %v1761, %v2162
    %v2278 = vadd.f32 %v1762, %v1946
    %v2279 = vadd.f32 %v1763, %v2055
    %v2280 = vadd.f32 %v1764, %v2164
    %v2281 = vadd.f32 %v1765, %v1949
    %v2282 = vadd.f32 %v1766, %v2058
    %v2283 = vadd.f32 %v1767, %v2167
    %v2284 = vadd.f32 %v1768, %v1951
    %v2285 = vadd.f32 %v1769, %v2060
    %v2286 = vadd.f32 %v1770, %v2169
    %v2287 = vadd.f32 %v1771, %v1954
    %v2288 = vadd.f32 %v1772, %v2063
    %v2289 = vadd.f32 %v1773, %v2172
    %v2290 = vadd.f32 %v1774, %v1956
    %v2291 = vadd.f32 %v1775, %v2065
    %v2292 = vadd.f32 %v1776, %v2174
    %v2293 = vadd.f32 %v1777, %v1959
    %v2294 = vadd.f32 %v1778, %v2068
    %v2295 = vadd.f32 %v1779, %v2177
    %v2296 = vadd.f32 %v1780, %v1961
    %v2297 = vadd.f32 %v1781, %v2070
    %v2298 = vadd.f32 %v1782, %v2179
    %v2299 = vadd.f32 %v1783, %v1964
    %v2300 = vadd.f32 %v1784, %v2073
    %v2301 = vadd.f32 %v1785, %v2182
    %v2302 = vadd.f32 %v1786, %v1966
    %v2303 = vadd.f32 %v1787, %v2075
    %v2304 = vadd.f32 %v1788, %v2184
    %v2305 = vadd.f32 %v1789, %v1969
    %v2306 = vadd.f32 %v1790, %v2078
    %v2307 = vadd.f32 %v1791, %v2187
    %v2308 = vadd.f32 %v1792, %v1971
    %v2309 = vadd.f32 %v1793, %v2080
    %v2310 = vadd.f32 %v1794, %v2189
    %s2311 = scalar_lea.vmem [#allocation2], 288
    %v2312 = vld [vmem:[%s2311] sm:$0xff]
    %v2313 = vld [vmem:[%s2311 + $0x8] sm:$0xf]
    %v2314 = vld [vmem:[%s2311 + $0xc] sm:$0xff]
    %v2315 = vld [vmem:[%s2311 + $0x14] sm:$0xf]
    %v2316 = vld [vmem:[%s2311 + $0x18] sm:$0xff]
    %v2317 = vld [vmem:[%s2311 + $0x20] sm:$0xf]
    %v2318 = vld [vmem:[%s2311 + $0x24] sm:$0xff]
    %v2319 = vld [vmem:[%s2311 + $0x2c] sm:$0xf]
    %v2320 = vld [vmem:[%s2311 + $0x30] sm:$0xff]
    %v2321 = vld [vmem:[%s2311 + $0x38] sm:$0xf]
    %v2322 = vld [vmem:[%s2311 + $0x3c] sm:$0xff]
    %v2323 = vld [vmem:[%s2311 + $0x44] sm:$0xf]
    %v2326 = vunpack.c.l.b16 %v333
    %v2327 = vunpack.c.l.b16 %v334
    %v2328 = vpack.c.b16 %v2327, %v2326
    %v2341 = vunpack.c.l.b16 %v2312
    %v2342 = vunpack.c.h.b16 %v2312
    %v2343 = vunpack.c.l.b16 %v2313
    %v2344 = vunpack.c.l.b16 %v2314
    %v2345 = vunpack.c.h.b16 %v2314
    %v2346 = vunpack.c.l.b16 %v2315
    %v2347 = vunpack.c.l.b16 %v2316
    %v2348 = vunpack.c.h.b16 %v2316
    %v2349 = vunpack.c.l.b16 %v2317
    %v2350 = vunpack.c.l.b16 %v2318
    %v2351 = vunpack.c.h.b16 %v2318
    %v2352 = vunpack.c.l.b16 %v2319
    %v2353 = vunpack.c.l.b16 %v2320
    %v2354 = vunpack.c.h.b16 %v2320
    %v2355 = vunpack.c.l.b16 %v2321
    %v2356 = vunpack.c.l.b16 %v2322
    %v2357 = vunpack.c.h.b16 %v2322
    %v2358 = vunpack.c.l.b16 %v2323
    %v2359 = vpack.c.b16 %v2344, %v2341
    %v2360 = vpack.c.b16 %v2345, %v2342
    %v2361 = vpack.c.b16 %v2346, %v2343
    %v2362 = vpack.c.b16 %v2350, %v2347
    %v2363 = vpack.c.b16 %v2351, %v2348
    %v2364 = vpack.c.b16 %v2352, %v2349
    %v2365 = vpack.c.b16 %v2356, %v2353
    %v2366 = vpack.c.b16 %v2357, %v2354
    %v2367 = vpack.c.b16 %v2358, %v2355
    %v2378 = vsel %vm508, %v2328, 0
    %2380 = vmatpush.bf16.msra.mxu0 0
    %2381 = vmatpush.bf16.msra.mxu0 0
    %2382 = vmatpush.bf16.msra.mxu0 0
    %2383 = vmatpush.bf16.msra.mxu0 0
    %2384 = vmatpush.bf16.msra.mxu0 0
    %2385 = vmatpush.bf16.msra.mxu0 %v2365
    %2386 = vmatpush.bf16.msra.mxu0 %v2362
    %2387 = vmatpush.bf16.msra.mxu0 %v2359
    %2388 = vmatmul.bf16.gmra.mxu0 %v519
    %v2389 = vpop.f32.mrf.mxu0
    %v2390 = vadd.f32 0.0, %v2389
    %v2391 = vpop.f32.mrf.mxu0
    %v2392 = vadd.f32 0.0, %v2391
    %2393 = vmatmul.bf16.gmra.mxu0 %v522
    %v2394 = vpop.f32.mrf.mxu0
    %v2395 = vadd.f32 0.0, %v2394
    %v2396 = vpop.f32.mrf.mxu0
    %v2397 = vadd.f32 0.0, %v2396
    %2398 = vmatmul.bf16.gmra.mxu0 %v525
    %v2399 = vpop.f32.mrf.mxu0
    %v2400 = vadd.f32 0.0, %v2399
    %v2401 = vpop.f32.mrf.mxu0
    %v2402 = vadd.f32 0.0, %v2401
    %2403 = vmatmul.bf16.gmra.mxu0 %v528
    %v2404 = vpop.f32.mrf.mxu0
    %v2405 = vadd.f32 0.0, %v2404
    %v2406 = vpop.f32.mrf.mxu0
    %v2407 = vadd.f32 0.0, %v2406
    %2408 = vmatmul.bf16.gmra.mxu0 %v531
    %v2409 = vpop.f32.mrf.mxu0
    %v2410 = vadd.f32 0.0, %v2409
    %v2411 = vpop.f32.mrf.mxu0
    %v2412 = vadd.f32 0.0, %v2411
    %2413 = vmatmul.bf16.gmra.mxu0 %v534
    %v2414 = vpop.f32.mrf.mxu0
    %v2415 = vadd.f32 0.0, %v2414
    %v2416 = vpop.f32.mrf.mxu0
    %v2417 = vadd.f32 0.0, %v2416
    %2418 = vmatmul.bf16.gmra.mxu0 %v537
    %v2419 = vpop.f32.mrf.mxu0
    %v2420 = vadd.f32 0.0, %v2419
    %v2421 = vpop.f32.mrf.mxu0
    %v2422 = vadd.f32 0.0, %v2421
    %2423 = vmatmul.bf16.gmra.mxu0 %v540
    %v2424 = vpop.f32.mrf.mxu0
    %v2425 = vadd.f32 0.0, %v2424
    %v2426 = vpop.f32.mrf.mxu0
    %v2427 = vadd.f32 0.0, %v2426
    %2428 = vmatmul.bf16.gmra.mxu0 %v543
    %v2429 = vpop.f32.mrf.mxu0
    %v2430 = vadd.f32 0.0, %v2429
    %v2431 = vpop.f32.mrf.mxu0
    %v2432 = vadd.f32 0.0, %v2431
    %2433 = vmatmul.bf16.gmra.mxu0 %v546
    %v2434 = vpop.f32.mrf.mxu0
    %v2435 = vadd.f32 0.0, %v2434
    %v2436 = vpop.f32.mrf.mxu0
    %v2437 = vadd.f32 0.0, %v2436
    %2438 = vmatmul.bf16.gmra.mxu0 %v549
    %v2439 = vpop.f32.mrf.mxu0
    %v2440 = vadd.f32 0.0, %v2439
    %v2441 = vpop.f32.mrf.mxu0
    %v2442 = vadd.f32 0.0, %v2441
    %2443 = vmatmul.bf16.gmra.mxu0 %v552
    %v2444 = vpop.f32.mrf.mxu0
    %v2445 = vadd.f32 0.0, %v2444
    %v2446 = vpop.f32.mrf.mxu0
    %v2447 = vadd.f32 0.0, %v2446
    %2448 = vmatmul.bf16.gmra.mxu0 %v555
    %v2449 = vpop.f32.mrf.mxu0
    %v2450 = vadd.f32 0.0, %v2449
    %v2451 = vpop.f32.mrf.mxu0
    %v2452 = vadd.f32 0.0, %v2451
    %2453 = vmatmul.bf16.gmra.mxu0 %v558
    %v2454 = vpop.f32.mrf.mxu0
    %v2455 = vadd.f32 0.0, %v2454
    %v2456 = vpop.f32.mrf.mxu0
    %v2457 = vadd.f32 0.0, %v2456
    %2458 = vmatmul.bf16.gmra.mxu0 %v561
    %v2459 = vpop.f32.mrf.mxu0
    %v2460 = vadd.f32 0.0, %v2459
    %v2461 = vpop.f32.mrf.mxu0
    %v2462 = vadd.f32 0.0, %v2461
    %2463 = vmatmul.bf16.gmra.mxu0 %v564
    %v2464 = vpop.f32.mrf.mxu0
    %v2465 = vadd.f32 0.0, %v2464
    %v2466 = vpop.f32.mrf.mxu0
    %v2467 = vadd.f32 0.0, %v2466
    %2468 = vmatmul.bf16.gmra.mxu0 %v567
    %v2469 = vpop.f32.mrf.mxu0
    %v2470 = vadd.f32 0.0, %v2469
    %v2471 = vpop.f32.mrf.mxu0
    %v2472 = vadd.f32 0.0, %v2471
    %2473 = vmatmul.bf16.gmra.mxu0 %v1346
    %v2474 = vpop.f32.mrf.mxu0
    %v2475 = vadd.f32 0.0, %v2474
    %v2476 = vpop.f32.mrf.mxu0
    %v2477 = vadd.f32 0.0, %v2476
    %2478 = vmatmul.bf16.gmra.mxu0 %v1862
    %v2479 = vpop.f32.mrf.mxu0
    %v2480 = vadd.f32 0.0, %v2479
    %v2481 = vpop.f32.mrf.mxu0
    %v2482 = vadd.f32 0.0, %v2481
    %2483 = vmatmul.bf16.gmra.mxu0 %v2378
    %v2484 = vpop.f32.mrf.mxu0
    %v2485 = vadd.f32 0.0, %v2484
    %v2486 = vpop.f32.mrf.mxu0
    %v2487 = vadd.f32 0.0, %v2486
    %2488 = vdwg.mxu0
    %2489 = vmatpush.bf16.msra.mxu0 0
    %2490 = vmatpush.bf16.msra.mxu0 0
    %2491 = vmatpush.bf16.msra.mxu0 0
    %2492 = vmatpush.bf16.msra.mxu0 0
    %2493 = vmatpush.bf16.msra.mxu0 0
    %2494 = vmatpush.bf16.msra.mxu0 %v2366
    %2495 = vmatpush.bf16.msra.mxu0 %v2363
    %2496 = vmatpush.bf16.msra.mxu0 %v2360
    %2497 = vmatmul.bf16.gmra.mxu0 %v519
    %v2498 = vpop.f32.mrf.mxu0
    %v2499 = vadd.f32 0.0, %v2498
    %v2500 = vpop.f32.mrf.mxu0
    %v2501 = vadd.f32 0.0, %v2500
    %2502 = vmatmul.bf16.gmra.mxu0 %v522
    %v2503 = vpop.f32.mrf.mxu0
    %v2504 = vadd.f32 0.0, %v2503
    %v2505 = vpop.f32.mrf.mxu0
    %v2506 = vadd.f32 0.0, %v2505
    %2507 = vmatmul.bf16.gmra.mxu0 %v525
    %v2508 = vpop.f32.mrf.mxu0
    %v2509 = vadd.f32 0.0, %v2508
    %v2510 = vpop.f32.mrf.mxu0
    %v2511 = vadd.f32 0.0, %v2510
    %2512 = vmatmul.bf16.gmra.mxu0 %v528
    %v2513 = vpop.f32.mrf.mxu0
    %v2514 = vadd.f32 0.0, %v2513
    %v2515 = vpop.f32.mrf.mxu0
    %v2516 = vadd.f32 0.0, %v2515
    %2517 = vmatmul.bf16.gmra.mxu0 %v531
    %v2518 = vpop.f32.mrf.mxu0
    %v2519 = vadd.f32 0.0, %v2518
    %v2520 = vpop.f32.mrf.mxu0
    %v2521 = vadd.f32 0.0, %v2520
    %2522 = vmatmul.bf16.gmra.mxu0 %v534
    %v2523 = vpop.f32.mrf.mxu0
    %v2524 = vadd.f32 0.0, %v2523
    %v2525 = vpop.f32.mrf.mxu0
    %v2526 = vadd.f32 0.0, %v2525
    %2527 = vmatmul.bf16.gmra.mxu0 %v537
    %v2528 = vpop.f32.mrf.mxu0
    %v2529 = vadd.f32 0.0, %v2528
    %v2530 = vpop.f32.mrf.mxu0
    %v2531 = vadd.f32 0.0, %v2530
    %2532 = vmatmul.bf16.gmra.mxu0 %v540
    %v2533 = vpop.f32.mrf.mxu0
    %v2534 = vadd.f32 0.0, %v2533
    %v2535 = vpop.f32.mrf.mxu0
    %v2536 = vadd.f32 0.0, %v2535
    %2537 = vmatmul.bf16.gmra.mxu0 %v543
    %v2538 = vpop.f32.mrf.mxu0
    %v2539 = vadd.f32 0.0, %v2538
    %v2540 = vpop.f32.mrf.mxu0
    %v2541 = vadd.f32 0.0, %v2540
    %2542 = vmatmul.bf16.gmra.mxu0 %v546
    %v2543 = vpop.f32.mrf.mxu0
    %v2544 = vadd.f32 0.0, %v2543
    %v2545 = vpop.f32.mrf.mxu0
    %v2546 = vadd.f32 0.0, %v2545
    %2547 = vmatmul.bf16.gmra.mxu0 %v549
    %v2548 = vpop.f32.mrf.mxu0
    %v2549 = vadd.f32 0.0, %v2548
    %v2550 = vpop.f32.mrf.mxu0
    %v2551 = vadd.f32 0.0, %v2550
    %2552 = vmatmul.bf16.gmra.mxu0 %v552
    %v2553 = vpop.f32.mrf.mxu0
    %v2554 = vadd.f32 0.0, %v2553
    %v2555 = vpop.f32.mrf.mxu0
    %v2556 = vadd.f32 0.0, %v2555
    %2557 = vmatmul.bf16.gmra.mxu0 %v555
    %v2558 = vpop.f32.mrf.mxu0
    %v2559 = vadd.f32 0.0, %v2558
    %v2560 = vpop.f32.mrf.mxu0
    %v2561 = vadd.f32 0.0, %v2560
    %2562 = vmatmul.bf16.gmra.mxu0 %v558
    %v2563 = vpop.f32.mrf.mxu0
    %v2564 = vadd.f32 0.0, %v2563
    %v2565 = vpop.f32.mrf.mxu0
    %v2566 = vadd.f32 0.0, %v2565
    %2567 = vmatmul.bf16.gmra.mxu0 %v561
    %v2568 = vpop.f32.mrf.mxu0
    %v2569 = vadd.f32 0.0, %v2568
    %v2570 = vpop.f32.mrf.mxu0
    %v2571 = vadd.f32 0.0, %v2570
    %2572 = vmatmul.bf16.gmra.mxu0 %v564
    %v2573 = vpop.f32.mrf.mxu0
    %v2574 = vadd.f32 0.0, %v2573
    %v2575 = vpop.f32.mrf.mxu0
    %v2576 = vadd.f32 0.0, %v2575
    %2577 = vmatmul.bf16.gmra.mxu0 %v567
    %v2578 = vpop.f32.mrf.mxu0
    %v2579 = vadd.f32 0.0, %v2578
    %v2580 = vpop.f32.mrf.mxu0
    %v2581 = vadd.f32 0.0, %v2580
    %2582 = vmatmul.bf16.gmra.mxu0 %v1346
    %v2583 = vpop.f32.mrf.mxu0
    %v2584 = vadd.f32 0.0, %v2583
    %v2585 = vpop.f32.mrf.mxu0
    %v2586 = vadd.f32 0.0, %v2585
    %2587 = vmatmul.bf16.gmra.mxu0 %v1862
    %v2588 = vpop.f32.mrf.mxu0
    %v2589 = vadd.f32 0.0, %v2588
    %v2590 = vpop.f32.mrf.mxu0
    %v2591 = vadd.f32 0.0, %v2590
    %2592 = vmatmul.bf16.gmra.mxu0 %v2378
    %v2593 = vpop.f32.mrf.mxu0
    %v2594 = vadd.f32 0.0, %v2593
    %v2595 = vpop.f32.mrf.mxu0
    %v2596 = vadd.f32 0.0, %v2595
    %2597 = vdwg.mxu0
    %2598 = vmatpush.bf16.msra.mxu0 0
    %2599 = vmatpush.bf16.msra.mxu0 0
    %2600 = vmatpush.bf16.msra.mxu0 0
    %2601 = vmatpush.bf16.msra.mxu0 0
    %2602 = vmatpush.bf16.msra.mxu0 0
    %2603 = vmatpush.bf16.msra.mxu0 %v2367
    %2604 = vmatpush.bf16.msra.mxu0 %v2364
    %2605 = vmatpush.bf16.msra.mxu0 %v2361
    %2606 = vmatmul.bf16.gmra.mxu0 %v519
    %v2607 = vpop.f32.mrf.mxu0
    %v2608 = vadd.f32 0.0, %v2607
    %v2609 = vpop.f32.mrf.mxu0
    %v2610 = vadd.f32 0.0, %v2609
    %2611 = vmatmul.bf16.gmra.mxu0 %v522
    %v2612 = vpop.f32.mrf.mxu0
    %v2613 = vadd.f32 0.0, %v2612
    %v2614 = vpop.f32.mrf.mxu0
    %v2615 = vadd.f32 0.0, %v2614
    %2616 = vmatmul.bf16.gmra.mxu0 %v525
    %v2617 = vpop.f32.mrf.mxu0
    %v2618 = vadd.f32 0.0, %v2617
    %v2619 = vpop.f32.mrf.mxu0
    %v2620 = vadd.f32 0.0, %v2619
    %2621 = vmatmul.bf16.gmra.mxu0 %v528
    %v2622 = vpop.f32.mrf.mxu0
    %v2623 = vadd.f32 0.0, %v2622
    %v2624 = vpop.f32.mrf.mxu0
    %v2625 = vadd.f32 0.0, %v2624
    %2626 = vmatmul.bf16.gmra.mxu0 %v531
    %v2627 = vpop.f32.mrf.mxu0
    %v2628 = vadd.f32 0.0, %v2627
    %v2629 = vpop.f32.mrf.mxu0
    %v2630 = vadd.f32 0.0, %v2629
    %2631 = vmatmul.bf16.gmra.mxu0 %v534
    %v2632 = vpop.f32.mrf.mxu0
    %v2633 = vadd.f32 0.0, %v2632
    %v2634 = vpop.f32.mrf.mxu0
    %v2635 = vadd.f32 0.0, %v2634
    %2636 = vmatmul.bf16.gmra.mxu0 %v537
    %v2637 = vpop.f32.mrf.mxu0
    %v2638 = vadd.f32 0.0, %v2637
    %v2639 = vpop.f32.mrf.mxu0
    %v2640 = vadd.f32 0.0, %v2639
    %2641 = vmatmul.bf16.gmra.mxu0 %v540
    %v2642 = vpop.f32.mrf.mxu0
    %v2643 = vadd.f32 0.0, %v2642
    %v2644 = vpop.f32.mrf.mxu0
    %v2645 = vadd.f32 0.0, %v2644
    %2646 = vmatmul.bf16.gmra.mxu0 %v543
    %v2647 = vpop.f32.mrf.mxu0
    %v2648 = vadd.f32 0.0, %v2647
    %v2649 = vpop.f32.mrf.mxu0
    %v2650 = vadd.f32 0.0, %v2649
    %2651 = vmatmul.bf16.gmra.mxu0 %v546
    %v2652 = vpop.f32.mrf.mxu0
    %v2653 = vadd.f32 0.0, %v2652
    %v2654 = vpop.f32.mrf.mxu0
    %v2655 = vadd.f32 0.0, %v2654
    %2656 = vmatmul.bf16.gmra.mxu0 %v549
    %v2657 = vpop.f32.mrf.mxu0
    %v2658 = vadd.f32 0.0, %v2657
    %v2659 = vpop.f32.mrf.mxu0
    %v2660 = vadd.f32 0.0, %v2659
    %2661 = vmatmul.bf16.gmra.mxu0 %v552
    %v2662 = vpop.f32.mrf.mxu0
    %v2663 = vadd.f32 0.0, %v2662
    %v2664 = vpop.f32.mrf.mxu0
    %v2665 = vadd.f32 0.0, %v2664
    %2666 = vmatmul.bf16.gmra.mxu0 %v555
    %v2667 = vpop.f32.mrf.mxu0
    %v2668 = vadd.f32 0.0, %v2667
    %v2669 = vpop.f32.mrf.mxu0
    %v2670 = vadd.f32 0.0, %v2669
    %2671 = vmatmul.bf16.gmra.mxu0 %v558
    %v2672 = vpop.f32.mrf.mxu0
    %v2673 = vadd.f32 0.0, %v2672
    %v2674 = vpop.f32.mrf.mxu0
    %v2675 = vadd.f32 0.0, %v2674
    %2676 = vmatmul.bf16.gmra.mxu0 %v561
    %v2677 = vpop.f32.mrf.mxu0
    %v2678 = vadd.f32 0.0, %v2677
    %v2679 = vpop.f32.mrf.mxu0
    %v2680 = vadd.f32 0.0, %v2679
    %2681 = vmatmul.bf16.gmra.mxu0 %v564
    %v2682 = vpop.f32.mrf.mxu0
    %v2683 = vadd.f32 0.0, %v2682
    %v2684 = vpop.f32.mrf.mxu0
    %v2685 = vadd.f32 0.0, %v2684
    %2686 = vmatmul.bf16.gmra.mxu0 %v567
    %v2687 = vpop.f32.mrf.mxu0
    %v2688 = vadd.f32 0.0, %v2687
    %v2689 = vpop.f32.mrf.mxu0
    %v2690 = vadd.f32 0.0, %v2689
    %2691 = vmatmul.bf16.gmra.mxu0 %v1346
    %v2692 = vpop.f32.mrf.mxu0
    %v2693 = vadd.f32 0.0, %v2692
    %v2694 = vpop.f32.mrf.mxu0
    %v2695 = vadd.f32 0.0, %v2694
    %2696 = vmatmul.bf16.gmra.mxu0 %v1862
    %v2697 = vpop.f32.mrf.mxu0
    %v2698 = vadd.f32 0.0, %v2697
    %v2699 = vpop.f32.mrf.mxu0
    %v2700 = vadd.f32 0.0, %v2699
    %2701 = vmatmul.bf16.gmra.mxu0 %v2378
    %v2702 = vpop.f32.mrf.mxu0
    %v2703 = vadd.f32 0.0, %v2702
    %v2704 = vpop.f32.mrf.mxu0
    %v2705 = vadd.f32 0.0, %v2704
    %2706 = vdwg.mxu0
    %v2707 = vadd.f32 %v2191, %v2390
    %v2708 = vadd.f32 %v2192, %v2499
    %v2709 = vadd.f32 %v2193, %v2608
    %v2710 = vadd.f32 %v2194, %v2392
    %v2711 = vadd.f32 %v2195, %v2501
    %v2712 = vadd.f32 %v2196, %v2610
    %v2713 = vadd.f32 %v2197, %v2395
    %v2714 = vadd.f32 %v2198, %v2504
    %v2715 = vadd.f32 %v2199, %v2613
    %v2716 = vadd.f32 %v2200, %v2397
    %v2717 = vadd.f32 %v2201, %v2506
    %v2718 = vadd.f32 %v2202, %v2615
    %v2719 = vadd.f32 %v2203, %v2400
    %v2720 = vadd.f32 %v2204, %v2509
    %v2721 = vadd.f32 %v2205, %v2618
    %v2722 = vadd.f32 %v2206, %v2402
    %v2723 = vadd.f32 %v2207, %v2511
    %v2724 = vadd.f32 %v2208, %v2620
    %v2725 = vadd.f32 %v2209, %v2405
    %v2726 = vadd.f32 %v2210, %v2514
    %v2727 = vadd.f32 %v2211, %v2623
    %v2728 = vadd.f32 %v2212, %v2407
    %v2729 = vadd.f32 %v2213, %v2516
    %v2730 = vadd.f32 %v2214, %v2625
    %v2731 = vadd.f32 %v2215, %v2410
    %v2732 = vadd.f32 %v2216, %v2519
    %v2733 = vadd.f32 %v2217, %v2628
    %v2734 = vadd.f32 %v2218, %v2412
    %v2735 = vadd.f32 %v2219, %v2521
    %v2736 = vadd.f32 %v2220, %v2630
    %v2737 = vadd.f32 %v2221, %v2415
    %v2738 = vadd.f32 %v2222, %v2524
    %v2739 = vadd.f32 %v2223, %v2633
    %v2740 = vadd.f32 %v2224, %v2417
    %v2741 = vadd.f32 %v2225, %v2526
    %v2742 = vadd.f32 %v2226, %v2635
    %v2743 = vadd.f32 %v2227, %v2420
    %v2744 = vadd.f32 %v2228, %v2529
    %v2745 = vadd.f32 %v2229, %v2638
    %v2746 = vadd.f32 %v2230, %v2422
    %v2747 = vadd.f32 %v2231, %v2531
    %v2748 = vadd.f32 %v2232, %v2640
    %v2749 = vadd.f32 %v2233, %v2425
    %v2750 = vadd.f32 %v2234, %v2534
    %v2751 = vadd.f32 %v2235, %v2643
    %v2752 = vadd.f32 %v2236, %v2427
    %v2753 = vadd.f32 %v2237, %v2536
    %v2754 = vadd.f32 %v2238, %v2645
    %v2755 = vadd.f32 %v2239, %v2430
    %v2756 = vadd.f32 %v2240, %v2539
    %v2757 = vadd.f32 %v2241, %v2648
    %v2758 = vadd.f32 %v2242, %v2432
    %v2759 = vadd.f32 %v2243, %v2541
    %v2760 = vadd.f32 %v2244, %v2650
    %v2761 = vadd.f32 %v2245, %v2435
    %v2762 = vadd.f32 %v2246, %v2544
    %v2763 = vadd.f32 %v2247, %v2653
    %v2764 = vadd.f32 %v2248, %v2437
    %v2765 = vadd.f32 %v2249, %v2546
    %v2766 = vadd.f32 %v2250, %v2655
    %v2767 = vadd.f32 %v2251, %v2440
    %v2768 = vadd.f32 %v2252, %v2549
    %v2769 = vadd.f32 %v2253, %v2658
    %v2770 = vadd.f32 %v2254, %v2442
    %v2771 = vadd.f32 %v2255, %v2551
    %v2772 = vadd.f32 %v2256, %v2660
    %v2773 = vadd.f32 %v2257, %v2445
    %v2774 = vadd.f32 %v2258, %v2554
    %v2775 = vadd.f32 %v2259, %v2663
    %v2776 = vadd.f32 %v2260, %v2447
    %v2777 = vadd.f32 %v2261, %v2556
    %v2778 = vadd.f32 %v2262, %v2665
    %v2779 = vadd.f32 %v2263, %v2450
    %v2780 = vadd.f32 %v2264, %v2559
    %v2781 = vadd.f32 %v2265, %v2668
    %v2782 = vadd.f32 %v2266, %v2452
    %v2783 = vadd.f32 %v2267, %v2561
    %v2784 = vadd.f32 %v2268, %v2670
    %v2785 = vadd.f32 %v2269, %v2455
    %v2786 = vadd.f32 %v2270, %v2564
    %v2787 = vadd.f32 %v2271, %v2673
    %v2788 = vadd.f32 %v2272, %v2457
    %v2789 = vadd.f32 %v2273, %v2566
    %v2790 = vadd.f32 %v2274, %v2675
    %v2791 = vadd.f32 %v2275, %v2460
    %v2792 = vadd.f32 %v2276, %v2569
    %v2793 = vadd.f32 %v2277, %v2678
    %v2794 = vadd.f32 %v2278, %v2462
    %v2795 = vadd.f32 %v2279, %v2571
    %v2796 = vadd.f32 %v2280, %v2680
    %v2797 = vadd.f32 %v2281, %v2465
    %v2798 = vadd.f32 %v2282, %v2574
    %v2799 = vadd.f32 %v2283, %v2683
    %v2800 = vadd.f32 %v2284, %v2467
    %v2801 = vadd.f32 %v2285, %v2576
    %v2802 = vadd.f32 %v2286, %v2685
    %v2803 = vadd.f32 %v2287, %v2470
    %v2804 = vadd.f32 %v2288, %v2579
    %v2805 = vadd.f32 %v2289, %v2688
    %v2806 = vadd.f32 %v2290, %v2472
    %v2807 = vadd.f32 %v2291, %v2581
    %v2808 = vadd.f32 %v2292, %v2690
    %v2809 = vadd.f32 %v2293, %v2475
    %v2810 = vadd.f32 %v2294, %v2584
    %v2811 = vadd.f32 %v2295, %v2693
    %v2812 = vadd.f32 %v2296, %v2477
    %v2813 = vadd.f32 %v2297, %v2586
    %v2814 = vadd.f32 %v2298, %v2695
    %v2815 = vadd.f32 %v2299, %v2480
    %v2816 = vadd.f32 %v2300, %v2589
    %v2817 = vadd.f32 %v2301, %v2698
    %v2818 = vadd.f32 %v2302, %v2482
    %v2819 = vadd.f32 %v2303, %v2591
    %v2820 = vadd.f32 %v2304, %v2700
    %v2821 = vadd.f32 %v2305, %v2485
    %v2822 = vadd.f32 %v2306, %v2594
    %v2823 = vadd.f32 %v2307, %v2703
    %v2824 = vadd.f32 %v2308, %v2487
    %v2825 = vadd.f32 %v2309, %v2596
    %v2826 = vadd.f32 %v2310, %v2705
    %v2827 = vld [vmem:[%s4] sm:$0x7]
    %v2829 = vperm.slane %v2827, 0
    %v2830 = vperm.slane %v2827, 1
    %v2831 = vperm.slane %v2827, 2
    %v2835 = vadd.f32 %v2707, %v2829
    %v2836 = vadd.f32 %v2708, %v2830
    %v2837 = vadd.f32 %v2709, %v2831
    %v2838 = vadd.f32 %v2710, %v2829
    %v2839 = vadd.f32 %v2711, %v2830
    %v2840 = vadd.f32 %v2712, %v2831
    %v2841 = vadd.f32 %v2713, %v2829
    %v2842 = vadd.f32 %v2714, %v2830
    %v2843 = vadd.f32 %v2715, %v2831
    %v2844 = vadd.f32 %v2716, %v2829
    %v2845 = vadd.f32 %v2717, %v2830
    %v2846 = vadd.f32 %v2718, %v2831
    %v2847 = vadd.f32 %v2719, %v2829
    %v2848 = vadd.f32 %v2720, %v2830
    %v2849 = vadd.f32 %v2721, %v2831
    %v2850 = vadd.f32 %v2722, %v2829
    %v2851 = vadd.f32 %v2723, %v2830
    %v2852 = vadd.f32 %v2724, %v2831
    %v2853 = vadd.f32 %v2725, %v2829
    %v2854 = vadd.f32 %v2726, %v2830
    %v2855 = vadd.f32 %v2727, %v2831
    %v2856 = vadd.f32 %v2728, %v2829
    %v2857 = vadd.f32 %v2729, %v2830
    %v2858 = vadd.f32 %v2730, %v2831
    %v2859 = vadd.f32 %v2731, %v2829
    %v2860 = vadd.f32 %v2732, %v2830
    %v2861 = vadd.f32 %v2733, %v2831
    %v2862 = vadd.f32 %v2734, %v2829
    %v2863 = vadd.f32 %v2735, %v2830
    %v2864 = vadd.f32 %v2736, %v2831
    %v2865 = vadd.f32 %v2737, %v2829
    %v2866 = vadd.f32 %v2738, %v2830
    %v2867 = vadd.f32 %v2739, %v2831
    %v2868 = vadd.f32 %v2740, %v2829
    %v2869 = vadd.f32 %v2741, %v2830
    %v2870 = vadd.f32 %v2742, %v2831
    %v2871 = vadd.f32 %v2743, %v2829
    %v2872 = vadd.f32 %v2744, %v2830
    %v2873 = vadd.f32 %v2745, %v2831
    %v2874 = vadd.f32 %v2746, %v2829
    %v2875 = vadd.f32 %v2747, %v2830
    %v2876 = vadd.f32 %v2748, %v2831
    %v2877 = vadd.f32 %v2749, %v2829
    %v2878 = vadd.f32 %v2750, %v2830
    %v2879 = vadd.f32 %v2751, %v2831
    %v2880 = vadd.f32 %v2752, %v2829
    %v2881 = vadd.f32 %v2753, %v2830
    %v2882 = vadd.f32 %v2754, %v2831
    %v2883 = vadd.f32 %v2755, %v2829
    %v2884 = vadd.f32 %v2756, %v2830
    %v2885 = vadd.f32 %v2757, %v2831
    %v2886 = vadd.f32 %v2758, %v2829
    %v2887 = vadd.f32 %v2759, %v2830
    %v2888 = vadd.f32 %v2760, %v2831
    %v2889 = vadd.f32 %v2761, %v2829
    %v2890 = vadd.f32 %v2762, %v2830
    %v2891 = vadd.f32 %v2763, %v2831
    %v2892 = vadd.f32 %v2764, %v2829
    %v2893 = vadd.f32 %v2765, %v2830
    %v2894 = vadd.f32 %v2766, %v2831
    %v2895 = vadd.f32 %v2767, %v2829
    %v2896 = vadd.f32 %v2768, %v2830
    %v2897 = vadd.f32 %v2769, %v2831
    %v2898 = vadd.f32 %v2770, %v2829
    %v2899 = vadd.f32 %v2771, %v2830
    %v2900 = vadd.f32 %v2772, %v2831
    %v2901 = vadd.f32 %v2773, %v2829
    %v2902 = vadd.f32 %v2774, %v2830
    %v2903 = vadd.f32 %v2775, %v2831
    %v2904 = vadd.f32 %v2776, %v2829
    %v2905 = vadd.f32 %v2777, %v2830
    %v2906 = vadd.f32 %v2778, %v2831
    %v2907 = vadd.f32 %v2779, %v2829
    %v2908 = vadd.f32 %v2780, %v2830
    %v2909 = vadd.f32 %v2781, %v2831
    %v2910 = vadd.f32 %v2782, %v2829
    %v2911 = vadd.f32 %v2783, %v2830
    %v2912 = vadd.f32 %v2784, %v2831
    %v2913 = vadd.f32 %v2785, %v2829
    %v2914 = vadd.f32 %v2786, %v2830
    %v2915 = vadd.f32 %v2787, %v2831
    %v2916 = vadd.f32 %v2788, %v2829
    %v2917 = vadd.f32 %v2789, %v2830
    %v2918 = vadd.f32 %v2790, %v2831
    %v2919 = vadd.f32 %v2791, %v2829
    %v2920 = vadd.f32 %v2792, %v2830
    %v2921 = vadd.f32 %v2793, %v2831
    %v2922 = vadd.f32 %v2794, %v2829
    %v2923 = vadd.f32 %v2795, %v2830
    %v2924 = vadd.f32 %v2796, %v2831
    %v2925 = vadd.f32 %v2797, %v2829
    %v2926 = vadd.f32 %v2798, %v2830
    %v2927 = vadd.f32 %v2799, %v2831
    %v2928 = vadd.f32 %v2800, %v2829
    %v2929 = vadd.f32 %v2801, %v2830
    %v2930 = vadd.f32 %v2802, %v2831
    %v2931 = vadd.f32 %v2803, %v2829
    %v2932 = vadd.f32 %v2804, %v2830
    %v2933 = vadd.f32 %v2805, %v2831
    %v2934 = vadd.f32 %v2806, %v2829
    %v2935 = vadd.f32 %v2807, %v2830
    %v2936 = vadd.f32 %v2808, %v2831
    %v2937 = vadd.f32 %v2809, %v2829
    %v2938 = vadd.f32 %v2810, %v2830
    %v2939 = vadd.f32 %v2811, %v2831
    %v2940 = vadd.f32 %v2812, %v2829
    %v2941 = vadd.f32 %v2813, %v2830
    %v2942 = vadd.f32 %v2814, %v2831
    %v2943 = vadd.f32 %v2815, %v2829
    %v2944 = vadd.f32 %v2816, %v2830
    %v2945 = vadd.f32 %v2817, %v2831
    %v2946 = vadd.f32 %v2818, %v2829
    %v2947 = vadd.f32 %v2819, %v2830
    %v2948 = vadd.f32 %v2820, %v2831
    %v2949 = vadd.f32 %v2821, %v2829
    %v2950 = vadd.f32 %v2822, %v2830
    %v2951 = vadd.f32 %v2823, %v2831
    %v2952 = vadd.f32 %v2824, %v2829
    %v2953 = vadd.f32 %v2825, %v2830
    %v2954 = vadd.f32 %v2826, %v2831
    %vm2955 = vcmp.ge.f32.partialorder %v2835, 0.0
    %vm2956 = vcmp.ge.f32.partialorder %v2836, 0.0
    %vm2957 = vcmp.ge.f32.partialorder %v2837, 0.0
    %vm2958 = vcmp.ge.f32.partialorder %v2838, 0.0
    %vm2959 = vcmp.ge.f32.partialorder %v2839, 0.0
    %vm2960 = vcmp.ge.f32.partialorder %v2840, 0.0
    %vm2961 = vcmp.ge.f32.partialorder %v2841, 0.0
    %vm2962 = vcmp.ge.f32.partialorder %v2842, 0.0
    %vm2963 = vcmp.ge.f32.partialorder %v2843, 0.0
    %vm2964 = vcmp.ge.f32.partialorder %v2844, 0.0
    %vm2965 = vcmp.ge.f32.partialorder %v2845, 0.0
    %vm2966 = vcmp.ge.f32.partialorder %v2846, 0.0
    %vm2967 = vcmp.ge.f32.partialorder %v2847, 0.0
    %vm2968 = vcmp.ge.f32.partialorder %v2848, 0.0
    %vm2969 = vcmp.ge.f32.partialorder %v2849, 0.0
    %vm2970 = vcmp.ge.f32.partialorder %v2850, 0.0
    %vm2971 = vcmp.ge.f32.partialorder %v2851, 0.0
    %vm2972 = vcmp.ge.f32.partialorder %v2852, 0.0
    %vm2973 = vcmp.ge.f32.partialorder %v2853, 0.0
    %vm2974 = vcmp.ge.f32.partialorder %v2854, 0.0
    %vm2975 = vcmp.ge.f32.partialorder %v2855, 0.0
    %vm2976 = vcmp.ge.f32.partialorder %v2856, 0.0
    %vm2977 = vcmp.ge.f32.partialorder %v2857, 0.0
    %vm2978 = vcmp.ge.f32.partialorder %v2858, 0.0
    %vm2979 = vcmp.ge.f32.partialorder %v2859, 0.0
    %vm2980 = vcmp.ge.f32.partialorder %v2860, 0.0
    %vm2981 = vcmp.ge.f32.partialorder %v2861, 0.0
    %vm2982 = vcmp.ge.f32.partialorder %v2862, 0.0
    %vm2983 = vcmp.ge.f32.partialorder %v2863, 0.0
    %vm2984 = vcmp.ge.f32.partialorder %v2864, 0.0
    %vm2985 = vcmp.ge.f32.partialorder %v2865, 0.0
    %vm2986 = vcmp.ge.f32.partialorder %v2866, 0.0
    %vm2987 = vcmp.ge.f32.partialorder %v2867, 0.0
    %vm2988 = vcmp.ge.f32.partialorder %v2868, 0.0
    %vm2989 = vcmp.ge.f32.partialorder %v2869, 0.0
    %vm2990 = vcmp.ge.f32.partialorder %v2870, 0.0
    %vm2991 = vcmp.ge.f32.partialorder %v2871, 0.0
    %vm2992 = vcmp.ge.f32.partialorder %v2872, 0.0
    %vm2993 = vcmp.ge.f32.partialorder %v2873, 0.0
    %vm2994 = vcmp.ge.f32.partialorder %v2874, 0.0
    %vm2995 = vcmp.ge.f32.partialorder %v2875, 0.0
    %vm2996 = vcmp.ge.f32.partialorder %v2876, 0.0
    %vm2997 = vcmp.ge.f32.partialorder %v2877, 0.0
    %vm2998 = vcmp.ge.f32.partialorder %v2878, 0.0
    %vm2999 = vcmp.ge.f32.partialorder %v2879, 0.0
    %vm3000 = vcmp.ge.f32.partialorder %v2880, 0.0
    %vm3001 = vcmp.ge.f32.partialorder %v2881, 0.0
    %vm3002 = vcmp.ge.f32.partialorder %v2882, 0.0
    %vm3003 = vcmp.ge.f32.partialorder %v2883, 0.0
    %vm3004 = vcmp.ge.f32.partialorder %v2884, 0.0
    %vm3005 = vcmp.ge.f32.partialorder %v2885, 0.0
    %vm3006 = vcmp.ge.f32.partialorder %v2886, 0.0
    %vm3007 = vcmp.ge.f32.partialorder %v2887, 0.0
    %vm3008 = vcmp.ge.f32.partialorder %v2888, 0.0
    %vm3009 = vcmp.ge.f32.partialorder %v2889, 0.0
    %vm3010 = vcmp.ge.f32.partialorder %v2890, 0.0
    %vm3011 = vcmp.ge.f32.partialorder %v2891, 0.0
    %vm3012 = vcmp.ge.f32.partialorder %v2892, 0.0
    %vm3013 = vcmp.ge.f32.partialorder %v2893, 0.0
    %vm3014 = vcmp.ge.f32.partialorder %v2894, 0.0
    %vm3015 = vcmp.ge.f32.partialorder %v2895, 0.0
    %vm3016 = vcmp.ge.f32.partialorder %v2896, 0.0
    %vm3017 = vcmp.ge.f32.partialorder %v2897, 0.0
    %vm3018 = vcmp.ge.f32.partialorder %v2898, 0.0
    %vm3019 = vcmp.ge.f32.partialorder %v2899, 0.0
    %vm3020 = vcmp.ge.f32.partialorder %v2900, 0.0
    %vm3021 = vcmp.ge.f32.partialorder %v2901, 0.0
    %vm3022 = vcmp.ge.f32.partialorder %v2902, 0.0
    %vm3023 = vcmp.ge.f32.partialorder %v2903, 0.0
    %vm3024 = vcmp.ge.f32.partialorder %v2904, 0.0
    %vm3025 = vcmp.ge.f32.partialorder %v2905, 0.0
    %vm3026 = vcmp.ge.f32.partialorder %v2906, 0.0
    %vm3027 = vcmp.ge.f32.partialorder %v2907, 0.0
    %vm3028 = vcmp.ge.f32.partialorder %v2908, 0.0
    %vm3029 = vcmp.ge.f32.partialorder %v2909, 0.0
    %vm3030 = vcmp.ge.f32.partialorder %v2910, 0.0
    %vm3031 = vcmp.ge.f32.partialorder %v2911, 0.0
    %vm3032 = vcmp.ge.f32.partialorder %v2912, 0.0
    %vm3033 = vcmp.ge.f32.partialorder %v2913, 0.0
    %vm3034 = vcmp.ge.f32.partialorder %v2914, 0.0
    %vm3035 = vcmp.ge.f32.partialorder %v2915, 0.0
    %vm3036 = vcmp.ge.f32.partialorder %v2916, 0.0
    %vm3037 = vcmp.ge.f32.partialorder %v2917, 0.0
    %vm3038 = vcmp.ge.f32.partialorder %v2918, 0.0
    %vm3039 = vcmp.ge.f32.partialorder %v2919, 0.0
    %vm3040 = vcmp.ge.f32.partialorder %v2920, 0.0
    %vm3041 = vcmp.ge.f32.partialorder %v2921, 0.0
    %vm3042 = vcmp.ge.f32.partialorder %v2922, 0.0
    %vm3043 = vcmp.ge.f32.partialorder %v2923, 0.0
    %vm3044 = vcmp.ge.f32.partialorder %v2924, 0.0
    %vm3045 = vcmp.ge.f32.partialorder %v2925, 0.0
    %vm3046 = vcmp.ge.f32.partialorder %v2926, 0.0
    %vm3047 = vcmp.ge.f32.partialorder %v2927, 0.0
    %vm3048 = vcmp.ge.f32.partialorder %v2928, 0.0
    %vm3049 = vcmp.ge.f32.partialorder %v2929, 0.0
    %vm3050 = vcmp.ge.f32.partialorder %v2930, 0.0
    %vm3051 = vcmp.ge.f32.partialorder %v2931, 0.0
    %vm3052 = vcmp.ge.f32.partialorder %v2932, 0.0
    %vm3053 = vcmp.ge.f32.partialorder %v2933, 0.0
    %vm3054 = vcmp.ge.f32.partialorder %v2934, 0.0
    %vm3055 = vcmp.ge.f32.partialorder %v2935, 0.0
    %vm3056 = vcmp.ge.f32.partialorder %v2936, 0.0
    %vm3057 = vcmp.ge.f32.partialorder %v2937, 0.0
    %vm3058 = vcmp.ge.f32.partialorder %v2938, 0.0
    %vm3059 = vcmp.ge.f32.partialorder %v2939, 0.0
    %vm3060 = vcmp.ge.f32.partialorder %v2940, 0.0
    %vm3061 = vcmp.ge.f32.partialorder %v2941, 0.0
    %vm3062 = vcmp.ge.f32.partialorder %v2942, 0.0
    %vm3063 = vcmp.ge.f32.partialorder %v2943, 0.0
    %vm3064 = vcmp.ge.f32.partialorder %v2944, 0.0
    %vm3065 = vcmp.ge.f32.partialorder %v2945, 0.0
    %vm3066 = vcmp.ge.f32.partialorder %v2946, 0.0
    %vm3067 = vcmp.ge.f32.partialorder %v2947, 0.0
    %vm3068 = vcmp.ge.f32.partialorder %v2948, 0.0
    %vm3069 = vcmp.ge.f32.partialorder %v2949, 0.0
    %vm3070 = vcmp.ge.f32.partialorder %v2950, 0.0
    %vm3071 = vcmp.ge.f32.partialorder %v2951, 0.0
    %vm3072 = vcmp.ge.f32.partialorder %v2952, 0.0
    %vm3073 = vcmp.ge.f32.partialorder %v2953, 0.0
    %vm3074 = vcmp.ge.f32.partialorder %v2954, 0.0
    %v3075 = vmul.f32 %v2835, 0.3
    %v3076 = vmul.f32 %v2836, 0.3
    %v3077 = vmul.f32 %v2837, 0.3
    %v3078 = vmul.f32 %v2838, 0.3
    %v3079 = vmul.f32 %v2839, 0.3
    %v3080 = vmul.f32 %v2840, 0.3
    %v3081 = vmul.f32 %v2841, 0.3
    %v3082 = vmul.f32 %v2842, 0.3
    %v3083 = vmul.f32 %v2843, 0.3
    %v3084 = vmul.f32 %v2844, 0.3
    %v3085 = vmul.f32 %v2845, 0.3
    %v3086 = vmul.f32 %v2846, 0.3
    %v3087 = vmul.f32 %v2847, 0.3
    %v3088 = vmul.f32 %v2848, 0.3
    %v3089 = vmul.f32 %v2849, 0.3
    %v3090 = vmul.f32 %v2850, 0.3
    %v3091 = vmul.f32 %v2851, 0.3
    %v3092 = vmul.f32 %v2852, 0.3
    %v3093 = vmul.f32 %v2853, 0.3
    %v3094 = vmul.f32 %v2854, 0.3
    %v3095 = vmul.f32 %v2855, 0.3
    %v3096 = vmul.f32 %v2856, 0.3
    %v3097 = vmul.f32 %v2857, 0.3
    %v3098 = vmul.f32 %v2858, 0.3
    %v3099 = vmul.f32 %v2859, 0.3
    %v3100 = vmul.f32 %v2860, 0.3
    %v3101 = vmul.f32 %v2861, 0.3
    %v3102 = vmul.f32 %v2862, 0.3
    %v3103 = vmul.f32 %v2863, 0.3
    %v3104 = vmul.f32 %v2864, 0.3
    %v3105 = vmul.f32 %v2865, 0.3
    %v3106 = vmul.f32 %v2866, 0.3
    %v3107 = vmul.f32 %v2867, 0.3
    %v3108 = vmul.f32 %v2868, 0.3
    %v3109 = vmul.f32 %v2869, 0.3
    %v3110 = vmul.f32 %v2870, 0.3
    %v3111 = vmul.f32 %v2871, 0.3
    %v3112 = vmul.f32 %v2872, 0.3
    %v3113 = vmul.f32 %v2873, 0.3
    %v3114 = vmul.f32 %v2874, 0.3
    %v3115 = vmul.f32 %v2875, 0.3
    %v3116 = vmul.f32 %v2876, 0.3
    %v3117 = vmul.f32 %v2877, 0.3
    %v3118 = vmul.f32 %v2878, 0.3
    %v3119 = vmul.f32 %v2879, 0.3
    %v3120 = vmul.f32 %v2880, 0.3
    %v3121 = vmul.f32 %v2881, 0.3
    %v3122 = vmul.f32 %v2882, 0.3
    %v3123 = vmul.f32 %v2883, 0.3
    %v3124 = vmul.f32 %v2884, 0.3
    %v3125 = vmul.f32 %v2885, 0.3
    %v3126 = vmul.f32 %v2886, 0.3
    %v3127 = vmul.f32 %v2887, 0.3
    %v3128 = vmul.f32 %v2888, 0.3
    %v3129 = vmul.f32 %v2889, 0.3
    %v3130 = vmul.f32 %v2890, 0.3
    %v3131 = vmul.f32 %v2891, 0.3
    %v3132 = vmul.f32 %v2892, 0.3
    %v3133 = vmul.f32 %v2893, 0.3
    %v3134 = vmul.f32 %v2894, 0.3
    %v3135 = vmul.f32 %v2895, 0.3
    %v3136 = vmul.f32 %v2896, 0.3
    %v3137 = vmul.f32 %v2897, 0.3
    %v3138 = vmul.f32 %v2898, 0.3
    %v3139 = vmul.f32 %v2899, 0.3
    %v3140 = vmul.f32 %v2900, 0.3
    %v3141 = vmul.f32 %v2901, 0.3
    %v3142 = vmul.f32 %v2902, 0.3
    %v3143 = vmul.f32 %v2903, 0.3
    %v3144 = vmul.f32 %v2904, 0.3
    %v3145 = vmul.f32 %v2905, 0.3
    %v3146 = vmul.f32 %v2906, 0.3
    %v3147 = vmul.f32 %v2907, 0.3
    %v3148 = vmul.f32 %v2908, 0.3
    %v3149 = vmul.f32 %v2909, 0.3
    %v3150 = vmul.f32 %v2910, 0.3
    %v3151 = vmul.f32 %v2911, 0.3
    %v3152 = vmul.f32 %v2912, 0.3
    %v3153 = vmul.f32 %v2913, 0.3
    %v3154 = vmul.f32 %v2914, 0.3
    %v3155 = vmul.f32 %v2915, 0.3
    %v3156 = vmul.f32 %v2916, 0.3
    %v3157 = vmul.f32 %v2917, 0.3
    %v3158 = vmul.f32 %v2918, 0.3
    %v3159 = vmul.f32 %v2919, 0.3
    %v3160 = vmul.f32 %v2920, 0.3
    %v3161 = vmul.f32 %v2921, 0.3
    %v3162 = vmul.f32 %v2922, 0.3
    %v3163 = vmul.f32 %v2923, 0.3
    %v3164 = vmul.f32 %v2924, 0.3
    %v3165 = vmul.f32 %v2925, 0.3
    %v3166 = vmul.f32 %v2926, 0.3
    %v3167 = vmul.f32 %v2927, 0.3
    %v3168 = vmul.f32 %v2928, 0.3
    %v3169 = vmul.f32 %v2929, 0.3
    %v3170 = vmul.f32 %v2930, 0.3
    %v3171 = vmul.f32 %v2931, 0.3
    %v3172 = vmul.f32 %v2932, 0.3
    %v3173 = vmul.f32 %v2933, 0.3
    %v3174 = vmul.f32 %v2934, 0.3
    %v3175 = vmul.f32 %v2935, 0.3
    %v3176 = vmul.f32 %v2936, 0.3
    %v3177 = vmul.f32 %v2937, 0.3
    %v3178 = vmul.f32 %v2938, 0.3
    %v3179 = vmul.f32 %v2939, 0.3
    %v3180 = vmul.f32 %v2940, 0.3
    %v3181 = vmul.f32 %v2941, 0.3
    %v3182 = vmul.f32 %v2942, 0.3
    %v3183 = vmul.f32 %v2943, 0.3
    %v3184 = vmul.f32 %v2944, 0.3
    %v3185 = vmul.f32 %v2945, 0.3
    %v3186 = vmul.f32 %v2946, 0.3
    %v3187 = vmul.f32 %v2947, 0.3
    %v3188 = vmul.f32 %v2948, 0.3
    %v3189 = vmul.f32 %v2949, 0.3
    %v3190 = vmul.f32 %v2950, 0.3
    %v3191 = vmul.f32 %v2951, 0.3
    %v3192 = vmul.f32 %v2952, 0.3
    %v3193 = vmul.f32 %v2953, 0.3
    %v3194 = vmul.f32 %v2954, 0.3
    %v3195 = vsel %vm2955, %v2835, %v3075
    %v3196 = vsel %vm2956, %v2836, %v3076
    %v3197 = vsel %vm2957, %v2837, %v3077
    %v3198 = vsel %vm2958, %v2838, %v3078
    %v3199 = vsel %vm2959, %v2839, %v3079
    %v3200 = vsel %vm2960, %v2840, %v3080
    %v3201 = vsel %vm2961, %v2841, %v3081
    %v3202 = vsel %vm2962, %v2842, %v3082
    %v3203 = vsel %vm2963, %v2843, %v3083
    %v3204 = vsel %vm2964, %v2844, %v3084
    %v3205 = vsel %vm2965, %v2845, %v3085
    %v3206 = vsel %vm2966, %v2846, %v3086
    %v3207 = vsel %vm2967, %v2847, %v3087
    %v3208 = vsel %vm2968, %v2848, %v3088
    %v3209 = vsel %vm2969, %v2849, %v3089
    %v3210 = vsel %vm2970, %v2850, %v3090
    %v3211 = vsel %vm2971, %v2851, %v3091
    %v3212 = vsel %vm2972, %v2852, %v3092
    %v3213 = vsel %vm2973, %v2853, %v3093
    %v3214 = vsel %vm2974, %v2854, %v3094
    %v3215 = vsel %vm2975, %v2855, %v3095
    %v3216 = vsel %vm2976, %v2856, %v3096
    %v3217 = vsel %vm2977, %v2857, %v3097
    %v3218 = vsel %vm2978, %v2858, %v3098
    %v3219 = vsel %vm2979, %v2859, %v3099
    %v3220 = vsel %vm2980, %v2860, %v3100
    %v3221 = vsel %vm2981, %v2861, %v3101
    %v3222 = vsel %vm2982, %v2862, %v3102
    %v3223 = vsel %vm2983, %v2863, %v3103
    %v3224 = vsel %vm2984, %v2864, %v3104
    %v3225 = vsel %vm2985, %v2865, %v3105
    %v3226 = vsel %vm2986, %v2866, %v3106
    %v3227 = vsel %vm2987, %v2867, %v3107
    %v3228 = vsel %vm2988, %v2868, %v3108
    %v3229 = vsel %vm2989, %v2869, %v3109
    %v3230 = vsel %vm2990, %v2870, %v3110
    %v3231 = vsel %vm2991, %v2871, %v3111
    %v3232 = vsel %vm2992, %v2872, %v3112
    %v3233 = vsel %vm2993, %v2873, %v3113
    %v3234 = vsel %vm2994, %v2874, %v3114
    %v3235 = vsel %vm2995, %v2875, %v3115
    %v3236 = vsel %vm2996, %v2876, %v3116
    %v3237 = vsel %vm2997, %v2877, %v3117
    %v3238 = vsel %vm2998, %v2878, %v3118
    %v3239 = vsel %vm2999, %v2879, %v3119
    %v3240 = vsel %vm3000, %v2880, %v3120
    %v3241 = vsel %vm3001, %v2881, %v3121
    %v3242 = vsel %vm3002, %v2882, %v3122
    %v3243 = vsel %vm3003, %v2883, %v3123
    %v3244 = vsel %vm3004, %v2884, %v3124
    %v3245 = vsel %vm3005, %v2885, %v3125
    %v3246 = vsel %vm3006, %v2886, %v3126
    %v3247 = vsel %vm3007, %v2887, %v3127
    %v3248 = vsel %vm3008, %v2888, %v3128
    %v3249 = vsel %vm3009, %v2889, %v3129
    %v3250 = vsel %vm3010, %v2890, %v3130
    %v3251 = vsel %vm3011, %v2891, %v3131
    %v3252 = vsel %vm3012, %v2892, %v3132
    %v3253 = vsel %vm3013, %v2893, %v3133
    %v3254 = vsel %vm3014, %v2894, %v3134
    %v3255 = vsel %vm3015, %v2895, %v3135
    %v3256 = vsel %vm3016, %v2896, %v3136
    %v3257 = vsel %vm3017, %v2897, %v3137
    %v3258 = vsel %vm3018, %v2898, %v3138
    %v3259 = vsel %vm3019, %v2899, %v3139
    %v3260 = vsel %vm3020, %v2900, %v3140
    %v3261 = vsel %vm3021, %v2901, %v3141
    %v3262 = vsel %vm3022, %v2902, %v3142
    %v3263 = vsel %vm3023, %v2903, %v3143
    %v3264 = vsel %vm3024, %v2904, %v3144
    %v3265 = vsel %vm3025, %v2905, %v3145
    %v3266 = vsel %vm3026, %v2906, %v3146
    %v3267 = vsel %vm3027, %v2907, %v3147
    %v3268 = vsel %vm3028, %v2908, %v3148
    %v3269 = vsel %vm3029, %v2909, %v3149
    %v3270 = vsel %vm3030, %v2910, %v3150
    %v3271 = vsel %vm3031, %v2911, %v3151
    %v3272 = vsel %vm3032, %v2912, %v3152
    %v3273 = vsel %vm3033, %v2913, %v3153
    %v3274 = vsel %vm3034, %v2914, %v3154
    %v3275 = vsel %vm3035, %v2915, %v3155
    %v3276 = vsel %vm3036, %v2916, %v3156
    %v3277 = vsel %vm3037, %v2917, %v3157
    %v3278 = vsel %vm3038, %v2918, %v3158
    %v3279 = vsel %vm3039, %v2919, %v3159
    %v3280 = vsel %vm3040, %v2920, %v3160
    %v3281 = vsel %vm3041, %v2921, %v3161
    %v3282 = vsel %vm3042, %v2922, %v3162
    %v3283 = vsel %vm3043, %v2923, %v3163
    %v3284 = vsel %vm3044, %v2924, %v3164
    %v3285 = vsel %vm3045, %v2925, %v3165
    %v3286 = vsel %vm3046, %v2926, %v3166
    %v3287 = vsel %vm3047, %v2927, %v3167
    %v3288 = vsel %vm3048, %v2928, %v3168
    %v3289 = vsel %vm3049, %v2929, %v3169
    %v3290 = vsel %vm3050, %v2930, %v3170
    %v3291 = vsel %vm3051, %v2931, %v3171
    %v3292 = vsel %vm3052, %v2932, %v3172
    %v3293 = vsel %vm3053, %v2933, %v3173
    %v3294 = vsel %vm3054, %v2934, %v3174
    %v3295 = vsel %vm3055, %v2935, %v3175
    %v3296 = vsel %vm3056, %v2936, %v3176
    %v3297 = vsel %vm3057, %v2937, %v3177
    %v3298 = vsel %vm3058, %v2938, %v3178
    %v3299 = vsel %vm3059, %v2939, %v3179
    %v3300 = vsel %vm3060, %v2940, %v3180
    %v3301 = vsel %vm3061, %v2941, %v3181
    %v3302 = vsel %vm3062, %v2942, %v3182
    %v3303 = vsel %vm3063, %v2943, %v3183
    %v3304 = vsel %vm3064, %v2944, %v3184
    %v3305 = vsel %vm3065, %v2945, %v3185
    %v3306 = vsel %vm3066, %v2946, %v3186
    %v3307 = vsel %vm3067, %v2947, %v3187
    %v3308 = vsel %vm3068, %v2948, %v3188
    %v3309 = vsel %vm3069, %v2949, %v3189
    %v3310 = vsel %vm3070, %v2950, %v3190
    %v3311 = vsel %vm3071, %v2951, %v3191
    %v3312 = vsel %vm3072, %v2952, %v3192
    %v3313 = vsel %vm3073, %v2953, %v3193
    %v3314 = vsel %vm3074, %v2954, %v3194
    %v3315 = vpack.c.bf16 %v3196, %v3195
    %v3316 = vpack.c.bf16 %v3197, %v3197
    %v3317 = vpack.c.bf16 %v3199, %v3198
    %v3318 = vpack.c.bf16 %v3200, %v3200
    %v3319 = vpack.c.bf16 %v3202, %v3201
    %v3320 = vpack.c.bf16 %v3203, %v3203
    %v3321 = vpack.c.bf16 %v3205, %v3204
    %v3322 = vpack.c.bf16 %v3206, %v3206
    %v3323 = vpack.c.bf16 %v3208, %v3207
    %v3324 = vpack.c.bf16 %v3209, %v3209
    %v3325 = vpack.c.bf16 %v3211, %v3210
    %v3326 = vpack.c.bf16 %v3212, %v3212
    %v3327 = vpack.c.bf16 %v3214, %v3213
    %v3328 = vpack.c.bf16 %v3215, %v3215
    %v3329 = vpack.c.bf16 %v3217, %v3216
    %v3330 = vpack.c.bf16 %v3218, %v3218
    %v3331 = vpack.c.bf16 %v3220, %v3219
    %v3332 = vpack.c.bf16 %v3221, %v3221
    %v3333 = vpack.c.bf16 %v3223, %v3222
    %v3334 = vpack.c.bf16 %v3224, %v3224
    %v3335 = vpack.c.bf16 %v3226, %v3225
    %v3336 = vpack.c.bf16 %v3227, %v3227
    %v3337 = vpack.c.bf16 %v3229, %v3228
    %v3338 = vpack.c.bf16 %v3230, %v3230
    %v3339 = vpack.c.bf16 %v3232, %v3231
    %v3340 = vpack.c.bf16 %v3233, %v3233
    %v3341 = vpack.c.bf16 %v3235, %v3234
    %v3342 = vpack.c.bf16 %v3236, %v3236
    %v3343 = vpack.c.bf16 %v3238, %v3237
    %v3344 = vpack.c.bf16 %v3239, %v3239
    %v3345 = vpack.c.bf16 %v3241, %v3240
    %v3346 = vpack.c.bf16 %v3242, %v3242
    %v3347 = vpack.c.bf16 %v3244, %v3243
    %v3348 = vpack.c.bf16 %v3245, %v3245
    %v3349 = vpack.c.bf16 %v3247, %v3246
    %v3350 = vpack.c.bf16 %v3248, %v3248
    %v3351 = vpack.c.bf16 %v3250, %v3249
    %v3352 = vpack.c.bf16 %v3251, %v3251
    %v3353 = vpack.c.bf16 %v3253, %v3252
    %v3354 = vpack.c.bf16 %v3254, %v3254
    %v3355 = vpack.c.bf16 %v3256, %v3255
    %v3356 = vpack.c.bf16 %v3257, %v3257
    %v3357 = vpack.c.bf16 %v3259, %v3258
    %v3358 = vpack.c.bf16 %v3260, %v3260
    %v3359 = vpack.c.bf16 %v3262, %v3261
    %v3360 = vpack.c.bf16 %v3263, %v3263
    %v3361 = vpack.c.bf16 %v3265, %v3264
    %v3362 = vpack.c.bf16 %v3266, %v3266
    %v3363 = vpack.c.bf16 %v3268, %v3267
    %v3364 = vpack.c.bf16 %v3269, %v3269
    %v3365 = vpack.c.bf16 %v3271, %v3270
    %v3366 = vpack.c.bf16 %v3272, %v3272
    %v3367 = vpack.c.bf16 %v3274, %v3273
    %v3368 = vpack.c.bf16 %v3275, %v3275
    %v3369 = vpack.c.bf16 %v3277, %v3276
    %v3370 = vpack.c.bf16 %v3278, %v3278
    %v3371 = vpack.c.bf16 %v3280, %v3279
    %v3372 = vpack.c.bf16 %v3281, %v3281
    %v3373 = vpack.c.bf16 %v3283, %v3282
    %v3374 = vpack.c.bf16 %v3284, %v3284
    %v3375 = vpack.c.bf16 %v3286, %v3285
    %v3376 = vpack.c.bf16 %v3287, %v3287
    %v3377 = vpack.c.bf16 %v3289, %v3288
    %v3378 = vpack.c.bf16 %v3290, %v3290
    %v3379 = vpack.c.bf16 %v3292, %v3291
    %v3380 = vpack.c.bf16 %v3293, %v3293
    %v3381 = vpack.c.bf16 %v3295, %v3294
    %v3382 = vpack.c.bf16 %v3296, %v3296
    %v3383 = vpack.c.bf16 %v3298, %v3297
    %v3384 = vpack.c.bf16 %v3299, %v3299
    %v3385 = vpack.c.bf16 %v3301, %v3300
    %v3386 = vpack.c.bf16 %v3302, %v3302
    %v3387 = vpack.c.bf16 %v3304, %v3303
    %v3388 = vpack.c.bf16 %v3305, %v3305
    %v3389 = vpack.c.bf16 %v3307, %v3306
    %v3390 = vpack.c.bf16 %v3308, %v3308
    %v3391 = vpack.c.bf16 %v3310, %v3309
    %v3392 = vpack.c.bf16 %v3311, %v3311
    %v3393 = vpack.c.bf16 %v3313, %v3312
    %v3394 = vpack.c.bf16 %v3314, %v3314
    %v3395 = vld [vmem:[#allocation4] sm:$0xff]
    %v3396 = vld [vmem:[#allocation4 + $0x8] sm:$0xff]
    %v3397 = vld [vmem:[#allocation4 + $0x10] sm:$0xff]
    %v3398 = vld [vmem:[#allocation4 + $0x18] sm:$0xff]
    %v3399 = vld [vmem:[#allocation4 + $0x20] sm:$0xff]
    %v3400 = vld [vmem:[#allocation4 + $0x28] sm:$0xff]
    %v3401 = vld [vmem:[#allocation4 + $0x30] sm:$0xff]
    %v3402 = vld [vmem:[#allocation4 + $0x38] sm:$0xff]
    %v3403 = vld [vmem:[#allocation4 + $0x40] sm:$0xff]
    %v3404 = vld [vmem:[#allocation4 + $0x48] sm:$0xff]
    %v3405 = vld [vmem:[#allocation4 + $0x50] sm:$0xff]
    %v3406 = vld [vmem:[#allocation4 + $0x58] sm:$0xff]
    %v3407 = vld [vmem:[#allocation4 + $0x60] sm:$0xff]
    %v3408 = vld [vmem:[#allocation4 + $0x68] sm:$0xff]
    %v3409 = vld [vmem:[#allocation4 + $0x70] sm:$0xff]
    %v3410 = vld [vmem:[#allocation4 + $0x78] sm:$0xff]
    %v3411 = vld [vmem:[#allocation4 + $0x80] sm:$0xff]
    %v3412 = vld [vmem:[#allocation4 + $0x88] sm:$0xff]
    %v3413 = vld [vmem:[#allocation4 + $0x90] sm:$0xff]
    %v3414 = vld [vmem:[#allocation4 + $0x98] sm:$0xff]
    %v3415 = vld [vmem:[#allocation4 + $0xa0] sm:$0xff]
    %v3416 = vld [vmem:[#allocation4 + $0xa8] sm:$0xff]
    %v3417 = vld [vmem:[#allocation4 + $0xb0] sm:$0xff]
    %v3418 = vld [vmem:[#allocation4 + $0xb8] sm:$0xff]
    %v3419 = vld [vmem:[#allocation4 + $0xc0] sm:$0xff]
    %v3420 = vld [vmem:[#allocation4 + $0xc8] sm:$0xff]
    %v3421 = vld [vmem:[#allocation4 + $0xd0] sm:$0xff]
    %v3422 = vld [vmem:[#allocation4 + $0xd8] sm:$0xff]
    %v3423 = vld [vmem:[#allocation4 + $0xe0] sm:$0xff]
    %v3424 = vld [vmem:[#allocation4 + $0xe8] sm:$0xff]
    %v3425 = vld [vmem:[#allocation4 + $0xf0] sm:$0xff]
    %v3426 = vld [vmem:[#allocation4 + $0xf8] sm:$0xff]
    %v3427 = vld [vmem:[#allocation4 + $0x100] sm:$0xff]
    %v3428 = vld [vmem:[#allocation4 + $0x108] sm:$0xff]
    %v3429 = vld [vmem:[#allocation4 + $0x110] sm:$0xff]
    %v3430 = vld [vmem:[#allocation4 + $0x118] sm:$0xff]
    %v3431 = vld [vmem:[#allocation4 + $0x120] sm:$0xff]
    %v3432 = vld [vmem:[#allocation4 + $0x128] sm:$0xff]
    %v3433 = vld [vmem:[#allocation4 + $0x130] sm:$0xff]
    %v3434 = vld [vmem:[#allocation4 + $0x138] sm:$0xff]
    %v3435 = vld [vmem:[#allocation4 + $0x140] sm:$0xff]
    %v3436 = vld [vmem:[#allocation4 + $0x148] sm:$0xff]
    %v3437 = vld [vmem:[#allocation4 + $0x150] sm:$0xff]
    %v3438 = vld [vmem:[#allocation4 + $0x158] sm:$0xff]
    %v3439 = vld [vmem:[#allocation4 + $0x160] sm:$0xff]
    %v3440 = vld [vmem:[#allocation4 + $0x168] sm:$0xff]
    %v3441 = vld [vmem:[#allocation4 + $0x170] sm:$0xff]
    %v3442 = vld [vmem:[#allocation4 + $0x178] sm:$0xff]
    %s3443 = scalar_lea.vmem [#allocation4], 384
    %v3444 = vld [vmem:[%s3443] sm:$0xff]
    %v3445 = vld [vmem:[%s3443 + $0x8] sm:$0xff]
    %v3446 = vld [vmem:[%s3443 + $0x10] sm:$0xff]
    %v3447 = vld [vmem:[%s3443 + $0x18] sm:$0xff]
    %v3448 = vld [vmem:[%s3443 + $0x20] sm:$0xff]
    %v3449 = vld [vmem:[%s3443 + $0x28] sm:$0xff]
    %v3450 = vld [vmem:[%s3443 + $0x30] sm:$0xff]
    %v3451 = vld [vmem:[%s3443 + $0x38] sm:$0xff]
    %v3452 = vld [vmem:[%s3443 + $0x40] sm:$0xff]
    %v3453 = vld [vmem:[%s3443 + $0x48] sm:$0xff]
    %v3454 = vld [vmem:[%s3443 + $0x50] sm:$0xff]
    %v3455 = vld [vmem:[%s3443 + $0x58] sm:$0xff]
    %v3456 = vld [vmem:[%s3443 + $0x60] sm:$0xff]
    %v3457 = vld [vmem:[%s3443 + $0x68] sm:$0xff]
    %v3458 = vld [vmem:[%s3443 + $0x70] sm:$0xff]
    %v3459 = vld [vmem:[%s3443 + $0x78] sm:$0xff]
    %v3460 = vld [vmem:[%s3443 + $0x80] sm:$0xff]
    %v3461 = vld [vmem:[%s3443 + $0x88] sm:$0xff]
    %v3462 = vld [vmem:[%s3443 + $0x90] sm:$0xff]
    %v3463 = vld [vmem:[%s3443 + $0x98] sm:$0xff]
    %v3464 = vld [vmem:[%s3443 + $0xa0] sm:$0xff]
    %v3465 = vld [vmem:[%s3443 + $0xa8] sm:$0xff]
    %v3466 = vld [vmem:[%s3443 + $0xb0] sm:$0xff]
    %v3467 = vld [vmem:[%s3443 + $0xb8] sm:$0xff]
    %v3468 = vld [vmem:[%s3443 + $0xc0] sm:$0xff]
    %v3469 = vld [vmem:[%s3443 + $0xc8] sm:$0xff]
    %v3470 = vld [vmem:[%s3443 + $0xd0] sm:$0xff]
    %v3471 = vld [vmem:[%s3443 + $0xd8] sm:$0xff]
    %v3472 = vld [vmem:[%s3443 + $0xe0] sm:$0xff]
    %v3473 = vld [vmem:[%s3443 + $0xe8] sm:$0xff]
    %v3474 = vld [vmem:[%s3443 + $0xf0] sm:$0xff]
    %v3475 = vld [vmem:[%s3443 + $0xf8] sm:$0xff]
    %v3476 = vld [vmem:[%s3443 + $0x100] sm:$0xff]
    %v3477 = vld [vmem:[%s3443 + $0x108] sm:$0xff]
    %v3478 = vld [vmem:[%s3443 + $0x110] sm:$0xff]
    %v3479 = vld [vmem:[%s3443 + $0x118] sm:$0xff]
    %v3480 = vld [vmem:[%s3443 + $0x120] sm:$0xff]
    %v3481 = vld [vmem:[%s3443 + $0x128] sm:$0xff]
    %v3482 = vld [vmem:[%s3443 + $0x130] sm:$0xff]
    %v3483 = vld [vmem:[%s3443 + $0x138] sm:$0xff]
    %v3484 = vld [vmem:[%s3443 + $0x140] sm:$0xff]
    %v3485 = vld [vmem:[%s3443 + $0x148] sm:$0xff]
    %v3486 = vld [vmem:[%s3443 + $0x150] sm:$0xff]
    %v3487 = vld [vmem:[%s3443 + $0x158] sm:$0xff]
    %v3488 = vld [vmem:[%s3443 + $0x160] sm:$0xff]
    %v3489 = vld [vmem:[%s3443 + $0x168] sm:$0xff]
    %v3490 = vld [vmem:[%s3443 + $0x170] sm:$0xff]
    %v3491 = vld [vmem:[%s3443 + $0x178] sm:$0xff]
    %v3556 = vunpack.c.l.b16 %v3319
    %v3557 = vunpack.c.h.b16 %v3319
    %v3558 = vunpack.c.l.b16 %v3320
    %v3559 = vunpack.c.l.b16 %v3321
    %v3560 = vunpack.c.h.b16 %v3321
    %v3561 = vunpack.c.l.b16 %v3322
    %v3562 = vunpack.c.l.b16 %v3323
    %v3563 = vunpack.c.h.b16 %v3323
    %v3564 = vunpack.c.l.b16 %v3324
    %v3565 = vunpack.c.l.b16 %v3325
    %v3566 = vunpack.c.h.b16 %v3325
    %v3567 = vunpack.c.l.b16 %v3326
    %v3568 = vunpack.c.l.b16 %v3327
    %v3569 = vunpack.c.h.b16 %v3327
    %v3570 = vunpack.c.l.b16 %v3328
    %v3571 = vunpack.c.l.b16 %v3329
    %v3572 = vunpack.c.h.b16 %v3329
    %v3573 = vunpack.c.l.b16 %v3330
    %v3574 = vunpack.c.l.b16 %v3331
    %v3575 = vunpack.c.h.b16 %v3331
    %v3576 = vunpack.c.l.b16 %v3332
    %v3577 = vunpack.c.l.b16 %v3333
    %v3578 = vunpack.c.h.b16 %v3333
    %v3579 = vunpack.c.l.b16 %v3334
    %v3580 = vunpack.c.l.b16 %v3335
    %v3581 = vunpack.c.h.b16 %v3335
    %v3582 = vunpack.c.l.b16 %v3336
    %v3583 = vunpack.c.l.b16 %v3337
    %v3584 = vunpack.c.h.b16 %v3337
    %v3585 = vunpack.c.l.b16 %v3338
    %v3586 = vunpack.c.l.b16 %v3339
    %v3587 = vunpack.c.h.b16 %v3339
    %v3588 = vunpack.c.l.b16 %v3340
    %v3589 = vunpack.c.l.b16 %v3341
    %v3590 = vunpack.c.h.b16 %v3341
    %v3591 = vunpack.c.l.b16 %v3342
    %v3592 = vunpack.c.l.b16 %v3343
    %v3593 = vunpack.c.h.b16 %v3343
    %v3594 = vunpack.c.l.b16 %v3344
    %v3595 = vunpack.c.l.b16 %v3345
    %v3596 = vunpack.c.h.b16 %v3345
    %v3597 = vunpack.c.l.b16 %v3346
    %v3598 = vunpack.c.l.b16 %v3347
    %v3599 = vunpack.c.h.b16 %v3347
    %v3600 = vunpack.c.l.b16 %v3348
    %v3601 = vunpack.c.l.b16 %v3349
    %v3602 = vunpack.c.h.b16 %v3349
    %v3603 = vunpack.c.l.b16 %v3350
    %v3604 = vunpack.c.l.b16 %v3351
    %v3605 = vunpack.c.h.b16 %v3351
    %v3606 = vunpack.c.l.b16 %v3352
    %v3607 = vunpack.c.l.b16 %v3353
    %v3608 = vunpack.c.h.b16 %v3353
    %v3609 = vunpack.c.l.b16 %v3354
    %v3610 = vunpack.c.l.b16 %v3355
    %v3611 = vunpack.c.h.b16 %v3355
    %v3612 = vunpack.c.l.b16 %v3356
    %v3613 = vunpack.c.l.b16 %v3357
    %v3614 = vunpack.c.h.b16 %v3357
    %v3615 = vunpack.c.l.b16 %v3358
    %v3616 = vunpack.c.l.b16 %v3359
    %v3617 = vunpack.c.h.b16 %v3359
    %v3618 = vunpack.c.l.b16 %v3360
    %v3619 = vunpack.c.l.b16 %v3361
    %v3620 = vunpack.c.h.b16 %v3361
    %v3621 = vunpack.c.l.b16 %v3362
    %v3622 = vunpack.c.l.b16 %v3363
    %v3623 = vunpack.c.h.b16 %v3363
    %v3624 = vunpack.c.l.b16 %v3364
    %v3625 = vunpack.c.l.b16 %v3365
    %v3626 = vunpack.c.h.b16 %v3365
    %v3627 = vunpack.c.l.b16 %v3366
    %v3628 = vunpack.c.l.b16 %v3367
    %v3629 = vunpack.c.h.b16 %v3367
    %v3630 = vunpack.c.l.b16 %v3368
    %v3631 = vunpack.c.l.b16 %v3369
    %v3632 = vunpack.c.h.b16 %v3369
    %v3633 = vunpack.c.l.b16 %v3370
    %v3634 = vunpack.c.l.b16 %v3371
    %v3635 = vunpack.c.h.b16 %v3371
    %v3636 = vunpack.c.l.b16 %v3372
    %v3637 = vunpack.c.l.b16 %v3373
    %v3638 = vunpack.c.h.b16 %v3373
    %v3639 = vunpack.c.l.b16 %v3374
    %v3640 = vunpack.c.l.b16 %v3375
    %v3641 = vunpack.c.h.b16 %v3375
    %v3642 = vunpack.c.l.b16 %v3376
    %v3643 = vunpack.c.l.b16 %v3377
    %v3644 = vunpack.c.h.b16 %v3377
    %v3645 = vunpack.c.l.b16 %v3378
    %v3646 = vunpack.c.l.b16 %v3379
    %v3647 = vunpack.c.h.b16 %v3379
    %v3648 = vunpack.c.l.b16 %v3380
    %v3649 = vunpack.c.l.b16 %v3381
    %v3650 = vunpack.c.h.b16 %v3381
    %v3651 = vunpack.c.l.b16 %v3382
    %v3652 = vpack.c.b16 %v3559, %v3556
    %v3653 = vpack.c.b16 %v3560, %v3557
    %v3654 = vpack.c.b16 %v3561, %v3558
    %v3655 = vpack.c.b16 %v3565, %v3562
    %v3656 = vpack.c.b16 %v3566, %v3563
    %v3657 = vpack.c.b16 %v3567, %v3564
    %v3658 = vpack.c.b16 %v3571, %v3568
    %v3659 = vpack.c.b16 %v3572, %v3569
    %v3660 = vpack.c.b16 %v3573, %v3570
    %v3661 = vpack.c.b16 %v3577, %v3574
    %v3662 = vpack.c.b16 %v3578, %v3575
    %v3663 = vpack.c.b16 %v3579, %v3576
    %v3664 = vpack.c.b16 %v3583, %v3580
    %v3665 = vpack.c.b16 %v3584, %v3581
    %v3666 = vpack.c.b16 %v3585, %v3582
    %v3667 = vpack.c.b16 %v3589, %v3586
    %v3668 = vpack.c.b16 %v3590, %v3587
    %v3669 = vpack.c.b16 %v3591, %v3588
    %v3670 = vpack.c.b16 %v3595, %v3592
    %v3671 = vpack.c.b16 %v3596, %v3593
    %v3672 = vpack.c.b16 %v3597, %v3594
    %v3673 = vpack.c.b16 %v3601, %v3598
    %v3674 = vpack.c.b16 %v3602, %v3599
    %v3675 = vpack.c.b16 %v3603, %v3600
    %v3676 = vpack.c.b16 %v3607, %v3604
    %v3677 = vpack.c.b16 %v3608, %v3605
    %v3678 = vpack.c.b16 %v3609, %v3606
    %v3679 = vpack.c.b16 %v3613, %v3610
    %v3680 = vpack.c.b16 %v3614, %v3611
    %v3681 = vpack.c.b16 %v3615, %v3612
    %v3682 = vpack.c.b16 %v3619, %v3616
    %v3683 = vpack.c.b16 %v3620, %v3617
    %v3684 = vpack.c.b16 %v3621, %v3618
    %v3685 = vpack.c.b16 %v3625, %v3622
    %v3686 = vpack.c.b16 %v3626, %v3623
    %v3687 = vpack.c.b16 %v3627, %v3624
    %v3688 = vpack.c.b16 %v3631, %v3628
    %v3689 = vpack.c.b16 %v3632, %v3629
    %v3690 = vpack.c.b16 %v3633, %v3630
    %v3691 = vpack.c.b16 %v3637, %v3634
    %v3692 = vpack.c.b16 %v3638, %v3635
    %v3693 = vpack.c.b16 %v3639, %v3636
    %v3694 = vpack.c.b16 %v3643, %v3640
    %v3695 = vpack.c.b16 %v3644, %v3641
    %v3696 = vpack.c.b16 %v3645, %v3642
    %v3697 = vpack.c.b16 %v3649, %v3646
    %v3698 = vpack.c.b16 %v3650, %v3647
    %v3699 = vpack.c.b16 %v3651, %v3648
    %v3796 = vunpack.c.l.b16 %v3444
    %v3797 = vunpack.c.h.b16 %v3444
    %v3798 = vunpack.c.l.b16 %v3445
    %v3799 = vunpack.c.h.b16 %v3445
    %v3800 = vunpack.c.l.b16 %v3446
    %v3801 = vunpack.c.h.b16 %v3446
    %v3802 = vunpack.c.l.b16 %v3447
    %v3803 = vunpack.c.h.b16 %v3447
    %v3804 = vunpack.c.l.b16 %v3448
    %v3805 = vunpack.c.h.b16 %v3448
    %v3806 = vunpack.c.l.b16 %v3449
    %v3807 = vunpack.c.h.b16 %v3449
    %v3808 = vunpack.c.l.b16 %v3450
    %v3809 = vunpack.c.h.b16 %v3450
    %v3810 = vunpack.c.l.b16 %v3451
    %v3811 = vunpack.c.h.b16 %v3451
    %v3812 = vunpack.c.l.b16 %v3452
    %v3813 = vunpack.c.h.b16 %v3452
    %v3814 = vunpack.c.l.b16 %v3453
    %v3815 = vunpack.c.h.b16 %v3453
    %v3816 = vunpack.c.l.b16 %v3454
    %v3817 = vunpack.c.h.b16 %v3454
    %v3818 = vunpack.c.l.b16 %v3455
    %v3819 = vunpack.c.h.b16 %v3455
    %v3820 = vunpack.c.l.b16 %v3456
    %v3821 = vunpack.c.h.b16 %v3456
    %v3822 = vunpack.c.l.b16 %v3457
    %v3823 = vunpack.c.h.b16 %v3457
    %v3824 = vunpack.c.l.b16 %v3458
    %v3825 = vunpack.c.h.b16 %v3458
    %v3826 = vunpack.c.l.b16 %v3459
    %v3827 = vunpack.c.h.b16 %v3459
    %v3828 = vunpack.c.l.b16 %v3460
    %v3829 = vunpack.c.h.b16 %v3460
    %v3830 = vunpack.c.l.b16 %v3461
    %v3831 = vunpack.c.h.b16 %v3461
    %v3832 = vunpack.c.l.b16 %v3462
    %v3833 = vunpack.c.h.b16 %v3462
    %v3834 = vunpack.c.l.b16 %v3463
    %v3835 = vunpack.c.h.b16 %v3463
    %v3836 = vunpack.c.l.b16 %v3464
    %v3837 = vunpack.c.h.b16 %v3464
    %v3838 = vunpack.c.l.b16 %v3465
    %v3839 = vunpack.c.h.b16 %v3465
    %v3840 = vunpack.c.l.b16 %v3466
    %v3841 = vunpack.c.h.b16 %v3466
    %v3842 = vunpack.c.l.b16 %v3467
    %v3843 = vunpack.c.h.b16 %v3467
    %v3844 = vunpack.c.l.b16 %v3468
    %v3845 = vunpack.c.h.b16 %v3468
    %v3846 = vunpack.c.l.b16 %v3469
    %v3847 = vunpack.c.h.b16 %v3469
    %v3848 = vunpack.c.l.b16 %v3470
    %v3849 = vunpack.c.h.b16 %v3470
    %v3850 = vunpack.c.l.b16 %v3471
    %v3851 = vunpack.c.h.b16 %v3471
    %v3852 = vunpack.c.l.b16 %v3472
    %v3853 = vunpack.c.h.b16 %v3472
    %v3854 = vunpack.c.l.b16 %v3473
    %v3855 = vunpack.c.h.b16 %v3473
    %v3856 = vunpack.c.l.b16 %v3474
    %v3857 = vunpack.c.h.b16 %v3474
    %v3858 = vunpack.c.l.b16 %v3475
    %v3859 = vunpack.c.h.b16 %v3475
    %v3860 = vunpack.c.l.b16 %v3476
    %v3861 = vunpack.c.h.b16 %v3476
    %v3862 = vunpack.c.l.b16 %v3477
    %v3863 = vunpack.c.h.b16 %v3477
    %v3864 = vunpack.c.l.b16 %v3478
    %v3865 = vunpack.c.h.b16 %v3478
    %v3866 = vunpack.c.l.b16 %v3479
    %v3867 = vunpack.c.h.b16 %v3479
    %v3868 = vunpack.c.l.b16 %v3480
    %v3869 = vunpack.c.h.b16 %v3480
    %v3870 = vunpack.c.l.b16 %v3481
    %v3871 = vunpack.c.h.b16 %v3481
    %v3872 = vunpack.c.l.b16 %v3482
    %v3873 = vunpack.c.h.b16 %v3482
    %v3874 = vunpack.c.l.b16 %v3483
    %v3875 = vunpack.c.h.b16 %v3483
    %v3876 = vunpack.c.l.b16 %v3484
    %v3877 = vunpack.c.h.b16 %v3484
    %v3878 = vunpack.c.l.b16 %v3485
    %v3879 = vunpack.c.h.b16 %v3485
    %v3880 = vunpack.c.l.b16 %v3486
    %v3881 = vunpack.c.h.b16 %v3486
    %v3882 = vunpack.c.l.b16 %v3487
    %v3883 = vunpack.c.h.b16 %v3487
    %v3884 = vunpack.c.l.b16 %v3488
    %v3885 = vunpack.c.h.b16 %v3488
    %v3886 = vunpack.c.l.b16 %v3489
    %v3887 = vunpack.c.h.b16 %v3489
    %v3888 = vunpack.c.l.b16 %v3490
    %v3889 = vunpack.c.h.b16 %v3490
    %v3890 = vunpack.c.l.b16 %v3491
    %v3891 = vunpack.c.h.b16 %v3491
    %v3892 = vpack.c.b16 %v3798, %v3796
    %v3893 = vpack.c.b16 %v3799, %v3797
    %v3894 = vpack.c.b16 %v3802, %v3800
    %v3895 = vpack.c.b16 %v3803, %v3801
    %v3896 = vpack.c.b16 %v3806, %v3804
    %v3897 = vpack.c.b16 %v3807, %v3805
    %v3898 = vpack.c.b16 %v3810, %v3808
    %v3899 = vpack.c.b16 %v3811, %v3809
    %v3900 = vpack.c.b16 %v3814, %v3812
    %v3901 = vpack.c.b16 %v3815, %v3813
    %v3902 = vpack.c.b16 %v3818, %v3816
    %v3903 = vpack.c.b16 %v3819, %v3817
    %v3904 = vpack.c.b16 %v3822, %v3820
    %v3905 = vpack.c.b16 %v3823, %v3821
    %v3906 = vpack.c.b16 %v3826, %v3824
    %v3907 = vpack.c.b16 %v3827, %v3825
    %v3908 = vpack.c.b16 %v3830, %v3828
    %v3909 = vpack.c.b16 %v3831, %v3829
    %v3910 = vpack.c.b16 %v3834, %v3832
    %v3911 = vpack.c.b16 %v3835, %v3833
    %v3912 = vpack.c.b16 %v3838, %v3836
    %v3913 = vpack.c.b16 %v3839, %v3837
    %v3914 = vpack.c.b16 %v3842, %v3840
    %v3915 = vpack.c.b16 %v3843, %v3841
    %v3916 = vpack.c.b16 %v3846, %v3844
    %v3917 = vpack.c.b16 %v3847, %v3845
    %v3918 = vpack.c.b16 %v3850, %v3848
    %v3919 = vpack.c.b16 %v3851, %v3849
    %v3920 = vpack.c.b16 %v3854, %v3852
    %v3921 = vpack.c.b16 %v3855, %v3853
    %v3922 = vpack.c.b16 %v3858, %v3856
    %v3923 = vpack.c.b16 %v3859, %v3857
    %v3924 = vpack.c.b16 %v3862, %v3860
    %v3925 = vpack.c.b16 %v3863, %v3861
    %v3926 = vpack.c.b16 %v3866, %v3864
    %v3927 = vpack.c.b16 %v3867, %v3865
    %v3928 = vpack.c.b16 %v3870, %v3868
    %v3929 = vpack.c.b16 %v3871, %v3869
    %v3930 = vpack.c.b16 %v3874, %v3872
    %v3931 = vpack.c.b16 %v3875, %v3873
    %v3932 = vpack.c.b16 %v3878, %v3876
    %v3933 = vpack.c.b16 %v3879, %v3877
    %v3934 = vpack.c.b16 %v3882, %v3880
    %v3935 = vpack.c.b16 %v3883, %v3881
    %v3936 = vpack.c.b16 %v3886, %v3884
    %v3937 = vpack.c.b16 %v3887, %v3885
    %v3938 = vpack.c.b16 %v3890, %v3888
    %v3939 = vpack.c.b16 %v3891, %v3889
    %3988 = vmatpush.bf16.msra.mxu0 %v3906
    %3989 = vmatpush.bf16.msra.mxu0 %v3904
    %3990 = vmatpush.bf16.msra.mxu0 %v3902
    %3991 = vmatpush.bf16.msra.mxu0 %v3900
    %3992 = vmatpush.bf16.msra.mxu0 %v3898
    %3993 = vmatpush.bf16.msra.mxu0 %v3896
    %3994 = vmatpush.bf16.msra.mxu0 %v3894
    %3995 = vmatpush.bf16.msra.mxu0 %v3892
    %3996 = vmatmul.bf16.gmra.mxu0 %v3652
    %v3997 = vpop.f32.mrf.mxu0
    %v3998 = vadd.f32 0.0, %v3997
    %v3999 = vpop.f32.mrf.mxu0
    %v4000 = vadd.f32 0.0, %v3999
    %4001 = vmatmul.bf16.gmra.mxu0 %v3655
    %v4002 = vpop.f32.mrf.mxu0
    %v4003 = vadd.f32 0.0, %v4002
    %v4004 = vpop.f32.mrf.mxu0
    %v4005 = vadd.f32 0.0, %v4004
    %4006 = vmatmul.bf16.gmra.mxu0 %v3658
    %v4007 = vpop.f32.mrf.mxu0
    %v4008 = vadd.f32 0.0, %v4007
    %v4009 = vpop.f32.mrf.mxu0
    %v4010 = vadd.f32 0.0, %v4009
    %4011 = vmatmul.bf16.gmra.mxu0 %v3661
    %v4012 = vpop.f32.mrf.mxu0
    %v4013 = vadd.f32 0.0, %v4012
    %v4014 = vpop.f32.mrf.mxu0
    %v4015 = vadd.f32 0.0, %v4014
    %4016 = vmatmul.bf16.gmra.mxu0 %v3664
    %v4017 = vpop.f32.mrf.mxu0
    %v4018 = vadd.f32 0.0, %v4017
    %v4019 = vpop.f32.mrf.mxu0
    %v4020 = vadd.f32 0.0, %v4019
    %4021 = vmatmul.bf16.gmra.mxu0 %v3667
    %v4022 = vpop.f32.mrf.mxu0
    %v4023 = vadd.f32 0.0, %v4022
    %v4024 = vpop.f32.mrf.mxu0
    %v4025 = vadd.f32 0.0, %v4024
    %4026 = vmatmul.bf16.gmra.mxu0 %v3670
    %v4027 = vpop.f32.mrf.mxu0
    %v4028 = vadd.f32 0.0, %v4027
    %v4029 = vpop.f32.mrf.mxu0
    %v4030 = vadd.f32 0.0, %v4029
    %4031 = vmatmul.bf16.gmra.mxu0 %v3673
    %v4032 = vpop.f32.mrf.mxu0
    %v4033 = vadd.f32 0.0, %v4032
    %v4034 = vpop.f32.mrf.mxu0
    %v4035 = vadd.f32 0.0, %v4034
    %4036 = vmatmul.bf16.gmra.mxu0 %v3676
    %v4037 = vpop.f32.mrf.mxu0
    %v4038 = vadd.f32 0.0, %v4037
    %v4039 = vpop.f32.mrf.mxu0
    %v4040 = vadd.f32 0.0, %v4039
    %4041 = vmatmul.bf16.gmra.mxu0 %v3679
    %v4042 = vpop.f32.mrf.mxu0
    %v4043 = vadd.f32 0.0, %v4042
    %v4044 = vpop.f32.mrf.mxu0
    %v4045 = vadd.f32 0.0, %v4044
    %4046 = vmatmul.bf16.gmra.mxu0 %v3682
    %v4047 = vpop.f32.mrf.mxu0
    %v4048 = vadd.f32 0.0, %v4047
    %v4049 = vpop.f32.mrf.mxu0
    %v4050 = vadd.f32 0.0, %v4049
    %4051 = vmatmul.bf16.gmra.mxu0 %v3685
    %v4052 = vpop.f32.mrf.mxu0
    %v4053 = vadd.f32 0.0, %v4052
    %v4054 = vpop.f32.mrf.mxu0
    %v4055 = vadd.f32 0.0, %v4054
    %4056 = vmatmul.bf16.gmra.mxu0 %v3688
    %v4057 = vpop.f32.mrf.mxu0
    %v4058 = vadd.f32 0.0, %v4057
    %v4059 = vpop.f32.mrf.mxu0
    %v4060 = vadd.f32 0.0, %v4059
    %4061 = vmatmul.bf16.gmra.mxu0 %v3691
    %v4062 = vpop.f32.mrf.mxu0
    %v4063 = vadd.f32 0.0, %v4062
    %v4064 = vpop.f32.mrf.mxu0
    %v4065 = vadd.f32 0.0, %v4064
    %4066 = vmatmul.bf16.gmra.mxu0 %v3694
    %v4067 = vpop.f32.mrf.mxu0
    %v4068 = vadd.f32 0.0, %v4067
    %v4069 = vpop.f32.mrf.mxu0
    %v4070 = vadd.f32 0.0, %v4069
    %4071 = vmatmul.bf16.gmra.mxu0 %v3697
    %v4072 = vpop.f32.mrf.mxu0
    %v4073 = vadd.f32 0.0, %v4072
    %v4074 = vpop.f32.mrf.mxu0
    %v4075 = vadd.f32 0.0, %v4074
    %4076 = vdwg.mxu0
    %4077 = vmatpush.bf16.msra.mxu0 %v3922
    %4078 = vmatpush.bf16.msra.mxu0 %v3920
    %4079 = vmatpush.bf16.msra.mxu0 %v3918
    %4080 = vmatpush.bf16.msra.mxu0 %v3916
    %4081 = vmatpush.bf16.msra.mxu0 %v3914
    %4082 = vmatpush.bf16.msra.mxu0 %v3912
    %4083 = vmatpush.bf16.msra.mxu0 %v3910
    %4084 = vmatpush.bf16.msra.mxu0 %v3908
    %4085 = vmatmul.bf16.gmra.mxu0 %v3653
    %v4086 = vpop.f32.mrf.mxu0
    %v4087 = vadd.f32 %v3998, %v4086
    %v4088 = vpop.f32.mrf.mxu0
    %v4089 = vadd.f32 %v4000, %v4088
    %4090 = vmatmul.bf16.gmra.mxu0 %v3656
    %v4091 = vpop.f32.mrf.mxu0
    %v4092 = vadd.f32 %v4003, %v4091
    %v4093 = vpop.f32.mrf.mxu0
    %v4094 = vadd.f32 %v4005, %v4093
    %4095 = vmatmul.bf16.gmra.mxu0 %v3659
    %v4096 = vpop.f32.mrf.mxu0
    %v4097 = vadd.f32 %v4008, %v4096
    %v4098 = vpop.f32.mrf.mxu0
    %v4099 = vadd.f32 %v4010, %v4098
    %4100 = vmatmul.bf16.gmra.mxu0 %v3662
    %v4101 = vpop.f32.mrf.mxu0
    %v4102 = vadd.f32 %v4013, %v4101
    %v4103 = vpop.f32.mrf.mxu0
    %v4104 = vadd.f32 %v4015, %v4103
    %4105 = vmatmul.bf16.gmra.mxu0 %v3665
    %v4106 = vpop.f32.mrf.mxu0
    %v4107 = vadd.f32 %v4018, %v4106
    %v4108 = vpop.f32.mrf.mxu0
    %v4109 = vadd.f32 %v4020, %v4108
    %4110 = vmatmul.bf16.gmra.mxu0 %v3668
    %v4111 = vpop.f32.mrf.mxu0
    %v4112 = vadd.f32 %v4023, %v4111
    %v4113 = vpop.f32.mrf.mxu0
    %v4114 = vadd.f32 %v4025, %v4113
    %4115 = vmatmul.bf16.gmra.mxu0 %v3671
    %v4116 = vpop.f32.mrf.mxu0
    %v4117 = vadd.f32 %v4028, %v4116
    %v4118 = vpop.f32.mrf.mxu0
    %v4119 = vadd.f32 %v4030, %v4118
    %4120 = vmatmul.bf16.gmra.mxu0 %v3674
    %v4121 = vpop.f32.mrf.mxu0
    %v4122 = vadd.f32 %v4033, %v4121
    %v4123 = vpop.f32.mrf.mxu0
    %v4124 = vadd.f32 %v4035, %v4123
    %4125 = vmatmul.bf16.gmra.mxu0 %v3677
    %v4126 = vpop.f32.mrf.mxu0
    %v4127 = vadd.f32 %v4038, %v4126
    %v4128 = vpop.f32.mrf.mxu0
    %v4129 = vadd.f32 %v4040, %v4128
    %4130 = vmatmul.bf16.gmra.mxu0 %v3680
    %v4131 = vpop.f32.mrf.mxu0
    %v4132 = vadd.f32 %v4043, %v4131
    %v4133 = vpop.f32.mrf.mxu0
    %v4134 = vadd.f32 %v4045, %v4133
    %4135 = vmatmul.bf16.gmra.mxu0 %v3683
    %v4136 = vpop.f32.mrf.mxu0
    %v4137 = vadd.f32 %v4048, %v4136
    %v4138 = vpop.f32.mrf.mxu0
    %v4139 = vadd.f32 %v4050, %v4138
    %4140 = vmatmul.bf16.gmra.mxu0 %v3686
    %v4141 = vpop.f32.mrf.mxu0
    %v4142 = vadd.f32 %v4053, %v4141
    %v4143 = vpop.f32.mrf.mxu0
    %v4144 = vadd.f32 %v4055, %v4143
    %4145 = vmatmul.bf16.gmra.mxu0 %v3689
    %v4146 = vpop.f32.mrf.mxu0
    %v4147 = vadd.f32 %v4058, %v4146
    %v4148 = vpop.f32.mrf.mxu0
    %v4149 = vadd.f32 %v4060, %v4148
    %4150 = vmatmul.bf16.gmra.mxu0 %v3692
    %v4151 = vpop.f32.mrf.mxu0
    %v4152 = vadd.f32 %v4063, %v4151
    %v4153 = vpop.f32.mrf.mxu0
    %v4154 = vadd.f32 %v4065, %v4153
    %4155 = vmatmul.bf16.gmra.mxu0 %v3695
    %v4156 = vpop.f32.mrf.mxu0
    %v4157 = vadd.f32 %v4068, %v4156
    %v4158 = vpop.f32.mrf.mxu0
    %v4159 = vadd.f32 %v4070, %v4158
    %4160 = vmatmul.bf16.gmra.mxu0 %v3698
    %v4161 = vpop.f32.mrf.mxu0
    %v4162 = vadd.f32 %v4073, %v4161
    %v4163 = vpop.f32.mrf.mxu0
    %v4164 = vadd.f32 %v4075, %v4163
    %4165 = vdwg.mxu0
    %4166 = vmatpush.bf16.msra.mxu0 %v3938
    %4167 = vmatpush.bf16.msra.mxu0 %v3936
    %4168 = vmatpush.bf16.msra.mxu0 %v3934
    %4169 = vmatpush.bf16.msra.mxu0 %v3932
    %4170 = vmatpush.bf16.msra.mxu0 %v3930
    %4171 = vmatpush.bf16.msra.mxu0 %v3928
    %4172 = vmatpush.bf16.msra.mxu0 %v3926
    %4173 = vmatpush.bf16.msra.mxu0 %v3924
    %4174 = vmatmul.bf16.gmra.mxu0 %v3654
    %v4175 = vpop.f32.mrf.mxu0
    %v4176 = vadd.f32 %v4087, %v4175
    %v4177 = vpop.f32.mrf.mxu0
    %v4178 = vadd.f32 %v4089, %v4177
    %4179 = vmatmul.bf16.gmra.mxu0 %v3657
    %v4180 = vpop.f32.mrf.mxu0
    %v4181 = vadd.f32 %v4092, %v4180
    %v4182 = vpop.f32.mrf.mxu0
    %v4183 = vadd.f32 %v4094, %v4182
    %4184 = vmatmul.bf16.gmra.mxu0 %v3660
    %v4185 = vpop.f32.mrf.mxu0
    %v4186 = vadd.f32 %v4097, %v4185
    %v4187 = vpop.f32.mrf.mxu0
    %v4188 = vadd.f32 %v4099, %v4187
    %4189 = vmatmul.bf16.gmra.mxu0 %v3663
    %v4190 = vpop.f32.mrf.mxu0
    %v4191 = vadd.f32 %v4102, %v4190
    %v4192 = vpop.f32.mrf.mxu0
    %v4193 = vadd.f32 %v4104, %v4192
    %4194 = vmatmul.bf16.gmra.mxu0 %v3666
    %v4195 = vpop.f32.mrf.mxu0
    %v4196 = vadd.f32 %v4107, %v4195
    %v4197 = vpop.f32.mrf.mxu0
    %v4198 = vadd.f32 %v4109, %v4197
    %4199 = vmatmul.bf16.gmra.mxu0 %v3669
    %v4200 = vpop.f32.mrf.mxu0
    %v4201 = vadd.f32 %v4112, %v4200
    %v4202 = vpop.f32.mrf.mxu0
    %v4203 = vadd.f32 %v4114, %v4202
    %4204 = vmatmul.bf16.gmra.mxu0 %v3672
    %v4205 = vpop.f32.mrf.mxu0
    %v4206 = vadd.f32 %v4117, %v4205
    %v4207 = vpop.f32.mrf.mxu0
    %v4208 = vadd.f32 %v4119, %v4207
    %4209 = vmatmul.bf16.gmra.mxu0 %v3675
    %v4210 = vpop.f32.mrf.mxu0
    %v4211 = vadd.f32 %v4122, %v4210
    %v4212 = vpop.f32.mrf.mxu0
    %v4213 = vadd.f32 %v4124, %v4212
    %4214 = vmatmul.bf16.gmra.mxu0 %v3678
    %v4215 = vpop.f32.mrf.mxu0
    %v4216 = vadd.f32 %v4127, %v4215
    %v4217 = vpop.f32.mrf.mxu0
    %v4218 = vadd.f32 %v4129, %v4217
    %4219 = vmatmul.bf16.gmra.mxu0 %v3681
    %v4220 = vpop.f32.mrf.mxu0
    %v4221 = vadd.f32 %v4132, %v4220
    %v4222 = vpop.f32.mrf.mxu0
    %v4223 = vadd.f32 %v4134, %v4222
    %4224 = vmatmul.bf16.gmra.mxu0 %v3684
    %v4225 = vpop.f32.mrf.mxu0
    %v4226 = vadd.f32 %v4137, %v4225
    %v4227 = vpop.f32.mrf.mxu0
    %v4228 = vadd.f32 %v4139, %v4227
    %4229 = vmatmul.bf16.gmra.mxu0 %v3687
    %v4230 = vpop.f32.mrf.mxu0
    %v4231 = vadd.f32 %v4142, %v4230
    %v4232 = vpop.f32.mrf.mxu0
    %v4233 = vadd.f32 %v4144, %v4232
    %4234 = vmatmul.bf16.gmra.mxu0 %v3690
    %v4235 = vpop.f32.mrf.mxu0
    %v4236 = vadd.f32 %v4147, %v4235
    %v4237 = vpop.f32.mrf.mxu0
    %v4238 = vadd.f32 %v4149, %v4237
    %4239 = vmatmul.bf16.gmra.mxu0 %v3693
    %v4240 = vpop.f32.mrf.mxu0
    %v4241 = vadd.f32 %v4152, %v4240
    %v4242 = vpop.f32.mrf.mxu0
    %v4243 = vadd.f32 %v4154, %v4242
    %4244 = vmatmul.bf16.gmra.mxu0 %v3696
    %v4245 = vpop.f32.mrf.mxu0
    %v4246 = vadd.f32 %v4157, %v4245
    %v4247 = vpop.f32.mrf.mxu0
    %v4248 = vadd.f32 %v4159, %v4247
    %4249 = vmatmul.bf16.gmra.mxu0 %v3699
    %v4250 = vpop.f32.mrf.mxu0
    %v4251 = vadd.f32 %v4162, %v4250
    %v4252 = vpop.f32.mrf.mxu0
    %v4253 = vadd.f32 %v4164, %v4252
    %4254 = vdwg.mxu0
    %4255 = vmatpush.bf16.msra.mxu0 %v3907
    %4256 = vmatpush.bf16.msra.mxu0 %v3905
    %4257 = vmatpush.bf16.msra.mxu0 %v3903
    %4258 = vmatpush.bf16.msra.mxu0 %v3901
    %4259 = vmatpush.bf16.msra.mxu0 %v3899
    %4260 = vmatpush.bf16.msra.mxu0 %v3897
    %4261 = vmatpush.bf16.msra.mxu0 %v3895
    %4262 = vmatpush.bf16.msra.mxu0 %v3893
    %4263 = vmatmul.bf16.gmra.mxu0 %v3652
    %v4264 = vpop.f32.mrf.mxu0
    %v4265 = vadd.f32 0.0, %v4264
    %v4266 = vpop.f32.mrf.mxu0
    %v4267 = vadd.f32 0.0, %v4266
    %4268 = vmatmul.bf16.gmra.mxu0 %v3655
    %v4269 = vpop.f32.mrf.mxu0
    %v4270 = vadd.f32 0.0, %v4269
    %v4271 = vpop.f32.mrf.mxu0
    %v4272 = vadd.f32 0.0, %v4271
    %4273 = vmatmul.bf16.gmra.mxu0 %v3658
    %v4274 = vpop.f32.mrf.mxu0
    %v4275 = vadd.f32 0.0, %v4274
    %v4276 = vpop.f32.mrf.mxu0
    %v4277 = vadd.f32 0.0, %v4276
    %4278 = vmatmul.bf16.gmra.mxu0 %v3661
    %v4279 = vpop.f32.mrf.mxu0
    %v4280 = vadd.f32 0.0, %v4279
    %v4281 = vpop.f32.mrf.mxu0
    %v4282 = vadd.f32 0.0, %v4281
    %4283 = vmatmul.bf16.gmra.mxu0 %v3664
    %v4284 = vpop.f32.mrf.mxu0
    %v4285 = vadd.f32 0.0, %v4284
    %v4286 = vpop.f32.mrf.mxu0
    %v4287 = vadd.f32 0.0, %v4286
    %4288 = vmatmul.bf16.gmra.mxu0 %v3667
    %v4289 = vpop.f32.mrf.mxu0
    %v4290 = vadd.f32 0.0, %v4289
    %v4291 = vpop.f32.mrf.mxu0
    %v4292 = vadd.f32 0.0, %v4291
    %4293 = vmatmul.bf16.gmra.mxu0 %v3670
    %v4294 = vpop.f32.mrf.mxu0
    %v4295 = vadd.f32 0.0, %v4294
    %v4296 = vpop.f32.mrf.mxu0
    %v4297 = vadd.f32 0.0, %v4296
    %4298 = vmatmul.bf16.gmra.mxu0 %v3673
    %v4299 = vpop.f32.mrf.mxu0
    %v4300 = vadd.f32 0.0, %v4299
    %v4301 = vpop.f32.mrf.mxu0
    %v4302 = vadd.f32 0.0, %v4301
    %4303 = vmatmul.bf16.gmra.mxu0 %v3676
    %v4304 = vpop.f32.mrf.mxu0
    %v4305 = vadd.f32 0.0, %v4304
    %v4306 = vpop.f32.mrf.mxu0
    %v4307 = vadd.f32 0.0, %v4306
    %4308 = vmatmul.bf16.gmra.mxu0 %v3679
    %v4309 = vpop.f32.mrf.mxu0
    %v4310 = vadd.f32 0.0, %v4309
    %v4311 = vpop.f32.mrf.mxu0
    %v4312 = vadd.f32 0.0, %v4311
    %4313 = vmatmul.bf16.gmra.mxu0 %v3682
    %v4314 = vpop.f32.mrf.mxu0
    %v4315 = vadd.f32 0.0, %v4314
    %v4316 = vpop.f32.mrf.mxu0
    %v4317 = vadd.f32 0.0, %v4316
    %4318 = vmatmul.bf16.gmra.mxu0 %v3685
    %v4319 = vpop.f32.mrf.mxu0
    %v4320 = vadd.f32 0.0, %v4319
    %v4321 = vpop.f32.mrf.mxu0
    %v4322 = vadd.f32 0.0, %v4321
    %4323 = vmatmul.bf16.gmra.mxu0 %v3688
    %v4324 = vpop.f32.mrf.mxu0
    %v4325 = vadd.f32 0.0, %v4324
    %v4326 = vpop.f32.mrf.mxu0
    %v4327 = vadd.f32 0.0, %v4326
    %4328 = vmatmul.bf16.gmra.mxu0 %v3691
    %v4329 = vpop.f32.mrf.mxu0
    %v4330 = vadd.f32 0.0, %v4329
    %v4331 = vpop.f32.mrf.mxu0
    %v4332 = vadd.f32 0.0, %v4331
    %4333 = vmatmul.bf16.gmra.mxu0 %v3694
    %v4334 = vpop.f32.mrf.mxu0
    %v4335 = vadd.f32 0.0, %v4334
    %v4336 = vpop.f32.mrf.mxu0
    %v4337 = vadd.f32 0.0, %v4336
    %4338 = vmatmul.bf16.gmra.mxu0 %v3697
    %v4339 = vpop.f32.mrf.mxu0
    %v4340 = vadd.f32 0.0, %v4339
    %v4341 = vpop.f32.mrf.mxu0
    %v4342 = vadd.f32 0.0, %v4341
    %4343 = vdwg.mxu0
    %4344 = vmatpush.bf16.msra.mxu0 %v3923
    %4345 = vmatpush.bf16.msra.mxu0 %v3921
    %4346 = vmatpush.bf16.msra.mxu0 %v3919
    %4347 = vmatpush.bf16.msra.mxu0 %v3917
    %4348 = vmatpush.bf16.msra.mxu0 %v3915
    %4349 = vmatpush.bf16.msra.mxu0 %v3913
    %4350 = vmatpush.bf16.msra.mxu0 %v3911
    %4351 = vmatpush.bf16.msra.mxu0 %v3909
    %4352 = vmatmul.bf16.gmra.mxu0 %v3653
    %v4353 = vpop.f32.mrf.mxu0
    %v4354 = vadd.f32 %v4265, %v4353
    %v4355 = vpop.f32.mrf.mxu0
    %v4356 = vadd.f32 %v4267, %v4355
    %4357 = vmatmul.bf16.gmra.mxu0 %v3656
    %v4358 = vpop.f32.mrf.mxu0
    %v4359 = vadd.f32 %v4270, %v4358
    %v4360 = vpop.f32.mrf.mxu0
    %v4361 = vadd.f32 %v4272, %v4360
    %4362 = vmatmul.bf16.gmra.mxu0 %v3659
    %v4363 = vpop.f32.mrf.mxu0
    %v4364 = vadd.f32 %v4275, %v4363
    %v4365 = vpop.f32.mrf.mxu0
    %v4366 = vadd.f32 %v4277, %v4365
    %4367 = vmatmul.bf16.gmra.mxu0 %v3662
    %v4368 = vpop.f32.mrf.mxu0
    %v4369 = vadd.f32 %v4280, %v4368
    %v4370 = vpop.f32.mrf.mxu0
    %v4371 = vadd.f32 %v4282, %v4370
    %4372 = vmatmul.bf16.gmra.mxu0 %v3665
    %v4373 = vpop.f32.mrf.mxu0
    %v4374 = vadd.f32 %v4285, %v4373
    %v4375 = vpop.f32.mrf.mxu0
    %v4376 = vadd.f32 %v4287, %v4375
    %4377 = vmatmul.bf16.gmra.mxu0 %v3668
    %v4378 = vpop.f32.mrf.mxu0
    %v4379 = vadd.f32 %v4290, %v4378
    %v4380 = vpop.f32.mrf.mxu0
    %v4381 = vadd.f32 %v4292, %v4380
    %4382 = vmatmul.bf16.gmra.mxu0 %v3671
    %v4383 = vpop.f32.mrf.mxu0
    %v4384 = vadd.f32 %v4295, %v4383
    %v4385 = vpop.f32.mrf.mxu0
    %v4386 = vadd.f32 %v4297, %v4385
    %4387 = vmatmul.bf16.gmra.mxu0 %v3674
    %v4388 = vpop.f32.mrf.mxu0
    %v4389 = vadd.f32 %v4300, %v4388
    %v4390 = vpop.f32.mrf.mxu0
    %v4391 = vadd.f32 %v4302, %v4390
    %4392 = vmatmul.bf16.gmra.mxu0 %v3677
    %v4393 = vpop.f32.mrf.mxu0
    %v4394 = vadd.f32 %v4305, %v4393
    %v4395 = vpop.f32.mrf.mxu0
    %v4396 = vadd.f32 %v4307, %v4395
    %4397 = vmatmul.bf16.gmra.mxu0 %v3680
    %v4398 = vpop.f32.mrf.mxu0
    %v4399 = vadd.f32 %v4310, %v4398
    %v4400 = vpop.f32.mrf.mxu0
    %v4401 = vadd.f32 %v4312, %v4400
    %4402 = vmatmul.bf16.gmra.mxu0 %v3683
    %v4403 = vpop.f32.mrf.mxu0
    %v4404 = vadd.f32 %v4315, %v4403
    %v4405 = vpop.f32.mrf.mxu0
    %v4406 = vadd.f32 %v4317, %v4405
    %4407 = vmatmul.bf16.gmra.mxu0 %v3686
    %v4408 = vpop.f32.mrf.mxu0
    %v4409 = vadd.f32 %v4320, %v4408
    %v4410 = vpop.f32.mrf.mxu0
    %v4411 = vadd.f32 %v4322, %v4410
    %4412 = vmatmul.bf16.gmra.mxu0 %v3689
    %v4413 = vpop.f32.mrf.mxu0
    %v4414 = vadd.f32 %v4325, %v4413
    %v4415 = vpop.f32.mrf.mxu0
    %v4416 = vadd.f32 %v4327, %v4415
    %4417 = vmatmul.bf16.gmra.mxu0 %v3692
    %v4418 = vpop.f32.mrf.mxu0
    %v4419 = vadd.f32 %v4330, %v4418
    %v4420 = vpop.f32.mrf.mxu0
    %v4421 = vadd.f32 %v4332, %v4420
    %4422 = vmatmul.bf16.gmra.mxu0 %v3695
    %v4423 = vpop.f32.mrf.mxu0
    %v4424 = vadd.f32 %v4335, %v4423
    %v4425 = vpop.f32.mrf.mxu0
    %v4426 = vadd.f32 %v4337, %v4425
    %4427 = vmatmul.bf16.gmra.mxu0 %v3698
    %v4428 = vpop.f32.mrf.mxu0
    %v4429 = vadd.f32 %v4340, %v4428
    %v4430 = vpop.f32.mrf.mxu0
    %v4431 = vadd.f32 %v4342, %v4430
    %4432 = vdwg.mxu0
    %4433 = vmatpush.bf16.msra.mxu0 %v3939
    %4434 = vmatpush.bf16.msra.mxu0 %v3937
    %4435 = vmatpush.bf16.msra.mxu0 %v3935
    %4436 = vmatpush.bf16.msra.mxu0 %v3933
    %4437 = vmatpush.bf16.msra.mxu0 %v3931
    %4438 = vmatpush.bf16.msra.mxu0 %v3929
    %4439 = vmatpush.bf16.msra.mxu0 %v3927
    %4440 = vmatpush.bf16.msra.mxu0 %v3925
    %4441 = vmatmul.bf16.gmra.mxu0 %v3654
    %v4442 = vpop.f32.mrf.mxu0
    %v4443 = vadd.f32 %v4354, %v4442
    %v4444 = vpop.f32.mrf.mxu0
    %v4445 = vadd.f32 %v4356, %v4444
    %4446 = vmatmul.bf16.gmra.mxu0 %v3657
    %v4447 = vpop.f32.mrf.mxu0
    %v4448 = vadd.f32 %v4359, %v4447
    %v4449 = vpop.f32.mrf.mxu0
    %v4450 = vadd.f32 %v4361, %v4449
    %4451 = vmatmul.bf16.gmra.mxu0 %v3660
    %v4452 = vpop.f32.mrf.mxu0
    %v4453 = vadd.f32 %v4364, %v4452
    %v4454 = vpop.f32.mrf.mxu0
    %v4455 = vadd.f32 %v4366, %v4454
    %4456 = vmatmul.bf16.gmra.mxu0 %v3663
    %v4457 = vpop.f32.mrf.mxu0
    %v4458 = vadd.f32 %v4369, %v4457
    %v4459 = vpop.f32.mrf.mxu0
    %v4460 = vadd.f32 %v4371, %v4459
    %4461 = vmatmul.bf16.gmra.mxu0 %v3666
    %v4462 = vpop.f32.mrf.mxu0
    %v4463 = vadd.f32 %v4374, %v4462
    %v4464 = vpop.f32.mrf.mxu0
    %v4465 = vadd.f32 %v4376, %v4464
    %4466 = vmatmul.bf16.gmra.mxu0 %v3669
    %v4467 = vpop.f32.mrf.mxu0
    %v4468 = vadd.f32 %v4379, %v4467
    %v4469 = vpop.f32.mrf.mxu0
    %v4470 = vadd.f32 %v4381, %v4469
    %4471 = vmatmul.bf16.gmra.mxu0 %v3672
    %v4472 = vpop.f32.mrf.mxu0
    %v4473 = vadd.f32 %v4384, %v4472
    %v4474 = vpop.f32.mrf.mxu0
    %v4475 = vadd.f32 %v4386, %v4474
    %4476 = vmatmul.bf16.gmra.mxu0 %v3675
    %v4477 = vpop.f32.mrf.mxu0
    %v4478 = vadd.f32 %v4389, %v4477
    %v4479 = vpop.f32.mrf.mxu0
    %v4480 = vadd.f32 %v4391, %v4479
    %4481 = vmatmul.bf16.gmra.mxu0 %v3678
    %v4482 = vpop.f32.mrf.mxu0
    %v4483 = vadd.f32 %v4394, %v4482
    %v4484 = vpop.f32.mrf.mxu0
    %v4485 = vadd.f32 %v4396, %v4484
    %4486 = vmatmul.bf16.gmra.mxu0 %v3681
    %v4487 = vpop.f32.mrf.mxu0
    %v4488 = vadd.f32 %v4399, %v4487
    %v4489 = vpop.f32.mrf.mxu0
    %v4490 = vadd.f32 %v4401, %v4489
    %4491 = vmatmul.bf16.gmra.mxu0 %v3684
    %v4492 = vpop.f32.mrf.mxu0
    %v4493 = vadd.f32 %v4404, %v4492
    %v4494 = vpop.f32.mrf.mxu0
    %v4495 = vadd.f32 %v4406, %v4494
    %4496 = vmatmul.bf16.gmra.mxu0 %v3687
    %v4497 = vpop.f32.mrf.mxu0
    %v4498 = vadd.f32 %v4409, %v4497
    %v4499 = vpop.f32.mrf.mxu0
    %v4500 = vadd.f32 %v4411, %v4499
    %4501 = vmatmul.bf16.gmra.mxu0 %v3690
    %v4502 = vpop.f32.mrf.mxu0
    %v4503 = vadd.f32 %v4414, %v4502
    %v4504 = vpop.f32.mrf.mxu0
    %v4505 = vadd.f32 %v4416, %v4504
    %4506 = vmatmul.bf16.gmra.mxu0 %v3693
    %v4507 = vpop.f32.mrf.mxu0
    %v4508 = vadd.f32 %v4419, %v4507
    %v4509 = vpop.f32.mrf.mxu0
    %v4510 = vadd.f32 %v4421, %v4509
    %4511 = vmatmul.bf16.gmra.mxu0 %v3696
    %v4512 = vpop.f32.mrf.mxu0
    %v4513 = vadd.f32 %v4424, %v4512
    %v4514 = vpop.f32.mrf.mxu0
    %v4515 = vadd.f32 %v4426, %v4514
    %4516 = vmatmul.bf16.gmra.mxu0 %v3699
    %v4517 = vpop.f32.mrf.mxu0
    %v4518 = vadd.f32 %v4429, %v4517
    %v4519 = vpop.f32.mrf.mxu0
    %v4520 = vadd.f32 %v4431, %v4519
    %4521 = vdwg.mxu0
    %v4526 = vunpack.c.l.b16 %v3315
    %v4527 = vunpack.c.h.b16 %v3315
    %v4528 = vunpack.c.l.b16 %v3316
    %v4529 = vunpack.c.l.b16 %v3317
    %v4530 = vunpack.c.h.b16 %v3317
    %v4531 = vunpack.c.l.b16 %v3318
    %v4532 = vpack.c.b16 %v4529, %v4526
    %v4533 = vpack.c.b16 %v4530, %v4527
    %v4534 = vpack.c.b16 %v4531, %v4528
    %v4586 = vunpack.c.l.b16 %v3395
    %v4587 = vunpack.c.h.b16 %v3395
    %v4588 = vunpack.c.l.b16 %v3396
    %v4589 = vunpack.c.h.b16 %v3396
    %v4590 = vunpack.c.l.b16 %v3397
    %v4591 = vunpack.c.h.b16 %v3397
    %v4592 = vunpack.c.l.b16 %v3398
    %v4593 = vunpack.c.h.b16 %v3398
    %v4594 = vunpack.c.l.b16 %v3399
    %v4595 = vunpack.c.h.b16 %v3399
    %v4596 = vunpack.c.l.b16 %v3400
    %v4597 = vunpack.c.h.b16 %v3400
    %v4598 = vunpack.c.l.b16 %v3401
    %v4599 = vunpack.c.h.b16 %v3401
    %v4600 = vunpack.c.l.b16 %v3402
    %v4601 = vunpack.c.h.b16 %v3402
    %v4602 = vunpack.c.l.b16 %v3403
    %v4603 = vunpack.c.h.b16 %v3403
    %v4604 = vunpack.c.l.b16 %v3404
    %v4605 = vunpack.c.h.b16 %v3404
    %v4606 = vunpack.c.l.b16 %v3405
    %v4607 = vunpack.c.h.b16 %v3405
    %v4608 = vunpack.c.l.b16 %v3406
    %v4609 = vunpack.c.h.b16 %v3406
    %v4610 = vunpack.c.l.b16 %v3407
    %v4611 = vunpack.c.h.b16 %v3407
    %v4612 = vunpack.c.l.b16 %v3408
    %v4613 = vunpack.c.h.b16 %v3408
    %v4614 = vunpack.c.l.b16 %v3409
    %v4615 = vunpack.c.h.b16 %v3409
    %v4616 = vunpack.c.l.b16 %v3410
    %v4617 = vunpack.c.h.b16 %v3410
    %v4618 = vunpack.c.l.b16 %v3411
    %v4619 = vunpack.c.h.b16 %v3411
    %v4620 = vunpack.c.l.b16 %v3412
    %v4621 = vunpack.c.h.b16 %v3412
    %v4622 = vunpack.c.l.b16 %v3413
    %v4623 = vunpack.c.h.b16 %v3413
    %v4624 = vunpack.c.l.b16 %v3414
    %v4625 = vunpack.c.h.b16 %v3414
    %v4626 = vunpack.c.l.b16 %v3415
    %v4627 = vunpack.c.h.b16 %v3415
    %v4628 = vunpack.c.l.b16 %v3416
    %v4629 = vunpack.c.h.b16 %v3416
    %v4630 = vunpack.c.l.b16 %v3417
    %v4631 = vunpack.c.h.b16 %v3417
    %v4632 = vunpack.c.l.b16 %v3418
    %v4633 = vunpack.c.h.b16 %v3418
    %v4634 = vunpack.c.l.b16 %v3419
    %v4635 = vunpack.c.h.b16 %v3419
    %v4636 = vunpack.c.l.b16 %v3420
    %v4637 = vunpack.c.h.b16 %v3420
    %v4638 = vunpack.c.l.b16 %v3421
    %v4639 = vunpack.c.h.b16 %v3421
    %v4640 = vunpack.c.l.b16 %v3422
    %v4641 = vunpack.c.h.b16 %v3422
    %v4642 = vunpack.c.l.b16 %v3423
    %v4643 = vunpack.c.h.b16 %v3423
    %v4644 = vunpack.c.l.b16 %v3424
    %v4645 = vunpack.c.h.b16 %v3424
    %v4646 = vunpack.c.l.b16 %v3425
    %v4647 = vunpack.c.h.b16 %v3425
    %v4648 = vunpack.c.l.b16 %v3426
    %v4649 = vunpack.c.h.b16 %v3426
    %v4650 = vunpack.c.l.b16 %v3427
    %v4651 = vunpack.c.h.b16 %v3427
    %v4652 = vunpack.c.l.b16 %v3428
    %v4653 = vunpack.c.h.b16 %v3428
    %v4654 = vunpack.c.l.b16 %v3429
    %v4655 = vunpack.c.h.b16 %v3429
    %v4656 = vunpack.c.l.b16 %v3430
    %v4657 = vunpack.c.h.b16 %v3430
    %v4658 = vunpack.c.l.b16 %v3431
    %v4659 = vunpack.c.h.b16 %v3431
    %v4660 = vunpack.c.l.b16 %v3432
    %v4661 = vunpack.c.h.b16 %v3432
    %v4662 = vunpack.c.l.b16 %v3433
    %v4663 = vunpack.c.h.b16 %v3433
    %v4664 = vunpack.c.l.b16 %v3434
    %v4665 = vunpack.c.h.b16 %v3434
    %v4666 = vunpack.c.l.b16 %v3435
    %v4667 = vunpack.c.h.b16 %v3435
    %v4668 = vunpack.c.l.b16 %v3436
    %v4669 = vunpack.c.h.b16 %v3436
    %v4670 = vunpack.c.l.b16 %v3437
    %v4671 = vunpack.c.h.b16 %v3437
    %v4672 = vunpack.c.l.b16 %v3438
    %v4673 = vunpack.c.h.b16 %v3438
    %v4674 = vunpack.c.l.b16 %v3439
    %v4675 = vunpack.c.h.b16 %v3439
    %v4676 = vunpack.c.l.b16 %v3440
    %v4677 = vunpack.c.h.b16 %v3440
    %v4678 = vunpack.c.l.b16 %v3441
    %v4679 = vunpack.c.h.b16 %v3441
    %v4680 = vunpack.c.l.b16 %v3442
    %v4681 = vunpack.c.h.b16 %v3442
    %v4682 = vpack.c.b16 %v4588, %v4586
    %v4683 = vpack.c.b16 %v4589, %v4587
    %v4684 = vpack.c.b16 %v4592, %v4590
    %v4685 = vpack.c.b16 %v4593, %v4591
    %v4686 = vpack.c.b16 %v4596, %v4594
    %v4687 = vpack.c.b16 %v4597, %v4595
    %v4688 = vpack.c.b16 %v4600, %v4598
    %v4689 = vpack.c.b16 %v4601, %v4599
    %v4690 = vpack.c.b16 %v4604, %v4602
    %v4691 = vpack.c.b16 %v4605, %v4603
    %v4692 = vpack.c.b16 %v4608, %v4606
    %v4693 = vpack.c.b16 %v4609, %v4607
    %v4694 = vpack.c.b16 %v4612, %v4610
    %v4695 = vpack.c.b16 %v4613, %v4611
    %v4696 = vpack.c.b16 %v4616, %v4614
    %v4697 = vpack.c.b16 %v4617, %v4615
    %v4698 = vpack.c.b16 %v4620, %v4618
    %v4699 = vpack.c.b16 %v4621, %v4619
    %v4700 = vpack.c.b16 %v4624, %v4622
    %v4701 = vpack.c.b16 %v4625, %v4623
    %v4702 = vpack.c.b16 %v4628, %v4626
    %v4703 = vpack.c.b16 %v4629, %v4627
    %v4704 = vpack.c.b16 %v4632, %v4630
    %v4705 = vpack.c.b16 %v4633, %v4631
    %v4706 = vpack.c.b16 %v4636, %v4634
    %v4707 = vpack.c.b16 %v4637, %v4635
    %v4708 = vpack.c.b16 %v4640, %v4638
    %v4709 = vpack.c.b16 %v4641, %v4639
    %v4710 = vpack.c.b16 %v4644, %v4642
    %v4711 = vpack.c.b16 %v4645, %v4643
    %v4712 = vpack.c.b16 %v4648, %v4646
    %v4713 = vpack.c.b16 %v4649, %v4647
    %v4714 = vpack.c.b16 %v4652, %v4650
    %v4715 = vpack.c.b16 %v4653, %v4651
    %v4716 = vpack.c.b16 %v4656, %v4654
    %v4717 = vpack.c.b16 %v4657, %v4655
    %v4718 = vpack.c.b16 %v4660, %v4658
    %v4719 = vpack.c.b16 %v4661, %v4659
    %v4720 = vpack.c.b16 %v4664, %v4662
    %v4721 = vpack.c.b16 %v4665, %v4663
    %v4722 = vpack.c.b16 %v4668, %v4666
    %v4723 = vpack.c.b16 %v4669, %v4667
    %v4724 = vpack.c.b16 %v4672, %v4670
    %v4725 = vpack.c.b16 %v4673, %v4671
    %v4726 = vpack.c.b16 %v4676, %v4674
    %v4727 = vpack.c.b16 %v4677, %v4675
    %v4728 = vpack.c.b16 %v4680, %v4678
    %v4729 = vpack.c.b16 %v4681, %v4679
    %4778 = vmatpush.bf16.msra.mxu0 %v4696
    %4779 = vmatpush.bf16.msra.mxu0 %v4694
    %4780 = vmatpush.bf16.msra.mxu0 %v4692
    %4781 = vmatpush.bf16.msra.mxu0 %v4690
    %4782 = vmatpush.bf16.msra.mxu0 %v4688
    %4783 = vmatpush.bf16.msra.mxu0 %v4686
    %4784 = vmatpush.bf16.msra.mxu0 %v4684
    %4785 = vmatpush.bf16.msra.mxu0 %v4682
    %4786 = vmatmul.bf16.gmra.mxu0 %v4532
    %v4787 = vpop.f32.mrf.mxu0
    %v4788 = vadd.f32 %v4176, %v4787
    %v4789 = vpop.f32.mrf.mxu0
    %v4790 = vadd.f32 %v4178, %v4789
    %4791 = vmatmul.bf16.gmra.mxu0 %v3652
    %v4792 = vpop.f32.mrf.mxu0
    %v4793 = vadd.f32 %v4181, %v4792
    %v4794 = vpop.f32.mrf.mxu0
    %v4795 = vadd.f32 %v4183, %v4794
    %4796 = vmatmul.bf16.gmra.mxu0 %v3655
    %v4797 = vpop.f32.mrf.mxu0
    %v4798 = vadd.f32 %v4186, %v4797
    %v4799 = vpop.f32.mrf.mxu0
    %v4800 = vadd.f32 %v4188, %v4799
    %4801 = vmatmul.bf16.gmra.mxu0 %v3658
    %v4802 = vpop.f32.mrf.mxu0
    %v4803 = vadd.f32 %v4191, %v4802
    %v4804 = vpop.f32.mrf.mxu0
    %v4805 = vadd.f32 %v4193, %v4804
    %4806 = vmatmul.bf16.gmra.mxu0 %v3661
    %v4807 = vpop.f32.mrf.mxu0
    %v4808 = vadd.f32 %v4196, %v4807
    %v4809 = vpop.f32.mrf.mxu0
    %v4810 = vadd.f32 %v4198, %v4809
    %4811 = vmatmul.bf16.gmra.mxu0 %v3664
    %v4812 = vpop.f32.mrf.mxu0
    %v4813 = vadd.f32 %v4201, %v4812
    %v4814 = vpop.f32.mrf.mxu0
    %v4815 = vadd.f32 %v4203, %v4814
    %4816 = vmatmul.bf16.gmra.mxu0 %v3667
    %v4817 = vpop.f32.mrf.mxu0
    %v4818 = vadd.f32 %v4206, %v4817
    %v4819 = vpop.f32.mrf.mxu0
    %v4820 = vadd.f32 %v4208, %v4819
    %4821 = vmatmul.bf16.gmra.mxu0 %v3670
    %v4822 = vpop.f32.mrf.mxu0
    %v4823 = vadd.f32 %v4211, %v4822
    %v4824 = vpop.f32.mrf.mxu0
    %v4825 = vadd.f32 %v4213, %v4824
    %4826 = vmatmul.bf16.gmra.mxu0 %v3673
    %v4827 = vpop.f32.mrf.mxu0
    %v4828 = vadd.f32 %v4216, %v4827
    %v4829 = vpop.f32.mrf.mxu0
    %v4830 = vadd.f32 %v4218, %v4829
    %4831 = vmatmul.bf16.gmra.mxu0 %v3676
    %v4832 = vpop.f32.mrf.mxu0
    %v4833 = vadd.f32 %v4221, %v4832
    %v4834 = vpop.f32.mrf.mxu0
    %v4835 = vadd.f32 %v4223, %v4834
    %4836 = vmatmul.bf16.gmra.mxu0 %v3679
    %v4837 = vpop.f32.mrf.mxu0
    %v4838 = vadd.f32 %v4226, %v4837
    %v4839 = vpop.f32.mrf.mxu0
    %v4840 = vadd.f32 %v4228, %v4839
    %4841 = vmatmul.bf16.gmra.mxu0 %v3682
    %v4842 = vpop.f32.mrf.mxu0
    %v4843 = vadd.f32 %v4231, %v4842
    %v4844 = vpop.f32.mrf.mxu0
    %v4845 = vadd.f32 %v4233, %v4844
    %4846 = vmatmul.bf16.gmra.mxu0 %v3685
    %v4847 = vpop.f32.mrf.mxu0
    %v4848 = vadd.f32 %v4236, %v4847
    %v4849 = vpop.f32.mrf.mxu0
    %v4850 = vadd.f32 %v4238, %v4849
    %4851 = vmatmul.bf16.gmra.mxu0 %v3688
    %v4852 = vpop.f32.mrf.mxu0
    %v4853 = vadd.f32 %v4241, %v4852
    %v4854 = vpop.f32.mrf.mxu0
    %v4855 = vadd.f32 %v4243, %v4854
    %4856 = vmatmul.bf16.gmra.mxu0 %v3691
    %v4857 = vpop.f32.mrf.mxu0
    %v4858 = vadd.f32 %v4246, %v4857
    %v4859 = vpop.f32.mrf.mxu0
    %v4860 = vadd.f32 %v4248, %v4859
    %4861 = vmatmul.bf16.gmra.mxu0 %v3694
    %v4862 = vpop.f32.mrf.mxu0
    %v4863 = vadd.f32 %v4251, %v4862
    %v4864 = vpop.f32.mrf.mxu0
    %v4865 = vadd.f32 %v4253, %v4864
    %4866 = vdwg.mxu0
    %4867 = vmatpush.bf16.msra.mxu0 %v4712
    %4868 = vmatpush.bf16.msra.mxu0 %v4710
    %4869 = vmatpush.bf16.msra.mxu0 %v4708
    %4870 = vmatpush.bf16.msra.mxu0 %v4706
    %4871 = vmatpush.bf16.msra.mxu0 %v4704
    %4872 = vmatpush.bf16.msra.mxu0 %v4702
    %4873 = vmatpush.bf16.msra.mxu0 %v4700
    %4874 = vmatpush.bf16.msra.mxu0 %v4698
    %4875 = vmatmul.bf16.gmra.mxu0 %v4533
    %v4876 = vpop.f32.mrf.mxu0
    %v4877 = vadd.f32 %v4788, %v4876
    %v4878 = vpop.f32.mrf.mxu0
    %v4879 = vadd.f32 %v4790, %v4878
    %4880 = vmatmul.bf16.gmra.mxu0 %v3653
    %v4881 = vpop.f32.mrf.mxu0
    %v4882 = vadd.f32 %v4793, %v4881
    %v4883 = vpop.f32.mrf.mxu0
    %v4884 = vadd.f32 %v4795, %v4883
    %4885 = vmatmul.bf16.gmra.mxu0 %v3656
    %v4886 = vpop.f32.mrf.mxu0
    %v4887 = vadd.f32 %v4798, %v4886
    %v4888 = vpop.f32.mrf.mxu0
    %v4889 = vadd.f32 %v4800, %v4888
    %4890 = vmatmul.bf16.gmra.mxu0 %v3659
    %v4891 = vpop.f32.mrf.mxu0
    %v4892 = vadd.f32 %v4803, %v4891
    %v4893 = vpop.f32.mrf.mxu0
    %v4894 = vadd.f32 %v4805, %v4893
    %4895 = vmatmul.bf16.gmra.mxu0 %v3662
    %v4896 = vpop.f32.mrf.mxu0
    %v4897 = vadd.f32 %v4808, %v4896
    %v4898 = vpop.f32.mrf.mxu0
    %v4899 = vadd.f32 %v4810, %v4898
    %4900 = vmatmul.bf16.gmra.mxu0 %v3665
    %v4901 = vpop.f32.mrf.mxu0
    %v4902 = vadd.f32 %v4813, %v4901
    %v4903 = vpop.f32.mrf.mxu0
    %v4904 = vadd.f32 %v4815, %v4903
    %4905 = vmatmul.bf16.gmra.mxu0 %v3668
    %v4906 = vpop.f32.mrf.mxu0
    %v4907 = vadd.f32 %v4818, %v4906
    %v4908 = vpop.f32.mrf.mxu0
    %v4909 = vadd.f32 %v4820, %v4908
    %4910 = vmatmul.bf16.gmra.mxu0 %v3671
    %v4911 = vpop.f32.mrf.mxu0
    %v4912 = vadd.f32 %v4823, %v4911
    %v4913 = vpop.f32.mrf.mxu0
    %v4914 = vadd.f32 %v4825, %v4913
    %4915 = vmatmul.bf16.gmra.mxu0 %v3674
    %v4916 = vpop.f32.mrf.mxu0
    %v4917 = vadd.f32 %v4828, %v4916
    %v4918 = vpop.f32.mrf.mxu0
    %v4919 = vadd.f32 %v4830, %v4918
    %4920 = vmatmul.bf16.gmra.mxu0 %v3677
    %v4921 = vpop.f32.mrf.mxu0
    %v4922 = vadd.f32 %v4833, %v4921
    %v4923 = vpop.f32.mrf.mxu0
    %v4924 = vadd.f32 %v4835, %v4923
    %4925 = vmatmul.bf16.gmra.mxu0 %v3680
    %v4926 = vpop.f32.mrf.mxu0
    %v4927 = vadd.f32 %v4838, %v4926
    %v4928 = vpop.f32.mrf.mxu0
    %v4929 = vadd.f32 %v4840, %v4928
    %4930 = vmatmul.bf16.gmra.mxu0 %v3683
    %v4931 = vpop.f32.mrf.mxu0
    %v4932 = vadd.f32 %v4843, %v4931
    %v4933 = vpop.f32.mrf.mxu0
    %v4934 = vadd.f32 %v4845, %v4933
    %4935 = vmatmul.bf16.gmra.mxu0 %v3686
    %v4936 = vpop.f32.mrf.mxu0
    %v4937 = vadd.f32 %v4848, %v4936
    %v4938 = vpop.f32.mrf.mxu0
    %v4939 = vadd.f32 %v4850, %v4938
    %4940 = vmatmul.bf16.gmra.mxu0 %v3689
    %v4941 = vpop.f32.mrf.mxu0
    %v4942 = vadd.f32 %v4853, %v4941
    %v4943 = vpop.f32.mrf.mxu0
    %v4944 = vadd.f32 %v4855, %v4943
    %4945 = vmatmul.bf16.gmra.mxu0 %v3692
    %v4946 = vpop.f32.mrf.mxu0
    %v4947 = vadd.f32 %v4858, %v4946
    %v4948 = vpop.f32.mrf.mxu0
    %v4949 = vadd.f32 %v4860, %v4948
    %4950 = vmatmul.bf16.gmra.mxu0 %v3695
    %v4951 = vpop.f32.mrf.mxu0
    %v4952 = vadd.f32 %v4863, %v4951
    %v4953 = vpop.f32.mrf.mxu0
    %v4954 = vadd.f32 %v4865, %v4953
    %4955 = vdwg.mxu0
    %4956 = vmatpush.bf16.msra.mxu0 %v4728
    %4957 = vmatpush.bf16.msra.mxu0 %v4726
    %4958 = vmatpush.bf16.msra.mxu0 %v4724
    %4959 = vmatpush.bf16.msra.mxu0 %v4722
    %4960 = vmatpush.bf16.msra.mxu0 %v4720
    %4961 = vmatpush.bf16.msra.mxu0 %v4718
    %4962 = vmatpush.bf16.msra.mxu0 %v4716
    %4963 = vmatpush.bf16.msra.mxu0 %v4714
    %4964 = vmatmul.bf16.gmra.mxu0 %v4534
    %v4965 = vpop.f32.mrf.mxu0
    %v4966 = vadd.f32 %v4877, %v4965
    %v4967 = vpop.f32.mrf.mxu0
    %v4968 = vadd.f32 %v4879, %v4967
    %4969 = vmatmul.bf16.gmra.mxu0 %v3654
    %v4970 = vpop.f32.mrf.mxu0
    %v4971 = vadd.f32 %v4882, %v4970
    %v4972 = vpop.f32.mrf.mxu0
    %v4973 = vadd.f32 %v4884, %v4972
    %4974 = vmatmul.bf16.gmra.mxu0 %v3657
    %v4975 = vpop.f32.mrf.mxu0
    %v4976 = vadd.f32 %v4887, %v4975
    %v4977 = vpop.f32.mrf.mxu0
    %v4978 = vadd.f32 %v4889, %v4977
    %4979 = vmatmul.bf16.gmra.mxu0 %v3660
    %v4980 = vpop.f32.mrf.mxu0
    %v4981 = vadd.f32 %v4892, %v4980
    %v4982 = vpop.f32.mrf.mxu0
    %v4983 = vadd.f32 %v4894, %v4982
    %4984 = vmatmul.bf16.gmra.mxu0 %v3663
    %v4985 = vpop.f32.mrf.mxu0
    %v4986 = vadd.f32 %v4897, %v4985
    %v4987 = vpop.f32.mrf.mxu0
    %v4988 = vadd.f32 %v4899, %v4987
    %4989 = vmatmul.bf16.gmra.mxu0 %v3666
    %v4990 = vpop.f32.mrf.mxu0
    %v4991 = vadd.f32 %v4902, %v4990
    %v4992 = vpop.f32.mrf.mxu0
    %v4993 = vadd.f32 %v4904, %v4992
    %4994 = vmatmul.bf16.gmra.mxu0 %v3669
    %v4995 = vpop.f32.mrf.mxu0
    %v4996 = vadd.f32 %v4907, %v4995
    %v4997 = vpop.f32.mrf.mxu0
    %v4998 = vadd.f32 %v4909, %v4997
    %4999 = vmatmul.bf16.gmra.mxu0 %v3672
    %v5000 = vpop.f32.mrf.mxu0
    %v5001 = vadd.f32 %v4912, %v5000
    %v5002 = vpop.f32.mrf.mxu0
    %v5003 = vadd.f32 %v4914, %v5002
    %5004 = vmatmul.bf16.gmra.mxu0 %v3675
    %v5005 = vpop.f32.mrf.mxu0
    %v5006 = vadd.f32 %v4917, %v5005
    %v5007 = vpop.f32.mrf.mxu0
    %v5008 = vadd.f32 %v4919, %v5007
    %5009 = vmatmul.bf16.gmra.mxu0 %v3678
    %v5010 = vpop.f32.mrf.mxu0
    %v5011 = vadd.f32 %v4922, %v5010
    %v5012 = vpop.f32.mrf.mxu0
    %v5013 = vadd.f32 %v4924, %v5012
    %5014 = vmatmul.bf16.gmra.mxu0 %v3681
    %v5015 = vpop.f32.mrf.mxu0
    %v5016 = vadd.f32 %v4927, %v5015
    %v5017 = vpop.f32.mrf.mxu0
    %v5018 = vadd.f32 %v4929, %v5017
    %5019 = vmatmul.bf16.gmra.mxu0 %v3684
    %v5020 = vpop.f32.mrf.mxu0
    %v5021 = vadd.f32 %v4932, %v5020
    %v5022 = vpop.f32.mrf.mxu0
    %v5023 = vadd.f32 %v4934, %v5022
    %5024 = vmatmul.bf16.gmra.mxu0 %v3687
    %v5025 = vpop.f32.mrf.mxu0
    %v5026 = vadd.f32 %v4937, %v5025
    %v5027 = vpop.f32.mrf.mxu0
    %v5028 = vadd.f32 %v4939, %v5027
    %5029 = vmatmul.bf16.gmra.mxu0 %v3690
    %v5030 = vpop.f32.mrf.mxu0
    %v5031 = vadd.f32 %v4942, %v5030
    %v5032 = vpop.f32.mrf.mxu0
    %v5033 = vadd.f32 %v4944, %v5032
    %5034 = vmatmul.bf16.gmra.mxu0 %v3693
    %v5035 = vpop.f32.mrf.mxu0
    %v5036 = vadd.f32 %v4947, %v5035
    %v5037 = vpop.f32.mrf.mxu0
    %v5038 = vadd.f32 %v4949, %v5037
    %5039 = vmatmul.bf16.gmra.mxu0 %v3696
    %v5040 = vpop.f32.mrf.mxu0
    %v5041 = vadd.f32 %v4952, %v5040
    %v5042 = vpop.f32.mrf.mxu0
    %v5043 = vadd.f32 %v4954, %v5042
    %5044 = vdwg.mxu0
    %5045 = vmatpush.bf16.msra.mxu0 %v4697
    %5046 = vmatpush.bf16.msra.mxu0 %v4695
    %5047 = vmatpush.bf16.msra.mxu0 %v4693
    %5048 = vmatpush.bf16.msra.mxu0 %v4691
    %5049 = vmatpush.bf16.msra.mxu0 %v4689
    %5050 = vmatpush.bf16.msra.mxu0 %v4687
    %5051 = vmatpush.bf16.msra.mxu0 %v4685
    %5052 = vmatpush.bf16.msra.mxu0 %v4683
    %5053 = vmatmul.bf16.gmra.mxu0 %v4532
    %v5054 = vpop.f32.mrf.mxu0
    %v5055 = vadd.f32 %v4443, %v5054
    %v5056 = vpop.f32.mrf.mxu0
    %v5057 = vadd.f32 %v4445, %v5056
    %5058 = vmatmul.bf16.gmra.mxu0 %v3652
    %v5059 = vpop.f32.mrf.mxu0
    %v5060 = vadd.f32 %v4448, %v5059
    %v5061 = vpop.f32.mrf.mxu0
    %v5062 = vadd.f32 %v4450, %v5061
    %5063 = vmatmul.bf16.gmra.mxu0 %v3655
    %v5064 = vpop.f32.mrf.mxu0
    %v5065 = vadd.f32 %v4453, %v5064
    %v5066 = vpop.f32.mrf.mxu0
    %v5067 = vadd.f32 %v4455, %v5066
    %5068 = vmatmul.bf16.gmra.mxu0 %v3658
    %v5069 = vpop.f32.mrf.mxu0
    %v5070 = vadd.f32 %v4458, %v5069
    %v5071 = vpop.f32.mrf.mxu0
    %v5072 = vadd.f32 %v4460, %v5071
    %5073 = vmatmul.bf16.gmra.mxu0 %v3661
    %v5074 = vpop.f32.mrf.mxu0
    %v5075 = vadd.f32 %v4463, %v5074
    %v5076 = vpop.f32.mrf.mxu0
    %v5077 = vadd.f32 %v4465, %v5076
    %5078 = vmatmul.bf16.gmra.mxu0 %v3664
    %v5079 = vpop.f32.mrf.mxu0
    %v5080 = vadd.f32 %v4468, %v5079
    %v5081 = vpop.f32.mrf.mxu0
    %v5082 = vadd.f32 %v4470, %v5081
    %5083 = vmatmul.bf16.gmra.mxu0 %v3667
    %v5084 = vpop.f32.mrf.mxu0
    %v5085 = vadd.f32 %v4473, %v5084
    %v5086 = vpop.f32.mrf.mxu0
    %v5087 = vadd.f32 %v4475, %v5086
    %5088 = vmatmul.bf16.gmra.mxu0 %v3670
    %v5089 = vpop.f32.mrf.mxu0
    %v5090 = vadd.f32 %v4478, %v5089
    %v5091 = vpop.f32.mrf.mxu0
    %v5092 = vadd.f32 %v4480, %v5091
    %5093 = vmatmul.bf16.gmra.mxu0 %v3673
    %v5094 = vpop.f32.mrf.mxu0
    %v5095 = vadd.f32 %v4483, %v5094
    %v5096 = vpop.f32.mrf.mxu0
    %v5097 = vadd.f32 %v4485, %v5096
    %5098 = vmatmul.bf16.gmra.mxu0 %v3676
    %v5099 = vpop.f32.mrf.mxu0
    %v5100 = vadd.f32 %v4488, %v5099
    %v5101 = vpop.f32.mrf.mxu0
    %v5102 = vadd.f32 %v4490, %v5101
    %5103 = vmatmul.bf16.gmra.mxu0 %v3679
    %v5104 = vpop.f32.mrf.mxu0
    %v5105 = vadd.f32 %v4493, %v5104
    %v5106 = vpop.f32.mrf.mxu0
    %v5107 = vadd.f32 %v4495, %v5106
    %5108 = vmatmul.bf16.gmra.mxu0 %v3682
    %v5109 = vpop.f32.mrf.mxu0
    %v5110 = vadd.f32 %v4498, %v5109
    %v5111 = vpop.f32.mrf.mxu0
    %v5112 = vadd.f32 %v4500, %v5111
    %5113 = vmatmul.bf16.gmra.mxu0 %v3685
    %v5114 = vpop.f32.mrf.mxu0
    %v5115 = vadd.f32 %v4503, %v5114
    %v5116 = vpop.f32.mrf.mxu0
    %v5117 = vadd.f32 %v4505, %v5116
    %5118 = vmatmul.bf16.gmra.mxu0 %v3688
    %v5119 = vpop.f32.mrf.mxu0
    %v5120 = vadd.f32 %v4508, %v5119
    %v5121 = vpop.f32.mrf.mxu0
    %v5122 = vadd.f32 %v4510, %v5121
    %5123 = vmatmul.bf16.gmra.mxu0 %v3691
    %v5124 = vpop.f32.mrf.mxu0
    %v5125 = vadd.f32 %v4513, %v5124
    %v5126 = vpop.f32.mrf.mxu0
    %v5127 = vadd.f32 %v4515, %v5126
    %5128 = vmatmul.bf16.gmra.mxu0 %v3694
    %v5129 = vpop.f32.mrf.mxu0
    %v5130 = vadd.f32 %v4518, %v5129
    %v5131 = vpop.f32.mrf.mxu0
    %v5132 = vadd.f32 %v4520, %v5131
    %5133 = vdwg.mxu0
    %5134 = vmatpush.bf16.msra.mxu0 %v4713
    %5135 = vmatpush.bf16.msra.mxu0 %v4711
    %5136 = vmatpush.bf16.msra.mxu0 %v4709
    %5137 = vmatpush.bf16.msra.mxu0 %v4707
    %5138 = vmatpush.bf16.msra.mxu0 %v4705
    %5139 = vmatpush.bf16.msra.mxu0 %v4703
    %5140 = vmatpush.bf16.msra.mxu0 %v4701
    %5141 = vmatpush.bf16.msra.mxu0 %v4699
    %5142 = vmatmul.bf16.gmra.mxu0 %v4533
    %v5143 = vpop.f32.mrf.mxu0
    %v5144 = vadd.f32 %v5055, %v5143
    %v5145 = vpop.f32.mrf.mxu0
    %v5146 = vadd.f32 %v5057, %v5145
    %5147 = vmatmul.bf16.gmra.mxu0 %v3653
    %v5148 = vpop.f32.mrf.mxu0
    %v5149 = vadd.f32 %v5060, %v5148
    %v5150 = vpop.f32.mrf.mxu0
    %v5151 = vadd.f32 %v5062, %v5150
    %5152 = vmatmul.bf16.gmra.mxu0 %v3656
    %v5153 = vpop.f32.mrf.mxu0
    %v5154 = vadd.f32 %v5065, %v5153
    %v5155 = vpop.f32.mrf.mxu0
    %v5156 = vadd.f32 %v5067, %v5155
    %5157 = vmatmul.bf16.gmra.mxu0 %v3659
    %v5158 = vpop.f32.mrf.mxu0
    %v5159 = vadd.f32 %v5070, %v5158
    %v5160 = vpop.f32.mrf.mxu0
    %v5161 = vadd.f32 %v5072, %v5160
    %5162 = vmatmul.bf16.gmra.mxu0 %v3662
    %v5163 = vpop.f32.mrf.mxu0
    %v5164 = vadd.f32 %v5075, %v5163
    %v5165 = vpop.f32.mrf.mxu0
    %v5166 = vadd.f32 %v5077, %v5165
    %5167 = vmatmul.bf16.gmra.mxu0 %v3665
    %v5168 = vpop.f32.mrf.mxu0
    %v5169 = vadd.f32 %v5080, %v5168
    %v5170 = vpop.f32.mrf.mxu0
    %v5171 = vadd.f32 %v5082, %v5170
    %5172 = vmatmul.bf16.gmra.mxu0 %v3668
    %v5173 = vpop.f32.mrf.mxu0
    %v5174 = vadd.f32 %v5085, %v5173
    %v5175 = vpop.f32.mrf.mxu0
    %v5176 = vadd.f32 %v5087, %v5175
    %5177 = vmatmul.bf16.gmra.mxu0 %v3671
    %v5178 = vpop.f32.mrf.mxu0
    %v5179 = vadd.f32 %v5090, %v5178
    %v5180 = vpop.f32.mrf.mxu0
    %v5181 = vadd.f32 %v5092, %v5180
    %5182 = vmatmul.bf16.gmra.mxu0 %v3674
    %v5183 = vpop.f32.mrf.mxu0
    %v5184 = vadd.f32 %v5095, %v5183
    %v5185 = vpop.f32.mrf.mxu0
    %v5186 = vadd.f32 %v5097, %v5185
    %5187 = vmatmul.bf16.gmra.mxu0 %v3677
    %v5188 = vpop.f32.mrf.mxu0
    %v5189 = vadd.f32 %v5100, %v5188
    %v5190 = vpop.f32.mrf.mxu0
    %v5191 = vadd.f32 %v5102, %v5190
    %5192 = vmatmul.bf16.gmra.mxu0 %v3680
    %v5193 = vpop.f32.mrf.mxu0
    %v5194 = vadd.f32 %v5105, %v5193
    %v5195 = vpop.f32.mrf.mxu0
    %v5196 = vadd.f32 %v5107, %v5195
    %5197 = vmatmul.bf16.gmra.mxu0 %v3683
    %v5198 = vpop.f32.mrf.mxu0
    %v5199 = vadd.f32 %v5110, %v5198
    %v5200 = vpop.f32.mrf.mxu0
    %v5201 = vadd.f32 %v5112, %v5200
    %5202 = vmatmul.bf16.gmra.mxu0 %v3686
    %v5203 = vpop.f32.mrf.mxu0
    %v5204 = vadd.f32 %v5115, %v5203
    %v5205 = vpop.f32.mrf.mxu0
    %v5206 = vadd.f32 %v5117, %v5205
    %5207 = vmatmul.bf16.gmra.mxu0 %v3689
    %v5208 = vpop.f32.mrf.mxu0
    %v5209 = vadd.f32 %v5120, %v5208
    %v5210 = vpop.f32.mrf.mxu0
    %v5211 = vadd.f32 %v5122, %v5210
    %5212 = vmatmul.bf16.gmra.mxu0 %v3692
    %v5213 = vpop.f32.mrf.mxu0
    %v5214 = vadd.f32 %v5125, %v5213
    %v5215 = vpop.f32.mrf.mxu0
    %v5216 = vadd.f32 %v5127, %v5215
    %5217 = vmatmul.bf16.gmra.mxu0 %v3695
    %v5218 = vpop.f32.mrf.mxu0
    %v5219 = vadd.f32 %v5130, %v5218
    %v5220 = vpop.f32.mrf.mxu0
    %v5221 = vadd.f32 %v5132, %v5220
    %5222 = vdwg.mxu0
    %5223 = vmatpush.bf16.msra.mxu0 %v4729
    %5224 = vmatpush.bf16.msra.mxu0 %v4727
    %5225 = vmatpush.bf16.msra.mxu0 %v4725
    %5226 = vmatpush.bf16.msra.mxu0 %v4723
    %5227 = vmatpush.bf16.msra.mxu0 %v4721
    %5228 = vmatpush.bf16.msra.mxu0 %v4719
    %5229 = vmatpush.bf16.msra.mxu0 %v4717
    %5230 = vmatpush.bf16.msra.mxu0 %v4715
    %5231 = vmatmul.bf16.gmra.mxu0 %v4534
    %v5232 = vpop.f32.mrf.mxu0
    %v5233 = vadd.f32 %v5144, %v5232
    %v5234 = vpop.f32.mrf.mxu0
    %v5235 = vadd.f32 %v5146, %v5234
    %5236 = vmatmul.bf16.gmra.mxu0 %v3654
    %v5237 = vpop.f32.mrf.mxu0
    %v5238 = vadd.f32 %v5149, %v5237
    %v5239 = vpop.f32.mrf.mxu0
    %v5240 = vadd.f32 %v5151, %v5239
    %5241 = vmatmul.bf16.gmra.mxu0 %v3657
    %v5242 = vpop.f32.mrf.mxu0
    %v5243 = vadd.f32 %v5154, %v5242
    %v5244 = vpop.f32.mrf.mxu0
    %v5245 = vadd.f32 %v5156, %v5244
    %5246 = vmatmul.bf16.gmra.mxu0 %v3660
    %v5247 = vpop.f32.mrf.mxu0
    %v5248 = vadd.f32 %v5159, %v5247
    %v5249 = vpop.f32.mrf.mxu0
    %v5250 = vadd.f32 %v5161, %v5249
    %5251 = vmatmul.bf16.gmra.mxu0 %v3663
    %v5252 = vpop.f32.mrf.mxu0
    %v5253 = vadd.f32 %v5164, %v5252
    %v5254 = vpop.f32.mrf.mxu0
    %v5255 = vadd.f32 %v5166, %v5254
    %5256 = vmatmul.bf16.gmra.mxu0 %v3666
    %v5257 = vpop.f32.mrf.mxu0
    %v5258 = vadd.f32 %v5169, %v5257
    %v5259 = vpop.f32.mrf.mxu0
    %v5260 = vadd.f32 %v5171, %v5259
    %5261 = vmatmul.bf16.gmra.mxu0 %v3669
    %v5262 = vpop.f32.mrf.mxu0
    %v5263 = vadd.f32 %v5174, %v5262
    %v5264 = vpop.f32.mrf.mxu0
    %v5265 = vadd.f32 %v5176, %v5264
    %5266 = vmatmul.bf16.gmra.mxu0 %v3672
    %v5267 = vpop.f32.mrf.mxu0
    %v5268 = vadd.f32 %v5179, %v5267
    %v5269 = vpop.f32.mrf.mxu0
    %v5270 = vadd.f32 %v5181, %v5269
    %5271 = vmatmul.bf16.gmra.mxu0 %v3675
    %v5272 = vpop.f32.mrf.mxu0
    %v5273 = vadd.f32 %v5184, %v5272
    %v5274 = vpop.f32.mrf.mxu0
    %v5275 = vadd.f32 %v5186, %v5274
    %5276 = vmatmul.bf16.gmra.mxu0 %v3678
    %v5277 = vpop.f32.mrf.mxu0
    %v5278 = vadd.f32 %v5189, %v5277
    %v5279 = vpop.f32.mrf.mxu0
    %v5280 = vadd.f32 %v5191, %v5279
    %5281 = vmatmul.bf16.gmra.mxu0 %v3681
    %v5282 = vpop.f32.mrf.mxu0
    %v5283 = vadd.f32 %v5194, %v5282
    %v5284 = vpop.f32.mrf.mxu0
    %v5285 = vadd.f32 %v5196, %v5284
    %5286 = vmatmul.bf16.gmra.mxu0 %v3684
    %v5287 = vpop.f32.mrf.mxu0
    %v5288 = vadd.f32 %v5199, %v5287
    %v5289 = vpop.f32.mrf.mxu0
    %v5290 = vadd.f32 %v5201, %v5289
    %5291 = vmatmul.bf16.gmra.mxu0 %v3687
    %v5292 = vpop.f32.mrf.mxu0
    %v5293 = vadd.f32 %v5204, %v5292
    %v5294 = vpop.f32.mrf.mxu0
    %v5295 = vadd.f32 %v5206, %v5294
    %5296 = vmatmul.bf16.gmra.mxu0 %v3690
    %v5297 = vpop.f32.mrf.mxu0
    %v5298 = vadd.f32 %v5209, %v5297
    %v5299 = vpop.f32.mrf.mxu0
    %v5300 = vadd.f32 %v5211, %v5299
    %5301 = vmatmul.bf16.gmra.mxu0 %v3693
    %v5302 = vpop.f32.mrf.mxu0
    %v5303 = vadd.f32 %v5214, %v5302
    %v5304 = vpop.f32.mrf.mxu0
    %v5305 = vadd.f32 %v5216, %v5304
    %5306 = vmatmul.bf16.gmra.mxu0 %v3696
    %v5307 = vpop.f32.mrf.mxu0
    %v5308 = vadd.f32 %v5219, %v5307
    %v5309 = vpop.f32.mrf.mxu0
    %v5310 = vadd.f32 %v5221, %v5309
    %5311 = vdwg.mxu0
    %s5312 = scalar_lea.vmem [#allocation4], 768
    %v5313 = vld [vmem:[%s5312] sm:$0xff]
    %v5314 = vld [vmem:[%s5312 + $0x8] sm:$0xff]
    %v5315 = vld [vmem:[%s5312 + $0x10] sm:$0xff]
    %v5316 = vld [vmem:[%s5312 + $0x18] sm:$0xff]
    %v5317 = vld [vmem:[%s5312 + $0x20] sm:$0xff]
    %v5318 = vld [vmem:[%s5312 + $0x28] sm:$0xff]
    %v5319 = vld [vmem:[%s5312 + $0x30] sm:$0xff]
    %v5320 = vld [vmem:[%s5312 + $0x38] sm:$0xff]
    %v5321 = vld [vmem:[%s5312 + $0x40] sm:$0xff]
    %v5322 = vld [vmem:[%s5312 + $0x48] sm:$0xff]
    %v5323 = vld [vmem:[%s5312 + $0x50] sm:$0xff]
    %v5324 = vld [vmem:[%s5312 + $0x58] sm:$0xff]
    %v5325 = vld [vmem:[%s5312 + $0x60] sm:$0xff]
    %v5326 = vld [vmem:[%s5312 + $0x68] sm:$0xff]
    %v5327 = vld [vmem:[%s5312 + $0x70] sm:$0xff]
    %v5328 = vld [vmem:[%s5312 + $0x78] sm:$0xff]
    %v5329 = vld [vmem:[%s5312 + $0x80] sm:$0xff]
    %v5330 = vld [vmem:[%s5312 + $0x88] sm:$0xff]
    %v5331 = vld [vmem:[%s5312 + $0x90] sm:$0xff]
    %v5332 = vld [vmem:[%s5312 + $0x98] sm:$0xff]
    %v5333 = vld [vmem:[%s5312 + $0xa0] sm:$0xff]
    %v5334 = vld [vmem:[%s5312 + $0xa8] sm:$0xff]
    %v5335 = vld [vmem:[%s5312 + $0xb0] sm:$0xff]
    %v5336 = vld [vmem:[%s5312 + $0xb8] sm:$0xff]
    %v5337 = vld [vmem:[%s5312 + $0xc0] sm:$0xff]
    %v5338 = vld [vmem:[%s5312 + $0xc8] sm:$0xff]
    %v5339 = vld [vmem:[%s5312 + $0xd0] sm:$0xff]
    %v5340 = vld [vmem:[%s5312 + $0xd8] sm:$0xff]
    %v5341 = vld [vmem:[%s5312 + $0xe0] sm:$0xff]
    %v5342 = vld [vmem:[%s5312 + $0xe8] sm:$0xff]
    %v5343 = vld [vmem:[%s5312 + $0xf0] sm:$0xff]
    %v5344 = vld [vmem:[%s5312 + $0xf8] sm:$0xff]
    %v5345 = vld [vmem:[%s5312 + $0x100] sm:$0xff]
    %v5346 = vld [vmem:[%s5312 + $0x108] sm:$0xff]
    %v5347 = vld [vmem:[%s5312 + $0x110] sm:$0xff]
    %v5348 = vld [vmem:[%s5312 + $0x118] sm:$0xff]
    %v5349 = vld [vmem:[%s5312 + $0x120] sm:$0xff]
    %v5350 = vld [vmem:[%s5312 + $0x128] sm:$0xff]
    %v5351 = vld [vmem:[%s5312 + $0x130] sm:$0xff]
    %v5352 = vld [vmem:[%s5312 + $0x138] sm:$0xff]
    %v5353 = vld [vmem:[%s5312 + $0x140] sm:$0xff]
    %v5354 = vld [vmem:[%s5312 + $0x148] sm:$0xff]
    %v5355 = vld [vmem:[%s5312 + $0x150] sm:$0xff]
    %v5356 = vld [vmem:[%s5312 + $0x158] sm:$0xff]
    %v5357 = vld [vmem:[%s5312 + $0x160] sm:$0xff]
    %v5358 = vld [vmem:[%s5312 + $0x168] sm:$0xff]
    %v5359 = vld [vmem:[%s5312 + $0x170] sm:$0xff]
    %v5360 = vld [vmem:[%s5312 + $0x178] sm:$0xff]
    %v5365 = vunpack.c.l.b16 %v3383
    %v5366 = vunpack.c.h.b16 %v3383
    %v5367 = vunpack.c.l.b16 %v3384
    %v5368 = vunpack.c.l.b16 %v3385
    %v5369 = vunpack.c.h.b16 %v3385
    %v5370 = vunpack.c.l.b16 %v3386
    %v5371 = vpack.c.b16 %v5368, %v5365
    %v5372 = vpack.c.b16 %v5369, %v5366
    %v5373 = vpack.c.b16 %v5370, %v5367
    %v5425 = vunpack.c.l.b16 %v5313
    %v5426 = vunpack.c.h.b16 %v5313
    %v5427 = vunpack.c.l.b16 %v5314
    %v5428 = vunpack.c.h.b16 %v5314
    %v5429 = vunpack.c.l.b16 %v5315
    %v5430 = vunpack.c.h.b16 %v5315
    %v5431 = vunpack.c.l.b16 %v5316
    %v5432 = vunpack.c.h.b16 %v5316
    %v5433 = vunpack.c.l.b16 %v5317
    %v5434 = vunpack.c.h.b16 %v5317
    %v5435 = vunpack.c.l.b16 %v5318
    %v5436 = vunpack.c.h.b16 %v5318
    %v5437 = vunpack.c.l.b16 %v5319
    %v5438 = vunpack.c.h.b16 %v5319
    %v5439 = vunpack.c.l.b16 %v5320
    %v5440 = vunpack.c.h.b16 %v5320
    %v5441 = vunpack.c.l.b16 %v5321
    %v5442 = vunpack.c.h.b16 %v5321
    %v5443 = vunpack.c.l.b16 %v5322
    %v5444 = vunpack.c.h.b16 %v5322
    %v5445 = vunpack.c.l.b16 %v5323
    %v5446 = vunpack.c.h.b16 %v5323
    %v5447 = vunpack.c.l.b16 %v5324
    %v5448 = vunpack.c.h.b16 %v5324
    %v5449 = vunpack.c.l.b16 %v5325
    %v5450 = vunpack.c.h.b16 %v5325
    %v5451 = vunpack.c.l.b16 %v5326
    %v5452 = vunpack.c.h.b16 %v5326
    %v5453 = vunpack.c.l.b16 %v5327
    %v5454 = vunpack.c.h.b16 %v5327
    %v5455 = vunpack.c.l.b16 %v5328
    %v5456 = vunpack.c.h.b16 %v5328
    %v5457 = vunpack.c.l.b16 %v5329
    %v5458 = vunpack.c.h.b16 %v5329
    %v5459 = vunpack.c.l.b16 %v5330
    %v5460 = vunpack.c.h.b16 %v5330
    %v5461 = vunpack.c.l.b16 %v5331
    %v5462 = vunpack.c.h.b16 %v5331
    %v5463 = vunpack.c.l.b16 %v5332
    %v5464 = vunpack.c.h.b16 %v5332
    %v5465 = vunpack.c.l.b16 %v5333
    %v5466 = vunpack.c.h.b16 %v5333
    %v5467 = vunpack.c.l.b16 %v5334
    %v5468 = vunpack.c.h.b16 %v5334
    %v5469 = vunpack.c.l.b16 %v5335
    %v5470 = vunpack.c.h.b16 %v5335
    %v5471 = vunpack.c.l.b16 %v5336
    %v5472 = vunpack.c.h.b16 %v5336
    %v5473 = vunpack.c.l.b16 %v5337
    %v5474 = vunpack.c.h.b16 %v5337
    %v5475 = vunpack.c.l.b16 %v5338
    %v5476 = vunpack.c.h.b16 %v5338
    %v5477 = vunpack.c.l.b16 %v5339
    %v5478 = vunpack.c.h.b16 %v5339
    %v5479 = vunpack.c.l.b16 %v5340
    %v5480 = vunpack.c.h.b16 %v5340
    %v5481 = vunpack.c.l.b16 %v5341
    %v5482 = vunpack.c.h.b16 %v5341
    %v5483 = vunpack.c.l.b16 %v5342
    %v5484 = vunpack.c.h.b16 %v5342
    %v5485 = vunpack.c.l.b16 %v5343
    %v5486 = vunpack.c.h.b16 %v5343
    %v5487 = vunpack.c.l.b16 %v5344
    %v5488 = vunpack.c.h.b16 %v5344
    %v5489 = vunpack.c.l.b16 %v5345
    %v5490 = vunpack.c.h.b16 %v5345
    %v5491 = vunpack.c.l.b16 %v5346
    %v5492 = vunpack.c.h.b16 %v5346
    %v5493 = vunpack.c.l.b16 %v5347
    %v5494 = vunpack.c.h.b16 %v5347
    %v5495 = vunpack.c.l.b16 %v5348
    %v5496 = vunpack.c.h.b16 %v5348
    %v5497 = vunpack.c.l.b16 %v5349
    %v5498 = vunpack.c.h.b16 %v5349
    %v5499 = vunpack.c.l.b16 %v5350
    %v5500 = vunpack.c.h.b16 %v5350
    %v5501 = vunpack.c.l.b16 %v5351
    %v5502 = vunpack.c.h.b16 %v5351
    %v5503 = vunpack.c.l.b16 %v5352
    %v5504 = vunpack.c.h.b16 %v5352
    %v5505 = vunpack.c.l.b16 %v5353
    %v5506 = vunpack.c.h.b16 %v5353
    %v5507 = vunpack.c.l.b16 %v5354
    %v5508 = vunpack.c.h.b16 %v5354
    %v5509 = vunpack.c.l.b16 %v5355
    %v5510 = vunpack.c.h.b16 %v5355
    %v5511 = vunpack.c.l.b16 %v5356
    %v5512 = vunpack.c.h.b16 %v5356
    %v5513 = vunpack.c.l.b16 %v5357
    %v5514 = vunpack.c.h.b16 %v5357
    %v5515 = vunpack.c.l.b16 %v5358
    %v5516 = vunpack.c.h.b16 %v5358
    %v5517 = vunpack.c.l.b16 %v5359
    %v5518 = vunpack.c.h.b16 %v5359
    %v5519 = vunpack.c.l.b16 %v5360
    %v5520 = vunpack.c.h.b16 %v5360
    %v5521 = vpack.c.b16 %v5427, %v5425
    %v5522 = vpack.c.b16 %v5428, %v5426
    %v5523 = vpack.c.b16 %v5431, %v5429
    %v5524 = vpack.c.b16 %v5432, %v5430
    %v5525 = vpack.c.b16 %v5435, %v5433
    %v5526 = vpack.c.b16 %v5436, %v5434
    %v5527 = vpack.c.b16 %v5439, %v5437
    %v5528 = vpack.c.b16 %v5440, %v5438
    %v5529 = vpack.c.b16 %v5443, %v5441
    %v5530 = vpack.c.b16 %v5444, %v5442
    %v5531 = vpack.c.b16 %v5447, %v5445
    %v5532 = vpack.c.b16 %v5448, %v5446
    %v5533 = vpack.c.b16 %v5451, %v5449
    %v5534 = vpack.c.b16 %v5452, %v5450
    %v5535 = vpack.c.b16 %v5455, %v5453
    %v5536 = vpack.c.b16 %v5456, %v5454
    %v5537 = vpack.c.b16 %v5459, %v5457
    %v5538 = vpack.c.b16 %v5460, %v5458
    %v5539 = vpack.c.b16 %v5463, %v5461
    %v5540 = vpack.c.b16 %v5464, %v5462
    %v5541 = vpack.c.b16 %v5467, %v5465
    %v5542 = vpack.c.b16 %v5468, %v5466
    %v5543 = vpack.c.b16 %v5471, %v5469
    %v5544 = vpack.c.b16 %v5472, %v5470
    %v5545 = vpack.c.b16 %v5475, %v5473
    %v5546 = vpack.c.b16 %v5476, %v5474
    %v5547 = vpack.c.b16 %v5479, %v5477
    %v5548 = vpack.c.b16 %v5480, %v5478
    %v5549 = vpack.c.b16 %v5483, %v5481
    %v5550 = vpack.c.b16 %v5484, %v5482
    %v5551 = vpack.c.b16 %v5487, %v5485
    %v5552 = vpack.c.b16 %v5488, %v5486
    %v5553 = vpack.c.b16 %v5491, %v5489
    %v5554 = vpack.c.b16 %v5492, %v5490
    %v5555 = vpack.c.b16 %v5495, %v5493
    %v5556 = vpack.c.b16 %v5496, %v5494
    %v5557 = vpack.c.b16 %v5499, %v5497
    %v5558 = vpack.c.b16 %v5500, %v5498
    %v5559 = vpack.c.b16 %v5503, %v5501
    %v5560 = vpack.c.b16 %v5504, %v5502
    %v5561 = vpack.c.b16 %v5507, %v5505
    %v5562 = vpack.c.b16 %v5508, %v5506
    %v5563 = vpack.c.b16 %v5511, %v5509
    %v5564 = vpack.c.b16 %v5512, %v5510
    %v5565 = vpack.c.b16 %v5515, %v5513
    %v5566 = vpack.c.b16 %v5516, %v5514
    %v5567 = vpack.c.b16 %v5519, %v5517
    %v5568 = vpack.c.b16 %v5520, %v5518
    %5617 = vmatpush.bf16.msra.mxu0 %v5535
    %5618 = vmatpush.bf16.msra.mxu0 %v5533
    %5619 = vmatpush.bf16.msra.mxu0 %v5531
    %5620 = vmatpush.bf16.msra.mxu0 %v5529
    %5621 = vmatpush.bf16.msra.mxu0 %v5527
    %5622 = vmatpush.bf16.msra.mxu0 %v5525
    %5623 = vmatpush.bf16.msra.mxu0 %v5523
    %5624 = vmatpush.bf16.msra.mxu0 %v5521
    %5625 = vmatmul.bf16.gmra.mxu0 %v3655
    %v5626 = vpop.f32.mrf.mxu0
    %v5627 = vadd.f32 0.0, %v5626
    %v5628 = vpop.f32.mrf.mxu0
    %v5629 = vadd.f32 0.0, %v5628
    %5630 = vmatmul.bf16.gmra.mxu0 %v3658
    %v5631 = vpop.f32.mrf.mxu0
    %v5632 = vadd.f32 0.0, %v5631
    %v5633 = vpop.f32.mrf.mxu0
    %v5634 = vadd.f32 0.0, %v5633
    %5635 = vmatmul.bf16.gmra.mxu0 %v3661
    %v5636 = vpop.f32.mrf.mxu0
    %v5637 = vadd.f32 0.0, %v5636
    %v5638 = vpop.f32.mrf.mxu0
    %v5639 = vadd.f32 0.0, %v5638
    %5640 = vmatmul.bf16.gmra.mxu0 %v3664
    %v5641 = vpop.f32.mrf.mxu0
    %v5642 = vadd.f32 0.0, %v5641
    %v5643 = vpop.f32.mrf.mxu0
    %v5644 = vadd.f32 0.0, %v5643
    %5645 = vmatmul.bf16.gmra.mxu0 %v3667
    %v5646 = vpop.f32.mrf.mxu0
    %v5647 = vadd.f32 0.0, %v5646
    %v5648 = vpop.f32.mrf.mxu0
    %v5649 = vadd.f32 0.0, %v5648
    %5650 = vmatmul.bf16.gmra.mxu0 %v3670
    %v5651 = vpop.f32.mrf.mxu0
    %v5652 = vadd.f32 0.0, %v5651
    %v5653 = vpop.f32.mrf.mxu0
    %v5654 = vadd.f32 0.0, %v5653
    %5655 = vmatmul.bf16.gmra.mxu0 %v3673
    %v5656 = vpop.f32.mrf.mxu0
    %v5657 = vadd.f32 0.0, %v5656
    %v5658 = vpop.f32.mrf.mxu0
    %v5659 = vadd.f32 0.0, %v5658
    %5660 = vmatmul.bf16.gmra.mxu0 %v3676
    %v5661 = vpop.f32.mrf.mxu0
    %v5662 = vadd.f32 0.0, %v5661
    %v5663 = vpop.f32.mrf.mxu0
    %v5664 = vadd.f32 0.0, %v5663
    %5665 = vmatmul.bf16.gmra.mxu0 %v3679
    %v5666 = vpop.f32.mrf.mxu0
    %v5667 = vadd.f32 0.0, %v5666
    %v5668 = vpop.f32.mrf.mxu0
    %v5669 = vadd.f32 0.0, %v5668
    %5670 = vmatmul.bf16.gmra.mxu0 %v3682
    %v5671 = vpop.f32.mrf.mxu0
    %v5672 = vadd.f32 0.0, %v5671
    %v5673 = vpop.f32.mrf.mxu0
    %v5674 = vadd.f32 0.0, %v5673
    %5675 = vmatmul.bf16.gmra.mxu0 %v3685
    %v5676 = vpop.f32.mrf.mxu0
    %v5677 = vadd.f32 0.0, %v5676
    %v5678 = vpop.f32.mrf.mxu0
    %v5679 = vadd.f32 0.0, %v5678
    %5680 = vmatmul.bf16.gmra.mxu0 %v3688
    %v5681 = vpop.f32.mrf.mxu0
    %v5682 = vadd.f32 0.0, %v5681
    %v5683 = vpop.f32.mrf.mxu0
    %v5684 = vadd.f32 0.0, %v5683
    %5685 = vmatmul.bf16.gmra.mxu0 %v3691
    %v5686 = vpop.f32.mrf.mxu0
    %v5687 = vadd.f32 0.0, %v5686
    %v5688 = vpop.f32.mrf.mxu0
    %v5689 = vadd.f32 0.0, %v5688
    %5690 = vmatmul.bf16.gmra.mxu0 %v3694
    %v5691 = vpop.f32.mrf.mxu0
    %v5692 = vadd.f32 0.0, %v5691
    %v5693 = vpop.f32.mrf.mxu0
    %v5694 = vadd.f32 0.0, %v5693
    %5695 = vmatmul.bf16.gmra.mxu0 %v3697
    %v5696 = vpop.f32.mrf.mxu0
    %v5697 = vadd.f32 0.0, %v5696
    %v5698 = vpop.f32.mrf.mxu0
    %v5699 = vadd.f32 0.0, %v5698
    %5700 = vmatmul.bf16.gmra.mxu0 %v5371
    %v5701 = vpop.f32.mrf.mxu0
    %v5702 = vadd.f32 0.0, %v5701
    %v5703 = vpop.f32.mrf.mxu0
    %v5704 = vadd.f32 0.0, %v5703
    %5705 = vdwg.mxu0
    %5706 = vmatpush.bf16.msra.mxu0 %v5551
    %5707 = vmatpush.bf16.msra.mxu0 %v5549
    %5708 = vmatpush.bf16.msra.mxu0 %v5547
    %5709 = vmatpush.bf16.msra.mxu0 %v5545
    %5710 = vmatpush.bf16.msra.mxu0 %v5543
    %5711 = vmatpush.bf16.msra.mxu0 %v5541
    %5712 = vmatpush.bf16.msra.mxu0 %v5539
    %5713 = vmatpush.bf16.msra.mxu0 %v5537
    %5714 = vmatmul.bf16.gmra.mxu0 %v3656
    %v5715 = vpop.f32.mrf.mxu0
    %v5716 = vadd.f32 %v5627, %v5715
    %v5717 = vpop.f32.mrf.mxu0
    %v5718 = vadd.f32 %v5629, %v5717
    %5719 = vmatmul.bf16.gmra.mxu0 %v3659
    %v5720 = vpop.f32.mrf.mxu0
    %v5721 = vadd.f32 %v5632, %v5720
    %v5722 = vpop.f32.mrf.mxu0
    %v5723 = vadd.f32 %v5634, %v5722
    %5724 = vmatmul.bf16.gmra.mxu0 %v3662
    %v5725 = vpop.f32.mrf.mxu0
    %v5726 = vadd.f32 %v5637, %v5725
    %v5727 = vpop.f32.mrf.mxu0
    %v5728 = vadd.f32 %v5639, %v5727
    %5729 = vmatmul.bf16.gmra.mxu0 %v3665
    %v5730 = vpop.f32.mrf.mxu0
    %v5731 = vadd.f32 %v5642, %v5730
    %v5732 = vpop.f32.mrf.mxu0
    %v5733 = vadd.f32 %v5644, %v5732
    %5734 = vmatmul.bf16.gmra.mxu0 %v3668
    %v5735 = vpop.f32.mrf.mxu0
    %v5736 = vadd.f32 %v5647, %v5735
    %v5737 = vpop.f32.mrf.mxu0
    %v5738 = vadd.f32 %v5649, %v5737
    %5739 = vmatmul.bf16.gmra.mxu0 %v3671
    %v5740 = vpop.f32.mrf.mxu0
    %v5741 = vadd.f32 %v5652, %v5740
    %v5742 = vpop.f32.mrf.mxu0
    %v5743 = vadd.f32 %v5654, %v5742
    %5744 = vmatmul.bf16.gmra.mxu0 %v3674
    %v5745 = vpop.f32.mrf.mxu0
    %v5746 = vadd.f32 %v5657, %v5745
    %v5747 = vpop.f32.mrf.mxu0
    %v5748 = vadd.f32 %v5659, %v5747
    %5749 = vmatmul.bf16.gmra.mxu0 %v3677
    %v5750 = vpop.f32.mrf.mxu0
    %v5751 = vadd.f32 %v5662, %v5750
    %v5752 = vpop.f32.mrf.mxu0
    %v5753 = vadd.f32 %v5664, %v5752
    %5754 = vmatmul.bf16.gmra.mxu0 %v3680
    %v5755 = vpop.f32.mrf.mxu0
    %v5756 = vadd.f32 %v5667, %v5755
    %v5757 = vpop.f32.mrf.mxu0
    %v5758 = vadd.f32 %v5669, %v5757
    %5759 = vmatmul.bf16.gmra.mxu0 %v3683
    %v5760 = vpop.f32.mrf.mxu0
    %v5761 = vadd.f32 %v5672, %v5760
    %v5762 = vpop.f32.mrf.mxu0
    %v5763 = vadd.f32 %v5674, %v5762
    %5764 = vmatmul.bf16.gmra.mxu0 %v3686
    %v5765 = vpop.f32.mrf.mxu0
    %v5766 = vadd.f32 %v5677, %v5765
    %v5767 = vpop.f32.mrf.mxu0
    %v5768 = vadd.f32 %v5679, %v5767
    %5769 = vmatmul.bf16.gmra.mxu0 %v3689
    %v5770 = vpop.f32.mrf.mxu0
    %v5771 = vadd.f32 %v5682, %v5770
    %v5772 = vpop.f32.mrf.mxu0
    %v5773 = vadd.f32 %v5684, %v5772
    %5774 = vmatmul.bf16.gmra.mxu0 %v3692
    %v5775 = vpop.f32.mrf.mxu0
    %v5776 = vadd.f32 %v5687, %v5775
    %v5777 = vpop.f32.mrf.mxu0
    %v5778 = vadd.f32 %v5689, %v5777
    %5779 = vmatmul.bf16.gmra.mxu0 %v3695
    %v5780 = vpop.f32.mrf.mxu0
    %v5781 = vadd.f32 %v5692, %v5780
    %v5782 = vpop.f32.mrf.mxu0
    %v5783 = vadd.f32 %v5694, %v5782
    %5784 = vmatmul.bf16.gmra.mxu0 %v3698
    %v5785 = vpop.f32.mrf.mxu0
    %v5786 = vadd.f32 %v5697, %v5785
    %v5787 = vpop.f32.mrf.mxu0
    %v5788 = vadd.f32 %v5699, %v5787
    %5789 = vmatmul.bf16.gmra.mxu0 %v5372
    %v5790 = vpop.f32.mrf.mxu0
    %v5791 = vadd.f32 %v5702, %v5790
    %v5792 = vpop.f32.mrf.mxu0
    %v5793 = vadd.f32 %v5704, %v5792
    %5794 = vdwg.mxu0
    %5795 = vmatpush.bf16.msra.mxu0 %v5567
    %5796 = vmatpush.bf16.msra.mxu0 %v5565
    %5797 = vmatpush.bf16.msra.mxu0 %v5563
    %5798 = vmatpush.bf16.msra.mxu0 %v5561
    %5799 = vmatpush.bf16.msra.mxu0 %v5559
    %5800 = vmatpush.bf16.msra.mxu0 %v5557
    %5801 = vmatpush.bf16.msra.mxu0 %v5555
    %5802 = vmatpush.bf16.msra.mxu0 %v5553
    %5803 = vmatmul.bf16.gmra.mxu0 %v3657
    %v5804 = vpop.f32.mrf.mxu0
    %v5805 = vadd.f32 %v5716, %v5804
    %v5806 = vpop.f32.mrf.mxu0
    %v5807 = vadd.f32 %v5718, %v5806
    %5808 = vmatmul.bf16.gmra.mxu0 %v3660
    %v5809 = vpop.f32.mrf.mxu0
    %v5810 = vadd.f32 %v5721, %v5809
    %v5811 = vpop.f32.mrf.mxu0
    %v5812 = vadd.f32 %v5723, %v5811
    %5813 = vmatmul.bf16.gmra.mxu0 %v3663
    %v5814 = vpop.f32.mrf.mxu0
    %v5815 = vadd.f32 %v5726, %v5814
    %v5816 = vpop.f32.mrf.mxu0
    %v5817 = vadd.f32 %v5728, %v5816
    %5818 = vmatmul.bf16.gmra.mxu0 %v3666
    %v5819 = vpop.f32.mrf.mxu0
    %v5820 = vadd.f32 %v5731, %v5819
    %v5821 = vpop.f32.mrf.mxu0
    %v5822 = vadd.f32 %v5733, %v5821
    %5823 = vmatmul.bf16.gmra.mxu0 %v3669
    %v5824 = vpop.f32.mrf.mxu0
    %v5825 = vadd.f32 %v5736, %v5824
    %v5826 = vpop.f32.mrf.mxu0
    %v5827 = vadd.f32 %v5738, %v5826
    %5828 = vmatmul.bf16.gmra.mxu0 %v3672
    %v5829 = vpop.f32.mrf.mxu0
    %v5830 = vadd.f32 %v5741, %v5829
    %v5831 = vpop.f32.mrf.mxu0
    %v5832 = vadd.f32 %v5743, %v5831
    %5833 = vmatmul.bf16.gmra.mxu0 %v3675
    %v5834 = vpop.f32.mrf.mxu0
    %v5835 = vadd.f32 %v5746, %v5834
    %v5836 = vpop.f32.mrf.mxu0
    %v5837 = vadd.f32 %v5748, %v5836
    %5838 = vmatmul.bf16.gmra.mxu0 %v3678
    %v5839 = vpop.f32.mrf.mxu0
    %v5840 = vadd.f32 %v5751, %v5839
    %v5841 = vpop.f32.mrf.mxu0
    %v5842 = vadd.f32 %v5753, %v5841
    %5843 = vmatmul.bf16.gmra.mxu0 %v3681
    %v5844 = vpop.f32.mrf.mxu0
    %v5845 = vadd.f32 %v5756, %v5844
    %v5846 = vpop.f32.mrf.mxu0
    %v5847 = vadd.f32 %v5758, %v5846
    %5848 = vmatmul.bf16.gmra.mxu0 %v3684
    %v5849 = vpop.f32.mrf.mxu0
    %v5850 = vadd.f32 %v5761, %v5849
    %v5851 = vpop.f32.mrf.mxu0
    %v5852 = vadd.f32 %v5763, %v5851
    %5853 = vmatmul.bf16.gmra.mxu0 %v3687
    %v5854 = vpop.f32.mrf.mxu0
    %v5855 = vadd.f32 %v5766, %v5854
    %v5856 = vpop.f32.mrf.mxu0
    %v5857 = vadd.f32 %v5768, %v5856
    %5858 = vmatmul.bf16.gmra.mxu0 %v3690
    %v5859 = vpop.f32.mrf.mxu0
    %v5860 = vadd.f32 %v5771, %v5859
    %v5861 = vpop.f32.mrf.mxu0
    %v5862 = vadd.f32 %v5773, %v5861
    %5863 = vmatmul.bf16.gmra.mxu0 %v3693
    %v5864 = vpop.f32.mrf.mxu0
    %v5865 = vadd.f32 %v5776, %v5864
    %v5866 = vpop.f32.mrf.mxu0
    %v5867 = vadd.f32 %v5778, %v5866
    %5868 = vmatmul.bf16.gmra.mxu0 %v3696
    %v5869 = vpop.f32.mrf.mxu0
    %v5870 = vadd.f32 %v5781, %v5869
    %v5871 = vpop.f32.mrf.mxu0
    %v5872 = vadd.f32 %v5783, %v5871
    %5873 = vmatmul.bf16.gmra.mxu0 %v3699
    %v5874 = vpop.f32.mrf.mxu0
    %v5875 = vadd.f32 %v5786, %v5874
    %v5876 = vpop.f32.mrf.mxu0
    %v5877 = vadd.f32 %v5788, %v5876
    %5878 = vmatmul.bf16.gmra.mxu0 %v5373
    %v5879 = vpop.f32.mrf.mxu0
    %v5880 = vadd.f32 %v5791, %v5879
    %v5881 = vpop.f32.mrf.mxu0
    %v5882 = vadd.f32 %v5793, %v5881
    %5883 = vdwg.mxu0
    %5884 = vmatpush.bf16.msra.mxu0 %v5536
    %5885 = vmatpush.bf16.msra.mxu0 %v5534
    %5886 = vmatpush.bf16.msra.mxu0 %v5532
    %5887 = vmatpush.bf16.msra.mxu0 %v5530
    %5888 = vmatpush.bf16.msra.mxu0 %v5528
    %5889 = vmatpush.bf16.msra.mxu0 %v5526
    %5890 = vmatpush.bf16.msra.mxu0 %v5524
    %5891 = vmatpush.bf16.msra.mxu0 %v5522
    %5892 = vmatmul.bf16.gmra.mxu0 %v3655
    %v5893 = vpop.f32.mrf.mxu0
    %v5894 = vadd.f32 0.0, %v5893
    %v5895 = vpop.f32.mrf.mxu0
    %v5896 = vadd.f32 0.0, %v5895
    %5897 = vmatmul.bf16.gmra.mxu0 %v3658
    %v5898 = vpop.f32.mrf.mxu0
    %v5899 = vadd.f32 0.0, %v5898
    %v5900 = vpop.f32.mrf.mxu0
    %v5901 = vadd.f32 0.0, %v5900
    %5902 = vmatmul.bf16.gmra.mxu0 %v3661
    %v5903 = vpop.f32.mrf.mxu0
    %v5904 = vadd.f32 0.0, %v5903
    %v5905 = vpop.f32.mrf.mxu0
    %v5906 = vadd.f32 0.0, %v5905
    %5907 = vmatmul.bf16.gmra.mxu0 %v3664
    %v5908 = vpop.f32.mrf.mxu0
    %v5909 = vadd.f32 0.0, %v5908
    %v5910 = vpop.f32.mrf.mxu0
    %v5911 = vadd.f32 0.0, %v5910
    %5912 = vmatmul.bf16.gmra.mxu0 %v3667
    %v5913 = vpop.f32.mrf.mxu0
    %v5914 = vadd.f32 0.0, %v5913
    %v5915 = vpop.f32.mrf.mxu0
    %v5916 = vadd.f32 0.0, %v5915
    %5917 = vmatmul.bf16.gmra.mxu0 %v3670
    %v5918 = vpop.f32.mrf.mxu0
    %v5919 = vadd.f32 0.0, %v5918
    %v5920 = vpop.f32.mrf.mxu0
    %v5921 = vadd.f32 0.0, %v5920
    %5922 = vmatmul.bf16.gmra.mxu0 %v3673
    %v5923 = vpop.f32.mrf.mxu0
    %v5924 = vadd.f32 0.0, %v5923
    %v5925 = vpop.f32.mrf.mxu0
    %v5926 = vadd.f32 0.0, %v5925
    %5927 = vmatmul.bf16.gmra.mxu0 %v3676
    %v5928 = vpop.f32.mrf.mxu0
    %v5929 = vadd.f32 0.0, %v5928
    %v5930 = vpop.f32.mrf.mxu0
    %v5931 = vadd.f32 0.0, %v5930
    %5932 = vmatmul.bf16.gmra.mxu0 %v3679
    %v5933 = vpop.f32.mrf.mxu0
    %v5934 = vadd.f32 0.0, %v5933
    %v5935 = vpop.f32.mrf.mxu0
    %v5936 = vadd.f32 0.0, %v5935
    %5937 = vmatmul.bf16.gmra.mxu0 %v3682
    %v5938 = vpop.f32.mrf.mxu0
    %v5939 = vadd.f32 0.0, %v5938
    %v5940 = vpop.f32.mrf.mxu0
    %v5941 = vadd.f32 0.0, %v5940
    %5942 = vmatmul.bf16.gmra.mxu0 %v3685
    %v5943 = vpop.f32.mrf.mxu0
    %v5944 = vadd.f32 0.0, %v5943
    %v5945 = vpop.f32.mrf.mxu0
    %v5946 = vadd.f32 0.0, %v5945
    %5947 = vmatmul.bf16.gmra.mxu0 %v3688
    %v5948 = vpop.f32.mrf.mxu0
    %v5949 = vadd.f32 0.0, %v5948
    %v5950 = vpop.f32.mrf.mxu0
    %v5951 = vadd.f32 0.0, %v5950
    %5952 = vmatmul.bf16.gmra.mxu0 %v3691
    %v5953 = vpop.f32.mrf.mxu0
    %v5954 = vadd.f32 0.0, %v5953
    %v5955 = vpop.f32.mrf.mxu0
    %v5956 = vadd.f32 0.0, %v5955
    %5957 = vmatmul.bf16.gmra.mxu0 %v3694
    %v5958 = vpop.f32.mrf.mxu0
    %v5959 = vadd.f32 0.0, %v5958
    %v5960 = vpop.f32.mrf.mxu0
    %v5961 = vadd.f32 0.0, %v5960
    %5962 = vmatmul.bf16.gmra.mxu0 %v3697
    %v5963 = vpop.f32.mrf.mxu0
    %v5964 = vadd.f32 0.0, %v5963
    %v5965 = vpop.f32.mrf.mxu0
    %v5966 = vadd.f32 0.0, %v5965
    %5967 = vmatmul.bf16.gmra.mxu0 %v5371
    %v5968 = vpop.f32.mrf.mxu0
    %v5969 = vadd.f32 0.0, %v5968
    %v5970 = vpop.f32.mrf.mxu0
    %v5971 = vadd.f32 0.0, %v5970
    %5972 = vdwg.mxu0
    %5973 = vmatpush.bf16.msra.mxu0 %v5552
    %5974 = vmatpush.bf16.msra.mxu0 %v5550
    %5975 = vmatpush.bf16.msra.mxu0 %v5548
    %5976 = vmatpush.bf16.msra.mxu0 %v5546
    %5977 = vmatpush.bf16.msra.mxu0 %v5544
    %5978 = vmatpush.bf16.msra.mxu0 %v5542
    %5979 = vmatpush.bf16.msra.mxu0 %v5540
    %5980 = vmatpush.bf16.msra.mxu0 %v5538
    %5981 = vmatmul.bf16.gmra.mxu0 %v3656
    %v5982 = vpop.f32.mrf.mxu0
    %v5983 = vadd.f32 %v5894, %v5982
    %v5984 = vpop.f32.mrf.mxu0
    %v5985 = vadd.f32 %v5896, %v5984
    %5986 = vmatmul.bf16.gmra.mxu0 %v3659
    %v5987 = vpop.f32.mrf.mxu0
    %v5988 = vadd.f32 %v5899, %v5987
    %v5989 = vpop.f32.mrf.mxu0
    %v5990 = vadd.f32 %v5901, %v5989
    %5991 = vmatmul.bf16.gmra.mxu0 %v3662
    %v5992 = vpop.f32.mrf.mxu0
    %v5993 = vadd.f32 %v5904, %v5992
    %v5994 = vpop.f32.mrf.mxu0
    %v5995 = vadd.f32 %v5906, %v5994
    %5996 = vmatmul.bf16.gmra.mxu0 %v3665
    %v5997 = vpop.f32.mrf.mxu0
    %v5998 = vadd.f32 %v5909, %v5997
    %v5999 = vpop.f32.mrf.mxu0
    %v6000 = vadd.f32 %v5911, %v5999
    %6001 = vmatmul.bf16.gmra.mxu0 %v3668
    %v6002 = vpop.f32.mrf.mxu0
    %v6003 = vadd.f32 %v5914, %v6002
    %v6004 = vpop.f32.mrf.mxu0
    %v6005 = vadd.f32 %v5916, %v6004
    %6006 = vmatmul.bf16.gmra.mxu0 %v3671
    %v6007 = vpop.f32.mrf.mxu0
    %v6008 = vadd.f32 %v5919, %v6007
    %v6009 = vpop.f32.mrf.mxu0
    %v6010 = vadd.f32 %v5921, %v6009
    %6011 = vmatmul.bf16.gmra.mxu0 %v3674
    %v6012 = vpop.f32.mrf.mxu0
    %v6013 = vadd.f32 %v5924, %v6012
    %v6014 = vpop.f32.mrf.mxu0
    %v6015 = vadd.f32 %v5926, %v6014
    %6016 = vmatmul.bf16.gmra.mxu0 %v3677
    %v6017 = vpop.f32.mrf.mxu0
    %v6018 = vadd.f32 %v5929, %v6017
    %v6019 = vpop.f32.mrf.mxu0
    %v6020 = vadd.f32 %v5931, %v6019
    %6021 = vmatmul.bf16.gmra.mxu0 %v3680
    %v6022 = vpop.f32.mrf.mxu0
    %v6023 = vadd.f32 %v5934, %v6022
    %v6024 = vpop.f32.mrf.mxu0
    %v6025 = vadd.f32 %v5936, %v6024
    %6026 = vmatmul.bf16.gmra.mxu0 %v3683
    %v6027 = vpop.f32.mrf.mxu0
    %v6028 = vadd.f32 %v5939, %v6027
    %v6029 = vpop.f32.mrf.mxu0
    %v6030 = vadd.f32 %v5941, %v6029
    %6031 = vmatmul.bf16.gmra.mxu0 %v3686
    %v6032 = vpop.f32.mrf.mxu0
    %v6033 = vadd.f32 %v5944, %v6032
    %v6034 = vpop.f32.mrf.mxu0
    %v6035 = vadd.f32 %v5946, %v6034
    %6036 = vmatmul.bf16.gmra.mxu0 %v3689
    %v6037 = vpop.f32.mrf.mxu0
    %v6038 = vadd.f32 %v5949, %v6037
    %v6039 = vpop.f32.mrf.mxu0
    %v6040 = vadd.f32 %v5951, %v6039
    %6041 = vmatmul.bf16.gmra.mxu0 %v3692
    %v6042 = vpop.f32.mrf.mxu0
    %v6043 = vadd.f32 %v5954, %v6042
    %v6044 = vpop.f32.mrf.mxu0
    %v6045 = vadd.f32 %v5956, %v6044
    %6046 = vmatmul.bf16.gmra.mxu0 %v3695
    %v6047 = vpop.f32.mrf.mxu0
    %v6048 = vadd.f32 %v5959, %v6047
    %v6049 = vpop.f32.mrf.mxu0
    %v6050 = vadd.f32 %v5961, %v6049
    %6051 = vmatmul.bf16.gmra.mxu0 %v3698
    %v6052 = vpop.f32.mrf.mxu0
    %v6053 = vadd.f32 %v5964, %v6052
    %v6054 = vpop.f32.mrf.mxu0
    %v6055 = vadd.f32 %v5966, %v6054
    %6056 = vmatmul.bf16.gmra.mxu0 %v5372
    %v6057 = vpop.f32.mrf.mxu0
    %v6058 = vadd.f32 %v5969, %v6057
    %v6059 = vpop.f32.mrf.mxu0
    %v6060 = vadd.f32 %v5971, %v6059
    %6061 = vdwg.mxu0
    %6062 = vmatpush.bf16.msra.mxu0 %v5568
    %6063 = vmatpush.bf16.msra.mxu0 %v5566
    %6064 = vmatpush.bf16.msra.mxu0 %v5564
    %6065 = vmatpush.bf16.msra.mxu0 %v5562
    %6066 = vmatpush.bf16.msra.mxu0 %v5560
    %6067 = vmatpush.bf16.msra.mxu0 %v5558
    %6068 = vmatpush.bf16.msra.mxu0 %v5556
    %6069 = vmatpush.bf16.msra.mxu0 %v5554
    %6070 = vmatmul.bf16.gmra.mxu0 %v3657
    %v6071 = vpop.f32.mrf.mxu0
    %v6072 = vadd.f32 %v5983, %v6071
    %v6073 = vpop.f32.mrf.mxu0
    %v6074 = vadd.f32 %v5985, %v6073
    %6075 = vmatmul.bf16.gmra.mxu0 %v3660
    %v6076 = vpop.f32.mrf.mxu0
    %v6077 = vadd.f32 %v5988, %v6076
    %v6078 = vpop.f32.mrf.mxu0
    %v6079 = vadd.f32 %v5990, %v6078
    %6080 = vmatmul.bf16.gmra.mxu0 %v3663
    %v6081 = vpop.f32.mrf.mxu0
    %v6082 = vadd.f32 %v5993, %v6081
    %v6083 = vpop.f32.mrf.mxu0
    %v6084 = vadd.f32 %v5995, %v6083
    %6085 = vmatmul.bf16.gmra.mxu0 %v3666
    %v6086 = vpop.f32.mrf.mxu0
    %v6087 = vadd.f32 %v5998, %v6086
    %v6088 = vpop.f32.mrf.mxu0
    %v6089 = vadd.f32 %v6000, %v6088
    %6090 = vmatmul.bf16.gmra.mxu0 %v3669
    %v6091 = vpop.f32.mrf.mxu0
    %v6092 = vadd.f32 %v6003, %v6091
    %v6093 = vpop.f32.mrf.mxu0
    %v6094 = vadd.f32 %v6005, %v6093
    %6095 = vmatmul.bf16.gmra.mxu0 %v3672
    %v6096 = vpop.f32.mrf.mxu0
    %v6097 = vadd.f32 %v6008, %v6096
    %v6098 = vpop.f32.mrf.mxu0
    %v6099 = vadd.f32 %v6010, %v6098
    %6100 = vmatmul.bf16.gmra.mxu0 %v3675
    %v6101 = vpop.f32.mrf.mxu0
    %v6102 = vadd.f32 %v6013, %v6101
    %v6103 = vpop.f32.mrf.mxu0
    %v6104 = vadd.f32 %v6015, %v6103
    %6105 = vmatmul.bf16.gmra.mxu0 %v3678
    %v6106 = vpop.f32.mrf.mxu0
    %v6107 = vadd.f32 %v6018, %v6106
    %v6108 = vpop.f32.mrf.mxu0
    %v6109 = vadd.f32 %v6020, %v6108
    %6110 = vmatmul.bf16.gmra.mxu0 %v3681
    %v6111 = vpop.f32.mrf.mxu0
    %v6112 = vadd.f32 %v6023, %v6111
    %v6113 = vpop.f32.mrf.mxu0
    %v6114 = vadd.f32 %v6025, %v6113
    %6115 = vmatmul.bf16.gmra.mxu0 %v3684
    %v6116 = vpop.f32.mrf.mxu0
    %v6117 = vadd.f32 %v6028, %v6116
    %v6118 = vpop.f32.mrf.mxu0
    %v6119 = vadd.f32 %v6030, %v6118
    %6120 = vmatmul.bf16.gmra.mxu0 %v3687
    %v6121 = vpop.f32.mrf.mxu0
    %v6122 = vadd.f32 %v6033, %v6121
    %v6123 = vpop.f32.mrf.mxu0
    %v6124 = vadd.f32 %v6035, %v6123
    %6125 = vmatmul.bf16.gmra.mxu0 %v3690
    %v6126 = vpop.f32.mrf.mxu0
    %v6127 = vadd.f32 %v6038, %v6126
    %v6128 = vpop.f32.mrf.mxu0
    %v6129 = vadd.f32 %v6040, %v6128
    %6130 = vmatmul.bf16.gmra.mxu0 %v3693
    %v6131 = vpop.f32.mrf.mxu0
    %v6132 = vadd.f32 %v6043, %v6131
    %v6133 = vpop.f32.mrf.mxu0
    %v6134 = vadd.f32 %v6045, %v6133
    %6135 = vmatmul.bf16.gmra.mxu0 %v3696
    %v6136 = vpop.f32.mrf.mxu0
    %v6137 = vadd.f32 %v6048, %v6136
    %v6138 = vpop.f32.mrf.mxu0
    %v6139 = vadd.f32 %v6050, %v6138
    %6140 = vmatmul.bf16.gmra.mxu0 %v3699
    %v6141 = vpop.f32.mrf.mxu0
    %v6142 = vadd.f32 %v6053, %v6141
    %v6143 = vpop.f32.mrf.mxu0
    %v6144 = vadd.f32 %v6055, %v6143
    %6145 = vmatmul.bf16.gmra.mxu0 %v5373
    %v6146 = vpop.f32.mrf.mxu0
    %v6147 = vadd.f32 %v6058, %v6146
    %v6148 = vpop.f32.mrf.mxu0
    %v6149 = vadd.f32 %v6060, %v6148
    %6150 = vdwg.mxu0
    %v6151 = vadd.f32 %v4966, %v5805
    %v6152 = vadd.f32 %v5233, %v6072
    %v6153 = vadd.f32 %v4968, %v5807
    %v6154 = vadd.f32 %v5235, %v6074
    %v6155 = vadd.f32 %v4971, %v5810
    %v6156 = vadd.f32 %v5238, %v6077
    %v6157 = vadd.f32 %v4973, %v5812
    %v6158 = vadd.f32 %v5240, %v6079
    %v6159 = vadd.f32 %v4976, %v5815
    %v6160 = vadd.f32 %v5243, %v6082
    %v6161 = vadd.f32 %v4978, %v5817
    %v6162 = vadd.f32 %v5245, %v6084
    %v6163 = vadd.f32 %v4981, %v5820
    %v6164 = vadd.f32 %v5248, %v6087
    %v6165 = vadd.f32 %v4983, %v5822
    %v6166 = vadd.f32 %v5250, %v6089
    %v6167 = vadd.f32 %v4986, %v5825
    %v6168 = vadd.f32 %v5253, %v6092
    %v6169 = vadd.f32 %v4988, %v5827
    %v6170 = vadd.f32 %v5255, %v6094
    %v6171 = vadd.f32 %v4991, %v5830
    %v6172 = vadd.f32 %v5258, %v6097
    %v6173 = vadd.f32 %v4993, %v5832
    %v6174 = vadd.f32 %v5260, %v6099
    %v6175 = vadd.f32 %v4996, %v5835
    %v6176 = vadd.f32 %v5263, %v6102
    %v6177 = vadd.f32 %v4998, %v5837
    %v6178 = vadd.f32 %v5265, %v6104
    %v6179 = vadd.f32 %v5001, %v5840
    %v6180 = vadd.f32 %v5268, %v6107
    %v6181 = vadd.f32 %v5003, %v5842
    %v6182 = vadd.f32 %v5270, %v6109
    %v6183 = vadd.f32 %v5006, %v5845
    %v6184 = vadd.f32 %v5273, %v6112
    %v6185 = vadd.f32 %v5008, %v5847
    %v6186 = vadd.f32 %v5275, %v6114
    %v6187 = vadd.f32 %v5011, %v5850
    %v6188 = vadd.f32 %v5278, %v6117
    %v6189 = vadd.f32 %v5013, %v5852
    %v6190 = vadd.f32 %v5280, %v6119
    %v6191 = vadd.f32 %v5016, %v5855
    %v6192 = vadd.f32 %v5283, %v6122
    %v6193 = vadd.f32 %v5018, %v5857
    %v6194 = vadd.f32 %v5285, %v6124
    %v6195 = vadd.f32 %v5021, %v5860
    %v6196 = vadd.f32 %v5288, %v6127
    %v6197 = vadd.f32 %v5023, %v5862
    %v6198 = vadd.f32 %v5290, %v6129
    %v6199 = vadd.f32 %v5026, %v5865
    %v6200 = vadd.f32 %v5293, %v6132
    %v6201 = vadd.f32 %v5028, %v5867
    %v6202 = vadd.f32 %v5295, %v6134
    %v6203 = vadd.f32 %v5031, %v5870
    %v6204 = vadd.f32 %v5298, %v6137
    %v6205 = vadd.f32 %v5033, %v5872
    %v6206 = vadd.f32 %v5300, %v6139
    %v6207 = vadd.f32 %v5036, %v5875
    %v6208 = vadd.f32 %v5303, %v6142
    %v6209 = vadd.f32 %v5038, %v5877
    %v6210 = vadd.f32 %v5305, %v6144
    %v6211 = vadd.f32 %v5041, %v5880
    %v6212 = vadd.f32 %v5308, %v6147
    %v6213 = vadd.f32 %v5043, %v5882
    %v6214 = vadd.f32 %v5310, %v6149
    %s6215 = scalar_lea.vmem [#allocation4], 1152
    %v6216 = vld [vmem:[%s6215] sm:$0xff]
    %v6217 = vld [vmem:[%s6215 + $0x8] sm:$0xff]
    %v6218 = vld [vmem:[%s6215 + $0x10] sm:$0xff]
    %v6219 = vld [vmem:[%s6215 + $0x18] sm:$0xff]
    %v6220 = vld [vmem:[%s6215 + $0x20] sm:$0xff]
    %v6221 = vld [vmem:[%s6215 + $0x28] sm:$0xff]
    %v6222 = vld [vmem:[%s6215 + $0x30] sm:$0xff]
    %v6223 = vld [vmem:[%s6215 + $0x38] sm:$0xff]
    %v6224 = vld [vmem:[%s6215 + $0x40] sm:$0xff]
    %v6225 = vld [vmem:[%s6215 + $0x48] sm:$0xff]
    %v6226 = vld [vmem:[%s6215 + $0x50] sm:$0xff]
    %v6227 = vld [vmem:[%s6215 + $0x58] sm:$0xff]
    %v6228 = vld [vmem:[%s6215 + $0x60] sm:$0xff]
    %v6229 = vld [vmem:[%s6215 + $0x68] sm:$0xff]
    %v6230 = vld [vmem:[%s6215 + $0x70] sm:$0xff]
    %v6231 = vld [vmem:[%s6215 + $0x78] sm:$0xff]
    %v6232 = vld [vmem:[%s6215 + $0x80] sm:$0xff]
    %v6233 = vld [vmem:[%s6215 + $0x88] sm:$0xff]
    %v6234 = vld [vmem:[%s6215 + $0x90] sm:$0xff]
    %v6235 = vld [vmem:[%s6215 + $0x98] sm:$0xff]
    %v6236 = vld [vmem:[%s6215 + $0xa0] sm:$0xff]
    %v6237 = vld [vmem:[%s6215 + $0xa8] sm:$0xff]
    %v6238 = vld [vmem:[%s6215 + $0xb0] sm:$0xff]
    %v6239 = vld [vmem:[%s6215 + $0xb8] sm:$0xff]
    %v6240 = vld [vmem:[%s6215 + $0xc0] sm:$0xff]
    %v6241 = vld [vmem:[%s6215 + $0xc8] sm:$0xff]
    %v6242 = vld [vmem:[%s6215 + $0xd0] sm:$0xff]
    %v6243 = vld [vmem:[%s6215 + $0xd8] sm:$0xff]
    %v6244 = vld [vmem:[%s6215 + $0xe0] sm:$0xff]
    %v6245 = vld [vmem:[%s6215 + $0xe8] sm:$0xff]
    %v6246 = vld [vmem:[%s6215 + $0xf0] sm:$0xff]
    %v6247 = vld [vmem:[%s6215 + $0xf8] sm:$0xff]
    %v6248 = vld [vmem:[%s6215 + $0x100] sm:$0xff]
    %v6249 = vld [vmem:[%s6215 + $0x108] sm:$0xff]
    %v6250 = vld [vmem:[%s6215 + $0x110] sm:$0xff]
    %v6251 = vld [vmem:[%s6215 + $0x118] sm:$0xff]
    %v6252 = vld [vmem:[%s6215 + $0x120] sm:$0xff]
    %v6253 = vld [vmem:[%s6215 + $0x128] sm:$0xff]
    %v6254 = vld [vmem:[%s6215 + $0x130] sm:$0xff]
    %v6255 = vld [vmem:[%s6215 + $0x138] sm:$0xff]
    %v6256 = vld [vmem:[%s6215 + $0x140] sm:$0xff]
    %v6257 = vld [vmem:[%s6215 + $0x148] sm:$0xff]
    %v6258 = vld [vmem:[%s6215 + $0x150] sm:$0xff]
    %v6259 = vld [vmem:[%s6215 + $0x158] sm:$0xff]
    %v6260 = vld [vmem:[%s6215 + $0x160] sm:$0xff]
    %v6261 = vld [vmem:[%s6215 + $0x168] sm:$0xff]
    %v6262 = vld [vmem:[%s6215 + $0x170] sm:$0xff]
    %v6263 = vld [vmem:[%s6215 + $0x178] sm:$0xff]
    %v6268 = vunpack.c.l.b16 %v3387
    %v6269 = vunpack.c.h.b16 %v3387
    %v6270 = vunpack.c.l.b16 %v3388
    %v6271 = vunpack.c.l.b16 %v3389
    %v6272 = vunpack.c.h.b16 %v3389
    %v6273 = vunpack.c.l.b16 %v3390
    %v6274 = vpack.c.b16 %v6271, %v6268
    %v6275 = vpack.c.b16 %v6272, %v6269
    %v6276 = vpack.c.b16 %v6273, %v6270
    %v6328 = vunpack.c.l.b16 %v6216
    %v6329 = vunpack.c.h.b16 %v6216
    %v6330 = vunpack.c.l.b16 %v6217
    %v6331 = vunpack.c.h.b16 %v6217
    %v6332 = vunpack.c.l.b16 %v6218
    %v6333 = vunpack.c.h.b16 %v6218
    %v6334 = vunpack.c.l.b16 %v6219
    %v6335 = vunpack.c.h.b16 %v6219
    %v6336 = vunpack.c.l.b16 %v6220
    %v6337 = vunpack.c.h.b16 %v6220
    %v6338 = vunpack.c.l.b16 %v6221
    %v6339 = vunpack.c.h.b16 %v6221
    %v6340 = vunpack.c.l.b16 %v6222
    %v6341 = vunpack.c.h.b16 %v6222
    %v6342 = vunpack.c.l.b16 %v6223
    %v6343 = vunpack.c.h.b16 %v6223
    %v6344 = vunpack.c.l.b16 %v6224
    %v6345 = vunpack.c.h.b16 %v6224
    %v6346 = vunpack.c.l.b16 %v6225
    %v6347 = vunpack.c.h.b16 %v6225
    %v6348 = vunpack.c.l.b16 %v6226
    %v6349 = vunpack.c.h.b16 %v6226
    %v6350 = vunpack.c.l.b16 %v6227
    %v6351 = vunpack.c.h.b16 %v6227
    %v6352 = vunpack.c.l.b16 %v6228
    %v6353 = vunpack.c.h.b16 %v6228
    %v6354 = vunpack.c.l.b16 %v6229
    %v6355 = vunpack.c.h.b16 %v6229
    %v6356 = vunpack.c.l.b16 %v6230
    %v6357 = vunpack.c.h.b16 %v6230
    %v6358 = vunpack.c.l.b16 %v6231
    %v6359 = vunpack.c.h.b16 %v6231
    %v6360 = vunpack.c.l.b16 %v6232
    %v6361 = vunpack.c.h.b16 %v6232
    %v6362 = vunpack.c.l.b16 %v6233
    %v6363 = vunpack.c.h.b16 %v6233
    %v6364 = vunpack.c.l.b16 %v6234
    %v6365 = vunpack.c.h.b16 %v6234
    %v6366 = vunpack.c.l.b16 %v6235
    %v6367 = vunpack.c.h.b16 %v6235
    %v6368 = vunpack.c.l.b16 %v6236
    %v6369 = vunpack.c.h.b16 %v6236
    %v6370 = vunpack.c.l.b16 %v6237
    %v6371 = vunpack.c.h.b16 %v6237
    %v6372 = vunpack.c.l.b16 %v6238
    %v6373 = vunpack.c.h.b16 %v6238
    %v6374 = vunpack.c.l.b16 %v6239
    %v6375 = vunpack.c.h.b16 %v6239
    %v6376 = vunpack.c.l.b16 %v6240
    %v6377 = vunpack.c.h.b16 %v6240
    %v6378 = vunpack.c.l.b16 %v6241
    %v6379 = vunpack.c.h.b16 %v6241
    %v6380 = vunpack.c.l.b16 %v6242
    %v6381 = vunpack.c.h.b16 %v6242
    %v6382 = vunpack.c.l.b16 %v6243
    %v6383 = vunpack.c.h.b16 %v6243
    %v6384 = vunpack.c.l.b16 %v6244
    %v6385 = vunpack.c.h.b16 %v6244
    %v6386 = vunpack.c.l.b16 %v6245
    %v6387 = vunpack.c.h.b16 %v6245
    %v6388 = vunpack.c.l.b16 %v6246
    %v6389 = vunpack.c.h.b16 %v6246
    %v6390 = vunpack.c.l.b16 %v6247
    %v6391 = vunpack.c.h.b16 %v6247
    %v6392 = vunpack.c.l.b16 %v6248
    %v6393 = vunpack.c.h.b16 %v6248
    %v6394 = vunpack.c.l.b16 %v6249
    %v6395 = vunpack.c.h.b16 %v6249
    %v6396 = vunpack.c.l.b16 %v6250
    %v6397 = vunpack.c.h.b16 %v6250
    %v6398 = vunpack.c.l.b16 %v6251
    %v6399 = vunpack.c.h.b16 %v6251
    %v6400 = vunpack.c.l.b16 %v6252
    %v6401 = vunpack.c.h.b16 %v6252
    %v6402 = vunpack.c.l.b16 %v6253
    %v6403 = vunpack.c.h.b16 %v6253
    %v6404 = vunpack.c.l.b16 %v6254
    %v6405 = vunpack.c.h.b16 %v6254
    %v6406 = vunpack.c.l.b16 %v6255
    %v6407 = vunpack.c.h.b16 %v6255
    %v6408 = vunpack.c.l.b16 %v6256
    %v6409 = vunpack.c.h.b16 %v6256
    %v6410 = vunpack.c.l.b16 %v6257
    %v6411 = vunpack.c.h.b16 %v6257
    %v6412 = vunpack.c.l.b16 %v6258
    %v6413 = vunpack.c.h.b16 %v6258
    %v6414 = vunpack.c.l.b16 %v6259
    %v6415 = vunpack.c.h.b16 %v6259
    %v6416 = vunpack.c.l.b16 %v6260
    %v6417 = vunpack.c.h.b16 %v6260
    %v6418 = vunpack.c.l.b16 %v6261
    %v6419 = vunpack.c.h.b16 %v6261
    %v6420 = vunpack.c.l.b16 %v6262
    %v6421 = vunpack.c.h.b16 %v6262
    %v6422 = vunpack.c.l.b16 %v6263
    %v6423 = vunpack.c.h.b16 %v6263
    %v6424 = vpack.c.b16 %v6330, %v6328
    %v6425 = vpack.c.b16 %v6331, %v6329
    %v6426 = vpack.c.b16 %v6334, %v6332
    %v6427 = vpack.c.b16 %v6335, %v6333
    %v6428 = vpack.c.b16 %v6338, %v6336
    %v6429 = vpack.c.b16 %v6339, %v6337
    %v6430 = vpack.c.b16 %v6342, %v6340
    %v6431 = vpack.c.b16 %v6343, %v6341
    %v6432 = vpack.c.b16 %v6346, %v6344
    %v6433 = vpack.c.b16 %v6347, %v6345
    %v6434 = vpack.c.b16 %v6350, %v6348
    %v6435 = vpack.c.b16 %v6351, %v6349
    %v6436 = vpack.c.b16 %v6354, %v6352
    %v6437 = vpack.c.b16 %v6355, %v6353
    %v6438 = vpack.c.b16 %v6358, %v6356
    %v6439 = vpack.c.b16 %v6359, %v6357
    %v6440 = vpack.c.b16 %v6362, %v6360
    %v6441 = vpack.c.b16 %v6363, %v6361
    %v6442 = vpack.c.b16 %v6366, %v6364
    %v6443 = vpack.c.b16 %v6367, %v6365
    %v6444 = vpack.c.b16 %v6370, %v6368
    %v6445 = vpack.c.b16 %v6371, %v6369
    %v6446 = vpack.c.b16 %v6374, %v6372
    %v6447 = vpack.c.b16 %v6375, %v6373
    %v6448 = vpack.c.b16 %v6378, %v6376
    %v6449 = vpack.c.b16 %v6379, %v6377
    %v6450 = vpack.c.b16 %v6382, %v6380
    %v6451 = vpack.c.b16 %v6383, %v6381
    %v6452 = vpack.c.b16 %v6386, %v6384
    %v6453 = vpack.c.b16 %v6387, %v6385
    %v6454 = vpack.c.b16 %v6390, %v6388
    %v6455 = vpack.c.b16 %v6391, %v6389
    %v6456 = vpack.c.b16 %v6394, %v6392
    %v6457 = vpack.c.b16 %v6395, %v6393
    %v6458 = vpack.c.b16 %v6398, %v6396
    %v6459 = vpack.c.b16 %v6399, %v6397
    %v6460 = vpack.c.b16 %v6402, %v6400
    %v6461 = vpack.c.b16 %v6403, %v6401
    %v6462 = vpack.c.b16 %v6406, %v6404
    %v6463 = vpack.c.b16 %v6407, %v6405
    %v6464 = vpack.c.b16 %v6410, %v6408
    %v6465 = vpack.c.b16 %v6411, %v6409
    %v6466 = vpack.c.b16 %v6414, %v6412
    %v6467 = vpack.c.b16 %v6415, %v6413
    %v6468 = vpack.c.b16 %v6418, %v6416
    %v6469 = vpack.c.b16 %v6419, %v6417
    %v6470 = vpack.c.b16 %v6422, %v6420
    %v6471 = vpack.c.b16 %v6423, %v6421
    %6520 = vmatpush.bf16.msra.mxu0 %v6438
    %6521 = vmatpush.bf16.msra.mxu0 %v6436
    %6522 = vmatpush.bf16.msra.mxu0 %v6434
    %6523 = vmatpush.bf16.msra.mxu0 %v6432
    %6524 = vmatpush.bf16.msra.mxu0 %v6430
    %6525 = vmatpush.bf16.msra.mxu0 %v6428
    %6526 = vmatpush.bf16.msra.mxu0 %v6426
    %6527 = vmatpush.bf16.msra.mxu0 %v6424
    %6528 = vmatmul.bf16.gmra.mxu0 %v3658
    %v6529 = vpop.f32.mrf.mxu0
    %v6530 = vadd.f32 0.0, %v6529
    %v6531 = vpop.f32.mrf.mxu0
    %v6532 = vadd.f32 0.0, %v6531
    %6533 = vmatmul.bf16.gmra.mxu0 %v3661
    %v6534 = vpop.f32.mrf.mxu0
    %v6535 = vadd.f32 0.0, %v6534
    %v6536 = vpop.f32.mrf.mxu0
    %v6537 = vadd.f32 0.0, %v6536
    %6538 = vmatmul.bf16.gmra.mxu0 %v3664
    %v6539 = vpop.f32.mrf.mxu0
    %v6540 = vadd.f32 0.0, %v6539
    %v6541 = vpop.f32.mrf.mxu0
    %v6542 = vadd.f32 0.0, %v6541
    %6543 = vmatmul.bf16.gmra.mxu0 %v3667
    %v6544 = vpop.f32.mrf.mxu0
    %v6545 = vadd.f32 0.0, %v6544
    %v6546 = vpop.f32.mrf.mxu0
    %v6547 = vadd.f32 0.0, %v6546
    %6548 = vmatmul.bf16.gmra.mxu0 %v3670
    %v6549 = vpop.f32.mrf.mxu0
    %v6550 = vadd.f32 0.0, %v6549
    %v6551 = vpop.f32.mrf.mxu0
    %v6552 = vadd.f32 0.0, %v6551
    %6553 = vmatmul.bf16.gmra.mxu0 %v3673
    %v6554 = vpop.f32.mrf.mxu0
    %v6555 = vadd.f32 0.0, %v6554
    %v6556 = vpop.f32.mrf.mxu0
    %v6557 = vadd.f32 0.0, %v6556
    %6558 = vmatmul.bf16.gmra.mxu0 %v3676
    %v6559 = vpop.f32.mrf.mxu0
    %v6560 = vadd.f32 0.0, %v6559
    %v6561 = vpop.f32.mrf.mxu0
    %v6562 = vadd.f32 0.0, %v6561
    %6563 = vmatmul.bf16.gmra.mxu0 %v3679
    %v6564 = vpop.f32.mrf.mxu0
    %v6565 = vadd.f32 0.0, %v6564
    %v6566 = vpop.f32.mrf.mxu0
    %v6567 = vadd.f32 0.0, %v6566
    %6568 = vmatmul.bf16.gmra.mxu0 %v3682
    %v6569 = vpop.f32.mrf.mxu0
    %v6570 = vadd.f32 0.0, %v6569
    %v6571 = vpop.f32.mrf.mxu0
    %v6572 = vadd.f32 0.0, %v6571
    %6573 = vmatmul.bf16.gmra.mxu0 %v3685
    %v6574 = vpop.f32.mrf.mxu0
    %v6575 = vadd.f32 0.0, %v6574
    %v6576 = vpop.f32.mrf.mxu0
    %v6577 = vadd.f32 0.0, %v6576
    %6578 = vmatmul.bf16.gmra.mxu0 %v3688
    %v6579 = vpop.f32.mrf.mxu0
    %v6580 = vadd.f32 0.0, %v6579
    %v6581 = vpop.f32.mrf.mxu0
    %v6582 = vadd.f32 0.0, %v6581
    %6583 = vmatmul.bf16.gmra.mxu0 %v3691
    %v6584 = vpop.f32.mrf.mxu0
    %v6585 = vadd.f32 0.0, %v6584
    %v6586 = vpop.f32.mrf.mxu0
    %v6587 = vadd.f32 0.0, %v6586
    %6588 = vmatmul.bf16.gmra.mxu0 %v3694
    %v6589 = vpop.f32.mrf.mxu0
    %v6590 = vadd.f32 0.0, %v6589
    %v6591 = vpop.f32.mrf.mxu0
    %v6592 = vadd.f32 0.0, %v6591
    %6593 = vmatmul.bf16.gmra.mxu0 %v3697
    %v6594 = vpop.f32.mrf.mxu0
    %v6595 = vadd.f32 0.0, %v6594
    %v6596 = vpop.f32.mrf.mxu0
    %v6597 = vadd.f32 0.0, %v6596
    %6598 = vmatmul.bf16.gmra.mxu0 %v5371
    %v6599 = vpop.f32.mrf.mxu0
    %v6600 = vadd.f32 0.0, %v6599
    %v6601 = vpop.f32.mrf.mxu0
    %v6602 = vadd.f32 0.0, %v6601
    %6603 = vmatmul.bf16.gmra.mxu0 %v6274
    %v6604 = vpop.f32.mrf.mxu0
    %v6605 = vadd.f32 0.0, %v6604
    %v6606 = vpop.f32.mrf.mxu0
    %v6607 = vadd.f32 0.0, %v6606
    %6608 = vdwg.mxu0
    %6609 = vmatpush.bf16.msra.mxu0 %v6454
    %6610 = vmatpush.bf16.msra.mxu0 %v6452
    %6611 = vmatpush.bf16.msra.mxu0 %v6450
    %6612 = vmatpush.bf16.msra.mxu0 %v6448
    %6613 = vmatpush.bf16.msra.mxu0 %v6446
    %6614 = vmatpush.bf16.msra.mxu0 %v6444
    %6615 = vmatpush.bf16.msra.mxu0 %v6442
    %6616 = vmatpush.bf16.msra.mxu0 %v6440
    %6617 = vmatmul.bf16.gmra.mxu0 %v3659
    %v6618 = vpop.f32.mrf.mxu0
    %v6619 = vadd.f32 %v6530, %v6618
    %v6620 = vpop.f32.mrf.mxu0
    %v6621 = vadd.f32 %v6532, %v6620
    %6622 = vmatmul.bf16.gmra.mxu0 %v3662
    %v6623 = vpop.f32.mrf.mxu0
    %v6624 = vadd.f32 %v6535, %v6623
    %v6625 = vpop.f32.mrf.mxu0
    %v6626 = vadd.f32 %v6537, %v6625
    %6627 = vmatmul.bf16.gmra.mxu0 %v3665
    %v6628 = vpop.f32.mrf.mxu0
    %v6629 = vadd.f32 %v6540, %v6628
    %v6630 = vpop.f32.mrf.mxu0
    %v6631 = vadd.f32 %v6542, %v6630
    %6632 = vmatmul.bf16.gmra.mxu0 %v3668
    %v6633 = vpop.f32.mrf.mxu0
    %v6634 = vadd.f32 %v6545, %v6633
    %v6635 = vpop.f32.mrf.mxu0
    %v6636 = vadd.f32 %v6547, %v6635
    %6637 = vmatmul.bf16.gmra.mxu0 %v3671
    %v6638 = vpop.f32.mrf.mxu0
    %v6639 = vadd.f32 %v6550, %v6638
    %v6640 = vpop.f32.mrf.mxu0
    %v6641 = vadd.f32 %v6552, %v6640
    %6642 = vmatmul.bf16.gmra.mxu0 %v3674
    %v6643 = vpop.f32.mrf.mxu0
    %v6644 = vadd.f32 %v6555, %v6643
    %v6645 = vpop.f32.mrf.mxu0
    %v6646 = vadd.f32 %v6557, %v6645
    %6647 = vmatmul.bf16.gmra.mxu0 %v3677
    %v6648 = vpop.f32.mrf.mxu0
    %v6649 = vadd.f32 %v6560, %v6648
    %v6650 = vpop.f32.mrf.mxu0
    %v6651 = vadd.f32 %v6562, %v6650
    %6652 = vmatmul.bf16.gmra.mxu0 %v3680
    %v6653 = vpop.f32.mrf.mxu0
    %v6654 = vadd.f32 %v6565, %v6653
    %v6655 = vpop.f32.mrf.mxu0
    %v6656 = vadd.f32 %v6567, %v6655
    %6657 = vmatmul.bf16.gmra.mxu0 %v3683
    %v6658 = vpop.f32.mrf.mxu0
    %v6659 = vadd.f32 %v6570, %v6658
    %v6660 = vpop.f32.mrf.mxu0
    %v6661 = vadd.f32 %v6572, %v6660
    %6662 = vmatmul.bf16.gmra.mxu0 %v3686
    %v6663 = vpop.f32.mrf.mxu0
    %v6664 = vadd.f32 %v6575, %v6663
    %v6665 = vpop.f32.mrf.mxu0
    %v6666 = vadd.f32 %v6577, %v6665
    %6667 = vmatmul.bf16.gmra.mxu0 %v3689
    %v6668 = vpop.f32.mrf.mxu0
    %v6669 = vadd.f32 %v6580, %v6668
    %v6670 = vpop.f32.mrf.mxu0
    %v6671 = vadd.f32 %v6582, %v6670
    %6672 = vmatmul.bf16.gmra.mxu0 %v3692
    %v6673 = vpop.f32.mrf.mxu0
    %v6674 = vadd.f32 %v6585, %v6673
    %v6675 = vpop.f32.mrf.mxu0
    %v6676 = vadd.f32 %v6587, %v6675
    %6677 = vmatmul.bf16.gmra.mxu0 %v3695
    %v6678 = vpop.f32.mrf.mxu0
    %v6679 = vadd.f32 %v6590, %v6678
    %v6680 = vpop.f32.mrf.mxu0
    %v6681 = vadd.f32 %v6592, %v6680
    %6682 = vmatmul.bf16.gmra.mxu0 %v3698
    %v6683 = vpop.f32.mrf.mxu0
    %v6684 = vadd.f32 %v6595, %v6683
    %v6685 = vpop.f32.mrf.mxu0
    %v6686 = vadd.f32 %v6597, %v6685
    %6687 = vmatmul.bf16.gmra.mxu0 %v5372
    %v6688 = vpop.f32.mrf.mxu0
    %v6689 = vadd.f32 %v6600, %v6688
    %v6690 = vpop.f32.mrf.mxu0
    %v6691 = vadd.f32 %v6602, %v6690
    %6692 = vmatmul.bf16.gmra.mxu0 %v6275
    %v6693 = vpop.f32.mrf.mxu0
    %v6694 = vadd.f32 %v6605, %v6693
    %v6695 = vpop.f32.mrf.mxu0
    %v6696 = vadd.f32 %v6607, %v6695
    %6697 = vdwg.mxu0
    %6698 = vmatpush.bf16.msra.mxu0 %v6470
    %6699 = vmatpush.bf16.msra.mxu0 %v6468
    %6700 = vmatpush.bf16.msra.mxu0 %v6466
    %6701 = vmatpush.bf16.msra.mxu0 %v6464
    %6702 = vmatpush.bf16.msra.mxu0 %v6462
    %6703 = vmatpush.bf16.msra.mxu0 %v6460
    %6704 = vmatpush.bf16.msra.mxu0 %v6458
    %6705 = vmatpush.bf16.msra.mxu0 %v6456
    %6706 = vmatmul.bf16.gmra.mxu0 %v3660
    %v6707 = vpop.f32.mrf.mxu0
    %v6708 = vadd.f32 %v6619, %v6707
    %v6709 = vpop.f32.mrf.mxu0
    %v6710 = vadd.f32 %v6621, %v6709
    %6711 = vmatmul.bf16.gmra.mxu0 %v3663
    %v6712 = vpop.f32.mrf.mxu0
    %v6713 = vadd.f32 %v6624, %v6712
    %v6714 = vpop.f32.mrf.mxu0
    %v6715 = vadd.f32 %v6626, %v6714
    %6716 = vmatmul.bf16.gmra.mxu0 %v3666
    %v6717 = vpop.f32.mrf.mxu0
    %v6718 = vadd.f32 %v6629, %v6717
    %v6719 = vpop.f32.mrf.mxu0
    %v6720 = vadd.f32 %v6631, %v6719
    %6721 = vmatmul.bf16.gmra.mxu0 %v3669
    %v6722 = vpop.f32.mrf.mxu0
    %v6723 = vadd.f32 %v6634, %v6722
    %v6724 = vpop.f32.mrf.mxu0
    %v6725 = vadd.f32 %v6636, %v6724
    %6726 = vmatmul.bf16.gmra.mxu0 %v3672
    %v6727 = vpop.f32.mrf.mxu0
    %v6728 = vadd.f32 %v6639, %v6727
    %v6729 = vpop.f32.mrf.mxu0
    %v6730 = vadd.f32 %v6641, %v6729
    %6731 = vmatmul.bf16.gmra.mxu0 %v3675
    %v6732 = vpop.f32.mrf.mxu0
    %v6733 = vadd.f32 %v6644, %v6732
    %v6734 = vpop.f32.mrf.mxu0
    %v6735 = vadd.f32 %v6646, %v6734
    %6736 = vmatmul.bf16.gmra.mxu0 %v3678
    %v6737 = vpop.f32.mrf.mxu0
    %v6738 = vadd.f32 %v6649, %v6737
    %v6739 = vpop.f32.mrf.mxu0
    %v6740 = vadd.f32 %v6651, %v6739
    %6741 = vmatmul.bf16.gmra.mxu0 %v3681
    %v6742 = vpop.f32.mrf.mxu0
    %v6743 = vadd.f32 %v6654, %v6742
    %v6744 = vpop.f32.mrf.mxu0
    %v6745 = vadd.f32 %v6656, %v6744
    %6746 = vmatmul.bf16.gmra.mxu0 %v3684
    %v6747 = vpop.f32.mrf.mxu0
    %v6748 = vadd.f32 %v6659, %v6747
    %v6749 = vpop.f32.mrf.mxu0
    %v6750 = vadd.f32 %v6661, %v6749
    %6751 = vmatmul.bf16.gmra.mxu0 %v3687
    %v6752 = vpop.f32.mrf.mxu0
    %v6753 = vadd.f32 %v6664, %v6752
    %v6754 = vpop.f32.mrf.mxu0
    %v6755 = vadd.f32 %v6666, %v6754
    %6756 = vmatmul.bf16.gmra.mxu0 %v3690
    %v6757 = vpop.f32.mrf.mxu0
    %v6758 = vadd.f32 %v6669, %v6757
    %v6759 = vpop.f32.mrf.mxu0
    %v6760 = vadd.f32 %v6671, %v6759
    %6761 = vmatmul.bf16.gmra.mxu0 %v3693
    %v6762 = vpop.f32.mrf.mxu0
    %v6763 = vadd.f32 %v6674, %v6762
    %v6764 = vpop.f32.mrf.mxu0
    %v6765 = vadd.f32 %v6676, %v6764
    %6766 = vmatmul.bf16.gmra.mxu0 %v3696
    %v6767 = vpop.f32.mrf.mxu0
    %v6768 = vadd.f32 %v6679, %v6767
    %v6769 = vpop.f32.mrf.mxu0
    %v6770 = vadd.f32 %v6681, %v6769
    %6771 = vmatmul.bf16.gmra.mxu0 %v3699
    %v6772 = vpop.f32.mrf.mxu0
    %v6773 = vadd.f32 %v6684, %v6772
    %v6774 = vpop.f32.mrf.mxu0
    %v6775 = vadd.f32 %v6686, %v6774
    %6776 = vmatmul.bf16.gmra.mxu0 %v5373
    %v6777 = vpop.f32.mrf.mxu0
    %v6778 = vadd.f32 %v6689, %v6777
    %v6779 = vpop.f32.mrf.mxu0
    %v6780 = vadd.f32 %v6691, %v6779
    %6781 = vmatmul.bf16.gmra.mxu0 %v6276
    %v6782 = vpop.f32.mrf.mxu0
    %v6783 = vadd.f32 %v6694, %v6782
    %v6784 = vpop.f32.mrf.mxu0
    %v6785 = vadd.f32 %v6696, %v6784
    %6786 = vdwg.mxu0
    %6787 = vmatpush.bf16.msra.mxu0 %v6439
    %6788 = vmatpush.bf16.msra.mxu0 %v6437
    %6789 = vmatpush.bf16.msra.mxu0 %v6435
    %6790 = vmatpush.bf16.msra.mxu0 %v6433
    %6791 = vmatpush.bf16.msra.mxu0 %v6431
    %6792 = vmatpush.bf16.msra.mxu0 %v6429
    %6793 = vmatpush.bf16.msra.mxu0 %v6427
    %6794 = vmatpush.bf16.msra.mxu0 %v6425
    %6795 = vmatmul.bf16.gmra.mxu0 %v3658
    %v6796 = vpop.f32.mrf.mxu0
    %v6797 = vadd.f32 0.0, %v6796
    %v6798 = vpop.f32.mrf.mxu0
    %v6799 = vadd.f32 0.0, %v6798
    %6800 = vmatmul.bf16.gmra.mxu0 %v3661
    %v6801 = vpop.f32.mrf.mxu0
    %v6802 = vadd.f32 0.0, %v6801
    %v6803 = vpop.f32.mrf.mxu0
    %v6804 = vadd.f32 0.0, %v6803
    %6805 = vmatmul.bf16.gmra.mxu0 %v3664
    %v6806 = vpop.f32.mrf.mxu0
    %v6807 = vadd.f32 0.0, %v6806
    %v6808 = vpop.f32.mrf.mxu0
    %v6809 = vadd.f32 0.0, %v6808
    %6810 = vmatmul.bf16.gmra.mxu0 %v3667
    %v6811 = vpop.f32.mrf.mxu0
    %v6812 = vadd.f32 0.0, %v6811
    %v6813 = vpop.f32.mrf.mxu0
    %v6814 = vadd.f32 0.0, %v6813
    %6815 = vmatmul.bf16.gmra.mxu0 %v3670
    %v6816 = vpop.f32.mrf.mxu0
    %v6817 = vadd.f32 0.0, %v6816
    %v6818 = vpop.f32.mrf.mxu0
    %v6819 = vadd.f32 0.0, %v6818
    %6820 = vmatmul.bf16.gmra.mxu0 %v3673
    %v6821 = vpop.f32.mrf.mxu0
    %v6822 = vadd.f32 0.0, %v6821
    %v6823 = vpop.f32.mrf.mxu0
    %v6824 = vadd.f32 0.0, %v6823
    %6825 = vmatmul.bf16.gmra.mxu0 %v3676
    %v6826 = vpop.f32.mrf.mxu0
    %v6827 = vadd.f32 0.0, %v6826
    %v6828 = vpop.f32.mrf.mxu0
    %v6829 = vadd.f32 0.0, %v6828
    %6830 = vmatmul.bf16.gmra.mxu0 %v3679
    %v6831 = vpop.f32.mrf.mxu0
    %v6832 = vadd.f32 0.0, %v6831
    %v6833 = vpop.f32.mrf.mxu0
    %v6834 = vadd.f32 0.0, %v6833
    %6835 = vmatmul.bf16.gmra.mxu0 %v3682
    %v6836 = vpop.f32.mrf.mxu0
    %v6837 = vadd.f32 0.0, %v6836
    %v6838 = vpop.f32.mrf.mxu0
    %v6839 = vadd.f32 0.0, %v6838
    %6840 = vmatmul.bf16.gmra.mxu0 %v3685
    %v6841 = vpop.f32.mrf.mxu0
    %v6842 = vadd.f32 0.0, %v6841
    %v6843 = vpop.f32.mrf.mxu0
    %v6844 = vadd.f32 0.0, %v6843
    %6845 = vmatmul.bf16.gmra.mxu0 %v3688
    %v6846 = vpop.f32.mrf.mxu0
    %v6847 = vadd.f32 0.0, %v6846
    %v6848 = vpop.f32.mrf.mxu0
    %v6849 = vadd.f32 0.0, %v6848
    %6850 = vmatmul.bf16.gmra.mxu0 %v3691
    %v6851 = vpop.f32.mrf.mxu0
    %v6852 = vadd.f32 0.0, %v6851
    %v6853 = vpop.f32.mrf.mxu0
    %v6854 = vadd.f32 0.0, %v6853
    %6855 = vmatmul.bf16.gmra.mxu0 %v3694
    %v6856 = vpop.f32.mrf.mxu0
    %v6857 = vadd.f32 0.0, %v6856
    %v6858 = vpop.f32.mrf.mxu0
    %v6859 = vadd.f32 0.0, %v6858
    %6860 = vmatmul.bf16.gmra.mxu0 %v3697
    %v6861 = vpop.f32.mrf.mxu0
    %v6862 = vadd.f32 0.0, %v6861
    %v6863 = vpop.f32.mrf.mxu0
    %v6864 = vadd.f32 0.0, %v6863
    %6865 = vmatmul.bf16.gmra.mxu0 %v5371
    %v6866 = vpop.f32.mrf.mxu0
    %v6867 = vadd.f32 0.0, %v6866
    %v6868 = vpop.f32.mrf.mxu0
    %v6869 = vadd.f32 0.0, %v6868
    %6870 = vmatmul.bf16.gmra.mxu0 %v6274
    %v6871 = vpop.f32.mrf.mxu0
    %v6872 = vadd.f32 0.0, %v6871
    %v6873 = vpop.f32.mrf.mxu0
    %v6874 = vadd.f32 0.0, %v6873
    %6875 = vdwg.mxu0
    %6876 = vmatpush.bf16.msra.mxu0 %v6455
    %6877 = vmatpush.bf16.msra.mxu0 %v6453
    %6878 = vmatpush.bf16.msra.mxu0 %v6451
    %6879 = vmatpush.bf16.msra.mxu0 %v6449
    %6880 = vmatpush.bf16.msra.mxu0 %v6447
    %6881 = vmatpush.bf16.msra.mxu0 %v6445
    %6882 = vmatpush.bf16.msra.mxu0 %v6443
    %6883 = vmatpush.bf16.msra.mxu0 %v6441
    %6884 = vmatmul.bf16.gmra.mxu0 %v3659
    %v6885 = vpop.f32.mrf.mxu0
    %v6886 = vadd.f32 %v6797, %v6885
    %v6887 = vpop.f32.mrf.mxu0
    %v6888 = vadd.f32 %v6799, %v6887
    %6889 = vmatmul.bf16.gmra.mxu0 %v3662
    %v6890 = vpop.f32.mrf.mxu0
    %v6891 = vadd.f32 %v6802, %v6890
    %v6892 = vpop.f32.mrf.mxu0
    %v6893 = vadd.f32 %v6804, %v6892
    %6894 = vmatmul.bf16.gmra.mxu0 %v3665
    %v6895 = vpop.f32.mrf.mxu0
    %v6896 = vadd.f32 %v6807, %v6895
    %v6897 = vpop.f32.mrf.mxu0
    %v6898 = vadd.f32 %v6809, %v6897
    %6899 = vmatmul.bf16.gmra.mxu0 %v3668
    %v6900 = vpop.f32.mrf.mxu0
    %v6901 = vadd.f32 %v6812, %v6900
    %v6902 = vpop.f32.mrf.mxu0
    %v6903 = vadd.f32 %v6814, %v6902
    %6904 = vmatmul.bf16.gmra.mxu0 %v3671
    %v6905 = vpop.f32.mrf.mxu0
    %v6906 = vadd.f32 %v6817, %v6905
    %v6907 = vpop.f32.mrf.mxu0
    %v6908 = vadd.f32 %v6819, %v6907
    %6909 = vmatmul.bf16.gmra.mxu0 %v3674
    %v6910 = vpop.f32.mrf.mxu0
    %v6911 = vadd.f32 %v6822, %v6910
    %v6912 = vpop.f32.mrf.mxu0
    %v6913 = vadd.f32 %v6824, %v6912
    %6914 = vmatmul.bf16.gmra.mxu0 %v3677
    %v6915 = vpop.f32.mrf.mxu0
    %v6916 = vadd.f32 %v6827, %v6915
    %v6917 = vpop.f32.mrf.mxu0
    %v6918 = vadd.f32 %v6829, %v6917
    %6919 = vmatmul.bf16.gmra.mxu0 %v3680
    %v6920 = vpop.f32.mrf.mxu0
    %v6921 = vadd.f32 %v6832, %v6920
    %v6922 = vpop.f32.mrf.mxu0
    %v6923 = vadd.f32 %v6834, %v6922
    %6924 = vmatmul.bf16.gmra.mxu0 %v3683
    %v6925 = vpop.f32.mrf.mxu0
    %v6926 = vadd.f32 %v6837, %v6925
    %v6927 = vpop.f32.mrf.mxu0
    %v6928 = vadd.f32 %v6839, %v6927
    %6929 = vmatmul.bf16.gmra.mxu0 %v3686
    %v6930 = vpop.f32.mrf.mxu0
    %v6931 = vadd.f32 %v6842, %v6930
    %v6932 = vpop.f32.mrf.mxu0
    %v6933 = vadd.f32 %v6844, %v6932
    %6934 = vmatmul.bf16.gmra.mxu0 %v3689
    %v6935 = vpop.f32.mrf.mxu0
    %v6936 = vadd.f32 %v6847, %v6935
    %v6937 = vpop.f32.mrf.mxu0
    %v6938 = vadd.f32 %v6849, %v6937
    %6939 = vmatmul.bf16.gmra.mxu0 %v3692
    %v6940 = vpop.f32.mrf.mxu0
    %v6941 = vadd.f32 %v6852, %v6940
    %v6942 = vpop.f32.mrf.mxu0
    %v6943 = vadd.f32 %v6854, %v6942
    %6944 = vmatmul.bf16.gmra.mxu0 %v3695
    %v6945 = vpop.f32.mrf.mxu0
    %v6946 = vadd.f32 %v6857, %v6945
    %v6947 = vpop.f32.mrf.mxu0
    %v6948 = vadd.f32 %v6859, %v6947
    %6949 = vmatmul.bf16.gmra.mxu0 %v3698
    %v6950 = vpop.f32.mrf.mxu0
    %v6951 = vadd.f32 %v6862, %v6950
    %v6952 = vpop.f32.mrf.mxu0
    %v6953 = vadd.f32 %v6864, %v6952
    %6954 = vmatmul.bf16.gmra.mxu0 %v5372
    %v6955 = vpop.f32.mrf.mxu0
    %v6956 = vadd.f32 %v6867, %v6955
    %v6957 = vpop.f32.mrf.mxu0
    %v6958 = vadd.f32 %v6869, %v6957
    %6959 = vmatmul.bf16.gmra.mxu0 %v6275
    %v6960 = vpop.f32.mrf.mxu0
    %v6961 = vadd.f32 %v6872, %v6960
    %v6962 = vpop.f32.mrf.mxu0
    %v6963 = vadd.f32 %v6874, %v6962
    %6964 = vdwg.mxu0
    %6965 = vmatpush.bf16.msra.mxu0 %v6471
    %6966 = vmatpush.bf16.msra.mxu0 %v6469
    %6967 = vmatpush.bf16.msra.mxu0 %v6467
    %6968 = vmatpush.bf16.msra.mxu0 %v6465
    %6969 = vmatpush.bf16.msra.mxu0 %v6463
    %6970 = vmatpush.bf16.msra.mxu0 %v6461
    %6971 = vmatpush.bf16.msra.mxu0 %v6459
    %6972 = vmatpush.bf16.msra.mxu0 %v6457
    %6973 = vmatmul.bf16.gmra.mxu0 %v3660
    %v6974 = vpop.f32.mrf.mxu0
    %v6975 = vadd.f32 %v6886, %v6974
    %v6976 = vpop.f32.mrf.mxu0
    %v6977 = vadd.f32 %v6888, %v6976
    %6978 = vmatmul.bf16.gmra.mxu0 %v3663
    %v6979 = vpop.f32.mrf.mxu0
    %v6980 = vadd.f32 %v6891, %v6979
    %v6981 = vpop.f32.mrf.mxu0
    %v6982 = vadd.f32 %v6893, %v6981
    %6983 = vmatmul.bf16.gmra.mxu0 %v3666
    %v6984 = vpop.f32.mrf.mxu0
    %v6985 = vadd.f32 %v6896, %v6984
    %v6986 = vpop.f32.mrf.mxu0
    %v6987 = vadd.f32 %v6898, %v6986
    %6988 = vmatmul.bf16.gmra.mxu0 %v3669
    %v6989 = vpop.f32.mrf.mxu0
    %v6990 = vadd.f32 %v6901, %v6989
    %v6991 = vpop.f32.mrf.mxu0
    %v6992 = vadd.f32 %v6903, %v6991
    %6993 = vmatmul.bf16.gmra.mxu0 %v3672
    %v6994 = vpop.f32.mrf.mxu0
    %v6995 = vadd.f32 %v6906, %v6994
    %v6996 = vpop.f32.mrf.mxu0
    %v6997 = vadd.f32 %v6908, %v6996
    %6998 = vmatmul.bf16.gmra.mxu0 %v3675
    %v6999 = vpop.f32.mrf.mxu0
    %v7000 = vadd.f32 %v6911, %v6999
    %v7001 = vpop.f32.mrf.mxu0
    %v7002 = vadd.f32 %v6913, %v7001
    %7003 = vmatmul.bf16.gmra.mxu0 %v3678
    %v7004 = vpop.f32.mrf.mxu0
    %v7005 = vadd.f32 %v6916, %v7004
    %v7006 = vpop.f32.mrf.mxu0
    %v7007 = vadd.f32 %v6918, %v7006
    %7008 = vmatmul.bf16.gmra.mxu0 %v3681
    %v7009 = vpop.f32.mrf.mxu0
    %v7010 = vadd.f32 %v6921, %v7009
    %v7011 = vpop.f32.mrf.mxu0
    %v7012 = vadd.f32 %v6923, %v7011
    %7013 = vmatmul.bf16.gmra.mxu0 %v3684
    %v7014 = vpop.f32.mrf.mxu0
    %v7015 = vadd.f32 %v6926, %v7014
    %v7016 = vpop.f32.mrf.mxu0
    %v7017 = vadd.f32 %v6928, %v7016
    %7018 = vmatmul.bf16.gmra.mxu0 %v3687
    %v7019 = vpop.f32.mrf.mxu0
    %v7020 = vadd.f32 %v6931, %v7019
    %v7021 = vpop.f32.mrf.mxu0
    %v7022 = vadd.f32 %v6933, %v7021
    %7023 = vmatmul.bf16.gmra.mxu0 %v3690
    %v7024 = vpop.f32.mrf.mxu0
    %v7025 = vadd.f32 %v6936, %v7024
    %v7026 = vpop.f32.mrf.mxu0
    %v7027 = vadd.f32 %v6938, %v7026
    %7028 = vmatmul.bf16.gmra.mxu0 %v3693
    %v7029 = vpop.f32.mrf.mxu0
    %v7030 = vadd.f32 %v6941, %v7029
    %v7031 = vpop.f32.mrf.mxu0
    %v7032 = vadd.f32 %v6943, %v7031
    %7033 = vmatmul.bf16.gmra.mxu0 %v3696
    %v7034 = vpop.f32.mrf.mxu0
    %v7035 = vadd.f32 %v6946, %v7034
    %v7036 = vpop.f32.mrf.mxu0
    %v7037 = vadd.f32 %v6948, %v7036
    %7038 = vmatmul.bf16.gmra.mxu0 %v3699
    %v7039 = vpop.f32.mrf.mxu0
    %v7040 = vadd.f32 %v6951, %v7039
    %v7041 = vpop.f32.mrf.mxu0
    %v7042 = vadd.f32 %v6953, %v7041
    %7043 = vmatmul.bf16.gmra.mxu0 %v5373
    %v7044 = vpop.f32.mrf.mxu0
    %v7045 = vadd.f32 %v6956, %v7044
    %v7046 = vpop.f32.mrf.mxu0
    %v7047 = vadd.f32 %v6958, %v7046
    %7048 = vmatmul.bf16.gmra.mxu0 %v6276
    %v7049 = vpop.f32.mrf.mxu0
    %v7050 = vadd.f32 %v6961, %v7049
    %v7051 = vpop.f32.mrf.mxu0
    %v7052 = vadd.f32 %v6963, %v7051
    %7053 = vdwg.mxu0
    %v7054 = vadd.f32 %v6151, %v6708
    %v7055 = vadd.f32 %v6152, %v6975
    %v7056 = vadd.f32 %v6153, %v6710
    %v7057 = vadd.f32 %v6154, %v6977
    %v7058 = vadd.f32 %v6155, %v6713
    %v7059 = vadd.f32 %v6156, %v6980
    %v7060 = vadd.f32 %v6157, %v6715
    %v7061 = vadd.f32 %v6158, %v6982
    %v7062 = vadd.f32 %v6159, %v6718
    %v7063 = vadd.f32 %v6160, %v6985
    %v7064 = vadd.f32 %v6161, %v6720
    %v7065 = vadd.f32 %v6162, %v6987
    %v7066 = vadd.f32 %v6163, %v6723
    %v7067 = vadd.f32 %v6164, %v6990
    %v7068 = vadd.f32 %v6165, %v6725
    %v7069 = vadd.f32 %v6166, %v6992
    %v7070 = vadd.f32 %v6167, %v6728
    %v7071 = vadd.f32 %v6168, %v6995
    %v7072 = vadd.f32 %v6169, %v6730
    %v7073 = vadd.f32 %v6170, %v6997
    %v7074 = vadd.f32 %v6171, %v6733
    %v7075 = vadd.f32 %v6172, %v7000
    %v7076 = vadd.f32 %v6173, %v6735
    %v7077 = vadd.f32 %v6174, %v7002
    %v7078 = vadd.f32 %v6175, %v6738
    %v7079 = vadd.f32 %v6176, %v7005
    %v7080 = vadd.f32 %v6177, %v6740
    %v7081 = vadd.f32 %v6178, %v7007
    %v7082 = vadd.f32 %v6179, %v6743
    %v7083 = vadd.f32 %v6180, %v7010
    %v7084 = vadd.f32 %v6181, %v6745
    %v7085 = vadd.f32 %v6182, %v7012
    %v7086 = vadd.f32 %v6183, %v6748
    %v7087 = vadd.f32 %v6184, %v7015
    %v7088 = vadd.f32 %v6185, %v6750
    %v7089 = vadd.f32 %v6186, %v7017
    %v7090 = vadd.f32 %v6187, %v6753
    %v7091 = vadd.f32 %v6188, %v7020
    %v7092 = vadd.f32 %v6189, %v6755
    %v7093 = vadd.f32 %v6190, %v7022
    %v7094 = vadd.f32 %v6191, %v6758
    %v7095 = vadd.f32 %v6192, %v7025
    %v7096 = vadd.f32 %v6193, %v6760
    %v7097 = vadd.f32 %v6194, %v7027
    %v7098 = vadd.f32 %v6195, %v6763
    %v7099 = vadd.f32 %v6196, %v7030
    %v7100 = vadd.f32 %v6197, %v6765
    %v7101 = vadd.f32 %v6198, %v7032
    %v7102 = vadd.f32 %v6199, %v6768
    %v7103 = vadd.f32 %v6200, %v7035
    %v7104 = vadd.f32 %v6201, %v6770
    %v7105 = vadd.f32 %v6202, %v7037
    %v7106 = vadd.f32 %v6203, %v6773
    %v7107 = vadd.f32 %v6204, %v7040
    %v7108 = vadd.f32 %v6205, %v6775
    %v7109 = vadd.f32 %v6206, %v7042
    %v7110 = vadd.f32 %v6207, %v6778
    %v7111 = vadd.f32 %v6208, %v7045
    %v7112 = vadd.f32 %v6209, %v6780
    %v7113 = vadd.f32 %v6210, %v7047
    %v7114 = vadd.f32 %v6211, %v6783
    %v7115 = vadd.f32 %v6212, %v7050
    %v7116 = vadd.f32 %v6213, %v6785
    %v7117 = vadd.f32 %v6214, %v7052
    %s7118 = scalar_lea.vmem [#allocation4], 1536
    %v7119 = vld [vmem:[%s7118] sm:$0xff]
    %v7120 = vld [vmem:[%s7118 + $0x8] sm:$0xff]
    %v7121 = vld [vmem:[%s7118 + $0x10] sm:$0xff]
    %v7122 = vld [vmem:[%s7118 + $0x18] sm:$0xff]
    %v7123 = vld [vmem:[%s7118 + $0x20] sm:$0xff]
    %v7124 = vld [vmem:[%s7118 + $0x28] sm:$0xff]
    %v7125 = vld [vmem:[%s7118 + $0x30] sm:$0xff]
    %v7126 = vld [vmem:[%s7118 + $0x38] sm:$0xff]
    %v7127 = vld [vmem:[%s7118 + $0x40] sm:$0xff]
    %v7128 = vld [vmem:[%s7118 + $0x48] sm:$0xff]
    %v7129 = vld [vmem:[%s7118 + $0x50] sm:$0xff]
    %v7130 = vld [vmem:[%s7118 + $0x58] sm:$0xff]
    %v7131 = vld [vmem:[%s7118 + $0x60] sm:$0xff]
    %v7132 = vld [vmem:[%s7118 + $0x68] sm:$0xff]
    %v7133 = vld [vmem:[%s7118 + $0x70] sm:$0xff]
    %v7134 = vld [vmem:[%s7118 + $0x78] sm:$0xff]
    %v7135 = vld [vmem:[%s7118 + $0x80] sm:$0xff]
    %v7136 = vld [vmem:[%s7118 + $0x88] sm:$0xff]
    %v7137 = vld [vmem:[%s7118 + $0x90] sm:$0xff]
    %v7138 = vld [vmem:[%s7118 + $0x98] sm:$0xff]
    %v7139 = vld [vmem:[%s7118 + $0xa0] sm:$0xff]
    %v7140 = vld [vmem:[%s7118 + $0xa8] sm:$0xff]
    %v7141 = vld [vmem:[%s7118 + $0xb0] sm:$0xff]
    %v7142 = vld [vmem:[%s7118 + $0xb8] sm:$0xff]
    %v7143 = vld [vmem:[%s7118 + $0xc0] sm:$0xff]
    %v7144 = vld [vmem:[%s7118 + $0xc8] sm:$0xff]
    %v7145 = vld [vmem:[%s7118 + $0xd0] sm:$0xff]
    %v7146 = vld [vmem:[%s7118 + $0xd8] sm:$0xff]
    %v7147 = vld [vmem:[%s7118 + $0xe0] sm:$0xff]
    %v7148 = vld [vmem:[%s7118 + $0xe8] sm:$0xff]
    %v7149 = vld [vmem:[%s7118 + $0xf0] sm:$0xff]
    %v7150 = vld [vmem:[%s7118 + $0xf8] sm:$0xff]
    %v7151 = vld [vmem:[%s7118 + $0x100] sm:$0xff]
    %v7152 = vld [vmem:[%s7118 + $0x108] sm:$0xff]
    %v7153 = vld [vmem:[%s7118 + $0x110] sm:$0xff]
    %v7154 = vld [vmem:[%s7118 + $0x118] sm:$0xff]
    %v7155 = vld [vmem:[%s7118 + $0x120] sm:$0xff]
    %v7156 = vld [vmem:[%s7118 + $0x128] sm:$0xff]
    %v7157 = vld [vmem:[%s7118 + $0x130] sm:$0xff]
    %v7158 = vld [vmem:[%s7118 + $0x138] sm:$0xff]
    %v7159 = vld [vmem:[%s7118 + $0x140] sm:$0xff]
    %v7160 = vld [vmem:[%s7118 + $0x148] sm:$0xff]
    %v7161 = vld [vmem:[%s7118 + $0x150] sm:$0xff]
    %v7162 = vld [vmem:[%s7118 + $0x158] sm:$0xff]
    %v7163 = vld [vmem:[%s7118 + $0x160] sm:$0xff]
    %v7164 = vld [vmem:[%s7118 + $0x168] sm:$0xff]
    %v7165 = vld [vmem:[%s7118 + $0x170] sm:$0xff]
    %v7166 = vld [vmem:[%s7118 + $0x178] sm:$0xff]
    %v7171 = vunpack.c.l.b16 %v3391
    %v7172 = vunpack.c.h.b16 %v3391
    %v7173 = vunpack.c.l.b16 %v3392
    %v7174 = vunpack.c.l.b16 %v3393
    %v7175 = vunpack.c.h.b16 %v3393
    %v7176 = vunpack.c.l.b16 %v3394
    %v7177 = vpack.c.b16 %v7174, %v7171
    %v7178 = vpack.c.b16 %v7175, %v7172
    %v7179 = vpack.c.b16 %v7176, %v7173
    %v7231 = vunpack.c.l.b16 %v7119
    %v7232 = vunpack.c.h.b16 %v7119
    %v7233 = vunpack.c.l.b16 %v7120
    %v7234 = vunpack.c.h.b16 %v7120
    %v7235 = vunpack.c.l.b16 %v7121
    %v7236 = vunpack.c.h.b16 %v7121
    %v7237 = vunpack.c.l.b16 %v7122
    %v7238 = vunpack.c.h.b16 %v7122
    %v7239 = vunpack.c.l.b16 %v7123
    %v7240 = vunpack.c.h.b16 %v7123
    %v7241 = vunpack.c.l.b16 %v7124
    %v7242 = vunpack.c.h.b16 %v7124
    %v7243 = vunpack.c.l.b16 %v7125
    %v7244 = vunpack.c.h.b16 %v7125
    %v7245 = vunpack.c.l.b16 %v7126
    %v7246 = vunpack.c.h.b16 %v7126
    %v7247 = vunpack.c.l.b16 %v7127
    %v7248 = vunpack.c.h.b16 %v7127
    %v7249 = vunpack.c.l.b16 %v7128
    %v7250 = vunpack.c.h.b16 %v7128
    %v7251 = vunpack.c.l.b16 %v7129
    %v7252 = vunpack.c.h.b16 %v7129
    %v7253 = vunpack.c.l.b16 %v7130
    %v7254 = vunpack.c.h.b16 %v7130
    %v7255 = vunpack.c.l.b16 %v7131
    %v7256 = vunpack.c.h.b16 %v7131
    %v7257 = vunpack.c.l.b16 %v7132
    %v7258 = vunpack.c.h.b16 %v7132
    %v7259 = vunpack.c.l.b16 %v7133
    %v7260 = vunpack.c.h.b16 %v7133
    %v7261 = vunpack.c.l.b16 %v7134
    %v7262 = vunpack.c.h.b16 %v7134
    %v7263 = vunpack.c.l.b16 %v7135
    %v7264 = vunpack.c.h.b16 %v7135
    %v7265 = vunpack.c.l.b16 %v7136
    %v7266 = vunpack.c.h.b16 %v7136
    %v7267 = vunpack.c.l.b16 %v7137
    %v7268 = vunpack.c.h.b16 %v7137
    %v7269 = vunpack.c.l.b16 %v7138
    %v7270 = vunpack.c.h.b16 %v7138
    %v7271 = vunpack.c.l.b16 %v7139
    %v7272 = vunpack.c.h.b16 %v7139
    %v7273 = vunpack.c.l.b16 %v7140
    %v7274 = vunpack.c.h.b16 %v7140
    %v7275 = vunpack.c.l.b16 %v7141
    %v7276 = vunpack.c.h.b16 %v7141
    %v7277 = vunpack.c.l.b16 %v7142
    %v7278 = vunpack.c.h.b16 %v7142
    %v7279 = vunpack.c.l.b16 %v7143
    %v7280 = vunpack.c.h.b16 %v7143
    %v7281 = vunpack.c.l.b16 %v7144
    %v7282 = vunpack.c.h.b16 %v7144
    %v7283 = vunpack.c.l.b16 %v7145
    %v7284 = vunpack.c.h.b16 %v7145
    %v7285 = vunpack.c.l.b16 %v7146
    %v7286 = vunpack.c.h.b16 %v7146
    %v7287 = vunpack.c.l.b16 %v7147
    %v7288 = vunpack.c.h.b16 %v7147
    %v7289 = vunpack.c.l.b16 %v7148
    %v7290 = vunpack.c.h.b16 %v7148
    %v7291 = vunpack.c.l.b16 %v7149
    %v7292 = vunpack.c.h.b16 %v7149
    %v7293 = vunpack.c.l.b16 %v7150
    %v7294 = vunpack.c.h.b16 %v7150
    %v7295 = vunpack.c.l.b16 %v7151
    %v7296 = vunpack.c.h.b16 %v7151
    %v7297 = vunpack.c.l.b16 %v7152
    %v7298 = vunpack.c.h.b16 %v7152
    %v7299 = vunpack.c.l.b16 %v7153
    %v7300 = vunpack.c.h.b16 %v7153
    %v7301 = vunpack.c.l.b16 %v7154
    %v7302 = vunpack.c.h.b16 %v7154
    %v7303 = vunpack.c.l.b16 %v7155
    %v7304 = vunpack.c.h.b16 %v7155
    %v7305 = vunpack.c.l.b16 %v7156
    %v7306 = vunpack.c.h.b16 %v7156
    %v7307 = vunpack.c.l.b16 %v7157
    %v7308 = vunpack.c.h.b16 %v7157
    %v7309 = vunpack.c.l.b16 %v7158
    %v7310 = vunpack.c.h.b16 %v7158
    %v7311 = vunpack.c.l.b16 %v7159
    %v7312 = vunpack.c.h.b16 %v7159
    %v7313 = vunpack.c.l.b16 %v7160
    %v7314 = vunpack.c.h.b16 %v7160
    %v7315 = vunpack.c.l.b16 %v7161
    %v7316 = vunpack.c.h.b16 %v7161
    %v7317 = vunpack.c.l.b16 %v7162
    %v7318 = vunpack.c.h.b16 %v7162
    %v7319 = vunpack.c.l.b16 %v7163
    %v7320 = vunpack.c.h.b16 %v7163
    %v7321 = vunpack.c.l.b16 %v7164
    %v7322 = vunpack.c.h.b16 %v7164
    %v7323 = vunpack.c.l.b16 %v7165
    %v7324 = vunpack.c.h.b16 %v7165
    %v7325 = vunpack.c.l.b16 %v7166
    %v7326 = vunpack.c.h.b16 %v7166
    %v7327 = vpack.c.b16 %v7233, %v7231
    %v7328 = vpack.c.b16 %v7234, %v7232
    %v7329 = vpack.c.b16 %v7237, %v7235
    %v7330 = vpack.c.b16 %v7238, %v7236
    %v7331 = vpack.c.b16 %v7241, %v7239
    %v7332 = vpack.c.b16 %v7242, %v7240
    %v7333 = vpack.c.b16 %v7245, %v7243
    %v7334 = vpack.c.b16 %v7246, %v7244
    %v7335 = vpack.c.b16 %v7249, %v7247
    %v7336 = vpack.c.b16 %v7250, %v7248
    %v7337 = vpack.c.b16 %v7253, %v7251
    %v7338 = vpack.c.b16 %v7254, %v7252
    %v7339 = vpack.c.b16 %v7257, %v7255
    %v7340 = vpack.c.b16 %v7258, %v7256
    %v7341 = vpack.c.b16 %v7261, %v7259
    %v7342 = vpack.c.b16 %v7262, %v7260
    %v7343 = vpack.c.b16 %v7265, %v7263
    %v7344 = vpack.c.b16 %v7266, %v7264
    %v7345 = vpack.c.b16 %v7269, %v7267
    %v7346 = vpack.c.b16 %v7270, %v7268
    %v7347 = vpack.c.b16 %v7273, %v7271
    %v7348 = vpack.c.b16 %v7274, %v7272
    %v7349 = vpack.c.b16 %v7277, %v7275
    %v7350 = vpack.c.b16 %v7278, %v7276
    %v7351 = vpack.c.b16 %v7281, %v7279
    %v7352 = vpack.c.b16 %v7282, %v7280
    %v7353 = vpack.c.b16 %v7285, %v7283
    %v7354 = vpack.c.b16 %v7286, %v7284
    %v7355 = vpack.c.b16 %v7289, %v7287
    %v7356 = vpack.c.b16 %v7290, %v7288
    %v7357 = vpack.c.b16 %v7293, %v7291
    %v7358 = vpack.c.b16 %v7294, %v7292
    %v7359 = vpack.c.b16 %v7297, %v7295
    %v7360 = vpack.c.b16 %v7298, %v7296
    %v7361 = vpack.c.b16 %v7301, %v7299
    %v7362 = vpack.c.b16 %v7302, %v7300
    %v7363 = vpack.c.b16 %v7305, %v7303
    %v7364 = vpack.c.b16 %v7306, %v7304
    %v7365 = vpack.c.b16 %v7309, %v7307
    %v7366 = vpack.c.b16 %v7310, %v7308
    %v7367 = vpack.c.b16 %v7313, %v7311
    %v7368 = vpack.c.b16 %v7314, %v7312
    %v7369 = vpack.c.b16 %v7317, %v7315
    %v7370 = vpack.c.b16 %v7318, %v7316
    %v7371 = vpack.c.b16 %v7321, %v7319
    %v7372 = vpack.c.b16 %v7322, %v7320
    %v7373 = vpack.c.b16 %v7325, %v7323
    %v7374 = vpack.c.b16 %v7326, %v7324
    %7423 = vmatpush.bf16.msra.mxu0 %v7341
    %7424 = vmatpush.bf16.msra.mxu0 %v7339
    %7425 = vmatpush.bf16.msra.mxu0 %v7337
    %7426 = vmatpush.bf16.msra.mxu0 %v7335
    %7427 = vmatpush.bf16.msra.mxu0 %v7333
    %7428 = vmatpush.bf16.msra.mxu0 %v7331
    %7429 = vmatpush.bf16.msra.mxu0 %v7329
    %7430 = vmatpush.bf16.msra.mxu0 %v7327
    %7431 = vmatmul.bf16.gmra.mxu0 %v3661
    %v7432 = vpop.f32.mrf.mxu0
    %v7433 = vadd.f32 0.0, %v7432
    %v7434 = vpop.f32.mrf.mxu0
    %v7435 = vadd.f32 0.0, %v7434
    %7436 = vmatmul.bf16.gmra.mxu0 %v3664
    %v7437 = vpop.f32.mrf.mxu0
    %v7438 = vadd.f32 0.0, %v7437
    %v7439 = vpop.f32.mrf.mxu0
    %v7440 = vadd.f32 0.0, %v7439
    %7441 = vmatmul.bf16.gmra.mxu0 %v3667
    %v7442 = vpop.f32.mrf.mxu0
    %v7443 = vadd.f32 0.0, %v7442
    %v7444 = vpop.f32.mrf.mxu0
    %v7445 = vadd.f32 0.0, %v7444
    %7446 = vmatmul.bf16.gmra.mxu0 %v3670
    %v7447 = vpop.f32.mrf.mxu0
    %v7448 = vadd.f32 0.0, %v7447
    %v7449 = vpop.f32.mrf.mxu0
    %v7450 = vadd.f32 0.0, %v7449
    %7451 = vmatmul.bf16.gmra.mxu0 %v3673
    %v7452 = vpop.f32.mrf.mxu0
    %v7453 = vadd.f32 0.0, %v7452
    %v7454 = vpop.f32.mrf.mxu0
    %v7455 = vadd.f32 0.0, %v7454
    %7456 = vmatmul.bf16.gmra.mxu0 %v3676
    %v7457 = vpop.f32.mrf.mxu0
    %v7458 = vadd.f32 0.0, %v7457
    %v7459 = vpop.f32.mrf.mxu0
    %v7460 = vadd.f32 0.0, %v7459
    %7461 = vmatmul.bf16.gmra.mxu0 %v3679
    %v7462 = vpop.f32.mrf.mxu0
    %v7463 = vadd.f32 0.0, %v7462
    %v7464 = vpop.f32.mrf.mxu0
    %v7465 = vadd.f32 0.0, %v7464
    %7466 = vmatmul.bf16.gmra.mxu0 %v3682
    %v7467 = vpop.f32.mrf.mxu0
    %v7468 = vadd.f32 0.0, %v7467
    %v7469 = vpop.f32.mrf.mxu0
    %v7470 = vadd.f32 0.0, %v7469
    %7471 = vmatmul.bf16.gmra.mxu0 %v3685
    %v7472 = vpop.f32.mrf.mxu0
    %v7473 = vadd.f32 0.0, %v7472
    %v7474 = vpop.f32.mrf.mxu0
    %v7475 = vadd.f32 0.0, %v7474
    %7476 = vmatmul.bf16.gmra.mxu0 %v3688
    %v7477 = vpop.f32.mrf.mxu0
    %v7478 = vadd.f32 0.0, %v7477
    %v7479 = vpop.f32.mrf.mxu0
    %v7480 = vadd.f32 0.0, %v7479
    %7481 = vmatmul.bf16.gmra.mxu0 %v3691
    %v7482 = vpop.f32.mrf.mxu0
    %v7483 = vadd.f32 0.0, %v7482
    %v7484 = vpop.f32.mrf.mxu0
    %v7485 = vadd.f32 0.0, %v7484
    %7486 = vmatmul.bf16.gmra.mxu0 %v3694
    %v7487 = vpop.f32.mrf.mxu0
    %v7488 = vadd.f32 0.0, %v7487
    %v7489 = vpop.f32.mrf.mxu0
    %v7490 = vadd.f32 0.0, %v7489
    %7491 = vmatmul.bf16.gmra.mxu0 %v3697
    %v7492 = vpop.f32.mrf.mxu0
    %v7493 = vadd.f32 0.0, %v7492
    %v7494 = vpop.f32.mrf.mxu0
    %v7495 = vadd.f32 0.0, %v7494
    %7496 = vmatmul.bf16.gmra.mxu0 %v5371
    %v7497 = vpop.f32.mrf.mxu0
    %v7498 = vadd.f32 0.0, %v7497
    %v7499 = vpop.f32.mrf.mxu0
    %v7500 = vadd.f32 0.0, %v7499
    %7501 = vmatmul.bf16.gmra.mxu0 %v6274
    %v7502 = vpop.f32.mrf.mxu0
    %v7503 = vadd.f32 0.0, %v7502
    %v7504 = vpop.f32.mrf.mxu0
    %v7505 = vadd.f32 0.0, %v7504
    %7506 = vmatmul.bf16.gmra.mxu0 %v7177
    %v7507 = vpop.f32.mrf.mxu0
    %v7508 = vadd.f32 0.0, %v7507
    %v7509 = vpop.f32.mrf.mxu0
    %v7510 = vadd.f32 0.0, %v7509
    %7511 = vdwg.mxu0
    %7512 = vmatpush.bf16.msra.mxu0 %v7357
    %7513 = vmatpush.bf16.msra.mxu0 %v7355
    %7514 = vmatpush.bf16.msra.mxu0 %v7353
    %7515 = vmatpush.bf16.msra.mxu0 %v7351
    %7516 = vmatpush.bf16.msra.mxu0 %v7349
    %7517 = vmatpush.bf16.msra.mxu0 %v7347
    %7518 = vmatpush.bf16.msra.mxu0 %v7345
    %7519 = vmatpush.bf16.msra.mxu0 %v7343
    %7520 = vmatmul.bf16.gmra.mxu0 %v3662
    %v7521 = vpop.f32.mrf.mxu0
    %v7522 = vadd.f32 %v7433, %v7521
    %v7523 = vpop.f32.mrf.mxu0
    %v7524 = vadd.f32 %v7435, %v7523
    %7525 = vmatmul.bf16.gmra.mxu0 %v3665
    %v7526 = vpop.f32.mrf.mxu0
    %v7527 = vadd.f32 %v7438, %v7526
    %v7528 = vpop.f32.mrf.mxu0
    %v7529 = vadd.f32 %v7440, %v7528
    %7530 = vmatmul.bf16.gmra.mxu0 %v3668
    %v7531 = vpop.f32.mrf.mxu0
    %v7532 = vadd.f32 %v7443, %v7531
    %v7533 = vpop.f32.mrf.mxu0
    %v7534 = vadd.f32 %v7445, %v7533
    %7535 = vmatmul.bf16.gmra.mxu0 %v3671
    %v7536 = vpop.f32.mrf.mxu0
    %v7537 = vadd.f32 %v7448, %v7536
    %v7538 = vpop.f32.mrf.mxu0
    %v7539 = vadd.f32 %v7450, %v7538
    %7540 = vmatmul.bf16.gmra.mxu0 %v3674
    %v7541 = vpop.f32.mrf.mxu0
    %v7542 = vadd.f32 %v7453, %v7541
    %v7543 = vpop.f32.mrf.mxu0
    %v7544 = vadd.f32 %v7455, %v7543
    %7545 = vmatmul.bf16.gmra.mxu0 %v3677
    %v7546 = vpop.f32.mrf.mxu0
    %v7547 = vadd.f32 %v7458, %v7546
    %v7548 = vpop.f32.mrf.mxu0
    %v7549 = vadd.f32 %v7460, %v7548
    %7550 = vmatmul.bf16.gmra.mxu0 %v3680
    %v7551 = vpop.f32.mrf.mxu0
    %v7552 = vadd.f32 %v7463, %v7551
    %v7553 = vpop.f32.mrf.mxu0
    %v7554 = vadd.f32 %v7465, %v7553
    %7555 = vmatmul.bf16.gmra.mxu0 %v3683
    %v7556 = vpop.f32.mrf.mxu0
    %v7557 = vadd.f32 %v7468, %v7556
    %v7558 = vpop.f32.mrf.mxu0
    %v7559 = vadd.f32 %v7470, %v7558
    %7560 = vmatmul.bf16.gmra.mxu0 %v3686
    %v7561 = vpop.f32.mrf.mxu0
    %v7562 = vadd.f32 %v7473, %v7561
    %v7563 = vpop.f32.mrf.mxu0
    %v7564 = vadd.f32 %v7475, %v7563
    %7565 = vmatmul.bf16.gmra.mxu0 %v3689
    %v7566 = vpop.f32.mrf.mxu0
    %v7567 = vadd.f32 %v7478, %v7566
    %v7568 = vpop.f32.mrf.mxu0
    %v7569 = vadd.f32 %v7480, %v7568
    %7570 = vmatmul.bf16.gmra.mxu0 %v3692
    %v7571 = vpop.f32.mrf.mxu0
    %v7572 = vadd.f32 %v7483, %v7571
    %v7573 = vpop.f32.mrf.mxu0
    %v7574 = vadd.f32 %v7485, %v7573
    %7575 = vmatmul.bf16.gmra.mxu0 %v3695
    %v7576 = vpop.f32.mrf.mxu0
    %v7577 = vadd.f32 %v7488, %v7576
    %v7578 = vpop.f32.mrf.mxu0
    %v7579 = vadd.f32 %v7490, %v7578
    %7580 = vmatmul.bf16.gmra.mxu0 %v3698
    %v7581 = vpop.f32.mrf.mxu0
    %v7582 = vadd.f32 %v7493, %v7581
    %v7583 = vpop.f32.mrf.mxu0
    %v7584 = vadd.f32 %v7495, %v7583
    %7585 = vmatmul.bf16.gmra.mxu0 %v5372
    %v7586 = vpop.f32.mrf.mxu0
    %v7587 = vadd.f32 %v7498, %v7586
    %v7588 = vpop.f32.mrf.mxu0
    %v7589 = vadd.f32 %v7500, %v7588
    %7590 = vmatmul.bf16.gmra.mxu0 %v6275
    %v7591 = vpop.f32.mrf.mxu0
    %v7592 = vadd.f32 %v7503, %v7591
    %v7593 = vpop.f32.mrf.mxu0
    %v7594 = vadd.f32 %v7505, %v7593
    %7595 = vmatmul.bf16.gmra.mxu0 %v7178
    %v7596 = vpop.f32.mrf.mxu0
    %v7597 = vadd.f32 %v7508, %v7596
    %v7598 = vpop.f32.mrf.mxu0
    %v7599 = vadd.f32 %v7510, %v7598
    %7600 = vdwg.mxu0
    %7601 = vmatpush.bf16.msra.mxu0 %v7373
    %7602 = vmatpush.bf16.msra.mxu0 %v7371
    %7603 = vmatpush.bf16.msra.mxu0 %v7369
    %7604 = vmatpush.bf16.msra.mxu0 %v7367
    %7605 = vmatpush.bf16.msra.mxu0 %v7365
    %7606 = vmatpush.bf16.msra.mxu0 %v7363
    %7607 = vmatpush.bf16.msra.mxu0 %v7361
    %7608 = vmatpush.bf16.msra.mxu0 %v7359
    %7609 = vmatmul.bf16.gmra.mxu0 %v3663
    %v7610 = vpop.f32.mrf.mxu0
    %v7611 = vadd.f32 %v7522, %v7610
    %v7612 = vpop.f32.mrf.mxu0
    %v7613 = vadd.f32 %v7524, %v7612
    %7614 = vmatmul.bf16.gmra.mxu0 %v3666
    %v7615 = vpop.f32.mrf.mxu0
    %v7616 = vadd.f32 %v7527, %v7615
    %v7617 = vpop.f32.mrf.mxu0
    %v7618 = vadd.f32 %v7529, %v7617
    %7619 = vmatmul.bf16.gmra.mxu0 %v3669
    %v7620 = vpop.f32.mrf.mxu0
    %v7621 = vadd.f32 %v7532, %v7620
    %v7622 = vpop.f32.mrf.mxu0
    %v7623 = vadd.f32 %v7534, %v7622
    %7624 = vmatmul.bf16.gmra.mxu0 %v3672
    %v7625 = vpop.f32.mrf.mxu0
    %v7626 = vadd.f32 %v7537, %v7625
    %v7627 = vpop.f32.mrf.mxu0
    %v7628 = vadd.f32 %v7539, %v7627
    %7629 = vmatmul.bf16.gmra.mxu0 %v3675
    %v7630 = vpop.f32.mrf.mxu0
    %v7631 = vadd.f32 %v7542, %v7630
    %v7632 = vpop.f32.mrf.mxu0
    %v7633 = vadd.f32 %v7544, %v7632
    %7634 = vmatmul.bf16.gmra.mxu0 %v3678
    %v7635 = vpop.f32.mrf.mxu0
    %v7636 = vadd.f32 %v7547, %v7635
    %v7637 = vpop.f32.mrf.mxu0
    %v7638 = vadd.f32 %v7549, %v7637
    %7639 = vmatmul.bf16.gmra.mxu0 %v3681
    %v7640 = vpop.f32.mrf.mxu0
    %v7641 = vadd.f32 %v7552, %v7640
    %v7642 = vpop.f32.mrf.mxu0
    %v7643 = vadd.f32 %v7554, %v7642
    %7644 = vmatmul.bf16.gmra.mxu0 %v3684
    %v7645 = vpop.f32.mrf.mxu0
    %v7646 = vadd.f32 %v7557, %v7645
    %v7647 = vpop.f32.mrf.mxu0
    %v7648 = vadd.f32 %v7559, %v7647
    %7649 = vmatmul.bf16.gmra.mxu0 %v3687
    %v7650 = vpop.f32.mrf.mxu0
    %v7651 = vadd.f32 %v7562, %v7650
    %v7652 = vpop.f32.mrf.mxu0
    %v7653 = vadd.f32 %v7564, %v7652
    %7654 = vmatmul.bf16.gmra.mxu0 %v3690
    %v7655 = vpop.f32.mrf.mxu0
    %v7656 = vadd.f32 %v7567, %v7655
    %v7657 = vpop.f32.mrf.mxu0
    %v7658 = vadd.f32 %v7569, %v7657
    %7659 = vmatmul.bf16.gmra.mxu0 %v3693
    %v7660 = vpop.f32.mrf.mxu0
    %v7661 = vadd.f32 %v7572, %v7660
    %v7662 = vpop.f32.mrf.mxu0
    %v7663 = vadd.f32 %v7574, %v7662
    %7664 = vmatmul.bf16.gmra.mxu0 %v3696
    %v7665 = vpop.f32.mrf.mxu0
    %v7666 = vadd.f32 %v7577, %v7665
    %v7667 = vpop.f32.mrf.mxu0
    %v7668 = vadd.f32 %v7579, %v7667
    %7669 = vmatmul.bf16.gmra.mxu0 %v3699
    %v7670 = vpop.f32.mrf.mxu0
    %v7671 = vadd.f32 %v7582, %v7670
    %v7672 = vpop.f32.mrf.mxu0
    %v7673 = vadd.f32 %v7584, %v7672
    %7674 = vmatmul.bf16.gmra.mxu0 %v5373
    %v7675 = vpop.f32.mrf.mxu0
    %v7676 = vadd.f32 %v7587, %v7675
    %v7677 = vpop.f32.mrf.mxu0
    %v7678 = vadd.f32 %v7589, %v7677
    %7679 = vmatmul.bf16.gmra.mxu0 %v6276
    %v7680 = vpop.f32.mrf.mxu0
    %v7681 = vadd.f32 %v7592, %v7680
    %v7682 = vpop.f32.mrf.mxu0
    %v7683 = vadd.f32 %v7594, %v7682
    %7684 = vmatmul.bf16.gmra.mxu0 %v7179
    %v7685 = vpop.f32.mrf.mxu0
    %v7686 = vadd.f32 %v7597, %v7685
    %v7687 = vpop.f32.mrf.mxu0
    %v7688 = vadd.f32 %v7599, %v7687
    %7689 = vdwg.mxu0
    %7690 = vmatpush.bf16.msra.mxu0 %v7342
    %7691 = vmatpush.bf16.msra.mxu0 %v7340
    %7692 = vmatpush.bf16.msra.mxu0 %v7338
    %7693 = vmatpush.bf16.msra.mxu0 %v7336
    %7694 = vmatpush.bf16.msra.mxu0 %v7334
    %7695 = vmatpush.bf16.msra.mxu0 %v7332
    %7696 = vmatpush.bf16.msra.mxu0 %v7330
    %7697 = vmatpush.bf16.msra.mxu0 %v7328
    %7698 = vmatmul.bf16.gmra.mxu0 %v3661
    %v7699 = vpop.f32.mrf.mxu0
    %v7700 = vadd.f32 0.0, %v7699
    %v7701 = vpop.f32.mrf.mxu0
    %v7702 = vadd.f32 0.0, %v7701
    %7703 = vmatmul.bf16.gmra.mxu0 %v3664
    %v7704 = vpop.f32.mrf.mxu0
    %v7705 = vadd.f32 0.0, %v7704
    %v7706 = vpop.f32.mrf.mxu0
    %v7707 = vadd.f32 0.0, %v7706
    %7708 = vmatmul.bf16.gmra.mxu0 %v3667
    %v7709 = vpop.f32.mrf.mxu0
    %v7710 = vadd.f32 0.0, %v7709
    %v7711 = vpop.f32.mrf.mxu0
    %v7712 = vadd.f32 0.0, %v7711
    %7713 = vmatmul.bf16.gmra.mxu0 %v3670
    %v7714 = vpop.f32.mrf.mxu0
    %v7715 = vadd.f32 0.0, %v7714
    %v7716 = vpop.f32.mrf.mxu0
    %v7717 = vadd.f32 0.0, %v7716
    %7718 = vmatmul.bf16.gmra.mxu0 %v3673
    %v7719 = vpop.f32.mrf.mxu0
    %v7720 = vadd.f32 0.0, %v7719
    %v7721 = vpop.f32.mrf.mxu0
    %v7722 = vadd.f32 0.0, %v7721
    %7723 = vmatmul.bf16.gmra.mxu0 %v3676
    %v7724 = vpop.f32.mrf.mxu0
    %v7725 = vadd.f32 0.0, %v7724
    %v7726 = vpop.f32.mrf.mxu0
    %v7727 = vadd.f32 0.0, %v7726
    %7728 = vmatmul.bf16.gmra.mxu0 %v3679
    %v7729 = vpop.f32.mrf.mxu0
    %v7730 = vadd.f32 0.0, %v7729
    %v7731 = vpop.f32.mrf.mxu0
    %v7732 = vadd.f32 0.0, %v7731
    %7733 = vmatmul.bf16.gmra.mxu0 %v3682
    %v7734 = vpop.f32.mrf.mxu0
    %v7735 = vadd.f32 0.0, %v7734
    %v7736 = vpop.f32.mrf.mxu0
    %v7737 = vadd.f32 0.0, %v7736
    %7738 = vmatmul.bf16.gmra.mxu0 %v3685
    %v7739 = vpop.f32.mrf.mxu0
    %v7740 = vadd.f32 0.0, %v7739
    %v7741 = vpop.f32.mrf.mxu0
    %v7742 = vadd.f32 0.0, %v7741
    %7743 = vmatmul.bf16.gmra.mxu0 %v3688
    %v7744 = vpop.f32.mrf.mxu0
    %v7745 = vadd.f32 0.0, %v7744
    %v7746 = vpop.f32.mrf.mxu0
    %v7747 = vadd.f32 0.0, %v7746
    %7748 = vmatmul.bf16.gmra.mxu0 %v3691
    %v7749 = vpop.f32.mrf.mxu0
    %v7750 = vadd.f32 0.0, %v7749
    %v7751 = vpop.f32.mrf.mxu0
    %v7752 = vadd.f32 0.0, %v7751
    %7753 = vmatmul.bf16.gmra.mxu0 %v3694
    %v7754 = vpop.f32.mrf.mxu0
    %v7755 = vadd.f32 0.0, %v7754
    %v7756 = vpop.f32.mrf.mxu0
    %v7757 = vadd.f32 0.0, %v7756
    %7758 = vmatmul.bf16.gmra.mxu0 %v3697
    %v7759 = vpop.f32.mrf.mxu0
    %v7760 = vadd.f32 0.0, %v7759
    %v7761 = vpop.f32.mrf.mxu0
    %v7762 = vadd.f32 0.0, %v7761
    %7763 = vmatmul.bf16.gmra.mxu0 %v5371
    %v7764 = vpop.f32.mrf.mxu0
    %v7765 = vadd.f32 0.0, %v7764
    %v7766 = vpop.f32.mrf.mxu0
    %v7767 = vadd.f32 0.0, %v7766
    %7768 = vmatmul.bf16.gmra.mxu0 %v6274
    %v7769 = vpop.f32.mrf.mxu0
    %v7770 = vadd.f32 0.0, %v7769
    %v7771 = vpop.f32.mrf.mxu0
    %v7772 = vadd.f32 0.0, %v7771
    %7773 = vmatmul.bf16.gmra.mxu0 %v7177
    %v7774 = vpop.f32.mrf.mxu0
    %v7775 = vadd.f32 0.0, %v7774
    %v7776 = vpop.f32.mrf.mxu0
    %v7777 = vadd.f32 0.0, %v7776
    %7778 = vdwg.mxu0
    %7779 = vmatpush.bf16.msra.mxu0 %v7358
    %7780 = vmatpush.bf16.msra.mxu0 %v7356
    %7781 = vmatpush.bf16.msra.mxu0 %v7354
    %7782 = vmatpush.bf16.msra.mxu0 %v7352
    %7783 = vmatpush.bf16.msra.mxu0 %v7350
    %7784 = vmatpush.bf16.msra.mxu0 %v7348
    %7785 = vmatpush.bf16.msra.mxu0 %v7346
    %7786 = vmatpush.bf16.msra.mxu0 %v7344
    %7787 = vmatmul.bf16.gmra.mxu0 %v3662
    %v7788 = vpop.f32.mrf.mxu0
    %v7789 = vadd.f32 %v7700, %v7788
    %v7790 = vpop.f32.mrf.mxu0
    %v7791 = vadd.f32 %v7702, %v7790
    %7792 = vmatmul.bf16.gmra.mxu0 %v3665
    %v7793 = vpop.f32.mrf.mxu0
    %v7794 = vadd.f32 %v7705, %v7793
    %v7795 = vpop.f32.mrf.mxu0
    %v7796 = vadd.f32 %v7707, %v7795
    %7797 = vmatmul.bf16.gmra.mxu0 %v3668
    %v7798 = vpop.f32.mrf.mxu0
    %v7799 = vadd.f32 %v7710, %v7798
    %v7800 = vpop.f32.mrf.mxu0
    %v7801 = vadd.f32 %v7712, %v7800
    %7802 = vmatmul.bf16.gmra.mxu0 %v3671
    %v7803 = vpop.f32.mrf.mxu0
    %v7804 = vadd.f32 %v7715, %v7803
    %v7805 = vpop.f32.mrf.mxu0
    %v7806 = vadd.f32 %v7717, %v7805
    %7807 = vmatmul.bf16.gmra.mxu0 %v3674
    %v7808 = vpop.f32.mrf.mxu0
    %v7809 = vadd.f32 %v7720, %v7808
    %v7810 = vpop.f32.mrf.mxu0
    %v7811 = vadd.f32 %v7722, %v7810
    %7812 = vmatmul.bf16.gmra.mxu0 %v3677
    %v7813 = vpop.f32.mrf.mxu0
    %v7814 = vadd.f32 %v7725, %v7813
    %v7815 = vpop.f32.mrf.mxu0
    %v7816 = vadd.f32 %v7727, %v7815
    %7817 = vmatmul.bf16.gmra.mxu0 %v3680
    %v7818 = vpop.f32.mrf.mxu0
    %v7819 = vadd.f32 %v7730, %v7818
    %v7820 = vpop.f32.mrf.mxu0
    %v7821 = vadd.f32 %v7732, %v7820
    %7822 = vmatmul.bf16.gmra.mxu0 %v3683
    %v7823 = vpop.f32.mrf.mxu0
    %v7824 = vadd.f32 %v7735, %v7823
    %v7825 = vpop.f32.mrf.mxu0
    %v7826 = vadd.f32 %v7737, %v7825
    %7827 = vmatmul.bf16.gmra.mxu0 %v3686
    %v7828 = vpop.f32.mrf.mxu0
    %v7829 = vadd.f32 %v7740, %v7828
    %v7830 = vpop.f32.mrf.mxu0
    %v7831 = vadd.f32 %v7742, %v7830
    %7832 = vmatmul.bf16.gmra.mxu0 %v3689
    %v7833 = vpop.f32.mrf.mxu0
    %v7834 = vadd.f32 %v7745, %v7833
    %v7835 = vpop.f32.mrf.mxu0
    %v7836 = vadd.f32 %v7747, %v7835
    %7837 = vmatmul.bf16.gmra.mxu0 %v3692
    %v7838 = vpop.f32.mrf.mxu0
    %v7839 = vadd.f32 %v7750, %v7838
    %v7840 = vpop.f32.mrf.mxu0
    %v7841 = vadd.f32 %v7752, %v7840
    %7842 = vmatmul.bf16.gmra.mxu0 %v3695
    %v7843 = vpop.f32.mrf.mxu0
    %v7844 = vadd.f32 %v7755, %v7843
    %v7845 = vpop.f32.mrf.mxu0
    %v7846 = vadd.f32 %v7757, %v7845
    %7847 = vmatmul.bf16.gmra.mxu0 %v3698
    %v7848 = vpop.f32.mrf.mxu0
    %v7849 = vadd.f32 %v7760, %v7848
    %v7850 = vpop.f32.mrf.mxu0
    %v7851 = vadd.f32 %v7762, %v7850
    %7852 = vmatmul.bf16.gmra.mxu0 %v5372
    %v7853 = vpop.f32.mrf.mxu0
    %v7854 = vadd.f32 %v7765, %v7853
    %v7855 = vpop.f32.mrf.mxu0
    %v7856 = vadd.f32 %v7767, %v7855
    %7857 = vmatmul.bf16.gmra.mxu0 %v6275
    %v7858 = vpop.f32.mrf.mxu0
    %v7859 = vadd.f32 %v7770, %v7858
    %v7860 = vpop.f32.mrf.mxu0
    %v7861 = vadd.f32 %v7772, %v7860
    %7862 = vmatmul.bf16.gmra.mxu0 %v7178
    %v7863 = vpop.f32.mrf.mxu0
    %v7864 = vadd.f32 %v7775, %v7863
    %v7865 = vpop.f32.mrf.mxu0
    %v7866 = vadd.f32 %v7777, %v7865
    %7867 = vdwg.mxu0
    %7868 = vmatpush.bf16.msra.mxu0 %v7374
    %7869 = vmatpush.bf16.msra.mxu0 %v7372
    %7870 = vmatpush.bf16.msra.mxu0 %v7370
    %7871 = vmatpush.bf16.msra.mxu0 %v7368
    %7872 = vmatpush.bf16.msra.mxu0 %v7366
    %7873 = vmatpush.bf16.msra.mxu0 %v7364
    %7874 = vmatpush.bf16.msra.mxu0 %v7362
    %7875 = vmatpush.bf16.msra.mxu0 %v7360
    %7876 = vmatmul.bf16.gmra.mxu0 %v3663
    %v7877 = vpop.f32.mrf.mxu0
    %v7878 = vadd.f32 %v7789, %v7877
    %v7879 = vpop.f32.mrf.mxu0
    %v7880 = vadd.f32 %v7791, %v7879
    %7881 = vmatmul.bf16.gmra.mxu0 %v3666
    %v7882 = vpop.f32.mrf.mxu0
    %v7883 = vadd.f32 %v7794, %v7882
    %v7884 = vpop.f32.mrf.mxu0
    %v7885 = vadd.f32 %v7796, %v7884
    %7886 = vmatmul.bf16.gmra.mxu0 %v3669
    %v7887 = vpop.f32.mrf.mxu0
    %v7888 = vadd.f32 %v7799, %v7887
    %v7889 = vpop.f32.mrf.mxu0
    %v7890 = vadd.f32 %v7801, %v7889
    %7891 = vmatmul.bf16.gmra.mxu0 %v3672
    %v7892 = vpop.f32.mrf.mxu0
    %v7893 = vadd.f32 %v7804, %v7892
    %v7894 = vpop.f32.mrf.mxu0
    %v7895 = vadd.f32 %v7806, %v7894
    %7896 = vmatmul.bf16.gmra.mxu0 %v3675
    %v7897 = vpop.f32.mrf.mxu0
    %v7898 = vadd.f32 %v7809, %v7897
    %v7899 = vpop.f32.mrf.mxu0
    %v7900 = vadd.f32 %v7811, %v7899
    %7901 = vmatmul.bf16.gmra.mxu0 %v3678
    %v7902 = vpop.f32.mrf.mxu0
    %v7903 = vadd.f32 %v7814, %v7902
    %v7904 = vpop.f32.mrf.mxu0
    %v7905 = vadd.f32 %v7816, %v7904
    %7906 = vmatmul.bf16.gmra.mxu0 %v3681
    %v7907 = vpop.f32.mrf.mxu0
    %v7908 = vadd.f32 %v7819, %v7907
    %v7909 = vpop.f32.mrf.mxu0
    %v7910 = vadd.f32 %v7821, %v7909
    %7911 = vmatmul.bf16.gmra.mxu0 %v3684
    %v7912 = vpop.f32.mrf.mxu0
    %v7913 = vadd.f32 %v7824, %v7912
    %v7914 = vpop.f32.mrf.mxu0
    %v7915 = vadd.f32 %v7826, %v7914
    %7916 = vmatmul.bf16.gmra.mxu0 %v3687
    %v7917 = vpop.f32.mrf.mxu0
    %v7918 = vadd.f32 %v7829, %v7917
    %v7919 = vpop.f32.mrf.mxu0
    %v7920 = vadd.f32 %v7831, %v7919
    %7921 = vmatmul.bf16.gmra.mxu0 %v3690
    %v7922 = vpop.f32.mrf.mxu0
    %v7923 = vadd.f32 %v7834, %v7922
    %v7924 = vpop.f32.mrf.mxu0
    %v7925 = vadd.f32 %v7836, %v7924
    %7926 = vmatmul.bf16.gmra.mxu0 %v3693
    %v7927 = vpop.f32.mrf.mxu0
    %v7928 = vadd.f32 %v7839, %v7927
    %v7929 = vpop.f32.mrf.mxu0
    %v7930 = vadd.f32 %v7841, %v7929
    %7931 = vmatmul.bf16.gmra.mxu0 %v3696
    %v7932 = vpop.f32.mrf.mxu0
    %v7933 = vadd.f32 %v7844, %v7932
    %v7934 = vpop.f32.mrf.mxu0
    %v7935 = vadd.f32 %v7846, %v7934
    %7936 = vmatmul.bf16.gmra.mxu0 %v3699
    %v7937 = vpop.f32.mrf.mxu0
    %v7938 = vadd.f32 %v7849, %v7937
    %v7939 = vpop.f32.mrf.mxu0
    %v7940 = vadd.f32 %v7851, %v7939
    %7941 = vmatmul.bf16.gmra.mxu0 %v5373
    %v7942 = vpop.f32.mrf.mxu0
    %v7943 = vadd.f32 %v7854, %v7942
    %v7944 = vpop.f32.mrf.mxu0
    %v7945 = vadd.f32 %v7856, %v7944
    %7946 = vmatmul.bf16.gmra.mxu0 %v6276
    %v7947 = vpop.f32.mrf.mxu0
    %v7948 = vadd.f32 %v7859, %v7947
    %v7949 = vpop.f32.mrf.mxu0
    %v7950 = vadd.f32 %v7861, %v7949
    %7951 = vmatmul.bf16.gmra.mxu0 %v7179
    %v7952 = vpop.f32.mrf.mxu0
    %v7953 = vadd.f32 %v7864, %v7952
    %v7954 = vpop.f32.mrf.mxu0
    %v7955 = vadd.f32 %v7866, %v7954
    %7956 = vdwg.mxu0
    %v7957 = vadd.f32 %v7054, %v7611
    %v7958 = vadd.f32 %v7055, %v7878
    %v7959 = vadd.f32 %v7056, %v7613
    %v7960 = vadd.f32 %v7057, %v7880
    %v7961 = vadd.f32 %v7058, %v7616
    %v7962 = vadd.f32 %v7059, %v7883
    %v7963 = vadd.f32 %v7060, %v7618
    %v7964 = vadd.f32 %v7061, %v7885
    %v7965 = vadd.f32 %v7062, %v7621
    %v7966 = vadd.f32 %v7063, %v7888
    %v7967 = vadd.f32 %v7064, %v7623
    %v7968 = vadd.f32 %v7065, %v7890
    %v7969 = vadd.f32 %v7066, %v7626
    %v7970 = vadd.f32 %v7067, %v7893
    %v7971 = vadd.f32 %v7068, %v7628
    %v7972 = vadd.f32 %v7069, %v7895
    %v7973 = vadd.f32 %v7070, %v7631
    %v7974 = vadd.f32 %v7071, %v7898
    %v7975 = vadd.f32 %v7072, %v7633
    %v7976 = vadd.f32 %v7073, %v7900
    %v7977 = vadd.f32 %v7074, %v7636
    %v7978 = vadd.f32 %v7075, %v7903
    %v7979 = vadd.f32 %v7076, %v7638
    %v7980 = vadd.f32 %v7077, %v7905
    %v7981 = vadd.f32 %v7078, %v7641
    %v7982 = vadd.f32 %v7079, %v7908
    %v7983 = vadd.f32 %v7080, %v7643
    %v7984 = vadd.f32 %v7081, %v7910
    %v7985 = vadd.f32 %v7082, %v7646
    %v7986 = vadd.f32 %v7083, %v7913
    %v7987 = vadd.f32 %v7084, %v7648
    %v7988 = vadd.f32 %v7085, %v7915
    %v7989 = vadd.f32 %v7086, %v7651
    %v7990 = vadd.f32 %v7087, %v7918
    %v7991 = vadd.f32 %v7088, %v7653
    %v7992 = vadd.f32 %v7089, %v7920
    %v7993 = vadd.f32 %v7090, %v7656
    %v7994 = vadd.f32 %v7091, %v7923
    %v7995 = vadd.f32 %v7092, %v7658
    %v7996 = vadd.f32 %v7093, %v7925
    %v7997 = vadd.f32 %v7094, %v7661
    %v7998 = vadd.f32 %v7095, %v7928
    %v7999 = vadd.f32 %v7096, %v7663
    %v8000 = vadd.f32 %v7097, %v7930
    %v8001 = vadd.f32 %v7098, %v7666
    %v8002 = vadd.f32 %v7099, %v7933
    %v8003 = vadd.f32 %v7100, %v7668
    %v8004 = vadd.f32 %v7101, %v7935
    %v8005 = vadd.f32 %v7102, %v7671
    %v8006 = vadd.f32 %v7103, %v7938
    %v8007 = vadd.f32 %v7104, %v7673
    %v8008 = vadd.f32 %v7105, %v7940
    %v8009 = vadd.f32 %v7106, %v7676
    %v8010 = vadd.f32 %v7107, %v7943
    %v8011 = vadd.f32 %v7108, %v7678
    %v8012 = vadd.f32 %v7109, %v7945
    %v8013 = vadd.f32 %v7110, %v7681
    %v8014 = vadd.f32 %v7111, %v7948
    %v8015 = vadd.f32 %v7112, %v7683
    %v8016 = vadd.f32 %v7113, %v7950
    %v8017 = vadd.f32 %v7114, %v7686
    %v8018 = vadd.f32 %v7115, %v7953
    %v8019 = vadd.f32 %v7116, %v7688
    %v8020 = vadd.f32 %v7117, %v7955
    %v8021 = vld [vmem:[%s6] sm:$0x3]
    %v8023 = vperm.slane %v8021, 0
    %v8024 = vperm.slane %v8021, 1
    %v8027 = vadd.f32 %v7957, %v8023
    %v8028 = vadd.f32 %v7958, %v8024
    %v8029 = vadd.f32 %v7959, %v8023
    %v8030 = vadd.f32 %v7960, %v8024
    %v8031 = vadd.f32 %v7961, %v8023
    %v8032 = vadd.f32 %v7962, %v8024
    %v8033 = vadd.f32 %v7963, %v8023
    %v8034 = vadd.f32 %v7964, %v8024
    %v8035 = vadd.f32 %v7965, %v8023
    %v8036 = vadd.f32 %v7966, %v8024
    %v8037 = vadd.f32 %v7967, %v8023
    %v8038 = vadd.f32 %v7968, %v8024
    %v8039 = vadd.f32 %v7969, %v8023
    %v8040 = vadd.f32 %v7970, %v8024
    %v8041 = vadd.f32 %v7971, %v8023
    %v8042 = vadd.f32 %v7972, %v8024
    %v8043 = vadd.f32 %v7973, %v8023
    %v8044 = vadd.f32 %v7974, %v8024
    %v8045 = vadd.f32 %v7975, %v8023
    %v8046 = vadd.f32 %v7976, %v8024
    %v8047 = vadd.f32 %v7977, %v8023
    %v8048 = vadd.f32 %v7978, %v8024
    %v8049 = vadd.f32 %v7979, %v8023
    %v8050 = vadd.f32 %v7980, %v8024
    %v8051 = vadd.f32 %v7981, %v8023
    %v8052 = vadd.f32 %v7982, %v8024
    %v8053 = vadd.f32 %v7983, %v8023
    %v8054 = vadd.f32 %v7984, %v8024
    %v8055 = vadd.f32 %v7985, %v8023
    %v8056 = vadd.f32 %v7986, %v8024
    %v8057 = vadd.f32 %v7987, %v8023
    %v8058 = vadd.f32 %v7988, %v8024
    %v8059 = vadd.f32 %v7989, %v8023
    %v8060 = vadd.f32 %v7990, %v8024
    %v8061 = vadd.f32 %v7991, %v8023
    %v8062 = vadd.f32 %v7992, %v8024
    %v8063 = vadd.f32 %v7993, %v8023
    %v8064 = vadd.f32 %v7994, %v8024
    %v8065 = vadd.f32 %v7995, %v8023
    %v8066 = vadd.f32 %v7996, %v8024
    %v8067 = vadd.f32 %v7997, %v8023
    %v8068 = vadd.f32 %v7998, %v8024
    %v8069 = vadd.f32 %v7999, %v8023
    %v8070 = vadd.f32 %v8000, %v8024
    %v8071 = vadd.f32 %v8001, %v8023
    %v8072 = vadd.f32 %v8002, %v8024
    %v8073 = vadd.f32 %v8003, %v8023
    %v8074 = vadd.f32 %v8004, %v8024
    %v8075 = vadd.f32 %v8005, %v8023
    %v8076 = vadd.f32 %v8006, %v8024
    %v8077 = vadd.f32 %v8007, %v8023
    %v8078 = vadd.f32 %v8008, %v8024
    %v8079 = vadd.f32 %v8009, %v8023
    %v8080 = vadd.f32 %v8010, %v8024
    %v8081 = vadd.f32 %v8011, %v8023
    %v8082 = vadd.f32 %v8012, %v8024
    %v8083 = vadd.f32 %v8013, %v8023
    %v8084 = vadd.f32 %v8014, %v8024
    %v8085 = vadd.f32 %v8015, %v8023
    %v8086 = vadd.f32 %v8016, %v8024
    %v8087 = vadd.f32 %v8017, %v8023
    %v8088 = vadd.f32 %v8018, %v8024
    %v8089 = vadd.f32 %v8019, %v8023
    %v8090 = vadd.f32 %v8020, %v8024
    %vm8091 = vcmp.ge.f32.partialorder %v8027, 0.0
    %vm8092 = vcmp.ge.f32.partialorder %v8028, 0.0
    %vm8093 = vcmp.ge.f32.partialorder %v8029, 0.0
    %vm8094 = vcmp.ge.f32.partialorder %v8030, 0.0
    %vm8095 = vcmp.ge.f32.partialorder %v8031, 0.0
    %vm8096 = vcmp.ge.f32.partialorder %v8032, 0.0
    %vm8097 = vcmp.ge.f32.partialorder %v8033, 0.0
    %vm8098 = vcmp.ge.f32.partialorder %v8034, 0.0
    %vm8099 = vcmp.ge.f32.partialorder %v8035, 0.0
    %vm8100 = vcmp.ge.f32.partialorder %v8036, 0.0
    %vm8101 = vcmp.ge.f32.partialorder %v8037, 0.0
    %vm8102 = vcmp.ge.f32.partialorder %v8038, 0.0
    %vm8103 = vcmp.ge.f32.partialorder %v8039, 0.0
    %vm8104 = vcmp.ge.f32.partialorder %v8040, 0.0
    %vm8105 = vcmp.ge.f32.partialorder %v8041, 0.0
    %vm8106 = vcmp.ge.f32.partialorder %v8042, 0.0
    %vm8107 = vcmp.ge.f32.partialorder %v8043, 0.0
    %vm8108 = vcmp.ge.f32.partialorder %v8044, 0.0
    %vm8109 = vcmp.ge.f32.partialorder %v8045, 0.0
    %vm8110 = vcmp.ge.f32.partialorder %v8046, 0.0
    %vm8111 = vcmp.ge.f32.partialorder %v8047, 0.0
    %vm8112 = vcmp.ge.f32.partialorder %v8048, 0.0
    %vm8113 = vcmp.ge.f32.partialorder %v8049, 0.0
    %vm8114 = vcmp.ge.f32.partialorder %v8050, 0.0
    %vm8115 = vcmp.ge.f32.partialorder %v8051, 0.0
    %vm8116 = vcmp.ge.f32.partialorder %v8052, 0.0
    %vm8117 = vcmp.ge.f32.partialorder %v8053, 0.0
    %vm8118 = vcmp.ge.f32.partialorder %v8054, 0.0
    %vm8119 = vcmp.ge.f32.partialorder %v8055, 0.0
    %vm8120 = vcmp.ge.f32.partialorder %v8056, 0.0
    %vm8121 = vcmp.ge.f32.partialorder %v8057, 0.0
    %vm8122 = vcmp.ge.f32.partialorder %v8058, 0.0
    %vm8123 = vcmp.ge.f32.partialorder %v8059, 0.0
    %vm8124 = vcmp.ge.f32.partialorder %v8060, 0.0
    %vm8125 = vcmp.ge.f32.partialorder %v8061, 0.0
    %vm8126 = vcmp.ge.f32.partialorder %v8062, 0.0
    %vm8127 = vcmp.ge.f32.partialorder %v8063, 0.0
    %vm8128 = vcmp.ge.f32.partialorder %v8064, 0.0
    %vm8129 = vcmp.ge.f32.partialorder %v8065, 0.0
    %vm8130 = vcmp.ge.f32.partialorder %v8066, 0.0
    %vm8131 = vcmp.ge.f32.partialorder %v8067, 0.0
    %vm8132 = vcmp.ge.f32.partialorder %v8068, 0.0
    %vm8133 = vcmp.ge.f32.partialorder %v8069, 0.0
    %vm8134 = vcmp.ge.f32.partialorder %v8070, 0.0
    %vm8135 = vcmp.ge.f32.partialorder %v8071, 0.0
    %vm8136 = vcmp.ge.f32.partialorder %v8072, 0.0
    %vm8137 = vcmp.ge.f32.partialorder %v8073, 0.0
    %vm8138 = vcmp.ge.f32.partialorder %v8074, 0.0
    %vm8139 = vcmp.ge.f32.partialorder %v8075, 0.0
    %vm8140 = vcmp.ge.f32.partialorder %v8076, 0.0
    %vm8141 = vcmp.ge.f32.partialorder %v8077, 0.0
    %vm8142 = vcmp.ge.f32.partialorder %v8078, 0.0
    %vm8143 = vcmp.ge.f32.partialorder %v8079, 0.0
    %vm8144 = vcmp.ge.f32.partialorder %v8080, 0.0
    %vm8145 = vcmp.ge.f32.partialorder %v8081, 0.0
    %vm8146 = vcmp.ge.f32.partialorder %v8082, 0.0
    %vm8147 = vcmp.ge.f32.partialorder %v8083, 0.0
    %vm8148 = vcmp.ge.f32.partialorder %v8084, 0.0
    %vm8149 = vcmp.ge.f32.partialorder %v8085, 0.0
    %vm8150 = vcmp.ge.f32.partialorder %v8086, 0.0
    %vm8151 = vcmp.ge.f32.partialorder %v8087, 0.0
    %vm8152 = vcmp.ge.f32.partialorder %v8088, 0.0
    %vm8153 = vcmp.ge.f32.partialorder %v8089, 0.0
    %vm8154 = vcmp.ge.f32.partialorder %v8090, 0.0
    %v8155 = vmul.f32 %v8027, 0.3
    %v8156 = vmul.f32 %v8028, 0.3
    %v8157 = vmul.f32 %v8029, 0.3
    %v8158 = vmul.f32 %v8030, 0.3
    %v8159 = vmul.f32 %v8031, 0.3
    %v8160 = vmul.f32 %v8032, 0.3
    %v8161 = vmul.f32 %v8033, 0.3
    %v8162 = vmul.f32 %v8034, 0.3
    %v8163 = vmul.f32 %v8035, 0.3
    %v8164 = vmul.f32 %v8036, 0.3
    %v8165 = vmul.f32 %v8037, 0.3
    %v8166 = vmul.f32 %v8038, 0.3
    %v8167 = vmul.f32 %v8039, 0.3
    %v8168 = vmul.f32 %v8040, 0.3
    %v8169 = vmul.f32 %v8041, 0.3
    %v8170 = vmul.f32 %v8042, 0.3
    %v8171 = vmul.f32 %v8043, 0.3
    %v8172 = vmul.f32 %v8044, 0.3
    %v8173 = vmul.f32 %v8045, 0.3
    %v8174 = vmul.f32 %v8046, 0.3
    %v8175 = vmul.f32 %v8047, 0.3
    %v8176 = vmul.f32 %v8048, 0.3
    %v8177 = vmul.f32 %v8049, 0.3
    %v8178 = vmul.f32 %v8050, 0.3
    %v8179 = vmul.f32 %v8051, 0.3
    %v8180 = vmul.f32 %v8052, 0.3
    %v8181 = vmul.f32 %v8053, 0.3
    %v8182 = vmul.f32 %v8054, 0.3
    %v8183 = vmul.f32 %v8055, 0.3
    %v8184 = vmul.f32 %v8056, 0.3
    %v8185 = vmul.f32 %v8057, 0.3
    %v8186 = vmul.f32 %v8058, 0.3
    %v8187 = vmul.f32 %v8059, 0.3
    %v8188 = vmul.f32 %v8060, 0.3
    %v8189 = vmul.f32 %v8061, 0.3
    %v8190 = vmul.f32 %v8062, 0.3
    %v8191 = vmul.f32 %v8063, 0.3
    %v8192 = vmul.f32 %v8064, 0.3
    %v8193 = vmul.f32 %v8065, 0.3
    %v8194 = vmul.f32 %v8066, 0.3
    %v8195 = vmul.f32 %v8067, 0.3
    %v8196 = vmul.f32 %v8068, 0.3
    %v8197 = vmul.f32 %v8069, 0.3
    %v8198 = vmul.f32 %v8070, 0.3
    %v8199 = vmul.f32 %v8071, 0.3
    %v8200 = vmul.f32 %v8072, 0.3
    %v8201 = vmul.f32 %v8073, 0.3
    %v8202 = vmul.f32 %v8074, 0.3
    %v8203 = vmul.f32 %v8075, 0.3
    %v8204 = vmul.f32 %v8076, 0.3
    %v8205 = vmul.f32 %v8077, 0.3
    %v8206 = vmul.f32 %v8078, 0.3
    %v8207 = vmul.f32 %v8079, 0.3
    %v8208 = vmul.f32 %v8080, 0.3
    %v8209 = vmul.f32 %v8081, 0.3
    %v8210 = vmul.f32 %v8082, 0.3
    %v8211 = vmul.f32 %v8083, 0.3
    %v8212 = vmul.f32 %v8084, 0.3
    %v8213 = vmul.f32 %v8085, 0.3
    %v8214 = vmul.f32 %v8086, 0.3
    %v8215 = vmul.f32 %v8087, 0.3
    %v8216 = vmul.f32 %v8088, 0.3
    %v8217 = vmul.f32 %v8089, 0.3
    %v8218 = vmul.f32 %v8090, 0.3
    %v8219 = vsel %vm8091, %v8027, %v8155
    %v8220 = vsel %vm8092, %v8028, %v8156
    %v8221 = vsel %vm8093, %v8029, %v8157
    %v8222 = vsel %vm8094, %v8030, %v8158
    %v8223 = vsel %vm8095, %v8031, %v8159
    %v8224 = vsel %vm8096, %v8032, %v8160
    %v8225 = vsel %vm8097, %v8033, %v8161
    %v8226 = vsel %vm8098, %v8034, %v8162
    %v8227 = vsel %vm8099, %v8035, %v8163
    %v8228 = vsel %vm8100, %v8036, %v8164
    %v8229 = vsel %vm8101, %v8037, %v8165
    %v8230 = vsel %vm8102, %v8038, %v8166
    %v8231 = vsel %vm8103, %v8039, %v8167
    %v8232 = vsel %vm8104, %v8040, %v8168
    %v8233 = vsel %vm8105, %v8041, %v8169
    %v8234 = vsel %vm8106, %v8042, %v8170
    %v8235 = vsel %vm8107, %v8043, %v8171
    %v8236 = vsel %vm8108, %v8044, %v8172
    %v8237 = vsel %vm8109, %v8045, %v8173
    %v8238 = vsel %vm8110, %v8046, %v8174
    %v8239 = vsel %vm8111, %v8047, %v8175
    %v8240 = vsel %vm8112, %v8048, %v8176
    %v8241 = vsel %vm8113, %v8049, %v8177
    %v8242 = vsel %vm8114, %v8050, %v8178
    %v8243 = vsel %vm8115, %v8051, %v8179
    %v8244 = vsel %vm8116, %v8052, %v8180
    %v8245 = vsel %vm8117, %v8053, %v8181
    %v8246 = vsel %vm8118, %v8054, %v8182
    %v8247 = vsel %vm8119, %v8055, %v8183
    %v8248 = vsel %vm8120, %v8056, %v8184
    %v8249 = vsel %vm8121, %v8057, %v8185
    %v8250 = vsel %vm8122, %v8058, %v8186
    %v8251 = vsel %vm8123, %v8059, %v8187
    %v8252 = vsel %vm8124, %v8060, %v8188
    %v8253 = vsel %vm8125, %v8061, %v8189
    %v8254 = vsel %vm8126, %v8062, %v8190
    %v8255 = vsel %vm8127, %v8063, %v8191
    %v8256 = vsel %vm8128, %v8064, %v8192
    %v8257 = vsel %vm8129, %v8065, %v8193
    %v8258 = vsel %vm8130, %v8066, %v8194
    %v8259 = vsel %vm8131, %v8067, %v8195
    %v8260 = vsel %vm8132, %v8068, %v8196
    %v8261 = vsel %vm8133, %v8069, %v8197
    %v8262 = vsel %vm8134, %v8070, %v8198
    %v8263 = vsel %vm8135, %v8071, %v8199
    %v8264 = vsel %vm8136, %v8072, %v8200
    %v8265 = vsel %vm8137, %v8073, %v8201
    %v8266 = vsel %vm8138, %v8074, %v8202
    %v8267 = vsel %vm8139, %v8075, %v8203
    %v8268 = vsel %vm8140, %v8076, %v8204
    %v8269 = vsel %vm8141, %v8077, %v8205
    %v8270 = vsel %vm8142, %v8078, %v8206
    %v8271 = vsel %vm8143, %v8079, %v8207
    %v8272 = vsel %vm8144, %v8080, %v8208
    %v8273 = vsel %vm8145, %v8081, %v8209
    %v8274 = vsel %vm8146, %v8082, %v8210
    %v8275 = vsel %vm8147, %v8083, %v8211
    %v8276 = vsel %vm8148, %v8084, %v8212
    %v8277 = vsel %vm8149, %v8085, %v8213
    %v8278 = vsel %vm8150, %v8086, %v8214
    %v8279 = vsel %vm8151, %v8087, %v8215
    %v8280 = vsel %vm8152, %v8088, %v8216
    %v8281 = vsel %vm8153, %v8089, %v8217
    %v8282 = vsel %vm8154, %v8090, %v8218
    %v8283 = vpack.c.bf16 %v8220, %v8219
    %v8284 = vpack.c.bf16 %v8222, %v8221
    %v8285 = vpack.c.bf16 %v8224, %v8223
    %v8286 = vpack.c.bf16 %v8226, %v8225
    %v8287 = vpack.c.bf16 %v8228, %v8227
    %v8288 = vpack.c.bf16 %v8230, %v8229
    %v8289 = vpack.c.bf16 %v8232, %v8231
    %v8290 = vpack.c.bf16 %v8234, %v8233
    %v8291 = vpack.c.bf16 %v8236, %v8235
    %v8292 = vpack.c.bf16 %v8238, %v8237
    %v8293 = vpack.c.bf16 %v8240, %v8239
    %v8294 = vpack.c.bf16 %v8242, %v8241
    %v8295 = vpack.c.bf16 %v8244, %v8243
    %v8296 = vpack.c.bf16 %v8246, %v8245
    %v8297 = vpack.c.bf16 %v8248, %v8247
    %v8298 = vpack.c.bf16 %v8250, %v8249
    %v8299 = vpack.c.bf16 %v8252, %v8251
    %v8300 = vpack.c.bf16 %v8254, %v8253
    %v8301 = vpack.c.bf16 %v8256, %v8255
    %v8302 = vpack.c.bf16 %v8258, %v8257
    %v8303 = vpack.c.bf16 %v8260, %v8259
    %v8304 = vpack.c.bf16 %v8262, %v8261
    %v8305 = vpack.c.bf16 %v8264, %v8263
    %v8306 = vpack.c.bf16 %v8266, %v8265
    %v8307 = vpack.c.bf16 %v8268, %v8267
    %v8308 = vpack.c.bf16 %v8270, %v8269
    %v8309 = vpack.c.bf16 %v8272, %v8271
    %v8310 = vpack.c.bf16 %v8274, %v8273
    %v8311 = vpack.c.bf16 %v8276, %v8275
    %v8312 = vpack.c.bf16 %v8278, %v8277
    %v8313 = vpack.c.bf16 %v8280, %v8279
    %v8314 = vpack.c.bf16 %v8282, %v8281
    %v8315 = vld [vmem:[#allocation6] sm:$0xff]
    %v8316 = vld [vmem:[#allocation6 + $0x8] sm:$0xff]
    %v8317 = vld [vmem:[#allocation6 + $0x10] sm:$0xff]
    %v8318 = vld [vmem:[#allocation6 + $0x18] sm:$0xff]
    %v8319 = vld [vmem:[#allocation6 + $0x20] sm:$0xff]
    %v8320 = vld [vmem:[#allocation6 + $0x28] sm:$0xff]
    %v8321 = vld [vmem:[#allocation6 + $0x30] sm:$0xff]
    %v8322 = vld [vmem:[#allocation6 + $0x38] sm:$0xff]
    %v8323 = vld [vmem:[#allocation6 + $0x40] sm:$0xff]
    %v8324 = vld [vmem:[#allocation6 + $0x48] sm:$0xff]
    %v8325 = vld [vmem:[#allocation6 + $0x50] sm:$0xff]
    %v8326 = vld [vmem:[#allocation6 + $0x58] sm:$0xff]
    %v8327 = vld [vmem:[#allocation6 + $0x60] sm:$0xff]
    %v8328 = vld [vmem:[#allocation6 + $0x68] sm:$0xff]
    %v8329 = vld [vmem:[#allocation6 + $0x70] sm:$0xff]
    %v8330 = vld [vmem:[#allocation6 + $0x78] sm:$0xff]
    %v8331 = vld [vmem:[#allocation6 + $0x80] sm:$0xff]
    %v8332 = vld [vmem:[#allocation6 + $0x88] sm:$0xff]
    %v8333 = vld [vmem:[#allocation6 + $0x90] sm:$0xff]
    %v8334 = vld [vmem:[#allocation6 + $0x98] sm:$0xff]
    %v8335 = vld [vmem:[#allocation6 + $0xa0] sm:$0xff]
    %v8336 = vld [vmem:[#allocation6 + $0xa8] sm:$0xff]
    %v8337 = vld [vmem:[#allocation6 + $0xb0] sm:$0xff]
    %v8338 = vld [vmem:[#allocation6 + $0xb8] sm:$0xff]
    %v8339 = vld [vmem:[#allocation6 + $0xc0] sm:$0xff]
    %v8340 = vld [vmem:[#allocation6 + $0xc8] sm:$0xff]
    %v8341 = vld [vmem:[#allocation6 + $0xd0] sm:$0xff]
    %v8342 = vld [vmem:[#allocation6 + $0xd8] sm:$0xff]
    %v8343 = vld [vmem:[#allocation6 + $0xe0] sm:$0xff]
    %v8344 = vld [vmem:[#allocation6 + $0xe8] sm:$0xff]
    %v8345 = vld [vmem:[#allocation6 + $0xf0] sm:$0xff]
    %v8346 = vld [vmem:[#allocation6 + $0xf8] sm:$0xff]
    %s8347 = scalar_lea.vmem [#allocation6], 256
    %v8348 = vld [vmem:[%s8347] sm:$0xff]
    %v8349 = vld [vmem:[%s8347 + $0x8] sm:$0xff]
    %v8350 = vld [vmem:[%s8347 + $0x10] sm:$0xff]
    %v8351 = vld [vmem:[%s8347 + $0x18] sm:$0xff]
    %v8352 = vld [vmem:[%s8347 + $0x20] sm:$0xff]
    %v8353 = vld [vmem:[%s8347 + $0x28] sm:$0xff]
    %v8354 = vld [vmem:[%s8347 + $0x30] sm:$0xff]
    %v8355 = vld [vmem:[%s8347 + $0x38] sm:$0xff]
    %v8356 = vld [vmem:[%s8347 + $0x40] sm:$0xff]
    %v8357 = vld [vmem:[%s8347 + $0x48] sm:$0xff]
    %v8358 = vld [vmem:[%s8347 + $0x50] sm:$0xff]
    %v8359 = vld [vmem:[%s8347 + $0x58] sm:$0xff]
    %v8360 = vld [vmem:[%s8347 + $0x60] sm:$0xff]
    %v8361 = vld [vmem:[%s8347 + $0x68] sm:$0xff]
    %v8362 = vld [vmem:[%s8347 + $0x70] sm:$0xff]
    %v8363 = vld [vmem:[%s8347 + $0x78] sm:$0xff]
    %v8364 = vld [vmem:[%s8347 + $0x80] sm:$0xff]
    %v8365 = vld [vmem:[%s8347 + $0x88] sm:$0xff]
    %v8366 = vld [vmem:[%s8347 + $0x90] sm:$0xff]
    %v8367 = vld [vmem:[%s8347 + $0x98] sm:$0xff]
    %v8368 = vld [vmem:[%s8347 + $0xa0] sm:$0xff]
    %v8369 = vld [vmem:[%s8347 + $0xa8] sm:$0xff]
    %v8370 = vld [vmem:[%s8347 + $0xb0] sm:$0xff]
    %v8371 = vld [vmem:[%s8347 + $0xb8] sm:$0xff]
    %v8372 = vld [vmem:[%s8347 + $0xc0] sm:$0xff]
    %v8373 = vld [vmem:[%s8347 + $0xc8] sm:$0xff]
    %v8374 = vld [vmem:[%s8347 + $0xd0] sm:$0xff]
    %v8375 = vld [vmem:[%s8347 + $0xd8] sm:$0xff]
    %v8376 = vld [vmem:[%s8347 + $0xe0] sm:$0xff]
    %v8377 = vld [vmem:[%s8347 + $0xe8] sm:$0xff]
    %v8378 = vld [vmem:[%s8347 + $0xf0] sm:$0xff]
    %v8379 = vld [vmem:[%s8347 + $0xf8] sm:$0xff]
    %v8404 = vunpack.c.l.b16 %v8285
    %v8405 = vunpack.c.h.b16 %v8285
    %v8406 = vunpack.c.l.b16 %v8286
    %v8407 = vunpack.c.h.b16 %v8286
    %v8408 = vunpack.c.l.b16 %v8287
    %v8409 = vunpack.c.h.b16 %v8287
    %v8410 = vunpack.c.l.b16 %v8288
    %v8411 = vunpack.c.h.b16 %v8288
    %v8412 = vunpack.c.l.b16 %v8289
    %v8413 = vunpack.c.h.b16 %v8289
    %v8414 = vunpack.c.l.b16 %v8290
    %v8415 = vunpack.c.h.b16 %v8290
    %v8416 = vunpack.c.l.b16 %v8291
    %v8417 = vunpack.c.h.b16 %v8291
    %v8418 = vunpack.c.l.b16 %v8292
    %v8419 = vunpack.c.h.b16 %v8292
    %v8420 = vunpack.c.l.b16 %v8293
    %v8421 = vunpack.c.h.b16 %v8293
    %v8422 = vunpack.c.l.b16 %v8294
    %v8423 = vunpack.c.h.b16 %v8294
    %v8424 = vunpack.c.l.b16 %v8295
    %v8425 = vunpack.c.h.b16 %v8295
    %v8426 = vunpack.c.l.b16 %v8296
    %v8427 = vunpack.c.h.b16 %v8296
    %v8428 = vunpack.c.l.b16 %v8297
    %v8429 = vunpack.c.h.b16 %v8297
    %v8430 = vunpack.c.l.b16 %v8298
    %v8431 = vunpack.c.h.b16 %v8298
    %v8432 = vunpack.c.l.b16 %v8299
    %v8433 = vunpack.c.h.b16 %v8299
    %v8434 = vunpack.c.l.b16 %v8300
    %v8435 = vunpack.c.h.b16 %v8300
    %v8436 = vunpack.c.l.b16 %v8301
    %v8437 = vunpack.c.h.b16 %v8301
    %v8438 = vunpack.c.l.b16 %v8302
    %v8439 = vunpack.c.h.b16 %v8302
    %v8440 = vunpack.c.l.b16 %v8303
    %v8441 = vunpack.c.h.b16 %v8303
    %v8442 = vunpack.c.l.b16 %v8304
    %v8443 = vunpack.c.h.b16 %v8304
    %v8444 = vunpack.c.l.b16 %v8305
    %v8445 = vunpack.c.h.b16 %v8305
    %v8446 = vunpack.c.l.b16 %v8306
    %v8447 = vunpack.c.h.b16 %v8306
    %v8448 = vunpack.c.l.b16 %v8307
    %v8449 = vunpack.c.h.b16 %v8307
    %v8450 = vunpack.c.l.b16 %v8308
    %v8451 = vunpack.c.h.b16 %v8308
    %v8452 = vpack.c.b16 %v8406, %v8404
    %v8453 = vpack.c.b16 %v8407, %v8405
    %v8454 = vpack.c.b16 %v8410, %v8408
    %v8455 = vpack.c.b16 %v8411, %v8409
    %v8456 = vpack.c.b16 %v8414, %v8412
    %v8457 = vpack.c.b16 %v8415, %v8413
    %v8458 = vpack.c.b16 %v8418, %v8416
    %v8459 = vpack.c.b16 %v8419, %v8417
    %v8460 = vpack.c.b16 %v8422, %v8420
    %v8461 = vpack.c.b16 %v8423, %v8421
    %v8462 = vpack.c.b16 %v8426, %v8424
    %v8463 = vpack.c.b16 %v8427, %v8425
    %v8464 = vpack.c.b16 %v8430, %v8428
    %v8465 = vpack.c.b16 %v8431, %v8429
    %v8466 = vpack.c.b16 %v8434, %v8432
    %v8467 = vpack.c.b16 %v8435, %v8433
    %v8468 = vpack.c.b16 %v8438, %v8436
    %v8469 = vpack.c.b16 %v8439, %v8437
    %v8470 = vpack.c.b16 %v8442, %v8440
    %v8471 = vpack.c.b16 %v8443, %v8441
    %v8472 = vpack.c.b16 %v8446, %v8444
    %v8473 = vpack.c.b16 %v8447, %v8445
    %v8474 = vpack.c.b16 %v8450, %v8448
    %v8475 = vpack.c.b16 %v8451, %v8449
    %v8532 = vunpack.c.l.b16 %v8348
    %v8533 = vunpack.c.h.b16 %v8348
    %v8534 = vunpack.c.l.b16 %v8349
    %v8535 = vunpack.c.h.b16 %v8349
    %v8536 = vunpack.c.l.b16 %v8350
    %v8537 = vunpack.c.h.b16 %v8350
    %v8538 = vunpack.c.l.b16 %v8351
    %v8539 = vunpack.c.h.b16 %v8351
    %v8540 = vunpack.c.l.b16 %v8352
    %v8541 = vunpack.c.h.b16 %v8352
    %v8542 = vunpack.c.l.b16 %v8353
    %v8543 = vunpack.c.h.b16 %v8353
    %v8544 = vunpack.c.l.b16 %v8354
    %v8545 = vunpack.c.h.b16 %v8354
    %v8546 = vunpack.c.l.b16 %v8355
    %v8547 = vunpack.c.h.b16 %v8355
    %v8548 = vunpack.c.l.b16 %v8356
    %v8549 = vunpack.c.h.b16 %v8356
    %v8550 = vunpack.c.l.b16 %v8357
    %v8551 = vunpack.c.h.b16 %v8357
    %v8552 = vunpack.c.l.b16 %v8358
    %v8553 = vunpack.c.h.b16 %v8358
    %v8554 = vunpack.c.l.b16 %v8359
    %v8555 = vunpack.c.h.b16 %v8359
    %v8556 = vunpack.c.l.b16 %v8360
    %v8557 = vunpack.c.h.b16 %v8360
    %v8558 = vunpack.c.l.b16 %v8361
    %v8559 = vunpack.c.h.b16 %v8361
    %v8560 = vunpack.c.l.b16 %v8362
    %v8561 = vunpack.c.h.b16 %v8362
    %v8562 = vunpack.c.l.b16 %v8363
    %v8563 = vunpack.c.h.b16 %v8363
    %v8564 = vunpack.c.l.b16 %v8364
    %v8565 = vunpack.c.h.b16 %v8364
    %v8566 = vunpack.c.l.b16 %v8365
    %v8567 = vunpack.c.h.b16 %v8365
    %v8568 = vunpack.c.l.b16 %v8366
    %v8569 = vunpack.c.h.b16 %v8366
    %v8570 = vunpack.c.l.b16 %v8367
    %v8571 = vunpack.c.h.b16 %v8367
    %v8572 = vunpack.c.l.b16 %v8368
    %v8573 = vunpack.c.h.b16 %v8368
    %v8574 = vunpack.c.l.b16 %v8369
    %v8575 = vunpack.c.h.b16 %v8369
    %v8576 = vunpack.c.l.b16 %v8370
    %v8577 = vunpack.c.h.b16 %v8370
    %v8578 = vunpack.c.l.b16 %v8371
    %v8579 = vunpack.c.h.b16 %v8371
    %v8580 = vunpack.c.l.b16 %v8372
    %v8581 = vunpack.c.h.b16 %v8372
    %v8582 = vunpack.c.l.b16 %v8373
    %v8583 = vunpack.c.h.b16 %v8373
    %v8584 = vunpack.c.l.b16 %v8374
    %v8585 = vunpack.c.h.b16 %v8374
    %v8586 = vunpack.c.l.b16 %v8375
    %v8587 = vunpack.c.h.b16 %v8375
    %v8588 = vunpack.c.l.b16 %v8376
    %v8589 = vunpack.c.h.b16 %v8376
    %v8590 = vunpack.c.l.b16 %v8377
    %v8591 = vunpack.c.h.b16 %v8377
    %v8592 = vunpack.c.l.b16 %v8378
    %v8593 = vunpack.c.h.b16 %v8378
    %v8594 = vunpack.c.l.b16 %v8379
    %v8595 = vunpack.c.h.b16 %v8379
    %v8596 = vpack.c.b16 %v8534, %v8532
    %v8597 = vpack.c.b16 %v8535, %v8533
    %v8598 = vpack.c.b16 %v8538, %v8536
    %v8599 = vpack.c.b16 %v8539, %v8537
    %v8600 = vpack.c.b16 %v8542, %v8540
    %v8601 = vpack.c.b16 %v8543, %v8541
    %v8602 = vpack.c.b16 %v8546, %v8544
    %v8603 = vpack.c.b16 %v8547, %v8545
    %v8604 = vpack.c.b16 %v8550, %v8548
    %v8605 = vpack.c.b16 %v8551, %v8549
    %v8606 = vpack.c.b16 %v8554, %v8552
    %v8607 = vpack.c.b16 %v8555, %v8553
    %v8608 = vpack.c.b16 %v8558, %v8556
    %v8609 = vpack.c.b16 %v8559, %v8557
    %v8610 = vpack.c.b16 %v8562, %v8560
    %v8611 = vpack.c.b16 %v8563, %v8561
    %v8612 = vpack.c.b16 %v8566, %v8564
    %v8613 = vpack.c.b16 %v8567, %v8565
    %v8614 = vpack.c.b16 %v8570, %v8568
    %v8615 = vpack.c.b16 %v8571, %v8569
    %v8616 = vpack.c.b16 %v8574, %v8572
    %v8617 = vpack.c.b16 %v8575, %v8573
    %v8618 = vpack.c.b16 %v8578, %v8576
    %v8619 = vpack.c.b16 %v8579, %v8577
    %v8620 = vpack.c.b16 %v8582, %v8580
    %v8621 = vpack.c.b16 %v8583, %v8581
    %v8622 = vpack.c.b16 %v8586, %v8584
    %v8623 = vpack.c.b16 %v8587, %v8585
    %v8624 = vpack.c.b16 %v8590, %v8588
    %v8625 = vpack.c.b16 %v8591, %v8589
    %v8626 = vpack.c.b16 %v8594, %v8592
    %v8627 = vpack.c.b16 %v8595, %v8593
    %8660 = vmatpush.bf16.msra.mxu0 %v8610
    %8661 = vmatpush.bf16.msra.mxu0 %v8608
    %8662 = vmatpush.bf16.msra.mxu0 %v8606
    %8663 = vmatpush.bf16.msra.mxu0 %v8604
    %8664 = vmatpush.bf16.msra.mxu0 %v8602
    %8665 = vmatpush.bf16.msra.mxu0 %v8600
    %8666 = vmatpush.bf16.msra.mxu0 %v8598
    %8667 = vmatpush.bf16.msra.mxu0 %v8596
    %8668 = vmatmul.bf16.gmra.mxu0 %v8452
    %v8669 = vpop.f32.mrf.mxu0
    %v8670 = vadd.f32 0.0, %v8669
    %v8671 = vpop.f32.mrf.mxu0
    %v8672 = vadd.f32 0.0, %v8671
    %8673 = vmatmul.bf16.gmra.mxu0 %v8454
    %v8674 = vpop.f32.mrf.mxu0
    %v8675 = vadd.f32 0.0, %v8674
    %v8676 = vpop.f32.mrf.mxu0
    %v8677 = vadd.f32 0.0, %v8676
    %8678 = vmatmul.bf16.gmra.mxu0 %v8456
    %v8679 = vpop.f32.mrf.mxu0
    %v8680 = vadd.f32 0.0, %v8679
    %v8681 = vpop.f32.mrf.mxu0
    %v8682 = vadd.f32 0.0, %v8681
    %8683 = vmatmul.bf16.gmra.mxu0 %v8458
    %v8684 = vpop.f32.mrf.mxu0
    %v8685 = vadd.f32 0.0, %v8684
    %v8686 = vpop.f32.mrf.mxu0
    %v8687 = vadd.f32 0.0, %v8686
    %8688 = vmatmul.bf16.gmra.mxu0 %v8460
    %v8689 = vpop.f32.mrf.mxu0
    %v8690 = vadd.f32 0.0, %v8689
    %v8691 = vpop.f32.mrf.mxu0
    %v8692 = vadd.f32 0.0, %v8691
    %8693 = vmatmul.bf16.gmra.mxu0 %v8462
    %v8694 = vpop.f32.mrf.mxu0
    %v8695 = vadd.f32 0.0, %v8694
    %v8696 = vpop.f32.mrf.mxu0
    %v8697 = vadd.f32 0.0, %v8696
    %8698 = vmatmul.bf16.gmra.mxu0 %v8464
    %v8699 = vpop.f32.mrf.mxu0
    %v8700 = vadd.f32 0.0, %v8699
    %v8701 = vpop.f32.mrf.mxu0
    %v8702 = vadd.f32 0.0, %v8701
    %8703 = vmatmul.bf16.gmra.mxu0 %v8466
    %v8704 = vpop.f32.mrf.mxu0
    %v8705 = vadd.f32 0.0, %v8704
    %v8706 = vpop.f32.mrf.mxu0
    %v8707 = vadd.f32 0.0, %v8706
    %8708 = vmatmul.bf16.gmra.mxu0 %v8468
    %v8709 = vpop.f32.mrf.mxu0
    %v8710 = vadd.f32 0.0, %v8709
    %v8711 = vpop.f32.mrf.mxu0
    %v8712 = vadd.f32 0.0, %v8711
    %8713 = vmatmul.bf16.gmra.mxu0 %v8470
    %v8714 = vpop.f32.mrf.mxu0
    %v8715 = vadd.f32 0.0, %v8714
    %v8716 = vpop.f32.mrf.mxu0
    %v8717 = vadd.f32 0.0, %v8716
    %8718 = vmatmul.bf16.gmra.mxu0 %v8472
    %v8719 = vpop.f32.mrf.mxu0
    %v8720 = vadd.f32 0.0, %v8719
    %v8721 = vpop.f32.mrf.mxu0
    %v8722 = vadd.f32 0.0, %v8721
    %8723 = vmatmul.bf16.gmra.mxu0 %v8474
    %v8724 = vpop.f32.mrf.mxu0
    %v8725 = vadd.f32 0.0, %v8724
    %v8726 = vpop.f32.mrf.mxu0
    %v8727 = vadd.f32 0.0, %v8726
    %8728 = vdwg.mxu0
    %8729 = vmatpush.bf16.msra.mxu0 %v8626
    %8730 = vmatpush.bf16.msra.mxu0 %v8624
    %8731 = vmatpush.bf16.msra.mxu0 %v8622
    %8732 = vmatpush.bf16.msra.mxu0 %v8620
    %8733 = vmatpush.bf16.msra.mxu0 %v8618
    %8734 = vmatpush.bf16.msra.mxu0 %v8616
    %8735 = vmatpush.bf16.msra.mxu0 %v8614
    %8736 = vmatpush.bf16.msra.mxu0 %v8612
    %8737 = vmatmul.bf16.gmra.mxu0 %v8453
    %v8738 = vpop.f32.mrf.mxu0
    %v8739 = vadd.f32 %v8670, %v8738
    %v8740 = vpop.f32.mrf.mxu0
    %v8741 = vadd.f32 %v8672, %v8740
    %8742 = vmatmul.bf16.gmra.mxu0 %v8455
    %v8743 = vpop.f32.mrf.mxu0
    %v8744 = vadd.f32 %v8675, %v8743
    %v8745 = vpop.f32.mrf.mxu0
    %v8746 = vadd.f32 %v8677, %v8745
    %8747 = vmatmul.bf16.gmra.mxu0 %v8457
    %v8748 = vpop.f32.mrf.mxu0
    %v8749 = vadd.f32 %v8680, %v8748
    %v8750 = vpop.f32.mrf.mxu0
    %v8751 = vadd.f32 %v8682, %v8750
    %8752 = vmatmul.bf16.gmra.mxu0 %v8459
    %v8753 = vpop.f32.mrf.mxu0
    %v8754 = vadd.f32 %v8685, %v8753
    %v8755 = vpop.f32.mrf.mxu0
    %v8756 = vadd.f32 %v8687, %v8755
    %8757 = vmatmul.bf16.gmra.mxu0 %v8461
    %v8758 = vpop.f32.mrf.mxu0
    %v8759 = vadd.f32 %v8690, %v8758
    %v8760 = vpop.f32.mrf.mxu0
    %v8761 = vadd.f32 %v8692, %v8760
    %8762 = vmatmul.bf16.gmra.mxu0 %v8463
    %v8763 = vpop.f32.mrf.mxu0
    %v8764 = vadd.f32 %v8695, %v8763
    %v8765 = vpop.f32.mrf.mxu0
    %v8766 = vadd.f32 %v8697, %v8765
    %8767 = vmatmul.bf16.gmra.mxu0 %v8465
    %v8768 = vpop.f32.mrf.mxu0
    %v8769 = vadd.f32 %v8700, %v8768
    %v8770 = vpop.f32.mrf.mxu0
    %v8771 = vadd.f32 %v8702, %v8770
    %8772 = vmatmul.bf16.gmra.mxu0 %v8467
    %v8773 = vpop.f32.mrf.mxu0
    %v8774 = vadd.f32 %v8705, %v8773
    %v8775 = vpop.f32.mrf.mxu0
    %v8776 = vadd.f32 %v8707, %v8775
    %8777 = vmatmul.bf16.gmra.mxu0 %v8469
    %v8778 = vpop.f32.mrf.mxu0
    %v8779 = vadd.f32 %v8710, %v8778
    %v8780 = vpop.f32.mrf.mxu0
    %v8781 = vadd.f32 %v8712, %v8780
    %8782 = vmatmul.bf16.gmra.mxu0 %v8471
    %v8783 = vpop.f32.mrf.mxu0
    %v8784 = vadd.f32 %v8715, %v8783
    %v8785 = vpop.f32.mrf.mxu0
    %v8786 = vadd.f32 %v8717, %v8785
    %8787 = vmatmul.bf16.gmra.mxu0 %v8473
    %v8788 = vpop.f32.mrf.mxu0
    %v8789 = vadd.f32 %v8720, %v8788
    %v8790 = vpop.f32.mrf.mxu0
    %v8791 = vadd.f32 %v8722, %v8790
    %8792 = vmatmul.bf16.gmra.mxu0 %v8475
    %v8793 = vpop.f32.mrf.mxu0
    %v8794 = vadd.f32 %v8725, %v8793
    %v8795 = vpop.f32.mrf.mxu0
    %v8796 = vadd.f32 %v8727, %v8795
    %8797 = vdwg.mxu0
    %8798 = vmatpush.bf16.msra.mxu0 %v8611
    %8799 = vmatpush.bf16.msra.mxu0 %v8609
    %8800 = vmatpush.bf16.msra.mxu0 %v8607
    %8801 = vmatpush.bf16.msra.mxu0 %v8605
    %8802 = vmatpush.bf16.msra.mxu0 %v8603
    %8803 = vmatpush.bf16.msra.mxu0 %v8601
    %8804 = vmatpush.bf16.msra.mxu0 %v8599
    %8805 = vmatpush.bf16.msra.mxu0 %v8597
    %8806 = vmatmul.bf16.gmra.mxu0 %v8452
    %v8807 = vpop.f32.mrf.mxu0
    %v8808 = vadd.f32 0.0, %v8807
    %v8809 = vpop.f32.mrf.mxu0
    %v8810 = vadd.f32 0.0, %v8809
    %8811 = vmatmul.bf16.gmra.mxu0 %v8454
    %v8812 = vpop.f32.mrf.mxu0
    %v8813 = vadd.f32 0.0, %v8812
    %v8814 = vpop.f32.mrf.mxu0
    %v8815 = vadd.f32 0.0, %v8814
    %8816 = vmatmul.bf16.gmra.mxu0 %v8456
    %v8817 = vpop.f32.mrf.mxu0
    %v8818 = vadd.f32 0.0, %v8817
    %v8819 = vpop.f32.mrf.mxu0
    %v8820 = vadd.f32 0.0, %v8819
    %8821 = vmatmul.bf16.gmra.mxu0 %v8458
    %v8822 = vpop.f32.mrf.mxu0
    %v8823 = vadd.f32 0.0, %v8822
    %v8824 = vpop.f32.mrf.mxu0
    %v8825 = vadd.f32 0.0, %v8824
    %8826 = vmatmul.bf16.gmra.mxu0 %v8460
    %v8827 = vpop.f32.mrf.mxu0
    %v8828 = vadd.f32 0.0, %v8827
    %v8829 = vpop.f32.mrf.mxu0
    %v8830 = vadd.f32 0.0, %v8829
    %8831 = vmatmul.bf16.gmra.mxu0 %v8462
    %v8832 = vpop.f32.mrf.mxu0
    %v8833 = vadd.f32 0.0, %v8832
    %v8834 = vpop.f32.mrf.mxu0
    %v8835 = vadd.f32 0.0, %v8834
    %8836 = vmatmul.bf16.gmra.mxu0 %v8464
    %v8837 = vpop.f32.mrf.mxu0
    %v8838 = vadd.f32 0.0, %v8837
    %v8839 = vpop.f32.mrf.mxu0
    %v8840 = vadd.f32 0.0, %v8839
    %8841 = vmatmul.bf16.gmra.mxu0 %v8466
    %v8842 = vpop.f32.mrf.mxu0
    %v8843 = vadd.f32 0.0, %v8842
    %v8844 = vpop.f32.mrf.mxu0
    %v8845 = vadd.f32 0.0, %v8844
    %8846 = vmatmul.bf16.gmra.mxu0 %v8468
    %v8847 = vpop.f32.mrf.mxu0
    %v8848 = vadd.f32 0.0, %v8847
    %v8849 = vpop.f32.mrf.mxu0
    %v8850 = vadd.f32 0.0, %v8849
    %8851 = vmatmul.bf16.gmra.mxu0 %v8470
    %v8852 = vpop.f32.mrf.mxu0
    %v8853 = vadd.f32 0.0, %v8852
    %v8854 = vpop.f32.mrf.mxu0
    %v8855 = vadd.f32 0.0, %v8854
    %8856 = vmatmul.bf16.gmra.mxu0 %v8472
    %v8857 = vpop.f32.mrf.mxu0
    %v8858 = vadd.f32 0.0, %v8857
    %v8859 = vpop.f32.mrf.mxu0
    %v8860 = vadd.f32 0.0, %v8859
    %8861 = vmatmul.bf16.gmra.mxu0 %v8474
    %v8862 = vpop.f32.mrf.mxu0
    %v8863 = vadd.f32 0.0, %v8862
    %v8864 = vpop.f32.mrf.mxu0
    %v8865 = vadd.f32 0.0, %v8864
    %8866 = vdwg.mxu0
    %8867 = vmatpush.bf16.msra.mxu0 %v8627
    %8868 = vmatpush.bf16.msra.mxu0 %v8625
    %8869 = vmatpush.bf16.msra.mxu0 %v8623
    %8870 = vmatpush.bf16.msra.mxu0 %v8621
    %8871 = vmatpush.bf16.msra.mxu0 %v8619
    %8872 = vmatpush.bf16.msra.mxu0 %v8617
    %8873 = vmatpush.bf16.msra.mxu0 %v8615
    %8874 = vmatpush.bf16.msra.mxu0 %v8613
    %8875 = vmatmul.bf16.gmra.mxu0 %v8453
    %v8876 = vpop.f32.mrf.mxu0
    %v8877 = vadd.f32 %v8808, %v8876
    %v8878 = vpop.f32.mrf.mxu0
    %v8879 = vadd.f32 %v8810, %v8878
    %8880 = vmatmul.bf16.gmra.mxu0 %v8455
    %v8881 = vpop.f32.mrf.mxu0
    %v8882 = vadd.f32 %v8813, %v8881
    %v8883 = vpop.f32.mrf.mxu0
    %v8884 = vadd.f32 %v8815, %v8883
    %8885 = vmatmul.bf16.gmra.mxu0 %v8457
    %v8886 = vpop.f32.mrf.mxu0
    %v8887 = vadd.f32 %v8818, %v8886
    %v8888 = vpop.f32.mrf.mxu0
    %v8889 = vadd.f32 %v8820, %v8888
    %8890 = vmatmul.bf16.gmra.mxu0 %v8459
    %v8891 = vpop.f32.mrf.mxu0
    %v8892 = vadd.f32 %v8823, %v8891
    %v8893 = vpop.f32.mrf.mxu0
    %v8894 = vadd.f32 %v8825, %v8893
    %8895 = vmatmul.bf16.gmra.mxu0 %v8461
    %v8896 = vpop.f32.mrf.mxu0
    %v8897 = vadd.f32 %v8828, %v8896
    %v8898 = vpop.f32.mrf.mxu0
    %v8899 = vadd.f32 %v8830, %v8898
    %8900 = vmatmul.bf16.gmra.mxu0 %v8463
    %v8901 = vpop.f32.mrf.mxu0
    %v8902 = vadd.f32 %v8833, %v8901
    %v8903 = vpop.f32.mrf.mxu0
    %v8904 = vadd.f32 %v8835, %v8903
    %8905 = vmatmul.bf16.gmra.mxu0 %v8465
    %v8906 = vpop.f32.mrf.mxu0
    %v8907 = vadd.f32 %v8838, %v8906
    %v8908 = vpop.f32.mrf.mxu0
    %v8909 = vadd.f32 %v8840, %v8908
    %8910 = vmatmul.bf16.gmra.mxu0 %v8467
    %v8911 = vpop.f32.mrf.mxu0
    %v8912 = vadd.f32 %v8843, %v8911
    %v8913 = vpop.f32.mrf.mxu0
    %v8914 = vadd.f32 %v8845, %v8913
    %8915 = vmatmul.bf16.gmra.mxu0 %v8469
    %v8916 = vpop.f32.mrf.mxu0
    %v8917 = vadd.f32 %v8848, %v8916
    %v8918 = vpop.f32.mrf.mxu0
    %v8919 = vadd.f32 %v8850, %v8918
    %8920 = vmatmul.bf16.gmra.mxu0 %v8471
    %v8921 = vpop.f32.mrf.mxu0
    %v8922 = vadd.f32 %v8853, %v8921
    %v8923 = vpop.f32.mrf.mxu0
    %v8924 = vadd.f32 %v8855, %v8923
    %8925 = vmatmul.bf16.gmra.mxu0 %v8473
    %v8926 = vpop.f32.mrf.mxu0
    %v8927 = vadd.f32 %v8858, %v8926
    %v8928 = vpop.f32.mrf.mxu0
    %v8929 = vadd.f32 %v8860, %v8928
    %8930 = vmatmul.bf16.gmra.mxu0 %v8475
    %v8931 = vpop.f32.mrf.mxu0
    %v8932 = vadd.f32 %v8863, %v8931
    %v8933 = vpop.f32.mrf.mxu0
    %v8934 = vadd.f32 %v8865, %v8933
    %8935 = vdwg.mxu0
    %v8938 = vunpack.c.l.b16 %v8283
    %v8939 = vunpack.c.h.b16 %v8283
    %v8940 = vunpack.c.l.b16 %v8284
    %v8941 = vunpack.c.h.b16 %v8284
    %v8942 = vpack.c.b16 %v8940, %v8938
    %v8943 = vpack.c.b16 %v8941, %v8939
    %v8978 = vunpack.c.l.b16 %v8315
    %v8979 = vunpack.c.h.b16 %v8315
    %v8980 = vunpack.c.l.b16 %v8316
    %v8981 = vunpack.c.h.b16 %v8316
    %v8982 = vunpack.c.l.b16 %v8317
    %v8983 = vunpack.c.h.b16 %v8317
    %v8984 = vunpack.c.l.b16 %v8318
    %v8985 = vunpack.c.h.b16 %v8318
    %v8986 = vunpack.c.l.b16 %v8319
    %v8987 = vunpack.c.h.b16 %v8319
    %v8988 = vunpack.c.l.b16 %v8320
    %v8989 = vunpack.c.h.b16 %v8320
    %v8990 = vunpack.c.l.b16 %v8321
    %v8991 = vunpack.c.h.b16 %v8321
    %v8992 = vunpack.c.l.b16 %v8322
    %v8993 = vunpack.c.h.b16 %v8322
    %v8994 = vunpack.c.l.b16 %v8323
    %v8995 = vunpack.c.h.b16 %v8323
    %v8996 = vunpack.c.l.b16 %v8324
    %v8997 = vunpack.c.h.b16 %v8324
    %v8998 = vunpack.c.l.b16 %v8325
    %v8999 = vunpack.c.h.b16 %v8325
    %v9000 = vunpack.c.l.b16 %v8326
    %v9001 = vunpack.c.h.b16 %v8326
    %v9002 = vunpack.c.l.b16 %v8327
    %v9003 = vunpack.c.h.b16 %v8327
    %v9004 = vunpack.c.l.b16 %v8328
    %v9005 = vunpack.c.h.b16 %v8328
    %v9006 = vunpack.c.l.b16 %v8329
    %v9007 = vunpack.c.h.b16 %v8329
    %v9008 = vunpack.c.l.b16 %v8330
    %v9009 = vunpack.c.h.b16 %v8330
    %v9010 = vunpack.c.l.b16 %v8331
    %v9011 = vunpack.c.h.b16 %v8331
    %v9012 = vunpack.c.l.b16 %v8332
    %v9013 = vunpack.c.h.b16 %v8332
    %v9014 = vunpack.c.l.b16 %v8333
    %v9015 = vunpack.c.h.b16 %v8333
    %v9016 = vunpack.c.l.b16 %v8334
    %v9017 = vunpack.c.h.b16 %v8334
    %v9018 = vunpack.c.l.b16 %v8335
    %v9019 = vunpack.c.h.b16 %v8335
    %v9020 = vunpack.c.l.b16 %v8336
    %v9021 = vunpack.c.h.b16 %v8336
    %v9022 = vunpack.c.l.b16 %v8337
    %v9023 = vunpack.c.h.b16 %v8337
    %v9024 = vunpack.c.l.b16 %v8338
    %v9025 = vunpack.c.h.b16 %v8338
    %v9026 = vunpack.c.l.b16 %v8339
    %v9027 = vunpack.c.h.b16 %v8339
    %v9028 = vunpack.c.l.b16 %v8340
    %v9029 = vunpack.c.h.b16 %v8340
    %v9030 = vunpack.c.l.b16 %v8341
    %v9031 = vunpack.c.h.b16 %v8341
    %v9032 = vunpack.c.l.b16 %v8342
    %v9033 = vunpack.c.h.b16 %v8342
    %v9034 = vunpack.c.l.b16 %v8343
    %v9035 = vunpack.c.h.b16 %v8343
    %v9036 = vunpack.c.l.b16 %v8344
    %v9037 = vunpack.c.h.b16 %v8344
    %v9038 = vunpack.c.l.b16 %v8345
    %v9039 = vunpack.c.h.b16 %v8345
    %v9040 = vunpack.c.l.b16 %v8346
    %v9041 = vunpack.c.h.b16 %v8346
    %v9042 = vpack.c.b16 %v8980, %v8978
    %v9043 = vpack.c.b16 %v8981, %v8979
    %v9044 = vpack.c.b16 %v8984, %v8982
    %v9045 = vpack.c.b16 %v8985, %v8983
    %v9046 = vpack.c.b16 %v8988, %v8986
    %v9047 = vpack.c.b16 %v8989, %v8987
    %v9048 = vpack.c.b16 %v8992, %v8990
    %v9049 = vpack.c.b16 %v8993, %v8991
    %v9050 = vpack.c.b16 %v8996, %v8994
    %v9051 = vpack.c.b16 %v8997, %v8995
    %v9052 = vpack.c.b16 %v9000, %v8998
    %v9053 = vpack.c.b16 %v9001, %v8999
    %v9054 = vpack.c.b16 %v9004, %v9002
    %v9055 = vpack.c.b16 %v9005, %v9003
    %v9056 = vpack.c.b16 %v9008, %v9006
    %v9057 = vpack.c.b16 %v9009, %v9007
    %v9058 = vpack.c.b16 %v9012, %v9010
    %v9059 = vpack.c.b16 %v9013, %v9011
    %v9060 = vpack.c.b16 %v9016, %v9014
    %v9061 = vpack.c.b16 %v9017, %v9015
    %v9062 = vpack.c.b16 %v9020, %v9018
    %v9063 = vpack.c.b16 %v9021, %v9019
    %v9064 = vpack.c.b16 %v9024, %v9022
    %v9065 = vpack.c.b16 %v9025, %v9023
    %v9066 = vpack.c.b16 %v9028, %v9026
    %v9067 = vpack.c.b16 %v9029, %v9027
    %v9068 = vpack.c.b16 %v9032, %v9030
    %v9069 = vpack.c.b16 %v9033, %v9031
    %v9070 = vpack.c.b16 %v9036, %v9034
    %v9071 = vpack.c.b16 %v9037, %v9035
    %v9072 = vpack.c.b16 %v9040, %v9038
    %v9073 = vpack.c.b16 %v9041, %v9039
    %9106 = vmatpush.bf16.msra.mxu0 %v9056
    %9107 = vmatpush.bf16.msra.mxu0 %v9054
    %9108 = vmatpush.bf16.msra.mxu0 %v9052
    %9109 = vmatpush.bf16.msra.mxu0 %v9050
    %9110 = vmatpush.bf16.msra.mxu0 %v9048
    %9111 = vmatpush.bf16.msra.mxu0 %v9046
    %9112 = vmatpush.bf16.msra.mxu0 %v9044
    %9113 = vmatpush.bf16.msra.mxu0 %v9042
    %9114 = vmatmul.bf16.gmra.mxu0 %v8942
    %v9115 = vpop.f32.mrf.mxu0
    %v9116 = vadd.f32 %v8739, %v9115
    %v9117 = vpop.f32.mrf.mxu0
    %v9118 = vadd.f32 %v8741, %v9117
    %9119 = vmatmul.bf16.gmra.mxu0 %v8452
    %v9120 = vpop.f32.mrf.mxu0
    %v9121 = vadd.f32 %v8744, %v9120
    %v9122 = vpop.f32.mrf.mxu0
    %v9123 = vadd.f32 %v8746, %v9122
    %9124 = vmatmul.bf16.gmra.mxu0 %v8454
    %v9125 = vpop.f32.mrf.mxu0
    %v9126 = vadd.f32 %v8749, %v9125
    %v9127 = vpop.f32.mrf.mxu0
    %v9128 = vadd.f32 %v8751, %v9127
    %9129 = vmatmul.bf16.gmra.mxu0 %v8456
    %v9130 = vpop.f32.mrf.mxu0
    %v9131 = vadd.f32 %v8754, %v9130
    %v9132 = vpop.f32.mrf.mxu0
    %v9133 = vadd.f32 %v8756, %v9132
    %9134 = vmatmul.bf16.gmra.mxu0 %v8458
    %v9135 = vpop.f32.mrf.mxu0
    %v9136 = vadd.f32 %v8759, %v9135
    %v9137 = vpop.f32.mrf.mxu0
    %v9138 = vadd.f32 %v8761, %v9137
    %9139 = vmatmul.bf16.gmra.mxu0 %v8460
    %v9140 = vpop.f32.mrf.mxu0
    %v9141 = vadd.f32 %v8764, %v9140
    %v9142 = vpop.f32.mrf.mxu0
    %v9143 = vadd.f32 %v8766, %v9142
    %9144 = vmatmul.bf16.gmra.mxu0 %v8462
    %v9145 = vpop.f32.mrf.mxu0
    %v9146 = vadd.f32 %v8769, %v9145
    %v9147 = vpop.f32.mrf.mxu0
    %v9148 = vadd.f32 %v8771, %v9147
    %9149 = vmatmul.bf16.gmra.mxu0 %v8464
    %v9150 = vpop.f32.mrf.mxu0
    %v9151 = vadd.f32 %v8774, %v9150
    %v9152 = vpop.f32.mrf.mxu0
    %v9153 = vadd.f32 %v8776, %v9152
    %9154 = vmatmul.bf16.gmra.mxu0 %v8466
    %v9155 = vpop.f32.mrf.mxu0
    %v9156 = vadd.f32 %v8779, %v9155
    %v9157 = vpop.f32.mrf.mxu0
    %v9158 = vadd.f32 %v8781, %v9157
    %9159 = vmatmul.bf16.gmra.mxu0 %v8468
    %v9160 = vpop.f32.mrf.mxu0
    %v9161 = vadd.f32 %v8784, %v9160
    %v9162 = vpop.f32.mrf.mxu0
    %v9163 = vadd.f32 %v8786, %v9162
    %9164 = vmatmul.bf16.gmra.mxu0 %v8470
    %v9165 = vpop.f32.mrf.mxu0
    %v9166 = vadd.f32 %v8789, %v9165
    %v9167 = vpop.f32.mrf.mxu0
    %v9168 = vadd.f32 %v8791, %v9167
    %9169 = vmatmul.bf16.gmra.mxu0 %v8472
    %v9170 = vpop.f32.mrf.mxu0
    %v9171 = vadd.f32 %v8794, %v9170
    %v9172 = vpop.f32.mrf.mxu0
    %v9173 = vadd.f32 %v8796, %v9172
    %9174 = vdwg.mxu0
    %9175 = vmatpush.bf16.msra.mxu0 %v9072
    %9176 = vmatpush.bf16.msra.mxu0 %v9070
    %9177 = vmatpush.bf16.msra.mxu0 %v9068
    %9178 = vmatpush.bf16.msra.mxu0 %v9066
    %9179 = vmatpush.bf16.msra.mxu0 %v9064
    %9180 = vmatpush.bf16.msra.mxu0 %v9062
    %9181 = vmatpush.bf16.msra.mxu0 %v9060
    %9182 = vmatpush.bf16.msra.mxu0 %v9058
    %9183 = vmatmul.bf16.gmra.mxu0 %v8943
    %v9184 = vpop.f32.mrf.mxu0
    %v9185 = vadd.f32 %v9116, %v9184
    %v9186 = vpop.f32.mrf.mxu0
    %v9187 = vadd.f32 %v9118, %v9186
    %9188 = vmatmul.bf16.gmra.mxu0 %v8453
    %v9189 = vpop.f32.mrf.mxu0
    %v9190 = vadd.f32 %v9121, %v9189
    %v9191 = vpop.f32.mrf.mxu0
    %v9192 = vadd.f32 %v9123, %v9191
    %9193 = vmatmul.bf16.gmra.mxu0 %v8455
    %v9194 = vpop.f32.mrf.mxu0
    %v9195 = vadd.f32 %v9126, %v9194
    %v9196 = vpop.f32.mrf.mxu0
    %v9197 = vadd.f32 %v9128, %v9196
    %9198 = vmatmul.bf16.gmra.mxu0 %v8457
    %v9199 = vpop.f32.mrf.mxu0
    %v9200 = vadd.f32 %v9131, %v9199
    %v9201 = vpop.f32.mrf.mxu0
    %v9202 = vadd.f32 %v9133, %v9201
    %9203 = vmatmul.bf16.gmra.mxu0 %v8459
    %v9204 = vpop.f32.mrf.mxu0
    %v9205 = vadd.f32 %v9136, %v9204
    %v9206 = vpop.f32.mrf.mxu0
    %v9207 = vadd.f32 %v9138, %v9206
    %9208 = vmatmul.bf16.gmra.mxu0 %v8461
    %v9209 = vpop.f32.mrf.mxu0
    %v9210 = vadd.f32 %v9141, %v9209
    %v9211 = vpop.f32.mrf.mxu0
    %v9212 = vadd.f32 %v9143, %v9211
    %9213 = vmatmul.bf16.gmra.mxu0 %v8463
    %v9214 = vpop.f32.mrf.mxu0
    %v9215 = vadd.f32 %v9146, %v9214
    %v9216 = vpop.f32.mrf.mxu0
    %v9217 = vadd.f32 %v9148, %v9216
    %9218 = vmatmul.bf16.gmra.mxu0 %v8465
    %v9219 = vpop.f32.mrf.mxu0
    %v9220 = vadd.f32 %v9151, %v9219
    %v9221 = vpop.f32.mrf.mxu0
    %v9222 = vadd.f32 %v9153, %v9221
    %9223 = vmatmul.bf16.gmra.mxu0 %v8467
    %v9224 = vpop.f32.mrf.mxu0
    %v9225 = vadd.f32 %v9156, %v9224
    %v9226 = vpop.f32.mrf.mxu0
    %v9227 = vadd.f32 %v9158, %v9226
    %9228 = vmatmul.bf16.gmra.mxu0 %v8469
    %v9229 = vpop.f32.mrf.mxu0
    %v9230 = vadd.f32 %v9161, %v9229
    %v9231 = vpop.f32.mrf.mxu0
    %v9232 = vadd.f32 %v9163, %v9231
    %9233 = vmatmul.bf16.gmra.mxu0 %v8471
    %v9234 = vpop.f32.mrf.mxu0
    %v9235 = vadd.f32 %v9166, %v9234
    %v9236 = vpop.f32.mrf.mxu0
    %v9237 = vadd.f32 %v9168, %v9236
    %9238 = vmatmul.bf16.gmra.mxu0 %v8473
    %v9239 = vpop.f32.mrf.mxu0
    %v9240 = vadd.f32 %v9171, %v9239
    %v9241 = vpop.f32.mrf.mxu0
    %v9242 = vadd.f32 %v9173, %v9241
    %9243 = vdwg.mxu0
    %9244 = vmatpush.bf16.msra.mxu0 %v9057
    %9245 = vmatpush.bf16.msra.mxu0 %v9055
    %9246 = vmatpush.bf16.msra.mxu0 %v9053
    %9247 = vmatpush.bf16.msra.mxu0 %v9051
    %9248 = vmatpush.bf16.msra.mxu0 %v9049
    %9249 = vmatpush.bf16.msra.mxu0 %v9047
    %9250 = vmatpush.bf16.msra.mxu0 %v9045
    %9251 = vmatpush.bf16.msra.mxu0 %v9043
    %9252 = vmatmul.bf16.gmra.mxu0 %v8942
    %v9253 = vpop.f32.mrf.mxu0
    %v9254 = vadd.f32 %v8877, %v9253
    %v9255 = vpop.f32.mrf.mxu0
    %v9256 = vadd.f32 %v8879, %v9255
    %9257 = vmatmul.bf16.gmra.mxu0 %v8452
    %v9258 = vpop.f32.mrf.mxu0
    %v9259 = vadd.f32 %v8882, %v9258
    %v9260 = vpop.f32.mrf.mxu0
    %v9261 = vadd.f32 %v8884, %v9260
    %9262 = vmatmul.bf16.gmra.mxu0 %v8454
    %v9263 = vpop.f32.mrf.mxu0
    %v9264 = vadd.f32 %v8887, %v9263
    %v9265 = vpop.f32.mrf.mxu0
    %v9266 = vadd.f32 %v8889, %v9265
    %9267 = vmatmul.bf16.gmra.mxu0 %v8456
    %v9268 = vpop.f32.mrf.mxu0
    %v9269 = vadd.f32 %v8892, %v9268
    %v9270 = vpop.f32.mrf.mxu0
    %v9271 = vadd.f32 %v8894, %v9270
    %9272 = vmatmul.bf16.gmra.mxu0 %v8458
    %v9273 = vpop.f32.mrf.mxu0
    %v9274 = vadd.f32 %v8897, %v9273
    %v9275 = vpop.f32.mrf.mxu0
    %v9276 = vadd.f32 %v8899, %v9275
    %9277 = vmatmul.bf16.gmra.mxu0 %v8460
    %v9278 = vpop.f32.mrf.mxu0
    %v9279 = vadd.f32 %v8902, %v9278
    %v9280 = vpop.f32.mrf.mxu0
    %v9281 = vadd.f32 %v8904, %v9280
    %9282 = vmatmul.bf16.gmra.mxu0 %v8462
    %v9283 = vpop.f32.mrf.mxu0
    %v9284 = vadd.f32 %v8907, %v9283
    %v9285 = vpop.f32.mrf.mxu0
    %v9286 = vadd.f32 %v8909, %v9285
    %9287 = vmatmul.bf16.gmra.mxu0 %v8464
    %v9288 = vpop.f32.mrf.mxu0
    %v9289 = vadd.f32 %v8912, %v9288
    %v9290 = vpop.f32.mrf.mxu0
    %v9291 = vadd.f32 %v8914, %v9290
    %9292 = vmatmul.bf16.gmra.mxu0 %v8466
    %v9293 = vpop.f32.mrf.mxu0
    %v9294 = vadd.f32 %v8917, %v9293
    %v9295 = vpop.f32.mrf.mxu0
    %v9296 = vadd.f32 %v8919, %v9295
    %9297 = vmatmul.bf16.gmra.mxu0 %v8468
    %v9298 = vpop.f32.mrf.mxu0
    %v9299 = vadd.f32 %v8922, %v9298
    %v9300 = vpop.f32.mrf.mxu0
    %v9301 = vadd.f32 %v8924, %v9300
    %9302 = vmatmul.bf16.gmra.mxu0 %v8470
    %v9303 = vpop.f32.mrf.mxu0
    %v9304 = vadd.f32 %v8927, %v9303
    %v9305 = vpop.f32.mrf.mxu0
    %v9306 = vadd.f32 %v8929, %v9305
    %9307 = vmatmul.bf16.gmra.mxu0 %v8472
    %v9308 = vpop.f32.mrf.mxu0
    %v9309 = vadd.f32 %v8932, %v9308
    %v9310 = vpop.f32.mrf.mxu0
    %v9311 = vadd.f32 %v8934, %v9310
    %9312 = vdwg.mxu0
    %9313 = vmatpush.bf16.msra.mxu0 %v9073
    %9314 = vmatpush.bf16.msra.mxu0 %v9071
    %9315 = vmatpush.bf16.msra.mxu0 %v9069
    %9316 = vmatpush.bf16.msra.mxu0 %v9067
    %9317 = vmatpush.bf16.msra.mxu0 %v9065
    %9318 = vmatpush.bf16.msra.mxu0 %v9063
    %9319 = vmatpush.bf16.msra.mxu0 %v9061
    %9320 = vmatpush.bf16.msra.mxu0 %v9059
    %9321 = vmatmul.bf16.gmra.mxu0 %v8943
    %v9322 = vpop.f32.mrf.mxu0
    %v9323 = vadd.f32 %v9254, %v9322
    %v9324 = vpop.f32.mrf.mxu0
    %v9325 = vadd.f32 %v9256, %v9324
    %9326 = vmatmul.bf16.gmra.mxu0 %v8453
    %v9327 = vpop.f32.mrf.mxu0
    %v9328 = vadd.f32 %v9259, %v9327
    %v9329 = vpop.f32.mrf.mxu0
    %v9330 = vadd.f32 %v9261, %v9329
    %9331 = vmatmul.bf16.gmra.mxu0 %v8455
    %v9332 = vpop.f32.mrf.mxu0
    %v9333 = vadd.f32 %v9264, %v9332
    %v9334 = vpop.f32.mrf.mxu0
    %v9335 = vadd.f32 %v9266, %v9334
    %9336 = vmatmul.bf16.gmra.mxu0 %v8457
    %v9337 = vpop.f32.mrf.mxu0
    %v9338 = vadd.f32 %v9269, %v9337
    %v9339 = vpop.f32.mrf.mxu0
    %v9340 = vadd.f32 %v9271, %v9339
    %9341 = vmatmul.bf16.gmra.mxu0 %v8459
    %v9342 = vpop.f32.mrf.mxu0
    %v9343 = vadd.f32 %v9274, %v9342
    %v9344 = vpop.f32.mrf.mxu0
    %v9345 = vadd.f32 %v9276, %v9344
    %9346 = vmatmul.bf16.gmra.mxu0 %v8461
    %v9347 = vpop.f32.mrf.mxu0
    %v9348 = vadd.f32 %v9279, %v9347
    %v9349 = vpop.f32.mrf.mxu0
    %v9350 = vadd.f32 %v9281, %v9349
    %9351 = vmatmul.bf16.gmra.mxu0 %v8463
    %v9352 = vpop.f32.mrf.mxu0
    %v9353 = vadd.f32 %v9284, %v9352
    %v9354 = vpop.f32.mrf.mxu0
    %v9355 = vadd.f32 %v9286, %v9354
    %9356 = vmatmul.bf16.gmra.mxu0 %v8465
    %v9357 = vpop.f32.mrf.mxu0
    %v9358 = vadd.f32 %v9289, %v9357
    %v9359 = vpop.f32.mrf.mxu0
    %v9360 = vadd.f32 %v9291, %v9359
    %9361 = vmatmul.bf16.gmra.mxu0 %v8467
    %v9362 = vpop.f32.mrf.mxu0
    %v9363 = vadd.f32 %v9294, %v9362
    %v9364 = vpop.f32.mrf.mxu0
    %v9365 = vadd.f32 %v9296, %v9364
    %9366 = vmatmul.bf16.gmra.mxu0 %v8469
    %v9367 = vpop.f32.mrf.mxu0
    %v9368 = vadd.f32 %v9299, %v9367
    %v9369 = vpop.f32.mrf.mxu0
    %v9370 = vadd.f32 %v9301, %v9369
    %9371 = vmatmul.bf16.gmra.mxu0 %v8471
    %v9372 = vpop.f32.mrf.mxu0
    %v9373 = vadd.f32 %v9304, %v9372
    %v9374 = vpop.f32.mrf.mxu0
    %v9375 = vadd.f32 %v9306, %v9374
    %9376 = vmatmul.bf16.gmra.mxu0 %v8473
    %v9377 = vpop.f32.mrf.mxu0
    %v9378 = vadd.f32 %v9309, %v9377
    %v9379 = vpop.f32.mrf.mxu0
    %v9380 = vadd.f32 %v9311, %v9379
    %9381 = vdwg.mxu0
    %s9382 = scalar_lea.vmem [#allocation6], 512
    %v9383 = vld [vmem:[%s9382] sm:$0xff]
    %v9384 = vld [vmem:[%s9382 + $0x8] sm:$0xff]
    %v9385 = vld [vmem:[%s9382 + $0x10] sm:$0xff]
    %v9386 = vld [vmem:[%s9382 + $0x18] sm:$0xff]
    %v9387 = vld [vmem:[%s9382 + $0x20] sm:$0xff]
    %v9388 = vld [vmem:[%s9382 + $0x28] sm:$0xff]
    %v9389 = vld [vmem:[%s9382 + $0x30] sm:$0xff]
    %v9390 = vld [vmem:[%s9382 + $0x38] sm:$0xff]
    %v9391 = vld [vmem:[%s9382 + $0x40] sm:$0xff]
    %v9392 = vld [vmem:[%s9382 + $0x48] sm:$0xff]
    %v9393 = vld [vmem:[%s9382 + $0x50] sm:$0xff]
    %v9394 = vld [vmem:[%s9382 + $0x58] sm:$0xff]
    %v9395 = vld [vmem:[%s9382 + $0x60] sm:$0xff]
    %v9396 = vld [vmem:[%s9382 + $0x68] sm:$0xff]
    %v9397 = vld [vmem:[%s9382 + $0x70] sm:$0xff]
    %v9398 = vld [vmem:[%s9382 + $0x78] sm:$0xff]
    %v9399 = vld [vmem:[%s9382 + $0x80] sm:$0xff]
    %v9400 = vld [vmem:[%s9382 + $0x88] sm:$0xff]
    %v9401 = vld [vmem:[%s9382 + $0x90] sm:$0xff]
    %v9402 = vld [vmem:[%s9382 + $0x98] sm:$0xff]
    %v9403 = vld [vmem:[%s9382 + $0xa0] sm:$0xff]
    %v9404 = vld [vmem:[%s9382 + $0xa8] sm:$0xff]
    %v9405 = vld [vmem:[%s9382 + $0xb0] sm:$0xff]
    %v9406 = vld [vmem:[%s9382 + $0xb8] sm:$0xff]
    %v9407 = vld [vmem:[%s9382 + $0xc0] sm:$0xff]
    %v9408 = vld [vmem:[%s9382 + $0xc8] sm:$0xff]
    %v9409 = vld [vmem:[%s9382 + $0xd0] sm:$0xff]
    %v9410 = vld [vmem:[%s9382 + $0xd8] sm:$0xff]
    %v9411 = vld [vmem:[%s9382 + $0xe0] sm:$0xff]
    %v9412 = vld [vmem:[%s9382 + $0xe8] sm:$0xff]
    %v9413 = vld [vmem:[%s9382 + $0xf0] sm:$0xff]
    %v9414 = vld [vmem:[%s9382 + $0xf8] sm:$0xff]
    %v9417 = vunpack.c.l.b16 %v8309
    %v9418 = vunpack.c.h.b16 %v8309
    %v9419 = vunpack.c.l.b16 %v8310
    %v9420 = vunpack.c.h.b16 %v8310
    %v9421 = vpack.c.b16 %v9419, %v9417
    %v9422 = vpack.c.b16 %v9420, %v9418
    %v9457 = vunpack.c.l.b16 %v9383
    %v9458 = vunpack.c.h.b16 %v9383
    %v9459 = vunpack.c.l.b16 %v9384
    %v9460 = vunpack.c.h.b16 %v9384
    %v9461 = vunpack.c.l.b16 %v9385
    %v9462 = vunpack.c.h.b16 %v9385
    %v9463 = vunpack.c.l.b16 %v9386
    %v9464 = vunpack.c.h.b16 %v9386
    %v9465 = vunpack.c.l.b16 %v9387
    %v9466 = vunpack.c.h.b16 %v9387
    %v9467 = vunpack.c.l.b16 %v9388
    %v9468 = vunpack.c.h.b16 %v9388
    %v9469 = vunpack.c.l.b16 %v9389
    %v9470 = vunpack.c.h.b16 %v9389
    %v9471 = vunpack.c.l.b16 %v9390
    %v9472 = vunpack.c.h.b16 %v9390
    %v9473 = vunpack.c.l.b16 %v9391
    %v9474 = vunpack.c.h.b16 %v9391
    %v9475 = vunpack.c.l.b16 %v9392
    %v9476 = vunpack.c.h.b16 %v9392
    %v9477 = vunpack.c.l.b16 %v9393
    %v9478 = vunpack.c.h.b16 %v9393
    %v9479 = vunpack.c.l.b16 %v9394
    %v9480 = vunpack.c.h.b16 %v9394
    %v9481 = vunpack.c.l.b16 %v9395
    %v9482 = vunpack.c.h.b16 %v9395
    %v9483 = vunpack.c.l.b16 %v9396
    %v9484 = vunpack.c.h.b16 %v9396
    %v9485 = vunpack.c.l.b16 %v9397
    %v9486 = vunpack.c.h.b16 %v9397
    %v9487 = vunpack.c.l.b16 %v9398
    %v9488 = vunpack.c.h.b16 %v9398
    %v9489 = vunpack.c.l.b16 %v9399
    %v9490 = vunpack.c.h.b16 %v9399
    %v9491 = vunpack.c.l.b16 %v9400
    %v9492 = vunpack.c.h.b16 %v9400
    %v9493 = vunpack.c.l.b16 %v9401
    %v9494 = vunpack.c.h.b16 %v9401
    %v9495 = vunpack.c.l.b16 %v9402
    %v9496 = vunpack.c.h.b16 %v9402
    %v9497 = vunpack.c.l.b16 %v9403
    %v9498 = vunpack.c.h.b16 %v9403
    %v9499 = vunpack.c.l.b16 %v9404
    %v9500 = vunpack.c.h.b16 %v9404
    %v9501 = vunpack.c.l.b16 %v9405
    %v9502 = vunpack.c.h.b16 %v9405
    %v9503 = vunpack.c.l.b16 %v9406
    %v9504 = vunpack.c.h.b16 %v9406
    %v9505 = vunpack.c.l.b16 %v9407
    %v9506 = vunpack.c.h.b16 %v9407
    %v9507 = vunpack.c.l.b16 %v9408
    %v9508 = vunpack.c.h.b16 %v9408
    %v9509 = vunpack.c.l.b16 %v9409
    %v9510 = vunpack.c.h.b16 %v9409
    %v9511 = vunpack.c.l.b16 %v9410
    %v9512 = vunpack.c.h.b16 %v9410
    %v9513 = vunpack.c.l.b16 %v9411
    %v9514 = vunpack.c.h.b16 %v9411
    %v9515 = vunpack.c.l.b16 %v9412
    %v9516 = vunpack.c.h.b16 %v9412
    %v9517 = vunpack.c.l.b16 %v9413
    %v9518 = vunpack.c.h.b16 %v9413
    %v9519 = vunpack.c.l.b16 %v9414
    %v9520 = vunpack.c.h.b16 %v9414
    %v9521 = vpack.c.b16 %v9459, %v9457
    %v9522 = vpack.c.b16 %v9460, %v9458
    %v9523 = vpack.c.b16 %v9463, %v9461
    %v9524 = vpack.c.b16 %v9464, %v9462
    %v9525 = vpack.c.b16 %v9467, %v9465
    %v9526 = vpack.c.b16 %v9468, %v9466
    %v9527 = vpack.c.b16 %v9471, %v9469
    %v9528 = vpack.c.b16 %v9472, %v9470
    %v9529 = vpack.c.b16 %v9475, %v9473
    %v9530 = vpack.c.b16 %v9476, %v9474
    %v9531 = vpack.c.b16 %v9479, %v9477
    %v9532 = vpack.c.b16 %v9480, %v9478
    %v9533 = vpack.c.b16 %v9483, %v9481
    %v9534 = vpack.c.b16 %v9484, %v9482
    %v9535 = vpack.c.b16 %v9487, %v9485
    %v9536 = vpack.c.b16 %v9488, %v9486
    %v9537 = vpack.c.b16 %v9491, %v9489
    %v9538 = vpack.c.b16 %v9492, %v9490
    %v9539 = vpack.c.b16 %v9495, %v9493
    %v9540 = vpack.c.b16 %v9496, %v9494
    %v9541 = vpack.c.b16 %v9499, %v9497
    %v9542 = vpack.c.b16 %v9500, %v9498
    %v9543 = vpack.c.b16 %v9503, %v9501
    %v9544 = vpack.c.b16 %v9504, %v9502
    %v9545 = vpack.c.b16 %v9507, %v9505
    %v9546 = vpack.c.b16 %v9508, %v9506
    %v9547 = vpack.c.b16 %v9511, %v9509
    %v9548 = vpack.c.b16 %v9512, %v9510
    %v9549 = vpack.c.b16 %v9515, %v9513
    %v9550 = vpack.c.b16 %v9516, %v9514
    %v9551 = vpack.c.b16 %v9519, %v9517
    %v9552 = vpack.c.b16 %v9520, %v9518
    %9585 = vmatpush.bf16.msra.mxu0 %v9535
    %9586 = vmatpush.bf16.msra.mxu0 %v9533
    %9587 = vmatpush.bf16.msra.mxu0 %v9531
    %9588 = vmatpush.bf16.msra.mxu0 %v9529
    %9589 = vmatpush.bf16.msra.mxu0 %v9527
    %9590 = vmatpush.bf16.msra.mxu0 %v9525
    %9591 = vmatpush.bf16.msra.mxu0 %v9523
    %9592 = vmatpush.bf16.msra.mxu0 %v9521
    %9593 = vmatmul.bf16.gmra.mxu0 %v8454
    %v9594 = vpop.f32.mrf.mxu0
    %v9595 = vadd.f32 0.0, %v9594
    %v9596 = vpop.f32.mrf.mxu0
    %v9597 = vadd.f32 0.0, %v9596
    %9598 = vmatmul.bf16.gmra.mxu0 %v8456
    %v9599 = vpop.f32.mrf.mxu0
    %v9600 = vadd.f32 0.0, %v9599
    %v9601 = vpop.f32.mrf.mxu0
    %v9602 = vadd.f32 0.0, %v9601
    %9603 = vmatmul.bf16.gmra.mxu0 %v8458
    %v9604 = vpop.f32.mrf.mxu0
    %v9605 = vadd.f32 0.0, %v9604
    %v9606 = vpop.f32.mrf.mxu0
    %v9607 = vadd.f32 0.0, %v9606
    %9608 = vmatmul.bf16.gmra.mxu0 %v8460
    %v9609 = vpop.f32.mrf.mxu0
    %v9610 = vadd.f32 0.0, %v9609
    %v9611 = vpop.f32.mrf.mxu0
    %v9612 = vadd.f32 0.0, %v9611
    %9613 = vmatmul.bf16.gmra.mxu0 %v8462
    %v9614 = vpop.f32.mrf.mxu0
    %v9615 = vadd.f32 0.0, %v9614
    %v9616 = vpop.f32.mrf.mxu0
    %v9617 = vadd.f32 0.0, %v9616
    %9618 = vmatmul.bf16.gmra.mxu0 %v8464
    %v9619 = vpop.f32.mrf.mxu0
    %v9620 = vadd.f32 0.0, %v9619
    %v9621 = vpop.f32.mrf.mxu0
    %v9622 = vadd.f32 0.0, %v9621
    %9623 = vmatmul.bf16.gmra.mxu0 %v8466
    %v9624 = vpop.f32.mrf.mxu0
    %v9625 = vadd.f32 0.0, %v9624
    %v9626 = vpop.f32.mrf.mxu0
    %v9627 = vadd.f32 0.0, %v9626
    %9628 = vmatmul.bf16.gmra.mxu0 %v8468
    %v9629 = vpop.f32.mrf.mxu0
    %v9630 = vadd.f32 0.0, %v9629
    %v9631 = vpop.f32.mrf.mxu0
    %v9632 = vadd.f32 0.0, %v9631
    %9633 = vmatmul.bf16.gmra.mxu0 %v8470
    %v9634 = vpop.f32.mrf.mxu0
    %v9635 = vadd.f32 0.0, %v9634
    %v9636 = vpop.f32.mrf.mxu0
    %v9637 = vadd.f32 0.0, %v9636
    %9638 = vmatmul.bf16.gmra.mxu0 %v8472
    %v9639 = vpop.f32.mrf.mxu0
    %v9640 = vadd.f32 0.0, %v9639
    %v9641 = vpop.f32.mrf.mxu0
    %v9642 = vadd.f32 0.0, %v9641
    %9643 = vmatmul.bf16.gmra.mxu0 %v8474
    %v9644 = vpop.f32.mrf.mxu0
    %v9645 = vadd.f32 0.0, %v9644
    %v9646 = vpop.f32.mrf.mxu0
    %v9647 = vadd.f32 0.0, %v9646
    %9648 = vmatmul.bf16.gmra.mxu0 %v9421
    %v9649 = vpop.f32.mrf.mxu0
    %v9650 = vadd.f32 0.0, %v9649
    %v9651 = vpop.f32.mrf.mxu0
    %v9652 = vadd.f32 0.0, %v9651
    %9653 = vdwg.mxu0
    %9654 = vmatpush.bf16.msra.mxu0 %v9551
    %9655 = vmatpush.bf16.msra.mxu0 %v9549
    %9656 = vmatpush.bf16.msra.mxu0 %v9547
    %9657 = vmatpush.bf16.msra.mxu0 %v9545
    %9658 = vmatpush.bf16.msra.mxu0 %v9543
    %9659 = vmatpush.bf16.msra.mxu0 %v9541
    %9660 = vmatpush.bf16.msra.mxu0 %v9539
    %9661 = vmatpush.bf16.msra.mxu0 %v9537
    %9662 = vmatmul.bf16.gmra.mxu0 %v8455
    %v9663 = vpop.f32.mrf.mxu0
    %v9664 = vadd.f32 %v9595, %v9663
    %v9665 = vpop.f32.mrf.mxu0
    %v9666 = vadd.f32 %v9597, %v9665
    %9667 = vmatmul.bf16.gmra.mxu0 %v8457
    %v9668 = vpop.f32.mrf.mxu0
    %v9669 = vadd.f32 %v9600, %v9668
    %v9670 = vpop.f32.mrf.mxu0
    %v9671 = vadd.f32 %v9602, %v9670
    %9672 = vmatmul.bf16.gmra.mxu0 %v8459
    %v9673 = vpop.f32.mrf.mxu0
    %v9674 = vadd.f32 %v9605, %v9673
    %v9675 = vpop.f32.mrf.mxu0
    %v9676 = vadd.f32 %v9607, %v9675
    %9677 = vmatmul.bf16.gmra.mxu0 %v8461
    %v9678 = vpop.f32.mrf.mxu0
    %v9679 = vadd.f32 %v9610, %v9678
    %v9680 = vpop.f32.mrf.mxu0
    %v9681 = vadd.f32 %v9612, %v9680
    %9682 = vmatmul.bf16.gmra.mxu0 %v8463
    %v9683 = vpop.f32.mrf.mxu0
    %v9684 = vadd.f32 %v9615, %v9683
    %v9685 = vpop.f32.mrf.mxu0
    %v9686 = vadd.f32 %v9617, %v9685
    %9687 = vmatmul.bf16.gmra.mxu0 %v8465
    %v9688 = vpop.f32.mrf.mxu0
    %v9689 = vadd.f32 %v9620, %v9688
    %v9690 = vpop.f32.mrf.mxu0
    %v9691 = vadd.f32 %v9622, %v9690
    %9692 = vmatmul.bf16.gmra.mxu0 %v8467
    %v9693 = vpop.f32.mrf.mxu0
    %v9694 = vadd.f32 %v9625, %v9693
    %v9695 = vpop.f32.mrf.mxu0
    %v9696 = vadd.f32 %v9627, %v9695
    %9697 = vmatmul.bf16.gmra.mxu0 %v8469
    %v9698 = vpop.f32.mrf.mxu0
    %v9699 = vadd.f32 %v9630, %v9698
    %v9700 = vpop.f32.mrf.mxu0
    %v9701 = vadd.f32 %v9632, %v9700
    %9702 = vmatmul.bf16.gmra.mxu0 %v8471
    %v9703 = vpop.f32.mrf.mxu0
    %v9704 = vadd.f32 %v9635, %v9703
    %v9705 = vpop.f32.mrf.mxu0
    %v9706 = vadd.f32 %v9637, %v9705
    %9707 = vmatmul.bf16.gmra.mxu0 %v8473
    %v9708 = vpop.f32.mrf.mxu0
    %v9709 = vadd.f32 %v9640, %v9708
    %v9710 = vpop.f32.mrf.mxu0
    %v9711 = vadd.f32 %v9642, %v9710
    %9712 = vmatmul.bf16.gmra.mxu0 %v8475
    %v9713 = vpop.f32.mrf.mxu0
    %v9714 = vadd.f32 %v9645, %v9713
    %v9715 = vpop.f32.mrf.mxu0
    %v9716 = vadd.f32 %v9647, %v9715
    %9717 = vmatmul.bf16.gmra.mxu0 %v9422
    %v9718 = vpop.f32.mrf.mxu0
    %v9719 = vadd.f32 %v9650, %v9718
    %v9720 = vpop.f32.mrf.mxu0
    %v9721 = vadd.f32 %v9652, %v9720
    %9722 = vdwg.mxu0
    %9723 = vmatpush.bf16.msra.mxu0 %v9536
    %9724 = vmatpush.bf16.msra.mxu0 %v9534
    %9725 = vmatpush.bf16.msra.mxu0 %v9532
    %9726 = vmatpush.bf16.msra.mxu0 %v9530
    %9727 = vmatpush.bf16.msra.mxu0 %v9528
    %9728 = vmatpush.bf16.msra.mxu0 %v9526
    %9729 = vmatpush.bf16.msra.mxu0 %v9524
    %9730 = vmatpush.bf16.msra.mxu0 %v9522
    %9731 = vmatmul.bf16.gmra.mxu0 %v8454
    %v9732 = vpop.f32.mrf.mxu0
    %v9733 = vadd.f32 0.0, %v9732
    %v9734 = vpop.f32.mrf.mxu0
    %v9735 = vadd.f32 0.0, %v9734
    %9736 = vmatmul.bf16.gmra.mxu0 %v8456
    %v9737 = vpop.f32.mrf.mxu0
    %v9738 = vadd.f32 0.0, %v9737
    %v9739 = vpop.f32.mrf.mxu0
    %v9740 = vadd.f32 0.0, %v9739
    %9741 = vmatmul.bf16.gmra.mxu0 %v8458
    %v9742 = vpop.f32.mrf.mxu0
    %v9743 = vadd.f32 0.0, %v9742
    %v9744 = vpop.f32.mrf.mxu0
    %v9745 = vadd.f32 0.0, %v9744
    %9746 = vmatmul.bf16.gmra.mxu0 %v8460
    %v9747 = vpop.f32.mrf.mxu0
    %v9748 = vadd.f32 0.0, %v9747
    %v9749 = vpop.f32.mrf.mxu0
    %v9750 = vadd.f32 0.0, %v9749
    %9751 = vmatmul.bf16.gmra.mxu0 %v8462
    %v9752 = vpop.f32.mrf.mxu0
    %v9753 = vadd.f32 0.0, %v9752
    %v9754 = vpop.f32.mrf.mxu0
    %v9755 = vadd.f32 0.0, %v9754
    %9756 = vmatmul.bf16.gmra.mxu0 %v8464
    %v9757 = vpop.f32.mrf.mxu0
    %v9758 = vadd.f32 0.0, %v9757
    %v9759 = vpop.f32.mrf.mxu0
    %v9760 = vadd.f32 0.0, %v9759
    %9761 = vmatmul.bf16.gmra.mxu0 %v8466
    %v9762 = vpop.f32.mrf.mxu0
    %v9763 = vadd.f32 0.0, %v9762
    %v9764 = vpop.f32.mrf.mxu0
    %v9765 = vadd.f32 0.0, %v9764
    %9766 = vmatmul.bf16.gmra.mxu0 %v8468
    %v9767 = vpop.f32.mrf.mxu0
    %v9768 = vadd.f32 0.0, %v9767
    %v9769 = vpop.f32.mrf.mxu0
    %v9770 = vadd.f32 0.0, %v9769
    %9771 = vmatmul.bf16.gmra.mxu0 %v8470
    %v9772 = vpop.f32.mrf.mxu0
    %v9773 = vadd.f32 0.0, %v9772
    %v9774 = vpop.f32.mrf.mxu0
    %v9775 = vadd.f32 0.0, %v9774
    %9776 = vmatmul.bf16.gmra.mxu0 %v8472
    %v9777 = vpop.f32.mrf.mxu0
    %v9778 = vadd.f32 0.0, %v9777
    %v9779 = vpop.f32.mrf.mxu0
    %v9780 = vadd.f32 0.0, %v9779
    %9781 = vmatmul.bf16.gmra.mxu0 %v8474
    %v9782 = vpop.f32.mrf.mxu0
    %v9783 = vadd.f32 0.0, %v9782
    %v9784 = vpop.f32.mrf.mxu0
    %v9785 = vadd.f32 0.0, %v9784
    %9786 = vmatmul.bf16.gmra.mxu0 %v9421
    %v9787 = vpop.f32.mrf.mxu0
    %v9788 = vadd.f32 0.0, %v9787
    %v9789 = vpop.f32.mrf.mxu0
    %v9790 = vadd.f32 0.0, %v9789
    %9791 = vdwg.mxu0
    %9792 = vmatpush.bf16.msra.mxu0 %v9552
    %9793 = vmatpush.bf16.msra.mxu0 %v9550
    %9794 = vmatpush.bf16.msra.mxu0 %v9548
    %9795 = vmatpush.bf16.msra.mxu0 %v9546
    %9796 = vmatpush.bf16.msra.mxu0 %v9544
    %9797 = vmatpush.bf16.msra.mxu0 %v9542
    %9798 = vmatpush.bf16.msra.mxu0 %v9540
    %9799 = vmatpush.bf16.msra.mxu0 %v9538
    %9800 = vmatmul.bf16.gmra.mxu0 %v8455
    %v9801 = vpop.f32.mrf.mxu0
    %v9802 = vadd.f32 %v9733, %v9801
    %v9803 = vpop.f32.mrf.mxu0
    %v9804 = vadd.f32 %v9735, %v9803
    %9805 = vmatmul.bf16.gmra.mxu0 %v8457
    %v9806 = vpop.f32.mrf.mxu0
    %v9807 = vadd.f32 %v9738, %v9806
    %v9808 = vpop.f32.mrf.mxu0
    %v9809 = vadd.f32 %v9740, %v9808
    %9810 = vmatmul.bf16.gmra.mxu0 %v8459
    %v9811 = vpop.f32.mrf.mxu0
    %v9812 = vadd.f32 %v9743, %v9811
    %v9813 = vpop.f32.mrf.mxu0
    %v9814 = vadd.f32 %v9745, %v9813
    %9815 = vmatmul.bf16.gmra.mxu0 %v8461
    %v9816 = vpop.f32.mrf.mxu0
    %v9817 = vadd.f32 %v9748, %v9816
    %v9818 = vpop.f32.mrf.mxu0
    %v9819 = vadd.f32 %v9750, %v9818
    %9820 = vmatmul.bf16.gmra.mxu0 %v8463
    %v9821 = vpop.f32.mrf.mxu0
    %v9822 = vadd.f32 %v9753, %v9821
    %v9823 = vpop.f32.mrf.mxu0
    %v9824 = vadd.f32 %v9755, %v9823
    %9825 = vmatmul.bf16.gmra.mxu0 %v8465
    %v9826 = vpop.f32.mrf.mxu0
    %v9827 = vadd.f32 %v9758, %v9826
    %v9828 = vpop.f32.mrf.mxu0
    %v9829 = vadd.f32 %v9760, %v9828
    %9830 = vmatmul.bf16.gmra.mxu0 %v8467
    %v9831 = vpop.f32.mrf.mxu0
    %v9832 = vadd.f32 %v9763, %v9831
    %v9833 = vpop.f32.mrf.mxu0
    %v9834 = vadd.f32 %v9765, %v9833
    %9835 = vmatmul.bf16.gmra.mxu0 %v8469
    %v9836 = vpop.f32.mrf.mxu0
    %v9837 = vadd.f32 %v9768, %v9836
    %v9838 = vpop.f32.mrf.mxu0
    %v9839 = vadd.f32 %v9770, %v9838
    %9840 = vmatmul.bf16.gmra.mxu0 %v8471
    %v9841 = vpop.f32.mrf.mxu0
    %v9842 = vadd.f32 %v9773, %v9841
    %v9843 = vpop.f32.mrf.mxu0
    %v9844 = vadd.f32 %v9775, %v9843
    %9845 = vmatmul.bf16.gmra.mxu0 %v8473
    %v9846 = vpop.f32.mrf.mxu0
    %v9847 = vadd.f32 %v9778, %v9846
    %v9848 = vpop.f32.mrf.mxu0
    %v9849 = vadd.f32 %v9780, %v9848
    %9850 = vmatmul.bf16.gmra.mxu0 %v8475
    %v9851 = vpop.f32.mrf.mxu0
    %v9852 = vadd.f32 %v9783, %v9851
    %v9853 = vpop.f32.mrf.mxu0
    %v9854 = vadd.f32 %v9785, %v9853
    %9855 = vmatmul.bf16.gmra.mxu0 %v9422
    %v9856 = vpop.f32.mrf.mxu0
    %v9857 = vadd.f32 %v9788, %v9856
    %v9858 = vpop.f32.mrf.mxu0
    %v9859 = vadd.f32 %v9790, %v9858
    %9860 = vdwg.mxu0
    %v9861 = vadd.f32 %v9185, %v9664
    %v9862 = vadd.f32 %v9323, %v9802
    %v9863 = vadd.f32 %v9187, %v9666
    %v9864 = vadd.f32 %v9325, %v9804
    %v9865 = vadd.f32 %v9190, %v9669
    %v9866 = vadd.f32 %v9328, %v9807
    %v9867 = vadd.f32 %v9192, %v9671
    %v9868 = vadd.f32 %v9330, %v9809
    %v9869 = vadd.f32 %v9195, %v9674
    %v9870 = vadd.f32 %v9333, %v9812
    %v9871 = vadd.f32 %v9197, %v9676
    %v9872 = vadd.f32 %v9335, %v9814
    %v9873 = vadd.f32 %v9200, %v9679
    %v9874 = vadd.f32 %v9338, %v9817
    %v9875 = vadd.f32 %v9202, %v9681
    %v9876 = vadd.f32 %v9340, %v9819
    %v9877 = vadd.f32 %v9205, %v9684
    %v9878 = vadd.f32 %v9343, %v9822
    %v9879 = vadd.f32 %v9207, %v9686
    %v9880 = vadd.f32 %v9345, %v9824
    %v9881 = vadd.f32 %v9210, %v9689
    %v9882 = vadd.f32 %v9348, %v9827
    %v9883 = vadd.f32 %v9212, %v9691
    %v9884 = vadd.f32 %v9350, %v9829
    %v9885 = vadd.f32 %v9215, %v9694
    %v9886 = vadd.f32 %v9353, %v9832
    %v9887 = vadd.f32 %v9217, %v9696
    %v9888 = vadd.f32 %v9355, %v9834
    %v9889 = vadd.f32 %v9220, %v9699
    %v9890 = vadd.f32 %v9358, %v9837
    %v9891 = vadd.f32 %v9222, %v9701
    %v9892 = vadd.f32 %v9360, %v9839
    %v9893 = vadd.f32 %v9225, %v9704
    %v9894 = vadd.f32 %v9363, %v9842
    %v9895 = vadd.f32 %v9227, %v9706
    %v9896 = vadd.f32 %v9365, %v9844
    %v9897 = vadd.f32 %v9230, %v9709
    %v9898 = vadd.f32 %v9368, %v9847
    %v9899 = vadd.f32 %v9232, %v9711
    %v9900 = vadd.f32 %v9370, %v9849
    %v9901 = vadd.f32 %v9235, %v9714
    %v9902 = vadd.f32 %v9373, %v9852
    %v9903 = vadd.f32 %v9237, %v9716
    %v9904 = vadd.f32 %v9375, %v9854
    %v9905 = vadd.f32 %v9240, %v9719
    %v9906 = vadd.f32 %v9378, %v9857
    %v9907 = vadd.f32 %v9242, %v9721
    %v9908 = vadd.f32 %v9380, %v9859
    %s9909 = scalar_lea.vmem [#allocation6], 768
    %v9910 = vld [vmem:[%s9909] sm:$0xff]
    %v9911 = vld [vmem:[%s9909 + $0x8] sm:$0xff]
    %v9912 = vld [vmem:[%s9909 + $0x10] sm:$0xff]
    %v9913 = vld [vmem:[%s9909 + $0x18] sm:$0xff]
    %v9914 = vld [vmem:[%s9909 + $0x20] sm:$0xff]
    %v9915 = vld [vmem:[%s9909 + $0x28] sm:$0xff]
    %v9916 = vld [vmem:[%s9909 + $0x30] sm:$0xff]
    %v9917 = vld [vmem:[%s9909 + $0x38] sm:$0xff]
    %v9918 = vld [vmem:[%s9909 + $0x40] sm:$0xff]
    %v9919 = vld [vmem:[%s9909 + $0x48] sm:$0xff]
    %v9920 = vld [vmem:[%s9909 + $0x50] sm:$0xff]
    %v9921 = vld [vmem:[%s9909 + $0x58] sm:$0xff]
    %v9922 = vld [vmem:[%s9909 + $0x60] sm:$0xff]
    %v9923 = vld [vmem:[%s9909 + $0x68] sm:$0xff]
    %v9924 = vld [vmem:[%s9909 + $0x70] sm:$0xff]
    %v9925 = vld [vmem:[%s9909 + $0x78] sm:$0xff]
    %v9926 = vld [vmem:[%s9909 + $0x80] sm:$0xff]
    %v9927 = vld [vmem:[%s9909 + $0x88] sm:$0xff]
    %v9928 = vld [vmem:[%s9909 + $0x90] sm:$0xff]
    %v9929 = vld [vmem:[%s9909 + $0x98] sm:$0xff]
    %v9930 = vld [vmem:[%s9909 + $0xa0] sm:$0xff]
    %v9931 = vld [vmem:[%s9909 + $0xa8] sm:$0xff]
    %v9932 = vld [vmem:[%s9909 + $0xb0] sm:$0xff]
    %v9933 = vld [vmem:[%s9909 + $0xb8] sm:$0xff]
    %v9934 = vld [vmem:[%s9909 + $0xc0] sm:$0xff]
    %v9935 = vld [vmem:[%s9909 + $0xc8] sm:$0xff]
    %v9936 = vld [vmem:[%s9909 + $0xd0] sm:$0xff]
    %v9937 = vld [vmem:[%s9909 + $0xd8] sm:$0xff]
    %v9938 = vld [vmem:[%s9909 + $0xe0] sm:$0xff]
    %v9939 = vld [vmem:[%s9909 + $0xe8] sm:$0xff]
    %v9940 = vld [vmem:[%s9909 + $0xf0] sm:$0xff]
    %v9941 = vld [vmem:[%s9909 + $0xf8] sm:$0xff]
    %v9944 = vunpack.c.l.b16 %v8311
    %v9945 = vunpack.c.h.b16 %v8311
    %v9946 = vunpack.c.l.b16 %v8312
    %v9947 = vunpack.c.h.b16 %v8312
    %v9948 = vpack.c.b16 %v9946, %v9944
    %v9949 = vpack.c.b16 %v9947, %v9945
    %v9984 = vunpack.c.l.b16 %v9910
    %v9985 = vunpack.c.h.b16 %v9910
    %v9986 = vunpack.c.l.b16 %v9911
    %v9987 = vunpack.c.h.b16 %v9911
    %v9988 = vunpack.c.l.b16 %v9912
    %v9989 = vunpack.c.h.b16 %v9912
    %v9990 = vunpack.c.l.b16 %v9913
    %v9991 = vunpack.c.h.b16 %v9913
    %v9992 = vunpack.c.l.b16 %v9914
    %v9993 = vunpack.c.h.b16 %v9914
    %v9994 = vunpack.c.l.b16 %v9915
    %v9995 = vunpack.c.h.b16 %v9915
    %v9996 = vunpack.c.l.b16 %v9916
    %v9997 = vunpack.c.h.b16 %v9916
    %v9998 = vunpack.c.l.b16 %v9917
    %v9999 = vunpack.c.h.b16 %v9917
    %v10000 = vunpack.c.l.b16 %v9918
    %v10001 = vunpack.c.h.b16 %v9918
    %v10002 = vunpack.c.l.b16 %v9919
    %v10003 = vunpack.c.h.b16 %v9919
    %v10004 = vunpack.c.l.b16 %v9920
    %v10005 = vunpack.c.h.b16 %v9920
    %v10006 = vunpack.c.l.b16 %v9921
    %v10007 = vunpack.c.h.b16 %v9921
    %v10008 = vunpack.c.l.b16 %v9922
    %v10009 = vunpack.c.h.b16 %v9922
    %v10010 = vunpack.c.l.b16 %v9923
    %v10011 = vunpack.c.h.b16 %v9923
    %v10012 = vunpack.c.l.b16 %v9924
    %v10013 = vunpack.c.h.b16 %v9924
    %v10014 = vunpack.c.l.b16 %v9925
    %v10015 = vunpack.c.h.b16 %v9925
    %v10016 = vunpack.c.l.b16 %v9926
    %v10017 = vunpack.c.h.b16 %v9926
    %v10018 = vunpack.c.l.b16 %v9927
    %v10019 = vunpack.c.h.b16 %v9927
    %v10020 = vunpack.c.l.b16 %v9928
    %v10021 = vunpack.c.h.b16 %v9928
    %v10022 = vunpack.c.l.b16 %v9929
    %v10023 = vunpack.c.h.b16 %v9929
    %v10024 = vunpack.c.l.b16 %v9930
    %v10025 = vunpack.c.h.b16 %v9930
    %v10026 = vunpack.c.l.b16 %v9931
    %v10027 = vunpack.c.h.b16 %v9931
    %v10028 = vunpack.c.l.b16 %v9932
    %v10029 = vunpack.c.h.b16 %v9932
    %v10030 = vunpack.c.l.b16 %v9933
    %v10031 = vunpack.c.h.b16 %v9933
    %v10032 = vunpack.c.l.b16 %v9934
    %v10033 = vunpack.c.h.b16 %v9934
    %v10034 = vunpack.c.l.b16 %v9935
    %v10035 = vunpack.c.h.b16 %v9935
    %v10036 = vunpack.c.l.b16 %v9936
    %v10037 = vunpack.c.h.b16 %v9936
    %v10038 = vunpack.c.l.b16 %v9937
    %v10039 = vunpack.c.h.b16 %v9937
    %v10040 = vunpack.c.l.b16 %v9938
    %v10041 = vunpack.c.h.b16 %v9938
    %v10042 = vunpack.c.l.b16 %v9939
    %v10043 = vunpack.c.h.b16 %v9939
    %v10044 = vunpack.c.l.b16 %v9940
    %v10045 = vunpack.c.h.b16 %v9940
    %v10046 = vunpack.c.l.b16 %v9941
    %v10047 = vunpack.c.h.b16 %v9941
    %v10048 = vpack.c.b16 %v9986, %v9984
    %v10049 = vpack.c.b16 %v9987, %v9985
    %v10050 = vpack.c.b16 %v9990, %v9988
    %v10051 = vpack.c.b16 %v9991, %v9989
    %v10052 = vpack.c.b16 %v9994, %v9992
    %v10053 = vpack.c.b16 %v9995, %v9993
    %v10054 = vpack.c.b16 %v9998, %v9996
    %v10055 = vpack.c.b16 %v9999, %v9997
    %v10056 = vpack.c.b16 %v10002, %v10000
    %v10057 = vpack.c.b16 %v10003, %v10001
    %v10058 = vpack.c.b16 %v10006, %v10004
    %v10059 = vpack.c.b16 %v10007, %v10005
    %v10060 = vpack.c.b16 %v10010, %v10008
    %v10061 = vpack.c.b16 %v10011, %v10009
    %v10062 = vpack.c.b16 %v10014, %v10012
    %v10063 = vpack.c.b16 %v10015, %v10013
    %v10064 = vpack.c.b16 %v10018, %v10016
    %v10065 = vpack.c.b16 %v10019, %v10017
    %v10066 = vpack.c.b16 %v10022, %v10020
    %v10067 = vpack.c.b16 %v10023, %v10021
    %v10068 = vpack.c.b16 %v10026, %v10024
    %v10069 = vpack.c.b16 %v10027, %v10025
    %v10070 = vpack.c.b16 %v10030, %v10028
    %v10071 = vpack.c.b16 %v10031, %v10029
    %v10072 = vpack.c.b16 %v10034, %v10032
    %v10073 = vpack.c.b16 %v10035, %v10033
    %v10074 = vpack.c.b16 %v10038, %v10036
    %v10075 = vpack.c.b16 %v10039, %v10037
    %v10076 = vpack.c.b16 %v10042, %v10040
    %v10077 = vpack.c.b16 %v10043, %v10041
    %v10078 = vpack.c.b16 %v10046, %v10044
    %v10079 = vpack.c.b16 %v10047, %v10045
    %10112 = vmatpush.bf16.msra.mxu0 %v10062
    %10113 = vmatpush.bf16.msra.mxu0 %v10060
    %10114 = vmatpush.bf16.msra.mxu0 %v10058
    %10115 = vmatpush.bf16.msra.mxu0 %v10056
    %10116 = vmatpush.bf16.msra.mxu0 %v10054
    %10117 = vmatpush.bf16.msra.mxu0 %v10052
    %10118 = vmatpush.bf16.msra.mxu0 %v10050
    %10119 = vmatpush.bf16.msra.mxu0 %v10048
    %10120 = vmatmul.bf16.gmra.mxu0 %v8456
    %v10121 = vpop.f32.mrf.mxu0
    %v10122 = vadd.f32 0.0, %v10121
    %v10123 = vpop.f32.mrf.mxu0
    %v10124 = vadd.f32 0.0, %v10123
    %10125 = vmatmul.bf16.gmra.mxu0 %v8458
    %v10126 = vpop.f32.mrf.mxu0
    %v10127 = vadd.f32 0.0, %v10126
    %v10128 = vpop.f32.mrf.mxu0
    %v10129 = vadd.f32 0.0, %v10128
    %10130 = vmatmul.bf16.gmra.mxu0 %v8460
    %v10131 = vpop.f32.mrf.mxu0
    %v10132 = vadd.f32 0.0, %v10131
    %v10133 = vpop.f32.mrf.mxu0
    %v10134 = vadd.f32 0.0, %v10133
    %10135 = vmatmul.bf16.gmra.mxu0 %v8462
    %v10136 = vpop.f32.mrf.mxu0
    %v10137 = vadd.f32 0.0, %v10136
    %v10138 = vpop.f32.mrf.mxu0
    %v10139 = vadd.f32 0.0, %v10138
    %10140 = vmatmul.bf16.gmra.mxu0 %v8464
    %v10141 = vpop.f32.mrf.mxu0
    %v10142 = vadd.f32 0.0, %v10141
    %v10143 = vpop.f32.mrf.mxu0
    %v10144 = vadd.f32 0.0, %v10143
    %10145 = vmatmul.bf16.gmra.mxu0 %v8466
    %v10146 = vpop.f32.mrf.mxu0
    %v10147 = vadd.f32 0.0, %v10146
    %v10148 = vpop.f32.mrf.mxu0
    %v10149 = vadd.f32 0.0, %v10148
    %10150 = vmatmul.bf16.gmra.mxu0 %v8468
    %v10151 = vpop.f32.mrf.mxu0
    %v10152 = vadd.f32 0.0, %v10151
    %v10153 = vpop.f32.mrf.mxu0
    %v10154 = vadd.f32 0.0, %v10153
    %10155 = vmatmul.bf16.gmra.mxu0 %v8470
    %v10156 = vpop.f32.mrf.mxu0
    %v10157 = vadd.f32 0.0, %v10156
    %v10158 = vpop.f32.mrf.mxu0
    %v10159 = vadd.f32 0.0, %v10158
    %10160 = vmatmul.bf16.gmra.mxu0 %v8472
    %v10161 = vpop.f32.mrf.mxu0
    %v10162 = vadd.f32 0.0, %v10161
    %v10163 = vpop.f32.mrf.mxu0
    %v10164 = vadd.f32 0.0, %v10163
    %10165 = vmatmul.bf16.gmra.mxu0 %v8474
    %v10166 = vpop.f32.mrf.mxu0
    %v10167 = vadd.f32 0.0, %v10166
    %v10168 = vpop.f32.mrf.mxu0
    %v10169 = vadd.f32 0.0, %v10168
    %10170 = vmatmul.bf16.gmra.mxu0 %v9421
    %v10171 = vpop.f32.mrf.mxu0
    %v10172 = vadd.f32 0.0, %v10171
    %v10173 = vpop.f32.mrf.mxu0
    %v10174 = vadd.f32 0.0, %v10173
    %10175 = vmatmul.bf16.gmra.mxu0 %v9948
    %v10176 = vpop.f32.mrf.mxu0
    %v10177 = vadd.f32 0.0, %v10176
    %v10178 = vpop.f32.mrf.mxu0
    %v10179 = vadd.f32 0.0, %v10178
    %10180 = vdwg.mxu0
    %10181 = vmatpush.bf16.msra.mxu0 %v10078
    %10182 = vmatpush.bf16.msra.mxu0 %v10076
    %10183 = vmatpush.bf16.msra.mxu0 %v10074
    %10184 = vmatpush.bf16.msra.mxu0 %v10072
    %10185 = vmatpush.bf16.msra.mxu0 %v10070
    %10186 = vmatpush.bf16.msra.mxu0 %v10068
    %10187 = vmatpush.bf16.msra.mxu0 %v10066
    %10188 = vmatpush.bf16.msra.mxu0 %v10064
    %10189 = vmatmul.bf16.gmra.mxu0 %v8457
    %v10190 = vpop.f32.mrf.mxu0
    %v10191 = vadd.f32 %v10122, %v10190
    %v10192 = vpop.f32.mrf.mxu0
    %v10193 = vadd.f32 %v10124, %v10192
    %10194 = vmatmul.bf16.gmra.mxu0 %v8459
    %v10195 = vpop.f32.mrf.mxu0
    %v10196 = vadd.f32 %v10127, %v10195
    %v10197 = vpop.f32.mrf.mxu0
    %v10198 = vadd.f32 %v10129, %v10197
    %10199 = vmatmul.bf16.gmra.mxu0 %v8461
    %v10200 = vpop.f32.mrf.mxu0
    %v10201 = vadd.f32 %v10132, %v10200
    %v10202 = vpop.f32.mrf.mxu0
    %v10203 = vadd.f32 %v10134, %v10202
    %10204 = vmatmul.bf16.gmra.mxu0 %v8463
    %v10205 = vpop.f32.mrf.mxu0
    %v10206 = vadd.f32 %v10137, %v10205
    %v10207 = vpop.f32.mrf.mxu0
    %v10208 = vadd.f32 %v10139, %v10207
    %10209 = vmatmul.bf16.gmra.mxu0 %v8465
    %v10210 = vpop.f32.mrf.mxu0
    %v10211 = vadd.f32 %v10142, %v10210
    %v10212 = vpop.f32.mrf.mxu0
    %v10213 = vadd.f32 %v10144, %v10212
    %10214 = vmatmul.bf16.gmra.mxu0 %v8467
    %v10215 = vpop.f32.mrf.mxu0
    %v10216 = vadd.f32 %v10147, %v10215
    %v10217 = vpop.f32.mrf.mxu0
    %v10218 = vadd.f32 %v10149, %v10217
    %10219 = vmatmul.bf16.gmra.mxu0 %v8469
    %v10220 = vpop.f32.mrf.mxu0
    %v10221 = vadd.f32 %v10152, %v10220
    %v10222 = vpop.f32.mrf.mxu0
    %v10223 = vadd.f32 %v10154, %v10222
    %10224 = vmatmul.bf16.gmra.mxu0 %v8471
    %v10225 = vpop.f32.mrf.mxu0
    %v10226 = vadd.f32 %v10157, %v10225
    %v10227 = vpop.f32.mrf.mxu0
    %v10228 = vadd.f32 %v10159, %v10227
    %10229 = vmatmul.bf16.gmra.mxu0 %v8473
    %v10230 = vpop.f32.mrf.mxu0
    %v10231 = vadd.f32 %v10162, %v10230
    %v10232 = vpop.f32.mrf.mxu0
    %v10233 = vadd.f32 %v10164, %v10232
    %10234 = vmatmul.bf16.gmra.mxu0 %v8475
    %v10235 = vpop.f32.mrf.mxu0
    %v10236 = vadd.f32 %v10167, %v10235
    %v10237 = vpop.f32.mrf.mxu0
    %v10238 = vadd.f32 %v10169, %v10237
    %10239 = vmatmul.bf16.gmra.mxu0 %v9422
    %v10240 = vpop.f32.mrf.mxu0
    %v10241 = vadd.f32 %v10172, %v10240
    %v10242 = vpop.f32.mrf.mxu0
    %v10243 = vadd.f32 %v10174, %v10242
    %10244 = vmatmul.bf16.gmra.mxu0 %v9949
    %v10245 = vpop.f32.mrf.mxu0
    %v10246 = vadd.f32 %v10177, %v10245
    %v10247 = vpop.f32.mrf.mxu0
    %v10248 = vadd.f32 %v10179, %v10247
    %10249 = vdwg.mxu0
    %10250 = vmatpush.bf16.msra.mxu0 %v10063
    %10251 = vmatpush.bf16.msra.mxu0 %v10061
    %10252 = vmatpush.bf16.msra.mxu0 %v10059
    %10253 = vmatpush.bf16.msra.mxu0 %v10057
    %10254 = vmatpush.bf16.msra.mxu0 %v10055
    %10255 = vmatpush.bf16.msra.mxu0 %v10053
    %10256 = vmatpush.bf16.msra.mxu0 %v10051
    %10257 = vmatpush.bf16.msra.mxu0 %v10049
    %10258 = vmatmul.bf16.gmra.mxu0 %v8456
    %v10259 = vpop.f32.mrf.mxu0
    %v10260 = vadd.f32 0.0, %v10259
    %v10261 = vpop.f32.mrf.mxu0
    %v10262 = vadd.f32 0.0, %v10261
    %10263 = vmatmul.bf16.gmra.mxu0 %v8458
    %v10264 = vpop.f32.mrf.mxu0
    %v10265 = vadd.f32 0.0, %v10264
    %v10266 = vpop.f32.mrf.mxu0
    %v10267 = vadd.f32 0.0, %v10266
    %10268 = vmatmul.bf16.gmra.mxu0 %v8460
    %v10269 = vpop.f32.mrf.mxu0
    %v10270 = vadd.f32 0.0, %v10269
    %v10271 = vpop.f32.mrf.mxu0
    %v10272 = vadd.f32 0.0, %v10271
    %10273 = vmatmul.bf16.gmra.mxu0 %v8462
    %v10274 = vpop.f32.mrf.mxu0
    %v10275 = vadd.f32 0.0, %v10274
    %v10276 = vpop.f32.mrf.mxu0
    %v10277 = vadd.f32 0.0, %v10276
    %10278 = vmatmul.bf16.gmra.mxu0 %v8464
    %v10279 = vpop.f32.mrf.mxu0
    %v10280 = vadd.f32 0.0, %v10279
    %v10281 = vpop.f32.mrf.mxu0
    %v10282 = vadd.f32 0.0, %v10281
    %10283 = vmatmul.bf16.gmra.mxu0 %v8466
    %v10284 = vpop.f32.mrf.mxu0
    %v10285 = vadd.f32 0.0, %v10284
    %v10286 = vpop.f32.mrf.mxu0
    %v10287 = vadd.f32 0.0, %v10286
    %10288 = vmatmul.bf16.gmra.mxu0 %v8468
    %v10289 = vpop.f32.mrf.mxu0
    %v10290 = vadd.f32 0.0, %v10289
    %v10291 = vpop.f32.mrf.mxu0
    %v10292 = vadd.f32 0.0, %v10291
    %10293 = vmatmul.bf16.gmra.mxu0 %v8470
    %v10294 = vpop.f32.mrf.mxu0
    %v10295 = vadd.f32 0.0, %v10294
    %v10296 = vpop.f32.mrf.mxu0
    %v10297 = vadd.f32 0.0, %v10296
    %10298 = vmatmul.bf16.gmra.mxu0 %v8472
    %v10299 = vpop.f32.mrf.mxu0
    %v10300 = vadd.f32 0.0, %v10299
    %v10301 = vpop.f32.mrf.mxu0
    %v10302 = vadd.f32 0.0, %v10301
    %10303 = vmatmul.bf16.gmra.mxu0 %v8474
    %v10304 = vpop.f32.mrf.mxu0
    %v10305 = vadd.f32 0.0, %v10304
    %v10306 = vpop.f32.mrf.mxu0
    %v10307 = vadd.f32 0.0, %v10306
    %10308 = vmatmul.bf16.gmra.mxu0 %v9421
    %v10309 = vpop.f32.mrf.mxu0
    %v10310 = vadd.f32 0.0, %v10309
    %v10311 = vpop.f32.mrf.mxu0
    %v10312 = vadd.f32 0.0, %v10311
    %10313 = vmatmul.bf16.gmra.mxu0 %v9948
    %v10314 = vpop.f32.mrf.mxu0
    %v10315 = vadd.f32 0.0, %v10314
    %v10316 = vpop.f32.mrf.mxu0
    %v10317 = vadd.f32 0.0, %v10316
    %10318 = vdwg.mxu0
    %10319 = vmatpush.bf16.msra.mxu0 %v10079
    %10320 = vmatpush.bf16.msra.mxu0 %v10077
    %10321 = vmatpush.bf16.msra.mxu0 %v10075
    %10322 = vmatpush.bf16.msra.mxu0 %v10073
    %10323 = vmatpush.bf16.msra.mxu0 %v10071
    %10324 = vmatpush.bf16.msra.mxu0 %v10069
    %10325 = vmatpush.bf16.msra.mxu0 %v10067
    %10326 = vmatpush.bf16.msra.mxu0 %v10065
    %10327 = vmatmul.bf16.gmra.mxu0 %v8457
    %v10328 = vpop.f32.mrf.mxu0
    %v10329 = vadd.f32 %v10260, %v10328
    %v10330 = vpop.f32.mrf.mxu0
    %v10331 = vadd.f32 %v10262, %v10330
    %10332 = vmatmul.bf16.gmra.mxu0 %v8459
    %v10333 = vpop.f32.mrf.mxu0
    %v10334 = vadd.f32 %v10265, %v10333
    %v10335 = vpop.f32.mrf.mxu0
    %v10336 = vadd.f32 %v10267, %v10335
    %10337 = vmatmul.bf16.gmra.mxu0 %v8461
    %v10338 = vpop.f32.mrf.mxu0
    %v10339 = vadd.f32 %v10270, %v10338
    %v10340 = vpop.f32.mrf.mxu0
    %v10341 = vadd.f32 %v10272, %v10340
    %10342 = vmatmul.bf16.gmra.mxu0 %v8463
    %v10343 = vpop.f32.mrf.mxu0
    %v10344 = vadd.f32 %v10275, %v10343
    %v10345 = vpop.f32.mrf.mxu0
    %v10346 = vadd.f32 %v10277, %v10345
    %10347 = vmatmul.bf16.gmra.mxu0 %v8465
    %v10348 = vpop.f32.mrf.mxu0
    %v10349 = vadd.f32 %v10280, %v10348
    %v10350 = vpop.f32.mrf.mxu0
    %v10351 = vadd.f32 %v10282, %v10350
    %10352 = vmatmul.bf16.gmra.mxu0 %v8467
    %v10353 = vpop.f32.mrf.mxu0
    %v10354 = vadd.f32 %v10285, %v10353
    %v10355 = vpop.f32.mrf.mxu0
    %v10356 = vadd.f32 %v10287, %v10355
    %10357 = vmatmul.bf16.gmra.mxu0 %v8469
    %v10358 = vpop.f32.mrf.mxu0
    %v10359 = vadd.f32 %v10290, %v10358
    %v10360 = vpop.f32.mrf.mxu0
    %v10361 = vadd.f32 %v10292, %v10360
    %10362 = vmatmul.bf16.gmra.mxu0 %v8471
    %v10363 = vpop.f32.mrf.mxu0
    %v10364 = vadd.f32 %v10295, %v10363
    %v10365 = vpop.f32.mrf.mxu0
    %v10366 = vadd.f32 %v10297, %v10365
    %10367 = vmatmul.bf16.gmra.mxu0 %v8473
    %v10368 = vpop.f32.mrf.mxu0
    %v10369 = vadd.f32 %v10300, %v10368
    %v10370 = vpop.f32.mrf.mxu0
    %v10371 = vadd.f32 %v10302, %v10370
    %10372 = vmatmul.bf16.gmra.mxu0 %v8475
    %v10373 = vpop.f32.mrf.mxu0
    %v10374 = vadd.f32 %v10305, %v10373
    %v10375 = vpop.f32.mrf.mxu0
    %v10376 = vadd.f32 %v10307, %v10375
    %10377 = vmatmul.bf16.gmra.mxu0 %v9422
    %v10378 = vpop.f32.mrf.mxu0
    %v10379 = vadd.f32 %v10310, %v10378
    %v10380 = vpop.f32.mrf.mxu0
    %v10381 = vadd.f32 %v10312, %v10380
    %10382 = vmatmul.bf16.gmra.mxu0 %v9949
    %v10383 = vpop.f32.mrf.mxu0
    %v10384 = vadd.f32 %v10315, %v10383
    %v10385 = vpop.f32.mrf.mxu0
    %v10386 = vadd.f32 %v10317, %v10385
    %10387 = vdwg.mxu0
    %v10388 = vadd.f32 %v9861, %v10191
    %v10389 = vadd.f32 %v9862, %v10329
    %v10390 = vadd.f32 %v9863, %v10193
    %v10391 = vadd.f32 %v9864, %v10331
    %v10392 = vadd.f32 %v9865, %v10196
    %v10393 = vadd.f32 %v9866, %v10334
    %v10394 = vadd.f32 %v9867, %v10198
    %v10395 = vadd.f32 %v9868, %v10336
    %v10396 = vadd.f32 %v9869, %v10201
    %v10397 = vadd.f32 %v9870, %v10339
    %v10398 = vadd.f32 %v9871, %v10203
    %v10399 = vadd.f32 %v9872, %v10341
    %v10400 = vadd.f32 %v9873, %v10206
    %v10401 = vadd.f32 %v9874, %v10344
    %v10402 = vadd.f32 %v9875, %v10208
    %v10403 = vadd.f32 %v9876, %v10346
    %v10404 = vadd.f32 %v9877, %v10211
    %v10405 = vadd.f32 %v9878, %v10349
    %v10406 = vadd.f32 %v9879, %v10213
    %v10407 = vadd.f32 %v9880, %v10351
    %v10408 = vadd.f32 %v9881, %v10216
    %v10409 = vadd.f32 %v9882, %v10354
    %v10410 = vadd.f32 %v9883, %v10218
    %v10411 = vadd.f32 %v9884, %v10356
    %v10412 = vadd.f32 %v9885, %v10221
    %v10413 = vadd.f32 %v9886, %v10359
    %v10414 = vadd.f32 %v9887, %v10223
    %v10415 = vadd.f32 %v9888, %v10361
    %v10416 = vadd.f32 %v9889, %v10226
    %v10417 = vadd.f32 %v9890, %v10364
    %v10418 = vadd.f32 %v9891, %v10228
    %v10419 = vadd.f32 %v9892, %v10366
    %v10420 = vadd.f32 %v9893, %v10231
    %v10421 = vadd.f32 %v9894, %v10369
    %v10422 = vadd.f32 %v9895, %v10233
    %v10423 = vadd.f32 %v9896, %v10371
    %v10424 = vadd.f32 %v9897, %v10236
    %v10425 = vadd.f32 %v9898, %v10374
    %v10426 = vadd.f32 %v9899, %v10238
    %v10427 = vadd.f32 %v9900, %v10376
    %v10428 = vadd.f32 %v9901, %v10241
    %v10429 = vadd.f32 %v9902, %v10379
    %v10430 = vadd.f32 %v9903, %v10243
    %v10431 = vadd.f32 %v9904, %v10381
    %v10432 = vadd.f32 %v9905, %v10246
    %v10433 = vadd.f32 %v9906, %v10384
    %v10434 = vadd.f32 %v9907, %v10248
    %v10435 = vadd.f32 %v9908, %v10386
    %s10436 = scalar_lea.vmem [#allocation6], 1024
    %v10437 = vld [vmem:[%s10436] sm:$0xff]
    %v10438 = vld [vmem:[%s10436 + $0x8] sm:$0xff]
    %v10439 = vld [vmem:[%s10436 + $0x10] sm:$0xff]
    %v10440 = vld [vmem:[%s10436 + $0x18] sm:$0xff]
    %v10441 = vld [vmem:[%s10436 + $0x20] sm:$0xff]
    %v10442 = vld [vmem:[%s10436 + $0x28] sm:$0xff]
    %v10443 = vld [vmem:[%s10436 + $0x30] sm:$0xff]
    %v10444 = vld [vmem:[%s10436 + $0x38] sm:$0xff]
    %v10445 = vld [vmem:[%s10436 + $0x40] sm:$0xff]
    %v10446 = vld [vmem:[%s10436 + $0x48] sm:$0xff]
    %v10447 = vld [vmem:[%s10436 + $0x50] sm:$0xff]
    %v10448 = vld [vmem:[%s10436 + $0x58] sm:$0xff]
    %v10449 = vld [vmem:[%s10436 + $0x60] sm:$0xff]
    %v10450 = vld [vmem:[%s10436 + $0x68] sm:$0xff]
    %v10451 = vld [vmem:[%s10436 + $0x70] sm:$0xff]
    %v10452 = vld [vmem:[%s10436 + $0x78] sm:$0xff]
    %v10453 = vld [vmem:[%s10436 + $0x80] sm:$0xff]
    %v10454 = vld [vmem:[%s10436 + $0x88] sm:$0xff]
    %v10455 = vld [vmem:[%s10436 + $0x90] sm:$0xff]
    %v10456 = vld [vmem:[%s10436 + $0x98] sm:$0xff]
    %v10457 = vld [vmem:[%s10436 + $0xa0] sm:$0xff]
    %v10458 = vld [vmem:[%s10436 + $0xa8] sm:$0xff]
    %v10459 = vld [vmem:[%s10436 + $0xb0] sm:$0xff]
    %v10460 = vld [vmem:[%s10436 + $0xb8] sm:$0xff]
    %v10461 = vld [vmem:[%s10436 + $0xc0] sm:$0xff]
    %v10462 = vld [vmem:[%s10436 + $0xc8] sm:$0xff]
    %v10463 = vld [vmem:[%s10436 + $0xd0] sm:$0xff]
    %v10464 = vld [vmem:[%s10436 + $0xd8] sm:$0xff]
    %v10465 = vld [vmem:[%s10436 + $0xe0] sm:$0xff]
    %v10466 = vld [vmem:[%s10436 + $0xe8] sm:$0xff]
    %v10467 = vld [vmem:[%s10436 + $0xf0] sm:$0xff]
    %v10468 = vld [vmem:[%s10436 + $0xf8] sm:$0xff]
    %v10471 = vunpack.c.l.b16 %v8313
    %v10472 = vunpack.c.h.b16 %v8313
    %v10473 = vunpack.c.l.b16 %v8314
    %v10474 = vunpack.c.h.b16 %v8314
    %v10475 = vpack.c.b16 %v10473, %v10471
    %v10476 = vpack.c.b16 %v10474, %v10472
    %v10511 = vunpack.c.l.b16 %v10437
    %v10512 = vunpack.c.h.b16 %v10437
    %v10513 = vunpack.c.l.b16 %v10438
    %v10514 = vunpack.c.h.b16 %v10438
    %v10515 = vunpack.c.l.b16 %v10439
    %v10516 = vunpack.c.h.b16 %v10439
    %v10517 = vunpack.c.l.b16 %v10440
    %v10518 = vunpack.c.h.b16 %v10440
    %v10519 = vunpack.c.l.b16 %v10441
    %v10520 = vunpack.c.h.b16 %v10441
    %v10521 = vunpack.c.l.b16 %v10442
    %v10522 = vunpack.c.h.b16 %v10442
    %v10523 = vunpack.c.l.b16 %v10443
    %v10524 = vunpack.c.h.b16 %v10443
    %v10525 = vunpack.c.l.b16 %v10444
    %v10526 = vunpack.c.h.b16 %v10444
    %v10527 = vunpack.c.l.b16 %v10445
    %v10528 = vunpack.c.h.b16 %v10445
    %v10529 = vunpack.c.l.b16 %v10446
    %v10530 = vunpack.c.h.b16 %v10446
    %v10531 = vunpack.c.l.b16 %v10447
    %v10532 = vunpack.c.h.b16 %v10447
    %v10533 = vunpack.c.l.b16 %v10448
    %v10534 = vunpack.c.h.b16 %v10448
    %v10535 = vunpack.c.l.b16 %v10449
    %v10536 = vunpack.c.h.b16 %v10449
    %v10537 = vunpack.c.l.b16 %v10450
    %v10538 = vunpack.c.h.b16 %v10450
    %v10539 = vunpack.c.l.b16 %v10451
    %v10540 = vunpack.c.h.b16 %v10451
    %v10541 = vunpack.c.l.b16 %v10452
    %v10542 = vunpack.c.h.b16 %v10452
    %v10543 = vunpack.c.l.b16 %v10453
    %v10544 = vunpack.c.h.b16 %v10453
    %v10545 = vunpack.c.l.b16 %v10454
    %v10546 = vunpack.c.h.b16 %v10454
    %v10547 = vunpack.c.l.b16 %v10455
    %v10548 = vunpack.c.h.b16 %v10455
    %v10549 = vunpack.c.l.b16 %v10456
    %v10550 = vunpack.c.h.b16 %v10456
    %v10551 = vunpack.c.l.b16 %v10457
    %v10552 = vunpack.c.h.b16 %v10457
    %v10553 = vunpack.c.l.b16 %v10458
    %v10554 = vunpack.c.h.b16 %v10458
    %v10555 = vunpack.c.l.b16 %v10459
    %v10556 = vunpack.c.h.b16 %v10459
    %v10557 = vunpack.c.l.b16 %v10460
    %v10558 = vunpack.c.h.b16 %v10460
    %v10559 = vunpack.c.l.b16 %v10461
    %v10560 = vunpack.c.h.b16 %v10461
    %v10561 = vunpack.c.l.b16 %v10462
    %v10562 = vunpack.c.h.b16 %v10462
    %v10563 = vunpack.c.l.b16 %v10463
    %v10564 = vunpack.c.h.b16 %v10463
    %v10565 = vunpack.c.l.b16 %v10464
    %v10566 = vunpack.c.h.b16 %v10464
    %v10567 = vunpack.c.l.b16 %v10465
    %v10568 = vunpack.c.h.b16 %v10465
    %v10569 = vunpack.c.l.b16 %v10466
    %v10570 = vunpack.c.h.b16 %v10466
    %v10571 = vunpack.c.l.b16 %v10467
    %v10572 = vunpack.c.h.b16 %v10467
    %v10573 = vunpack.c.l.b16 %v10468
    %v10574 = vunpack.c.h.b16 %v10468
    %v10575 = vpack.c.b16 %v10513, %v10511
    %v10576 = vpack.c.b16 %v10514, %v10512
    %v10577 = vpack.c.b16 %v10517, %v10515
    %v10578 = vpack.c.b16 %v10518, %v10516
    %v10579 = vpack.c.b16 %v10521, %v10519
    %v10580 = vpack.c.b16 %v10522, %v10520
    %v10581 = vpack.c.b16 %v10525, %v10523
    %v10582 = vpack.c.b16 %v10526, %v10524
    %v10583 = vpack.c.b16 %v10529, %v10527
    %v10584 = vpack.c.b16 %v10530, %v10528
    %v10585 = vpack.c.b16 %v10533, %v10531
    %v10586 = vpack.c.b16 %v10534, %v10532
    %v10587 = vpack.c.b16 %v10537, %v10535
    %v10588 = vpack.c.b16 %v10538, %v10536
    %v10589 = vpack.c.b16 %v10541, %v10539
    %v10590 = vpack.c.b16 %v10542, %v10540
    %v10591 = vpack.c.b16 %v10545, %v10543
    %v10592 = vpack.c.b16 %v10546, %v10544
    %v10593 = vpack.c.b16 %v10549, %v10547
    %v10594 = vpack.c.b16 %v10550, %v10548
    %v10595 = vpack.c.b16 %v10553, %v10551
    %v10596 = vpack.c.b16 %v10554, %v10552
    %v10597 = vpack.c.b16 %v10557, %v10555
    %v10598 = vpack.c.b16 %v10558, %v10556
    %v10599 = vpack.c.b16 %v10561, %v10559
    %v10600 = vpack.c.b16 %v10562, %v10560
    %v10601 = vpack.c.b16 %v10565, %v10563
    %v10602 = vpack.c.b16 %v10566, %v10564
    %v10603 = vpack.c.b16 %v10569, %v10567
    %v10604 = vpack.c.b16 %v10570, %v10568
    %v10605 = vpack.c.b16 %v10573, %v10571
    %v10606 = vpack.c.b16 %v10574, %v10572
    %10639 = vmatpush.bf16.msra.mxu0 %v10589
    %10640 = vmatpush.bf16.msra.mxu0 %v10587
    %10641 = vmatpush.bf16.msra.mxu0 %v10585
    %10642 = vmatpush.bf16.msra.mxu0 %v10583
    %10643 = vmatpush.bf16.msra.mxu0 %v10581
    %10644 = vmatpush.bf16.msra.mxu0 %v10579
    %10645 = vmatpush.bf16.msra.mxu0 %v10577
    %10646 = vmatpush.bf16.msra.mxu0 %v10575
    %10647 = vmatmul.bf16.gmra.mxu0 %v8458
    %v10648 = vpop.f32.mrf.mxu0
    %v10649 = vadd.f32 0.0, %v10648
    %v10650 = vpop.f32.mrf.mxu0
    %v10651 = vadd.f32 0.0, %v10650
    %10652 = vmatmul.bf16.gmra.mxu0 %v8460
    %v10653 = vpop.f32.mrf.mxu0
    %v10654 = vadd.f32 0.0, %v10653
    %v10655 = vpop.f32.mrf.mxu0
    %v10656 = vadd.f32 0.0, %v10655
    %10657 = vmatmul.bf16.gmra.mxu0 %v8462
    %v10658 = vpop.f32.mrf.mxu0
    %v10659 = vadd.f32 0.0, %v10658
    %v10660 = vpop.f32.mrf.mxu0
    %v10661 = vadd.f32 0.0, %v10660
    %10662 = vmatmul.bf16.gmra.mxu0 %v8464
    %v10663 = vpop.f32.mrf.mxu0
    %v10664 = vadd.f32 0.0, %v10663
    %v10665 = vpop.f32.mrf.mxu0
    %v10666 = vadd.f32 0.0, %v10665
    %10667 = vmatmul.bf16.gmra.mxu0 %v8466
    %v10668 = vpop.f32.mrf.mxu0
    %v10669 = vadd.f32 0.0, %v10668
    %v10670 = vpop.f32.mrf.mxu0
    %v10671 = vadd.f32 0.0, %v10670
    %10672 = vmatmul.bf16.gmra.mxu0 %v8468
    %v10673 = vpop.f32.mrf.mxu0
    %v10674 = vadd.f32 0.0, %v10673
    %v10675 = vpop.f32.mrf.mxu0
    %v10676 = vadd.f32 0.0, %v10675
    %10677 = vmatmul.bf16.gmra.mxu0 %v8470
    %v10678 = vpop.f32.mrf.mxu0
    %v10679 = vadd.f32 0.0, %v10678
    %v10680 = vpop.f32.mrf.mxu0
    %v10681 = vadd.f32 0.0, %v10680
    %10682 = vmatmul.bf16.gmra.mxu0 %v8472
    %v10683 = vpop.f32.mrf.mxu0
    %v10684 = vadd.f32 0.0, %v10683
    %v10685 = vpop.f32.mrf.mxu0
    %v10686 = vadd.f32 0.0, %v10685
    %10687 = vmatmul.bf16.gmra.mxu0 %v8474
    %v10688 = vpop.f32.mrf.mxu0
    %v10689 = vadd.f32 0.0, %v10688
    %v10690 = vpop.f32.mrf.mxu0
    %v10691 = vadd.f32 0.0, %v10690
    %10692 = vmatmul.bf16.gmra.mxu0 %v9421
    %v10693 = vpop.f32.mrf.mxu0
    %v10694 = vadd.f32 0.0, %v10693
    %v10695 = vpop.f32.mrf.mxu0
    %v10696 = vadd.f32 0.0, %v10695
    %10697 = vmatmul.bf16.gmra.mxu0 %v9948
    %v10698 = vpop.f32.mrf.mxu0
    %v10699 = vadd.f32 0.0, %v10698
    %v10700 = vpop.f32.mrf.mxu0
    %v10701 = vadd.f32 0.0, %v10700
    %10702 = vmatmul.bf16.gmra.mxu0 %v10475
    %v10703 = vpop.f32.mrf.mxu0
    %v10704 = vadd.f32 0.0, %v10703
    %v10705 = vpop.f32.mrf.mxu0
    %v10706 = vadd.f32 0.0, %v10705
    %10707 = vdwg.mxu0
    %10708 = vmatpush.bf16.msra.mxu0 %v10605
    %10709 = vmatpush.bf16.msra.mxu0 %v10603
    %10710 = vmatpush.bf16.msra.mxu0 %v10601
    %10711 = vmatpush.bf16.msra.mxu0 %v10599
    %10712 = vmatpush.bf16.msra.mxu0 %v10597
    %10713 = vmatpush.bf16.msra.mxu0 %v10595
    %10714 = vmatpush.bf16.msra.mxu0 %v10593
    %10715 = vmatpush.bf16.msra.mxu0 %v10591
    %10716 = vmatmul.bf16.gmra.mxu0 %v8459
    %v10717 = vpop.f32.mrf.mxu0
    %v10718 = vadd.f32 %v10649, %v10717
    %v10719 = vpop.f32.mrf.mxu0
    %v10720 = vadd.f32 %v10651, %v10719
    %10721 = vmatmul.bf16.gmra.mxu0 %v8461
    %v10722 = vpop.f32.mrf.mxu0
    %v10723 = vadd.f32 %v10654, %v10722
    %v10724 = vpop.f32.mrf.mxu0
    %v10725 = vadd.f32 %v10656, %v10724
    %10726 = vmatmul.bf16.gmra.mxu0 %v8463
    %v10727 = vpop.f32.mrf.mxu0
    %v10728 = vadd.f32 %v10659, %v10727
    %v10729 = vpop.f32.mrf.mxu0
    %v10730 = vadd.f32 %v10661, %v10729
    %10731 = vmatmul.bf16.gmra.mxu0 %v8465
    %v10732 = vpop.f32.mrf.mxu0
    %v10733 = vadd.f32 %v10664, %v10732
    %v10734 = vpop.f32.mrf.mxu0
    %v10735 = vadd.f32 %v10666, %v10734
    %10736 = vmatmul.bf16.gmra.mxu0 %v8467
    %v10737 = vpop.f32.mrf.mxu0
    %v10738 = vadd.f32 %v10669, %v10737
    %v10739 = vpop.f32.mrf.mxu0
    %v10740 = vadd.f32 %v10671, %v10739
    %10741 = vmatmul.bf16.gmra.mxu0 %v8469
    %v10742 = vpop.f32.mrf.mxu0
    %v10743 = vadd.f32 %v10674, %v10742
    %v10744 = vpop.f32.mrf.mxu0
    %v10745 = vadd.f32 %v10676, %v10744
    %10746 = vmatmul.bf16.gmra.mxu0 %v8471
    %v10747 = vpop.f32.mrf.mxu0
    %v10748 = vadd.f32 %v10679, %v10747
    %v10749 = vpop.f32.mrf.mxu0
    %v10750 = vadd.f32 %v10681, %v10749
    %10751 = vmatmul.bf16.gmra.mxu0 %v8473
    %v10752 = vpop.f32.mrf.mxu0
    %v10753 = vadd.f32 %v10684, %v10752
    %v10754 = vpop.f32.mrf.mxu0
    %v10755 = vadd.f32 %v10686, %v10754
    %10756 = vmatmul.bf16.gmra.mxu0 %v8475
    %v10757 = vpop.f32.mrf.mxu0
    %v10758 = vadd.f32 %v10689, %v10757
    %v10759 = vpop.f32.mrf.mxu0
    %v10760 = vadd.f32 %v10691, %v10759
    %10761 = vmatmul.bf16.gmra.mxu0 %v9422
    %v10762 = vpop.f32.mrf.mxu0
    %v10763 = vadd.f32 %v10694, %v10762
    %v10764 = vpop.f32.mrf.mxu0
    %v10765 = vadd.f32 %v10696, %v10764
    %10766 = vmatmul.bf16.gmra.mxu0 %v9949
    %v10767 = vpop.f32.mrf.mxu0
    %v10768 = vadd.f32 %v10699, %v10767
    %v10769 = vpop.f32.mrf.mxu0
    %v10770 = vadd.f32 %v10701, %v10769
    %10771 = vmatmul.bf16.gmra.mxu0 %v10476
    %v10772 = vpop.f32.mrf.mxu0
    %v10773 = vadd.f32 %v10704, %v10772
    %v10774 = vpop.f32.mrf.mxu0
    %v10775 = vadd.f32 %v10706, %v10774
    %10776 = vdwg.mxu0
    %10777 = vmatpush.bf16.msra.mxu0 %v10590
    %10778 = vmatpush.bf16.msra.mxu0 %v10588
    %10779 = vmatpush.bf16.msra.mxu0 %v10586
    %10780 = vmatpush.bf16.msra.mxu0 %v10584
    %10781 = vmatpush.bf16.msra.mxu0 %v10582
    %10782 = vmatpush.bf16.msra.mxu0 %v10580
    %10783 = vmatpush.bf16.msra.mxu0 %v10578
    %10784 = vmatpush.bf16.msra.mxu0 %v10576
    %10785 = vmatmul.bf16.gmra.mxu0 %v8458
    %v10786 = vpop.f32.mrf.mxu0
    %v10787 = vadd.f32 0.0, %v10786
    %v10788 = vpop.f32.mrf.mxu0
    %v10789 = vadd.f32 0.0, %v10788
    %10790 = vmatmul.bf16.gmra.mxu0 %v8460
    %v10791 = vpop.f32.mrf.mxu0
    %v10792 = vadd.f32 0.0, %v10791
    %v10793 = vpop.f32.mrf.mxu0
    %v10794 = vadd.f32 0.0, %v10793
    %10795 = vmatmul.bf16.gmra.mxu0 %v8462
    %v10796 = vpop.f32.mrf.mxu0
    %v10797 = vadd.f32 0.0, %v10796
    %v10798 = vpop.f32.mrf.mxu0
    %v10799 = vadd.f32 0.0, %v10798
    %10800 = vmatmul.bf16.gmra.mxu0 %v8464
    %v10801 = vpop.f32.mrf.mxu0
    %v10802 = vadd.f32 0.0, %v10801
    %v10803 = vpop.f32.mrf.mxu0
    %v10804 = vadd.f32 0.0, %v10803
    %10805 = vmatmul.bf16.gmra.mxu0 %v8466
    %v10806 = vpop.f32.mrf.mxu0
    %v10807 = vadd.f32 0.0, %v10806
    %v10808 = vpop.f32.mrf.mxu0
    %v10809 = vadd.f32 0.0, %v10808
    %10810 = vmatmul.bf16.gmra.mxu0 %v8468
    %v10811 = vpop.f32.mrf.mxu0
    %v10812 = vadd.f32 0.0, %v10811
    %v10813 = vpop.f32.mrf.mxu0
    %v10814 = vadd.f32 0.0, %v10813
    %10815 = vmatmul.bf16.gmra.mxu0 %v8470
    %v10816 = vpop.f32.mrf.mxu0
    %v10817 = vadd.f32 0.0, %v10816
    %v10818 = vpop.f32.mrf.mxu0
    %v10819 = vadd.f32 0.0, %v10818
    %10820 = vmatmul.bf16.gmra.mxu0 %v8472
    %v10821 = vpop.f32.mrf.mxu0
    %v10822 = vadd.f32 0.0, %v10821
    %v10823 = vpop.f32.mrf.mxu0
    %v10824 = vadd.f32 0.0, %v10823
    %10825 = vmatmul.bf16.gmra.mxu0 %v8474
    %v10826 = vpop.f32.mrf.mxu0
    %v10827 = vadd.f32 0.0, %v10826
    %v10828 = vpop.f32.mrf.mxu0
    %v10829 = vadd.f32 0.0, %v10828
    %10830 = vmatmul.bf16.gmra.mxu0 %v9421
    %v10831 = vpop.f32.mrf.mxu0
    %v10832 = vadd.f32 0.0, %v10831
    %v10833 = vpop.f32.mrf.mxu0
    %v10834 = vadd.f32 0.0, %v10833
    %10835 = vmatmul.bf16.gmra.mxu0 %v9948
    %v10836 = vpop.f32.mrf.mxu0
    %v10837 = vadd.f32 0.0, %v10836
    %v10838 = vpop.f32.mrf.mxu0
    %v10839 = vadd.f32 0.0, %v10838
    %10840 = vmatmul.bf16.gmra.mxu0 %v10475
    %v10841 = vpop.f32.mrf.mxu0
    %v10842 = vadd.f32 0.0, %v10841
    %v10843 = vpop.f32.mrf.mxu0
    %v10844 = vadd.f32 0.0, %v10843
    %10845 = vdwg.mxu0
    %10846 = vmatpush.bf16.msra.mxu0 %v10606
    %10847 = vmatpush.bf16.msra.mxu0 %v10604
    %10848 = vmatpush.bf16.msra.mxu0 %v10602
    %10849 = vmatpush.bf16.msra.mxu0 %v10600
    %10850 = vmatpush.bf16.msra.mxu0 %v10598
    %10851 = vmatpush.bf16.msra.mxu0 %v10596
    %10852 = vmatpush.bf16.msra.mxu0 %v10594
    %10853 = vmatpush.bf16.msra.mxu0 %v10592
    %10854 = vmatmul.bf16.gmra.mxu0 %v8459
    %v10855 = vpop.f32.mrf.mxu0
    %v10856 = vadd.f32 %v10787, %v10855
    %v10857 = vpop.f32.mrf.mxu0
    %v10858 = vadd.f32 %v10789, %v10857
    %10859 = vmatmul.bf16.gmra.mxu0 %v8461
    %v10860 = vpop.f32.mrf.mxu0
    %v10861 = vadd.f32 %v10792, %v10860
    %v10862 = vpop.f32.mrf.mxu0
    %v10863 = vadd.f32 %v10794, %v10862
    %10864 = vmatmul.bf16.gmra.mxu0 %v8463
    %v10865 = vpop.f32.mrf.mxu0
    %v10866 = vadd.f32 %v10797, %v10865
    %v10867 = vpop.f32.mrf.mxu0
    %v10868 = vadd.f32 %v10799, %v10867
    %10869 = vmatmul.bf16.gmra.mxu0 %v8465
    %v10870 = vpop.f32.mrf.mxu0
    %v10871 = vadd.f32 %v10802, %v10870
    %v10872 = vpop.f32.mrf.mxu0
    %v10873 = vadd.f32 %v10804, %v10872
    %10874 = vmatmul.bf16.gmra.mxu0 %v8467
    %v10875 = vpop.f32.mrf.mxu0
    %v10876 = vadd.f32 %v10807, %v10875
    %v10877 = vpop.f32.mrf.mxu0
    %v10878 = vadd.f32 %v10809, %v10877
    %10879 = vmatmul.bf16.gmra.mxu0 %v8469
    %v10880 = vpop.f32.mrf.mxu0
    %v10881 = vadd.f32 %v10812, %v10880
    %v10882 = vpop.f32.mrf.mxu0
    %v10883 = vadd.f32 %v10814, %v10882
    %10884 = vmatmul.bf16.gmra.mxu0 %v8471
    %v10885 = vpop.f32.mrf.mxu0
    %v10886 = vadd.f32 %v10817, %v10885
    %v10887 = vpop.f32.mrf.mxu0
    %v10888 = vadd.f32 %v10819, %v10887
    %10889 = vmatmul.bf16.gmra.mxu0 %v8473
    %v10890 = vpop.f32.mrf.mxu0
    %v10891 = vadd.f32 %v10822, %v10890
    %v10892 = vpop.f32.mrf.mxu0
    %v10893 = vadd.f32 %v10824, %v10892
    %10894 = vmatmul.bf16.gmra.mxu0 %v8475
    %v10895 = vpop.f32.mrf.mxu0
    %v10896 = vadd.f32 %v10827, %v10895
    %v10897 = vpop.f32.mrf.mxu0
    %v10898 = vadd.f32 %v10829, %v10897
    %10899 = vmatmul.bf16.gmra.mxu0 %v9422
    %v10900 = vpop.f32.mrf.mxu0
    %v10901 = vadd.f32 %v10832, %v10900
    %v10902 = vpop.f32.mrf.mxu0
    %v10903 = vadd.f32 %v10834, %v10902
    %10904 = vmatmul.bf16.gmra.mxu0 %v9949
    %v10905 = vpop.f32.mrf.mxu0
    %v10906 = vadd.f32 %v10837, %v10905
    %v10907 = vpop.f32.mrf.mxu0
    %v10908 = vadd.f32 %v10839, %v10907
    %10909 = vmatmul.bf16.gmra.mxu0 %v10476
    %v10910 = vpop.f32.mrf.mxu0
    %v10911 = vadd.f32 %v10842, %v10910
    %v10912 = vpop.f32.mrf.mxu0
    %v10913 = vadd.f32 %v10844, %v10912
    %10914 = vdwg.mxu0
    %v10915 = vadd.f32 %v10388, %v10718
    %v10916 = vadd.f32 %v10389, %v10856
    %v10917 = vadd.f32 %v10390, %v10720
    %v10918 = vadd.f32 %v10391, %v10858
    %v10919 = vadd.f32 %v10392, %v10723
    %v10920 = vadd.f32 %v10393, %v10861
    %v10921 = vadd.f32 %v10394, %v10725
    %v10922 = vadd.f32 %v10395, %v10863
    %v10923 = vadd.f32 %v10396, %v10728
    %v10924 = vadd.f32 %v10397, %v10866
    %v10925 = vadd.f32 %v10398, %v10730
    %v10926 = vadd.f32 %v10399, %v10868
    %v10927 = vadd.f32 %v10400, %v10733
    %v10928 = vadd.f32 %v10401, %v10871
    %v10929 = vadd.f32 %v10402, %v10735
    %v10930 = vadd.f32 %v10403, %v10873
    %v10931 = vadd.f32 %v10404, %v10738
    %v10932 = vadd.f32 %v10405, %v10876
    %v10933 = vadd.f32 %v10406, %v10740
    %v10934 = vadd.f32 %v10407, %v10878
    %v10935 = vadd.f32 %v10408, %v10743
    %v10936 = vadd.f32 %v10409, %v10881
    %v10937 = vadd.f32 %v10410, %v10745
    %v10938 = vadd.f32 %v10411, %v10883
    %v10939 = vadd.f32 %v10412, %v10748
    %v10940 = vadd.f32 %v10413, %v10886
    %v10941 = vadd.f32 %v10414, %v10750
    %v10942 = vadd.f32 %v10415, %v10888
    %v10943 = vadd.f32 %v10416, %v10753
    %v10944 = vadd.f32 %v10417, %v10891
    %v10945 = vadd.f32 %v10418, %v10755
    %v10946 = vadd.f32 %v10419, %v10893
    %v10947 = vadd.f32 %v10420, %v10758
    %v10948 = vadd.f32 %v10421, %v10896
    %v10949 = vadd.f32 %v10422, %v10760
    %v10950 = vadd.f32 %v10423, %v10898
    %v10951 = vadd.f32 %v10424, %v10763
    %v10952 = vadd.f32 %v10425, %v10901
    %v10953 = vadd.f32 %v10426, %v10765
    %v10954 = vadd.f32 %v10427, %v10903
    %v10955 = vadd.f32 %v10428, %v10768
    %v10956 = vadd.f32 %v10429, %v10906
    %v10957 = vadd.f32 %v10430, %v10770
    %v10958 = vadd.f32 %v10431, %v10908
    %v10959 = vadd.f32 %v10432, %v10773
    %v10960 = vadd.f32 %v10433, %v10911
    %v10961 = vadd.f32 %v10434, %v10775
    %v10962 = vadd.f32 %v10435, %v10913
    %v10963 = vld [vmem:[%s8] sm:$0x3]
    %v10965 = vperm.slane %v10963, 0
    %v10966 = vperm.slane %v10963, 1
    %v10969 = vadd.f32 %v10915, %v10965
    %v10970 = vadd.f32 %v10916, %v10966
    %v10971 = vadd.f32 %v10917, %v10965
    %v10972 = vadd.f32 %v10918, %v10966
    %v10973 = vadd.f32 %v10919, %v10965
    %v10974 = vadd.f32 %v10920, %v10966
    %v10975 = vadd.f32 %v10921, %v10965
    %v10976 = vadd.f32 %v10922, %v10966
    %v10977 = vadd.f32 %v10923, %v10965
    %v10978 = vadd.f32 %v10924, %v10966
    %v10979 = vadd.f32 %v10925, %v10965
    %v10980 = vadd.f32 %v10926, %v10966
    %v10981 = vadd.f32 %v10927, %v10965
    %v10982 = vadd.f32 %v10928, %v10966
    %v10983 = vadd.f32 %v10929, %v10965
    %v10984 = vadd.f32 %v10930, %v10966
    %v10985 = vadd.f32 %v10931, %v10965
    %v10986 = vadd.f32 %v10932, %v10966
    %v10987 = vadd.f32 %v10933, %v10965
    %v10988 = vadd.f32 %v10934, %v10966
    %v10989 = vadd.f32 %v10935, %v10965
    %v10990 = vadd.f32 %v10936, %v10966
    %v10991 = vadd.f32 %v10937, %v10965
    %v10992 = vadd.f32 %v10938, %v10966
    %v10993 = vadd.f32 %v10939, %v10965
    %v10994 = vadd.f32 %v10940, %v10966
    %v10995 = vadd.f32 %v10941, %v10965
    %v10996 = vadd.f32 %v10942, %v10966
    %v10997 = vadd.f32 %v10943, %v10965
    %v10998 = vadd.f32 %v10944, %v10966
    %v10999 = vadd.f32 %v10945, %v10965
    %v11000 = vadd.f32 %v10946, %v10966
    %v11001 = vadd.f32 %v10947, %v10965
    %v11002 = vadd.f32 %v10948, %v10966
    %v11003 = vadd.f32 %v10949, %v10965
    %v11004 = vadd.f32 %v10950, %v10966
    %v11005 = vadd.f32 %v10951, %v10965
    %v11006 = vadd.f32 %v10952, %v10966
    %v11007 = vadd.f32 %v10953, %v10965
    %v11008 = vadd.f32 %v10954, %v10966
    %v11009 = vadd.f32 %v10955, %v10965
    %v11010 = vadd.f32 %v10956, %v10966
    %v11011 = vadd.f32 %v10957, %v10965
    %v11012 = vadd.f32 %v10958, %v10966
    %v11013 = vadd.f32 %v10959, %v10965
    %v11014 = vadd.f32 %v10960, %v10966
    %v11015 = vadd.f32 %v10961, %v10965
    %v11016 = vadd.f32 %v10962, %v10966
    %vm11017 = vcmp.ge.f32.partialorder %v10969, 0.0
    %vm11018 = vcmp.ge.f32.partialorder %v10970, 0.0
    %vm11019 = vcmp.ge.f32.partialorder %v10971, 0.0
    %vm11020 = vcmp.ge.f32.partialorder %v10972, 0.0
    %vm11021 = vcmp.ge.f32.partialorder %v10973, 0.0
    %vm11022 = vcmp.ge.f32.partialorder %v10974, 0.0
    %vm11023 = vcmp.ge.f32.partialorder %v10975, 0.0
    %vm11024 = vcmp.ge.f32.partialorder %v10976, 0.0
    %vm11025 = vcmp.ge.f32.partialorder %v10977, 0.0
    %vm11026 = vcmp.ge.f32.partialorder %v10978, 0.0
    %vm11027 = vcmp.ge.f32.partialorder %v10979, 0.0
    %vm11028 = vcmp.ge.f32.partialorder %v10980, 0.0
    %vm11029 = vcmp.ge.f32.partialorder %v10981, 0.0
    %vm11030 = vcmp.ge.f32.partialorder %v10982, 0.0
    %vm11031 = vcmp.ge.f32.partialorder %v10983, 0.0
    %vm11032 = vcmp.ge.f32.partialorder %v10984, 0.0
    %vm11033 = vcmp.ge.f32.partialorder %v10985, 0.0
    %vm11034 = vcmp.ge.f32.partialorder %v10986, 0.0
    %vm11035 = vcmp.ge.f32.partialorder %v10987, 0.0
    %vm11036 = vcmp.ge.f32.partialorder %v10988, 0.0
    %vm11037 = vcmp.ge.f32.partialorder %v10989, 0.0
    %vm11038 = vcmp.ge.f32.partialorder %v10990, 0.0
    %vm11039 = vcmp.ge.f32.partialorder %v10991, 0.0
    %vm11040 = vcmp.ge.f32.partialorder %v10992, 0.0
    %vm11041 = vcmp.ge.f32.partialorder %v10993, 0.0
    %vm11042 = vcmp.ge.f32.partialorder %v10994, 0.0
    %vm11043 = vcmp.ge.f32.partialorder %v10995, 0.0
    %vm11044 = vcmp.ge.f32.partialorder %v10996, 0.0
    %vm11045 = vcmp.ge.f32.partialorder %v10997, 0.0
    %vm11046 = vcmp.ge.f32.partialorder %v10998, 0.0
    %vm11047 = vcmp.ge.f32.partialorder %v10999, 0.0
    %vm11048 = vcmp.ge.f32.partialorder %v11000, 0.0
    %vm11049 = vcmp.ge.f32.partialorder %v11001, 0.0
    %vm11050 = vcmp.ge.f32.partialorder %v11002, 0.0
    %vm11051 = vcmp.ge.f32.partialorder %v11003, 0.0
    %vm11052 = vcmp.ge.f32.partialorder %v11004, 0.0
    %vm11053 = vcmp.ge.f32.partialorder %v11005, 0.0
    %vm11054 = vcmp.ge.f32.partialorder %v11006, 0.0
    %vm11055 = vcmp.ge.f32.partialorder %v11007, 0.0
    %vm11056 = vcmp.ge.f32.partialorder %v11008, 0.0
    %vm11057 = vcmp.ge.f32.partialorder %v11009, 0.0
    %vm11058 = vcmp.ge.f32.partialorder %v11010, 0.0
    %vm11059 = vcmp.ge.f32.partialorder %v11011, 0.0
    %vm11060 = vcmp.ge.f32.partialorder %v11012, 0.0
    %vm11061 = vcmp.ge.f32.partialorder %v11013, 0.0
    %vm11062 = vcmp.ge.f32.partialorder %v11014, 0.0
    %vm11063 = vcmp.ge.f32.partialorder %v11015, 0.0
    %vm11064 = vcmp.ge.f32.partialorder %v11016, 0.0
    %v11065 = vmul.f32 %v10969, 0.3
    %v11066 = vmul.f32 %v10970, 0.3
    %v11067 = vmul.f32 %v10971, 0.3
    %v11068 = vmul.f32 %v10972, 0.3
    %v11069 = vmul.f32 %v10973, 0.3
    %v11070 = vmul.f32 %v10974, 0.3
    %v11071 = vmul.f32 %v10975, 0.3
    %v11072 = vmul.f32 %v10976, 0.3
    %v11073 = vmul.f32 %v10977, 0.3
    %v11074 = vmul.f32 %v10978, 0.3
    %v11075 = vmul.f32 %v10979, 0.3
    %v11076 = vmul.f32 %v10980, 0.3
    %v11077 = vmul.f32 %v10981, 0.3
    %v11078 = vmul.f32 %v10982, 0.3
    %v11079 = vmul.f32 %v10983, 0.3
    %v11080 = vmul.f32 %v10984, 0.3
    %v11081 = vmul.f32 %v10985, 0.3
    %v11082 = vmul.f32 %v10986, 0.3
    %v11083 = vmul.f32 %v10987, 0.3
    %v11084 = vmul.f32 %v10988, 0.3
    %v11085 = vmul.f32 %v10989, 0.3
    %v11086 = vmul.f32 %v10990, 0.3
    %v11087 = vmul.f32 %v10991, 0.3
    %v11088 = vmul.f32 %v10992, 0.3
    %v11089 = vmul.f32 %v10993, 0.3
    %v11090 = vmul.f32 %v10994, 0.3
    %v11091 = vmul.f32 %v10995, 0.3
    %v11092 = vmul.f32 %v10996, 0.3
    %v11093 = vmul.f32 %v10997, 0.3
    %v11094 = vmul.f32 %v10998, 0.3
    %v11095 = vmul.f32 %v10999, 0.3
    %v11096 = vmul.f32 %v11000, 0.3
    %v11097 = vmul.f32 %v11001, 0.3
    %v11098 = vmul.f32 %v11002, 0.3
    %v11099 = vmul.f32 %v11003, 0.3
    %v11100 = vmul.f32 %v11004, 0.3
    %v11101 = vmul.f32 %v11005, 0.3
    %v11102 = vmul.f32 %v11006, 0.3
    %v11103 = vmul.f32 %v11007, 0.3
    %v11104 = vmul.f32 %v11008, 0.3
    %v11105 = vmul.f32 %v11009, 0.3
    %v11106 = vmul.f32 %v11010, 0.3
    %v11107 = vmul.f32 %v11011, 0.3
    %v11108 = vmul.f32 %v11012, 0.3
    %v11109 = vmul.f32 %v11013, 0.3
    %v11110 = vmul.f32 %v11014, 0.3
    %v11111 = vmul.f32 %v11015, 0.3
    %v11112 = vmul.f32 %v11016, 0.3
    %v11113 = vsel %vm11017, %v10969, %v11065
    %v11114 = vsel %vm11018, %v10970, %v11066
    %v11115 = vsel %vm11019, %v10971, %v11067
    %v11116 = vsel %vm11020, %v10972, %v11068
    %v11117 = vsel %vm11021, %v10973, %v11069
    %v11118 = vsel %vm11022, %v10974, %v11070
    %v11119 = vsel %vm11023, %v10975, %v11071
    %v11120 = vsel %vm11024, %v10976, %v11072
    %v11121 = vsel %vm11025, %v10977, %v11073
    %v11122 = vsel %vm11026, %v10978, %v11074
    %v11123 = vsel %vm11027, %v10979, %v11075
    %v11124 = vsel %vm11028, %v10980, %v11076
    %v11125 = vsel %vm11029, %v10981, %v11077
    %v11126 = vsel %vm11030, %v10982, %v11078
    %v11127 = vsel %vm11031, %v10983, %v11079
    %v11128 = vsel %vm11032, %v10984, %v11080
    %v11129 = vsel %vm11033, %v10985, %v11081
    %v11130 = vsel %vm11034, %v10986, %v11082
    %v11131 = vsel %vm11035, %v10987, %v11083
    %v11132 = vsel %vm11036, %v10988, %v11084
    %v11133 = vsel %vm11037, %v10989, %v11085
    %v11134 = vsel %vm11038, %v10990, %v11086
    %v11135 = vsel %vm11039, %v10991, %v11087
    %v11136 = vsel %vm11040, %v10992, %v11088
    %v11137 = vsel %vm11041, %v10993, %v11089
    %v11138 = vsel %vm11042, %v10994, %v11090
    %v11139 = vsel %vm11043, %v10995, %v11091
    %v11140 = vsel %vm11044, %v10996, %v11092
    %v11141 = vsel %vm11045, %v10997, %v11093
    %v11142 = vsel %vm11046, %v10998, %v11094
    %v11143 = vsel %vm11047, %v10999, %v11095
    %v11144 = vsel %vm11048, %v11000, %v11096
    %v11145 = vsel %vm11049, %v11001, %v11097
    %v11146 = vsel %vm11050, %v11002, %v11098
    %v11147 = vsel %vm11051, %v11003, %v11099
    %v11148 = vsel %vm11052, %v11004, %v11100
    %v11149 = vsel %vm11053, %v11005, %v11101
    %v11150 = vsel %vm11054, %v11006, %v11102
    %v11151 = vsel %vm11055, %v11007, %v11103
    %v11152 = vsel %vm11056, %v11008, %v11104
    %v11153 = vsel %vm11057, %v11009, %v11105
    %v11154 = vsel %vm11058, %v11010, %v11106
    %v11155 = vsel %vm11059, %v11011, %v11107
    %v11156 = vsel %vm11060, %v11012, %v11108
    %v11157 = vsel %vm11061, %v11013, %v11109
    %v11158 = vsel %vm11062, %v11014, %v11110
    %v11159 = vsel %vm11063, %v11015, %v11111
    %v11160 = vsel %vm11064, %v11016, %v11112
    %v11161 = vpack.c.bf16 %v11114, %v11113
    %v11162 = vpack.c.bf16 %v11116, %v11115
    %v11163 = vpack.c.bf16 %v11118, %v11117
    %v11164 = vpack.c.bf16 %v11120, %v11119
    %v11165 = vpack.c.bf16 %v11122, %v11121
    %v11166 = vpack.c.bf16 %v11124, %v11123
    %v11167 = vpack.c.bf16 %v11126, %v11125
    %v11168 = vpack.c.bf16 %v11128, %v11127
    %v11169 = vpack.c.bf16 %v11130, %v11129
    %v11170 = vpack.c.bf16 %v11132, %v11131
    %v11171 = vpack.c.bf16 %v11134, %v11133
    %v11172 = vpack.c.bf16 %v11136, %v11135
    %v11173 = vpack.c.bf16 %v11138, %v11137
    %v11174 = vpack.c.bf16 %v11140, %v11139
    %v11175 = vpack.c.bf16 %v11142, %v11141
    %v11176 = vpack.c.bf16 %v11144, %v11143
    %v11177 = vpack.c.bf16 %v11146, %v11145
    %v11178 = vpack.c.bf16 %v11148, %v11147
    %v11179 = vpack.c.bf16 %v11150, %v11149
    %v11180 = vpack.c.bf16 %v11152, %v11151
    %v11181 = vpack.c.bf16 %v11154, %v11153
    %v11182 = vpack.c.bf16 %v11156, %v11155
    %v11183 = vpack.c.bf16 %v11158, %v11157
    %v11184 = vpack.c.bf16 %v11160, %v11159
    %v11185 = vld [vmem:[%s9] sm:$0xf]
    %v11186 = vld [vmem:[%s9 + $0x4] sm:$0xf]
    %v11187 = vld [vmem:[%s9 + $0x8] sm:$0xf]
    %v11188 = vld [vmem:[%s9 + $0xc] sm:$0xf]
    %v11189 = vld [vmem:[%s9 + $0x10] sm:$0xf]
    %v11190 = vld [vmem:[%s9 + $0x14] sm:$0xf]
    %v11191 = vld [vmem:[%s9 + $0x18] sm:$0xf]
    %v11192 = vld [vmem:[%s9 + $0x1c] sm:$0xf]
    %v11193 = vld [vmem:[%s9 + $0x20] sm:$0xf]
    %v11194 = vld [vmem:[%s9 + $0x24] sm:$0xf]
    %v11195 = vld [vmem:[%s9 + $0x28] sm:$0xf]
    %v11196 = vld [vmem:[%s9 + $0x2c] sm:$0xf]
    %v11197 = vld [vmem:[%s9 + $0x30] sm:$0xf]
    %v11198 = vld [vmem:[%s9 + $0x34] sm:$0xf]
    %v11199 = vld [vmem:[%s9 + $0x38] sm:$0xf]
    %v11200 = vld [vmem:[%s9 + $0x3c] sm:$0xf]
    %v11201 = vld [vmem:[%s9 + $0x40] sm:$0xf]
    %v11202 = vld [vmem:[%s9 + $0x44] sm:$0xf]
    %v11203 = vld [vmem:[%s9 + $0x48] sm:$0xf]
    %v11204 = vld [vmem:[%s9 + $0x4c] sm:$0xf]
    %v11205 = vld [vmem:[%s9 + $0x50] sm:$0xf]
    %v11206 = vld [vmem:[%s9 + $0x54] sm:$0xf]
    %v11207 = vld [vmem:[%s9 + $0x58] sm:$0xf]
    %v11208 = vld [vmem:[%s9 + $0x5c] sm:$0xf]
    %v11209 = vld [vmem:[%s9 + $0x60] sm:$0xf]
    %v11210 = vld [vmem:[%s9 + $0x64] sm:$0xf]
    %v11211 = vld [vmem:[%s9 + $0x68] sm:$0xf]
    %v11212 = vld [vmem:[%s9 + $0x6c] sm:$0xf]
    %v11213 = vld [vmem:[%s9 + $0x70] sm:$0xf]
    %v11214 = vld [vmem:[%s9 + $0x74] sm:$0xf]
    %v11215 = vld [vmem:[%s9 + $0x78] sm:$0xf]
    %v11216 = vld [vmem:[%s9 + $0x7c] sm:$0xf]
    %s11217 = scalar_lea.vmem %s9, 128
    %v11218 = vld [vmem:[%s11217] sm:$0xf]
    %v11219 = vld [vmem:[%s11217 + $0x4] sm:$0xf]
    %v11220 = vld [vmem:[%s11217 + $0x8] sm:$0xf]
    %v11221 = vld [vmem:[%s11217 + $0xc] sm:$0xf]
    %v11222 = vld [vmem:[%s11217 + $0x10] sm:$0xf]
    %v11223 = vld [vmem:[%s11217 + $0x14] sm:$0xf]
    %v11224 = vld [vmem:[%s11217 + $0x18] sm:$0xf]
    %v11225 = vld [vmem:[%s11217 + $0x1c] sm:$0xf]
    %v11226 = vld [vmem:[%s11217 + $0x20] sm:$0xf]
    %v11227 = vld [vmem:[%s11217 + $0x24] sm:$0xf]
    %v11228 = vld [vmem:[%s11217 + $0x28] sm:$0xf]
    %v11229 = vld [vmem:[%s11217 + $0x2c] sm:$0xf]
    %v11230 = vld [vmem:[%s11217 + $0x30] sm:$0xf]
    %v11231 = vld [vmem:[%s11217 + $0x34] sm:$0xf]
    %v11232 = vld [vmem:[%s11217 + $0x38] sm:$0xf]
    %v11233 = vld [vmem:[%s11217 + $0x3c] sm:$0xf]
    %v11234 = vld [vmem:[%s11217 + $0x40] sm:$0xf]
    %v11235 = vld [vmem:[%s11217 + $0x44] sm:$0xf]
    %v11236 = vld [vmem:[%s11217 + $0x48] sm:$0xf]
    %v11237 = vld [vmem:[%s11217 + $0x4c] sm:$0xf]
    %v11238 = vld [vmem:[%s11217 + $0x50] sm:$0xf]
    %v11239 = vld [vmem:[%s11217 + $0x54] sm:$0xf]
    %v11240 = vld [vmem:[%s11217 + $0x58] sm:$0xf]
    %v11241 = vld [vmem:[%s11217 + $0x5c] sm:$0xf]
    %v11242 = vld [vmem:[%s11217 + $0x60] sm:$0xf]
    %v11243 = vld [vmem:[%s11217 + $0x64] sm:$0xf]
    %v11244 = vld [vmem:[%s11217 + $0x68] sm:$0xf]
    %v11245 = vld [vmem:[%s11217 + $0x6c] sm:$0xf]
    %v11246 = vld [vmem:[%s11217 + $0x70] sm:$0xf]
    %v11247 = vld [vmem:[%s11217 + $0x74] sm:$0xf]
    %v11248 = vld [vmem:[%s11217 + $0x78] sm:$0xf]
    %v11249 = vld [vmem:[%s11217 + $0x7c] sm:$0xf]
    %v11266 = vunpack.c.l.b16 %v11163
    %v11267 = vunpack.c.h.b16 %v11163
    %v11268 = vunpack.c.l.b16 %v11164
    %v11269 = vunpack.c.h.b16 %v11164
    %v11270 = vunpack.c.l.b16 %v11165
    %v11271 = vunpack.c.h.b16 %v11165
    %v11272 = vunpack.c.l.b16 %v11166
    %v11273 = vunpack.c.h.b16 %v11166
    %v11274 = vunpack.c.l.b16 %v11167
    %v11275 = vunpack.c.h.b16 %v11167
    %v11276 = vunpack.c.l.b16 %v11168
    %v11277 = vunpack.c.h.b16 %v11168
    %v11278 = vunpack.c.l.b16 %v11169
    %v11279 = vunpack.c.h.b16 %v11169
    %v11280 = vunpack.c.l.b16 %v11170
    %v11281 = vunpack.c.h.b16 %v11170
    %v11282 = vunpack.c.l.b16 %v11171
    %v11283 = vunpack.c.h.b16 %v11171
    %v11284 = vunpack.c.l.b16 %v11172
    %v11285 = vunpack.c.h.b16 %v11172
    %v11286 = vunpack.c.l.b16 %v11173
    %v11287 = vunpack.c.h.b16 %v11173
    %v11288 = vunpack.c.l.b16 %v11174
    %v11289 = vunpack.c.h.b16 %v11174
    %v11290 = vunpack.c.l.b16 %v11175
    %v11291 = vunpack.c.h.b16 %v11175
    %v11292 = vunpack.c.l.b16 %v11176
    %v11293 = vunpack.c.h.b16 %v11176
    %v11294 = vunpack.c.l.b16 %v11177
    %v11295 = vunpack.c.h.b16 %v11177
    %v11296 = vunpack.c.l.b16 %v11178
    %v11297 = vunpack.c.h.b16 %v11178
    %v11298 = vpack.c.b16 %v11268, %v11266
    %v11299 = vpack.c.b16 %v11269, %v11267
    %v11300 = vpack.c.b16 %v11272, %v11270
    %v11301 = vpack.c.b16 %v11273, %v11271
    %v11302 = vpack.c.b16 %v11276, %v11274
    %v11303 = vpack.c.b16 %v11277, %v11275
    %v11304 = vpack.c.b16 %v11280, %v11278
    %v11305 = vpack.c.b16 %v11281, %v11279
    %v11306 = vpack.c.b16 %v11284, %v11282
    %v11307 = vpack.c.b16 %v11285, %v11283
    %v11308 = vpack.c.b16 %v11288, %v11286
    %v11309 = vpack.c.b16 %v11289, %v11287
    %v11310 = vpack.c.b16 %v11292, %v11290
    %v11311 = vpack.c.b16 %v11293, %v11291
    %v11312 = vpack.c.b16 %v11296, %v11294
    %v11313 = vpack.c.b16 %v11297, %v11295
    %v11362 = vunpack.c.l.b16 %v11218
    %v11363 = vunpack.c.l.b16 %v11219
    %v11364 = vunpack.c.l.b16 %v11220
    %v11365 = vunpack.c.l.b16 %v11221
    %v11366 = vunpack.c.l.b16 %v11222
    %v11367 = vunpack.c.l.b16 %v11223
    %v11368 = vunpack.c.l.b16 %v11224
    %v11369 = vunpack.c.l.b16 %v11225
    %v11370 = vunpack.c.l.b16 %v11226
    %v11371 = vunpack.c.l.b16 %v11227
    %v11372 = vunpack.c.l.b16 %v11228
    %v11373 = vunpack.c.l.b16 %v11229
    %v11374 = vunpack.c.l.b16 %v11230
    %v11375 = vunpack.c.l.b16 %v11231
    %v11376 = vunpack.c.l.b16 %v11232
    %v11377 = vunpack.c.l.b16 %v11233
    %v11378 = vunpack.c.l.b16 %v11234
    %v11379 = vunpack.c.l.b16 %v11235
    %v11380 = vunpack.c.l.b16 %v11236
    %v11381 = vunpack.c.l.b16 %v11237
    %v11382 = vunpack.c.l.b16 %v11238
    %v11383 = vunpack.c.l.b16 %v11239
    %v11384 = vunpack.c.l.b16 %v11240
    %v11385 = vunpack.c.l.b16 %v11241
    %v11386 = vunpack.c.l.b16 %v11242
    %v11387 = vunpack.c.l.b16 %v11243
    %v11388 = vunpack.c.l.b16 %v11244
    %v11389 = vunpack.c.l.b16 %v11245
    %v11390 = vunpack.c.l.b16 %v11246
    %v11391 = vunpack.c.l.b16 %v11247
    %v11392 = vunpack.c.l.b16 %v11248
    %v11393 = vunpack.c.l.b16 %v11249
    %v11394 = vpack.c.b16 %v11363, %v11362
    %v11395 = vpack.c.b16 %v11365, %v11364
    %v11396 = vpack.c.b16 %v11367, %v11366
    %v11397 = vpack.c.b16 %v11369, %v11368
    %v11398 = vpack.c.b16 %v11371, %v11370
    %v11399 = vpack.c.b16 %v11373, %v11372
    %v11400 = vpack.c.b16 %v11375, %v11374
    %v11401 = vpack.c.b16 %v11377, %v11376
    %v11402 = vpack.c.b16 %v11379, %v11378
    %v11403 = vpack.c.b16 %v11381, %v11380
    %v11404 = vpack.c.b16 %v11383, %v11382
    %v11405 = vpack.c.b16 %v11385, %v11384
    %v11406 = vpack.c.b16 %v11387, %v11386
    %v11407 = vpack.c.b16 %v11389, %v11388
    %v11408 = vpack.c.b16 %v11391, %v11390
    %v11409 = vpack.c.b16 %v11393, %v11392
    %11426 = vmatpush.bf16.msra.mxu0 %v11401
    %11427 = vmatpush.bf16.msra.mxu0 %v11400
    %11428 = vmatpush.bf16.msra.mxu0 %v11399
    %11429 = vmatpush.bf16.msra.mxu0 %v11398
    %11430 = vmatpush.bf16.msra.mxu0 %v11397
    %11431 = vmatpush.bf16.msra.mxu0 %v11396
    %11432 = vmatpush.bf16.msra.mxu0 %v11395
    %11433 = vmatpush.bf16.msra.mxu0 %v11394
    %11434 = vmatmul.bf16.gmra.mxu0 %v11298
    %v11435 = vpop.f32.mrf.mxu0
    %v11436 = vadd.f32 0.0, %v11435
    %v11437 = vpop.f32.mrf.mxu0
    %v11438 = vadd.f32 0.0, %v11437
    %11439 = vmatmul.bf16.gmra.mxu0 %v11300
    %v11440 = vpop.f32.mrf.mxu0
    %v11441 = vadd.f32 0.0, %v11440
    %v11442 = vpop.f32.mrf.mxu0
    %v11443 = vadd.f32 0.0, %v11442
    %11444 = vmatmul.bf16.gmra.mxu0 %v11302
    %v11445 = vpop.f32.mrf.mxu0
    %v11446 = vadd.f32 0.0, %v11445
    %v11447 = vpop.f32.mrf.mxu0
    %v11448 = vadd.f32 0.0, %v11447
    %11449 = vmatmul.bf16.gmra.mxu0 %v11304
    %v11450 = vpop.f32.mrf.mxu0
    %v11451 = vadd.f32 0.0, %v11450
    %v11452 = vpop.f32.mrf.mxu0
    %v11453 = vadd.f32 0.0, %v11452
    %11454 = vmatmul.bf16.gmra.mxu0 %v11306
    %v11455 = vpop.f32.mrf.mxu0
    %v11456 = vadd.f32 0.0, %v11455
    %v11457 = vpop.f32.mrf.mxu0
    %v11458 = vadd.f32 0.0, %v11457
    %11459 = vmatmul.bf16.gmra.mxu0 %v11308
    %v11460 = vpop.f32.mrf.mxu0
    %v11461 = vadd.f32 0.0, %v11460
    %v11462 = vpop.f32.mrf.mxu0
    %v11463 = vadd.f32 0.0, %v11462
    %11464 = vmatmul.bf16.gmra.mxu0 %v11310
    %v11465 = vpop.f32.mrf.mxu0
    %v11466 = vadd.f32 0.0, %v11465
    %v11467 = vpop.f32.mrf.mxu0
    %v11468 = vadd.f32 0.0, %v11467
    %11469 = vmatmul.bf16.gmra.mxu0 %v11312
    %v11470 = vpop.f32.mrf.mxu0
    %v11471 = vadd.f32 0.0, %v11470
    %v11472 = vpop.f32.mrf.mxu0
    %v11473 = vadd.f32 0.0, %v11472
    %11474 = vdwg.mxu0
    %11475 = vmatpush.bf16.msra.mxu0 %v11409
    %11476 = vmatpush.bf16.msra.mxu0 %v11408
    %11477 = vmatpush.bf16.msra.mxu0 %v11407
    %11478 = vmatpush.bf16.msra.mxu0 %v11406
    %11479 = vmatpush.bf16.msra.mxu0 %v11405
    %11480 = vmatpush.bf16.msra.mxu0 %v11404
    %11481 = vmatpush.bf16.msra.mxu0 %v11403
    %11482 = vmatpush.bf16.msra.mxu0 %v11402
    %11483 = vmatmul.bf16.gmra.mxu0 %v11299
    %v11484 = vpop.f32.mrf.mxu0
    %v11485 = vadd.f32 %v11436, %v11484
    %v11486 = vpop.f32.mrf.mxu0
    %v11487 = vadd.f32 %v11438, %v11486
    %11488 = vmatmul.bf16.gmra.mxu0 %v11301
    %v11489 = vpop.f32.mrf.mxu0
    %v11490 = vadd.f32 %v11441, %v11489
    %v11491 = vpop.f32.mrf.mxu0
    %v11492 = vadd.f32 %v11443, %v11491
    %11493 = vmatmul.bf16.gmra.mxu0 %v11303
    %v11494 = vpop.f32.mrf.mxu0
    %v11495 = vadd.f32 %v11446, %v11494
    %v11496 = vpop.f32.mrf.mxu0
    %v11497 = vadd.f32 %v11448, %v11496
    %11498 = vmatmul.bf16.gmra.mxu0 %v11305
    %v11499 = vpop.f32.mrf.mxu0
    %v11500 = vadd.f32 %v11451, %v11499
    %v11501 = vpop.f32.mrf.mxu0
    %v11502 = vadd.f32 %v11453, %v11501
    %11503 = vmatmul.bf16.gmra.mxu0 %v11307
    %v11504 = vpop.f32.mrf.mxu0
    %v11505 = vadd.f32 %v11456, %v11504
    %v11506 = vpop.f32.mrf.mxu0
    %v11507 = vadd.f32 %v11458, %v11506
    %11508 = vmatmul.bf16.gmra.mxu0 %v11309
    %v11509 = vpop.f32.mrf.mxu0
    %v11510 = vadd.f32 %v11461, %v11509
    %v11511 = vpop.f32.mrf.mxu0
    %v11512 = vadd.f32 %v11463, %v11511
    %11513 = vmatmul.bf16.gmra.mxu0 %v11311
    %v11514 = vpop.f32.mrf.mxu0
    %v11515 = vadd.f32 %v11466, %v11514
    %v11516 = vpop.f32.mrf.mxu0
    %v11517 = vadd.f32 %v11468, %v11516
    %11518 = vmatmul.bf16.gmra.mxu0 %v11313
    %v11519 = vpop.f32.mrf.mxu0
    %v11520 = vadd.f32 %v11471, %v11519
    %v11521 = vpop.f32.mrf.mxu0
    %v11522 = vadd.f32 %v11473, %v11521
    %11523 = vdwg.mxu0
    %v11526 = vunpack.c.l.b16 %v11161
    %v11527 = vunpack.c.h.b16 %v11161
    %v11528 = vunpack.c.l.b16 %v11162
    %v11529 = vunpack.c.h.b16 %v11162
    %v11530 = vpack.c.b16 %v11528, %v11526
    %v11531 = vpack.c.b16 %v11529, %v11527
    %v11566 = vunpack.c.l.b16 %v11185
    %v11567 = vunpack.c.l.b16 %v11186
    %v11568 = vunpack.c.l.b16 %v11187
    %v11569 = vunpack.c.l.b16 %v11188
    %v11570 = vunpack.c.l.b16 %v11189
    %v11571 = vunpack.c.l.b16 %v11190
    %v11572 = vunpack.c.l.b16 %v11191
    %v11573 = vunpack.c.l.b16 %v11192
    %v11574 = vunpack.c.l.b16 %v11193
    %v11575 = vunpack.c.l.b16 %v11194
    %v11576 = vunpack.c.l.b16 %v11195
    %v11577 = vunpack.c.l.b16 %v11196
    %v11578 = vunpack.c.l.b16 %v11197
    %v11579 = vunpack.c.l.b16 %v11198
    %v11580 = vunpack.c.l.b16 %v11199
    %v11581 = vunpack.c.l.b16 %v11200
    %v11582 = vunpack.c.l.b16 %v11201
    %v11583 = vunpack.c.l.b16 %v11202
    %v11584 = vunpack.c.l.b16 %v11203
    %v11585 = vunpack.c.l.b16 %v11204
    %v11586 = vunpack.c.l.b16 %v11205
    %v11587 = vunpack.c.l.b16 %v11206
    %v11588 = vunpack.c.l.b16 %v11207
    %v11589 = vunpack.c.l.b16 %v11208
    %v11590 = vunpack.c.l.b16 %v11209
    %v11591 = vunpack.c.l.b16 %v11210
    %v11592 = vunpack.c.l.b16 %v11211
    %v11593 = vunpack.c.l.b16 %v11212
    %v11594 = vunpack.c.l.b16 %v11213
    %v11595 = vunpack.c.l.b16 %v11214
    %v11596 = vunpack.c.l.b16 %v11215
    %v11597 = vunpack.c.l.b16 %v11216
    %v11598 = vpack.c.b16 %v11567, %v11566
    %v11599 = vpack.c.b16 %v11569, %v11568
    %v11600 = vpack.c.b16 %v11571, %v11570
    %v11601 = vpack.c.b16 %v11573, %v11572
    %v11602 = vpack.c.b16 %v11575, %v11574
    %v11603 = vpack.c.b16 %v11577, %v11576
    %v11604 = vpack.c.b16 %v11579, %v11578
    %v11605 = vpack.c.b16 %v11581, %v11580
    %v11606 = vpack.c.b16 %v11583, %v11582
    %v11607 = vpack.c.b16 %v11585, %v11584
    %v11608 = vpack.c.b16 %v11587, %v11586
    %v11609 = vpack.c.b16 %v11589, %v11588
    %v11610 = vpack.c.b16 %v11591, %v11590
    %v11611 = vpack.c.b16 %v11593, %v11592
    %v11612 = vpack.c.b16 %v11595, %v11594
    %v11613 = vpack.c.b16 %v11597, %v11596
    %11630 = vmatpush.bf16.msra.mxu0 %v11605
    %11631 = vmatpush.bf16.msra.mxu0 %v11604
    %11632 = vmatpush.bf16.msra.mxu0 %v11603
    %11633 = vmatpush.bf16.msra.mxu0 %v11602
    %11634 = vmatpush.bf16.msra.mxu0 %v11601
    %11635 = vmatpush.bf16.msra.mxu0 %v11600
    %11636 = vmatpush.bf16.msra.mxu0 %v11599
    %11637 = vmatpush.bf16.msra.mxu0 %v11598
    %11638 = vmatmul.bf16.gmra.mxu0 %v11530
    %v11639 = vpop.f32.mrf.mxu0
    %v11640 = vadd.f32 %v11485, %v11639
    %v11641 = vpop.f32.mrf.mxu0
    %v11642 = vadd.f32 %v11487, %v11641
    %11643 = vmatmul.bf16.gmra.mxu0 %v11298
    %v11644 = vpop.f32.mrf.mxu0
    %v11645 = vadd.f32 %v11490, %v11644
    %v11646 = vpop.f32.mrf.mxu0
    %v11647 = vadd.f32 %v11492, %v11646
    %11648 = vmatmul.bf16.gmra.mxu0 %v11300
    %v11649 = vpop.f32.mrf.mxu0
    %v11650 = vadd.f32 %v11495, %v11649
    %v11651 = vpop.f32.mrf.mxu0
    %v11652 = vadd.f32 %v11497, %v11651
    %11653 = vmatmul.bf16.gmra.mxu0 %v11302
    %v11654 = vpop.f32.mrf.mxu0
    %v11655 = vadd.f32 %v11500, %v11654
    %v11656 = vpop.f32.mrf.mxu0
    %v11657 = vadd.f32 %v11502, %v11656
    %11658 = vmatmul.bf16.gmra.mxu0 %v11304
    %v11659 = vpop.f32.mrf.mxu0
    %v11660 = vadd.f32 %v11505, %v11659
    %v11661 = vpop.f32.mrf.mxu0
    %v11662 = vadd.f32 %v11507, %v11661
    %11663 = vmatmul.bf16.gmra.mxu0 %v11306
    %v11664 = vpop.f32.mrf.mxu0
    %v11665 = vadd.f32 %v11510, %v11664
    %v11666 = vpop.f32.mrf.mxu0
    %v11667 = vadd.f32 %v11512, %v11666
    %11668 = vmatmul.bf16.gmra.mxu0 %v11308
    %v11669 = vpop.f32.mrf.mxu0
    %v11670 = vadd.f32 %v11515, %v11669
    %v11671 = vpop.f32.mrf.mxu0
    %v11672 = vadd.f32 %v11517, %v11671
    %11673 = vmatmul.bf16.gmra.mxu0 %v11310
    %v11674 = vpop.f32.mrf.mxu0
    %v11675 = vadd.f32 %v11520, %v11674
    %v11676 = vpop.f32.mrf.mxu0
    %v11677 = vadd.f32 %v11522, %v11676
    %11678 = vdwg.mxu0
    %11679 = vmatpush.bf16.msra.mxu0 %v11613
    %11680 = vmatpush.bf16.msra.mxu0 %v11612
    %11681 = vmatpush.bf16.msra.mxu0 %v11611
    %11682 = vmatpush.bf16.msra.mxu0 %v11610
    %11683 = vmatpush.bf16.msra.mxu0 %v11609
    %11684 = vmatpush.bf16.msra.mxu0 %v11608
    %11685 = vmatpush.bf16.msra.mxu0 %v11607
    %11686 = vmatpush.bf16.msra.mxu0 %v11606
    %11687 = vmatmul.bf16.gmra.mxu0 %v11531
    %v11688 = vpop.f32.mrf.mxu0
    %v11689 = vadd.f32 %v11640, %v11688
    %v11690 = vpop.f32.mrf.mxu0
    %v11691 = vadd.f32 %v11642, %v11690
    %11692 = vmatmul.bf16.gmra.mxu0 %v11299
    %v11693 = vpop.f32.mrf.mxu0
    %v11694 = vadd.f32 %v11645, %v11693
    %v11695 = vpop.f32.mrf.mxu0
    %v11696 = vadd.f32 %v11647, %v11695
    %11697 = vmatmul.bf16.gmra.mxu0 %v11301
    %v11698 = vpop.f32.mrf.mxu0
    %v11699 = vadd.f32 %v11650, %v11698
    %v11700 = vpop.f32.mrf.mxu0
    %v11701 = vadd.f32 %v11652, %v11700
    %11702 = vmatmul.bf16.gmra.mxu0 %v11303
    %v11703 = vpop.f32.mrf.mxu0
    %v11704 = vadd.f32 %v11655, %v11703
    %v11705 = vpop.f32.mrf.mxu0
    %v11706 = vadd.f32 %v11657, %v11705
    %11707 = vmatmul.bf16.gmra.mxu0 %v11305
    %v11708 = vpop.f32.mrf.mxu0
    %v11709 = vadd.f32 %v11660, %v11708
    %v11710 = vpop.f32.mrf.mxu0
    %v11711 = vadd.f32 %v11662, %v11710
    %11712 = vmatmul.bf16.gmra.mxu0 %v11307
    %v11713 = vpop.f32.mrf.mxu0
    %v11714 = vadd.f32 %v11665, %v11713
    %v11715 = vpop.f32.mrf.mxu0
    %v11716 = vadd.f32 %v11667, %v11715
    %11717 = vmatmul.bf16.gmra.mxu0 %v11309
    %v11718 = vpop.f32.mrf.mxu0
    %v11719 = vadd.f32 %v11670, %v11718
    %v11720 = vpop.f32.mrf.mxu0
    %v11721 = vadd.f32 %v11672, %v11720
    %11722 = vmatmul.bf16.gmra.mxu0 %v11311
    %v11723 = vpop.f32.mrf.mxu0
    %v11724 = vadd.f32 %v11675, %v11723
    %v11725 = vpop.f32.mrf.mxu0
    %v11726 = vadd.f32 %v11677, %v11725
    %11727 = vdwg.mxu0
    %s11728 = scalar_lea.vmem %s9, 256
    %v11729 = vld [vmem:[%s11728] sm:$0xf]
    %v11730 = vld [vmem:[%s11728 + $0x4] sm:$0xf]
    %v11731 = vld [vmem:[%s11728 + $0x8] sm:$0xf]
    %v11732 = vld [vmem:[%s11728 + $0xc] sm:$0xf]
    %v11733 = vld [vmem:[%s11728 + $0x10] sm:$0xf]
    %v11734 = vld [vmem:[%s11728 + $0x14] sm:$0xf]
    %v11735 = vld [vmem:[%s11728 + $0x18] sm:$0xf]
    %v11736 = vld [vmem:[%s11728 + $0x1c] sm:$0xf]
    %v11737 = vld [vmem:[%s11728 + $0x20] sm:$0xf]
    %v11738 = vld [vmem:[%s11728 + $0x24] sm:$0xf]
    %v11739 = vld [vmem:[%s11728 + $0x28] sm:$0xf]
    %v11740 = vld [vmem:[%s11728 + $0x2c] sm:$0xf]
    %v11741 = vld [vmem:[%s11728 + $0x30] sm:$0xf]
    %v11742 = vld [vmem:[%s11728 + $0x34] sm:$0xf]
    %v11743 = vld [vmem:[%s11728 + $0x38] sm:$0xf]
    %v11744 = vld [vmem:[%s11728 + $0x3c] sm:$0xf]
    %v11745 = vld [vmem:[%s11728 + $0x40] sm:$0xf]
    %v11746 = vld [vmem:[%s11728 + $0x44] sm:$0xf]
    %v11747 = vld [vmem:[%s11728 + $0x48] sm:$0xf]
    %v11748 = vld [vmem:[%s11728 + $0x4c] sm:$0xf]
    %v11749 = vld [vmem:[%s11728 + $0x50] sm:$0xf]
    %v11750 = vld [vmem:[%s11728 + $0x54] sm:$0xf]
    %v11751 = vld [vmem:[%s11728 + $0x58] sm:$0xf]
    %v11752 = vld [vmem:[%s11728 + $0x5c] sm:$0xf]
    %v11753 = vld [vmem:[%s11728 + $0x60] sm:$0xf]
    %v11754 = vld [vmem:[%s11728 + $0x64] sm:$0xf]
    %v11755 = vld [vmem:[%s11728 + $0x68] sm:$0xf]
    %v11756 = vld [vmem:[%s11728 + $0x6c] sm:$0xf]
    %v11757 = vld [vmem:[%s11728 + $0x70] sm:$0xf]
    %v11758 = vld [vmem:[%s11728 + $0x74] sm:$0xf]
    %v11759 = vld [vmem:[%s11728 + $0x78] sm:$0xf]
    %v11760 = vld [vmem:[%s11728 + $0x7c] sm:$0xf]
    %v11763 = vunpack.c.l.b16 %v11179
    %v11764 = vunpack.c.h.b16 %v11179
    %v11765 = vunpack.c.l.b16 %v11180
    %v11766 = vunpack.c.h.b16 %v11180
    %v11767 = vpack.c.b16 %v11765, %v11763
    %v11768 = vpack.c.b16 %v11766, %v11764
    %v11803 = vunpack.c.l.b16 %v11729
    %v11804 = vunpack.c.l.b16 %v11730
    %v11805 = vunpack.c.l.b16 %v11731
    %v11806 = vunpack.c.l.b16 %v11732
    %v11807 = vunpack.c.l.b16 %v11733
    %v11808 = vunpack.c.l.b16 %v11734
    %v11809 = vunpack.c.l.b16 %v11735
    %v11810 = vunpack.c.l.b16 %v11736
    %v11811 = vunpack.c.l.b16 %v11737
    %v11812 = vunpack.c.l.b16 %v11738
    %v11813 = vunpack.c.l.b16 %v11739
    %v11814 = vunpack.c.l.b16 %v11740
    %v11815 = vunpack.c.l.b16 %v11741
    %v11816 = vunpack.c.l.b16 %v11742
    %v11817 = vunpack.c.l.b16 %v11743
    %v11818 = vunpack.c.l.b16 %v11744
    %v11819 = vunpack.c.l.b16 %v11745
    %v11820 = vunpack.c.l.b16 %v11746
    %v11821 = vunpack.c.l.b16 %v11747
    %v11822 = vunpack.c.l.b16 %v11748
    %v11823 = vunpack.c.l.b16 %v11749
    %v11824 = vunpack.c.l.b16 %v11750
    %v11825 = vunpack.c.l.b16 %v11751
    %v11826 = vunpack.c.l.b16 %v11752
    %v11827 = vunpack.c.l.b16 %v11753
    %v11828 = vunpack.c.l.b16 %v11754
    %v11829 = vunpack.c.l.b16 %v11755
    %v11830 = vunpack.c.l.b16 %v11756
    %v11831 = vunpack.c.l.b16 %v11757
    %v11832 = vunpack.c.l.b16 %v11758
    %v11833 = vunpack.c.l.b16 %v11759
    %v11834 = vunpack.c.l.b16 %v11760
    %v11835 = vpack.c.b16 %v11804, %v11803
    %v11836 = vpack.c.b16 %v11806, %v11805
    %v11837 = vpack.c.b16 %v11808, %v11807
    %v11838 = vpack.c.b16 %v11810, %v11809
    %v11839 = vpack.c.b16 %v11812, %v11811
    %v11840 = vpack.c.b16 %v11814, %v11813
    %v11841 = vpack.c.b16 %v11816, %v11815
    %v11842 = vpack.c.b16 %v11818, %v11817
    %v11843 = vpack.c.b16 %v11820, %v11819
    %v11844 = vpack.c.b16 %v11822, %v11821
    %v11845 = vpack.c.b16 %v11824, %v11823
    %v11846 = vpack.c.b16 %v11826, %v11825
    %v11847 = vpack.c.b16 %v11828, %v11827
    %v11848 = vpack.c.b16 %v11830, %v11829
    %v11849 = vpack.c.b16 %v11832, %v11831
    %v11850 = vpack.c.b16 %v11834, %v11833
    %11867 = vmatpush.bf16.msra.mxu0 %v11842
    %11868 = vmatpush.bf16.msra.mxu0 %v11841
    %11869 = vmatpush.bf16.msra.mxu0 %v11840
    %11870 = vmatpush.bf16.msra.mxu0 %v11839
    %11871 = vmatpush.bf16.msra.mxu0 %v11838
    %11872 = vmatpush.bf16.msra.mxu0 %v11837
    %11873 = vmatpush.bf16.msra.mxu0 %v11836
    %11874 = vmatpush.bf16.msra.mxu0 %v11835
    %11875 = vmatmul.bf16.gmra.mxu0 %v11300
    %v11876 = vpop.f32.mrf.mxu0
    %v11877 = vadd.f32 0.0, %v11876
    %v11878 = vpop.f32.mrf.mxu0
    %v11879 = vadd.f32 0.0, %v11878
    %11880 = vmatmul.bf16.gmra.mxu0 %v11302
    %v11881 = vpop.f32.mrf.mxu0
    %v11882 = vadd.f32 0.0, %v11881
    %v11883 = vpop.f32.mrf.mxu0
    %v11884 = vadd.f32 0.0, %v11883
    %11885 = vmatmul.bf16.gmra.mxu0 %v11304
    %v11886 = vpop.f32.mrf.mxu0
    %v11887 = vadd.f32 0.0, %v11886
    %v11888 = vpop.f32.mrf.mxu0
    %v11889 = vadd.f32 0.0, %v11888
    %11890 = vmatmul.bf16.gmra.mxu0 %v11306
    %v11891 = vpop.f32.mrf.mxu0
    %v11892 = vadd.f32 0.0, %v11891
    %v11893 = vpop.f32.mrf.mxu0
    %v11894 = vadd.f32 0.0, %v11893
    %11895 = vmatmul.bf16.gmra.mxu0 %v11308
    %v11896 = vpop.f32.mrf.mxu0
    %v11897 = vadd.f32 0.0, %v11896
    %v11898 = vpop.f32.mrf.mxu0
    %v11899 = vadd.f32 0.0, %v11898
    %11900 = vmatmul.bf16.gmra.mxu0 %v11310
    %v11901 = vpop.f32.mrf.mxu0
    %v11902 = vadd.f32 0.0, %v11901
    %v11903 = vpop.f32.mrf.mxu0
    %v11904 = vadd.f32 0.0, %v11903
    %11905 = vmatmul.bf16.gmra.mxu0 %v11312
    %v11906 = vpop.f32.mrf.mxu0
    %v11907 = vadd.f32 0.0, %v11906
    %v11908 = vpop.f32.mrf.mxu0
    %v11909 = vadd.f32 0.0, %v11908
    %11910 = vmatmul.bf16.gmra.mxu0 %v11767
    %v11911 = vpop.f32.mrf.mxu0
    %v11912 = vadd.f32 0.0, %v11911
    %v11913 = vpop.f32.mrf.mxu0
    %v11914 = vadd.f32 0.0, %v11913
    %11915 = vdwg.mxu0
    %11916 = vmatpush.bf16.msra.mxu0 %v11850
    %11917 = vmatpush.bf16.msra.mxu0 %v11849
    %11918 = vmatpush.bf16.msra.mxu0 %v11848
    %11919 = vmatpush.bf16.msra.mxu0 %v11847
    %11920 = vmatpush.bf16.msra.mxu0 %v11846
    %11921 = vmatpush.bf16.msra.mxu0 %v11845
    %11922 = vmatpush.bf16.msra.mxu0 %v11844
    %11923 = vmatpush.bf16.msra.mxu0 %v11843
    %11924 = vmatmul.bf16.gmra.mxu0 %v11301
    %v11925 = vpop.f32.mrf.mxu0
    %v11926 = vadd.f32 %v11877, %v11925
    %v11927 = vpop.f32.mrf.mxu0
    %v11928 = vadd.f32 %v11879, %v11927
    %11929 = vmatmul.bf16.gmra.mxu0 %v11303
    %v11930 = vpop.f32.mrf.mxu0
    %v11931 = vadd.f32 %v11882, %v11930
    %v11932 = vpop.f32.mrf.mxu0
    %v11933 = vadd.f32 %v11884, %v11932
    %11934 = vmatmul.bf16.gmra.mxu0 %v11305
    %v11935 = vpop.f32.mrf.mxu0
    %v11936 = vadd.f32 %v11887, %v11935
    %v11937 = vpop.f32.mrf.mxu0
    %v11938 = vadd.f32 %v11889, %v11937
    %11939 = vmatmul.bf16.gmra.mxu0 %v11307
    %v11940 = vpop.f32.mrf.mxu0
    %v11941 = vadd.f32 %v11892, %v11940
    %v11942 = vpop.f32.mrf.mxu0
    %v11943 = vadd.f32 %v11894, %v11942
    %11944 = vmatmul.bf16.gmra.mxu0 %v11309
    %v11945 = vpop.f32.mrf.mxu0
    %v11946 = vadd.f32 %v11897, %v11945
    %v11947 = vpop.f32.mrf.mxu0
    %v11948 = vadd.f32 %v11899, %v11947
    %11949 = vmatmul.bf16.gmra.mxu0 %v11311
    %v11950 = vpop.f32.mrf.mxu0
    %v11951 = vadd.f32 %v11902, %v11950
    %v11952 = vpop.f32.mrf.mxu0
    %v11953 = vadd.f32 %v11904, %v11952
    %11954 = vmatmul.bf16.gmra.mxu0 %v11313
    %v11955 = vpop.f32.mrf.mxu0
    %v11956 = vadd.f32 %v11907, %v11955
    %v11957 = vpop.f32.mrf.mxu0
    %v11958 = vadd.f32 %v11909, %v11957
    %11959 = vmatmul.bf16.gmra.mxu0 %v11768
    %v11960 = vpop.f32.mrf.mxu0
    %v11961 = vadd.f32 %v11912, %v11960
    %v11962 = vpop.f32.mrf.mxu0
    %v11963 = vadd.f32 %v11914, %v11962
    %11964 = vdwg.mxu0
    %v11965 = vadd.f32 %v11689, %v11926
    %v11966 = vadd.f32 %v11691, %v11928
    %v11967 = vadd.f32 %v11694, %v11931
    %v11968 = vadd.f32 %v11696, %v11933
    %v11969 = vadd.f32 %v11699, %v11936
    %v11970 = vadd.f32 %v11701, %v11938
    %v11971 = vadd.f32 %v11704, %v11941
    %v11972 = vadd.f32 %v11706, %v11943
    %v11973 = vadd.f32 %v11709, %v11946
    %v11974 = vadd.f32 %v11711, %v11948
    %v11975 = vadd.f32 %v11714, %v11951
    %v11976 = vadd.f32 %v11716, %v11953
    %v11977 = vadd.f32 %v11719, %v11956
    %v11978 = vadd.f32 %v11721, %v11958
    %v11979 = vadd.f32 %v11724, %v11961
    %v11980 = vadd.f32 %v11726, %v11963
    %s11981 = scalar_lea.vmem %s9, 384
    %v11982 = vld [vmem:[%s11981] sm:$0xf]
    %v11983 = vld [vmem:[%s11981 + $0x4] sm:$0xf]
    %v11984 = vld [vmem:[%s11981 + $0x8] sm:$0xf]
    %v11985 = vld [vmem:[%s11981 + $0xc] sm:$0xf]
    %v11986 = vld [vmem:[%s11981 + $0x10] sm:$0xf]
    %v11987 = vld [vmem:[%s11981 + $0x14] sm:$0xf]
    %v11988 = vld [vmem:[%s11981 + $0x18] sm:$0xf]
    %v11989 = vld [vmem:[%s11981 + $0x1c] sm:$0xf]
    %v11990 = vld [vmem:[%s11981 + $0x20] sm:$0xf]
    %v11991 = vld [vmem:[%s11981 + $0x24] sm:$0xf]
    %v11992 = vld [vmem:[%s11981 + $0x28] sm:$0xf]
    %v11993 = vld [vmem:[%s11981 + $0x2c] sm:$0xf]
    %v11994 = vld [vmem:[%s11981 + $0x30] sm:$0xf]
    %v11995 = vld [vmem:[%s11981 + $0x34] sm:$0xf]
    %v11996 = vld [vmem:[%s11981 + $0x38] sm:$0xf]
    %v11997 = vld [vmem:[%s11981 + $0x3c] sm:$0xf]
    %v11998 = vld [vmem:[%s11981 + $0x40] sm:$0xf]
    %v11999 = vld [vmem:[%s11981 + $0x44] sm:$0xf]
    %v12000 = vld [vmem:[%s11981 + $0x48] sm:$0xf]
    %v12001 = vld [vmem:[%s11981 + $0x4c] sm:$0xf]
    %v12002 = vld [vmem:[%s11981 + $0x50] sm:$0xf]
    %v12003 = vld [vmem:[%s11981 + $0x54] sm:$0xf]
    %v12004 = vld [vmem:[%s11981 + $0x58] sm:$0xf]
    %v12005 = vld [vmem:[%s11981 + $0x5c] sm:$0xf]
    %v12006 = vld [vmem:[%s11981 + $0x60] sm:$0xf]
    %v12007 = vld [vmem:[%s11981 + $0x64] sm:$0xf]
    %v12008 = vld [vmem:[%s11981 + $0x68] sm:$0xf]
    %v12009 = vld [vmem:[%s11981 + $0x6c] sm:$0xf]
    %v12010 = vld [vmem:[%s11981 + $0x70] sm:$0xf]
    %v12011 = vld [vmem:[%s11981 + $0x74] sm:$0xf]
    %v12012 = vld [vmem:[%s11981 + $0x78] sm:$0xf]
    %v12013 = vld [vmem:[%s11981 + $0x7c] sm:$0xf]
    %v12016 = vunpack.c.l.b16 %v11181
    %v12017 = vunpack.c.h.b16 %v11181
    %v12018 = vunpack.c.l.b16 %v11182
    %v12019 = vunpack.c.h.b16 %v11182
    %v12020 = vpack.c.b16 %v12018, %v12016
    %v12021 = vpack.c.b16 %v12019, %v12017
    %v12056 = vunpack.c.l.b16 %v11982
    %v12057 = vunpack.c.l.b16 %v11983
    %v12058 = vunpack.c.l.b16 %v11984
    %v12059 = vunpack.c.l.b16 %v11985
    %v12060 = vunpack.c.l.b16 %v11986
    %v12061 = vunpack.c.l.b16 %v11987
    %v12062 = vunpack.c.l.b16 %v11988
    %v12063 = vunpack.c.l.b16 %v11989
    %v12064 = vunpack.c.l.b16 %v11990
    %v12065 = vunpack.c.l.b16 %v11991
    %v12066 = vunpack.c.l.b16 %v11992
    %v12067 = vunpack.c.l.b16 %v11993
    %v12068 = vunpack.c.l.b16 %v11994
    %v12069 = vunpack.c.l.b16 %v11995
    %v12070 = vunpack.c.l.b16 %v11996
    %v12071 = vunpack.c.l.b16 %v11997
    %v12072 = vunpack.c.l.b16 %v11998
    %v12073 = vunpack.c.l.b16 %v11999
    %v12074 = vunpack.c.l.b16 %v12000
    %v12075 = vunpack.c.l.b16 %v12001
    %v12076 = vunpack.c.l.b16 %v12002
    %v12077 = vunpack.c.l.b16 %v12003
    %v12078 = vunpack.c.l.b16 %v12004
    %v12079 = vunpack.c.l.b16 %v12005
    %v12080 = vunpack.c.l.b16 %v12006
    %v12081 = vunpack.c.l.b16 %v12007
    %v12082 = vunpack.c.l.b16 %v12008
    %v12083 = vunpack.c.l.b16 %v12009
    %v12084 = vunpack.c.l.b16 %v12010
    %v12085 = vunpack.c.l.b16 %v12011
    %v12086 = vunpack.c.l.b16 %v12012
    %v12087 = vunpack.c.l.b16 %v12013
    %v12088 = vpack.c.b16 %v12057, %v12056
    %v12089 = vpack.c.b16 %v12059, %v12058
    %v12090 = vpack.c.b16 %v12061, %v12060
    %v12091 = vpack.c.b16 %v12063, %v12062
    %v12092 = vpack.c.b16 %v12065, %v12064
    %v12093 = vpack.c.b16 %v12067, %v12066
    %v12094 = vpack.c.b16 %v12069, %v12068
    %v12095 = vpack.c.b16 %v12071, %v12070
    %v12096 = vpack.c.b16 %v12073, %v12072
    %v12097 = vpack.c.b16 %v12075, %v12074
    %v12098 = vpack.c.b16 %v12077, %v12076
    %v12099 = vpack.c.b16 %v12079, %v12078
    %v12100 = vpack.c.b16 %v12081, %v12080
    %v12101 = vpack.c.b16 %v12083, %v12082
    %v12102 = vpack.c.b16 %v12085, %v12084
    %v12103 = vpack.c.b16 %v12087, %v12086
    %12120 = vmatpush.bf16.msra.mxu0 %v12095
    %12121 = vmatpush.bf16.msra.mxu0 %v12094
    %12122 = vmatpush.bf16.msra.mxu0 %v12093
    %12123 = vmatpush.bf16.msra.mxu0 %v12092
    %12124 = vmatpush.bf16.msra.mxu0 %v12091
    %12125 = vmatpush.bf16.msra.mxu0 %v12090
    %12126 = vmatpush.bf16.msra.mxu0 %v12089
    %12127 = vmatpush.bf16.msra.mxu0 %v12088
    %12128 = vmatmul.bf16.gmra.mxu0 %v11302
    %v12129 = vpop.f32.mrf.mxu0
    %v12130 = vadd.f32 0.0, %v12129
    %v12131 = vpop.f32.mrf.mxu0
    %v12132 = vadd.f32 0.0, %v12131
    %12133 = vmatmul.bf16.gmra.mxu0 %v11304
    %v12134 = vpop.f32.mrf.mxu0
    %v12135 = vadd.f32 0.0, %v12134
    %v12136 = vpop.f32.mrf.mxu0
    %v12137 = vadd.f32 0.0, %v12136
    %12138 = vmatmul.bf16.gmra.mxu0 %v11306
    %v12139 = vpop.f32.mrf.mxu0
    %v12140 = vadd.f32 0.0, %v12139
    %v12141 = vpop.f32.mrf.mxu0
    %v12142 = vadd.f32 0.0, %v12141
    %12143 = vmatmul.bf16.gmra.mxu0 %v11308
    %v12144 = vpop.f32.mrf.mxu0
    %v12145 = vadd.f32 0.0, %v12144
    %v12146 = vpop.f32.mrf.mxu0
    %v12147 = vadd.f32 0.0, %v12146
    %12148 = vmatmul.bf16.gmra.mxu0 %v11310
    %v12149 = vpop.f32.mrf.mxu0
    %v12150 = vadd.f32 0.0, %v12149
    %v12151 = vpop.f32.mrf.mxu0
    %v12152 = vadd.f32 0.0, %v12151
    %12153 = vmatmul.bf16.gmra.mxu0 %v11312
    %v12154 = vpop.f32.mrf.mxu0
    %v12155 = vadd.f32 0.0, %v12154
    %v12156 = vpop.f32.mrf.mxu0
    %v12157 = vadd.f32 0.0, %v12156
    %12158 = vmatmul.bf16.gmra.mxu0 %v11767
    %v12159 = vpop.f32.mrf.mxu0
    %v12160 = vadd.f32 0.0, %v12159
    %v12161 = vpop.f32.mrf.mxu0
    %v12162 = vadd.f32 0.0, %v12161
    %12163 = vmatmul.bf16.gmra.mxu0 %v12020
    %v12164 = vpop.f32.mrf.mxu0
    %v12165 = vadd.f32 0.0, %v12164
    %v12166 = vpop.f32.mrf.mxu0
    %v12167 = vadd.f32 0.0, %v12166
    %12168 = vdwg.mxu0
    %12169 = vmatpush.bf16.msra.mxu0 %v12103
    %12170 = vmatpush.bf16.msra.mxu0 %v12102
    %12171 = vmatpush.bf16.msra.mxu0 %v12101
    %12172 = vmatpush.bf16.msra.mxu0 %v12100
    %12173 = vmatpush.bf16.msra.mxu0 %v12099
    %12174 = vmatpush.bf16.msra.mxu0 %v12098
    %12175 = vmatpush.bf16.msra.mxu0 %v12097
    %12176 = vmatpush.bf16.msra.mxu0 %v12096
    %12177 = vmatmul.bf16.gmra.mxu0 %v11303
    %v12178 = vpop.f32.mrf.mxu0
    %v12179 = vadd.f32 %v12130, %v12178
    %v12180 = vpop.f32.mrf.mxu0
    %v12181 = vadd.f32 %v12132, %v12180
    %12182 = vmatmul.bf16.gmra.mxu0 %v11305
    %v12183 = vpop.f32.mrf.mxu0
    %v12184 = vadd.f32 %v12135, %v12183
    %v12185 = vpop.f32.mrf.mxu0
    %v12186 = vadd.f32 %v12137, %v12185
    %12187 = vmatmul.bf16.gmra.mxu0 %v11307
    %v12188 = vpop.f32.mrf.mxu0
    %v12189 = vadd.f32 %v12140, %v12188
    %v12190 = vpop.f32.mrf.mxu0
    %v12191 = vadd.f32 %v12142, %v12190
    %12192 = vmatmul.bf16.gmra.mxu0 %v11309
    %v12193 = vpop.f32.mrf.mxu0
    %v12194 = vadd.f32 %v12145, %v12193
    %v12195 = vpop.f32.mrf.mxu0
    %v12196 = vadd.f32 %v12147, %v12195
    %12197 = vmatmul.bf16.gmra.mxu0 %v11311
    %v12198 = vpop.f32.mrf.mxu0
    %v12199 = vadd.f32 %v12150, %v12198
    %v12200 = vpop.f32.mrf.mxu0
    %v12201 = vadd.f32 %v12152, %v12200
    %12202 = vmatmul.bf16.gmra.mxu0 %v11313
    %v12203 = vpop.f32.mrf.mxu0
    %v12204 = vadd.f32 %v12155, %v12203
    %v12205 = vpop.f32.mrf.mxu0
    %v12206 = vadd.f32 %v12157, %v12205
    %12207 = vmatmul.bf16.gmra.mxu0 %v11768
    %v12208 = vpop.f32.mrf.mxu0
    %v12209 = vadd.f32 %v12160, %v12208
    %v12210 = vpop.f32.mrf.mxu0
    %v12211 = vadd.f32 %v12162, %v12210
    %12212 = vmatmul.bf16.gmra.mxu0 %v12021
    %v12213 = vpop.f32.mrf.mxu0
    %v12214 = vadd.f32 %v12165, %v12213
    %v12215 = vpop.f32.mrf.mxu0
    %v12216 = vadd.f32 %v12167, %v12215
    %12217 = vdwg.mxu0
    %v12218 = vadd.f32 %v11965, %v12179
    %v12219 = vadd.f32 %v11966, %v12181
    %v12220 = vadd.f32 %v11967, %v12184
    %v12221 = vadd.f32 %v11968, %v12186
    %v12222 = vadd.f32 %v11969, %v12189
    %v12223 = vadd.f32 %v11970, %v12191
    %v12224 = vadd.f32 %v11971, %v12194
    %v12225 = vadd.f32 %v11972, %v12196
    %v12226 = vadd.f32 %v11973, %v12199
    %v12227 = vadd.f32 %v11974, %v12201
    %v12228 = vadd.f32 %v11975, %v12204
    %v12229 = vadd.f32 %v11976, %v12206
    %v12230 = vadd.f32 %v11977, %v12209
    %v12231 = vadd.f32 %v11978, %v12211
    %v12232 = vadd.f32 %v11979, %v12214
    %v12233 = vadd.f32 %v11980, %v12216
    %s12234 = scalar_lea.vmem %s9, 512
    %v12235 = vld [vmem:[%s12234] sm:$0xf]
    %v12236 = vld [vmem:[%s12234 + $0x4] sm:$0xf]
    %v12237 = vld [vmem:[%s12234 + $0x8] sm:$0xf]
    %v12238 = vld [vmem:[%s12234 + $0xc] sm:$0xf]
    %v12239 = vld [vmem:[%s12234 + $0x10] sm:$0xf]
    %v12240 = vld [vmem:[%s12234 + $0x14] sm:$0xf]
    %v12241 = vld [vmem:[%s12234 + $0x18] sm:$0xf]
    %v12242 = vld [vmem:[%s12234 + $0x1c] sm:$0xf]
    %v12243 = vld [vmem:[%s12234 + $0x20] sm:$0xf]
    %v12244 = vld [vmem:[%s12234 + $0x24] sm:$0xf]
    %v12245 = vld [vmem:[%s12234 + $0x28] sm:$0xf]
    %v12246 = vld [vmem:[%s12234 + $0x2c] sm:$0xf]
    %v12247 = vld [vmem:[%s12234 + $0x30] sm:$0xf]
    %v12248 = vld [vmem:[%s12234 + $0x34] sm:$0xf]
    %v12249 = vld [vmem:[%s12234 + $0x38] sm:$0xf]
    %v12250 = vld [vmem:[%s12234 + $0x3c] sm:$0xf]
    %v12251 = vld [vmem:[%s12234 + $0x40] sm:$0xf]
    %v12252 = vld [vmem:[%s12234 + $0x44] sm:$0xf]
    %v12253 = vld [vmem:[%s12234 + $0x48] sm:$0xf]
    %v12254 = vld [vmem:[%s12234 + $0x4c] sm:$0xf]
    %v12255 = vld [vmem:[%s12234 + $0x50] sm:$0xf]
    %v12256 = vld [vmem:[%s12234 + $0x54] sm:$0xf]
    %v12257 = vld [vmem:[%s12234 + $0x58] sm:$0xf]
    %v12258 = vld [vmem:[%s12234 + $0x5c] sm:$0xf]
    %v12259 = vld [vmem:[%s12234 + $0x60] sm:$0xf]
    %v12260 = vld [vmem:[%s12234 + $0x64] sm:$0xf]
    %v12261 = vld [vmem:[%s12234 + $0x68] sm:$0xf]
    %v12262 = vld [vmem:[%s12234 + $0x6c] sm:$0xf]
    %v12263 = vld [vmem:[%s12234 + $0x70] sm:$0xf]
    %v12264 = vld [vmem:[%s12234 + $0x74] sm:$0xf]
    %v12265 = vld [vmem:[%s12234 + $0x78] sm:$0xf]
    %v12266 = vld [vmem:[%s12234 + $0x7c] sm:$0xf]
    %v12269 = vunpack.c.l.b16 %v11183
    %v12270 = vunpack.c.h.b16 %v11183
    %v12271 = vunpack.c.l.b16 %v11184
    %v12272 = vunpack.c.h.b16 %v11184
    %v12273 = vpack.c.b16 %v12271, %v12269
    %v12274 = vpack.c.b16 %v12272, %v12270
    %v12309 = vunpack.c.l.b16 %v12235
    %v12310 = vunpack.c.l.b16 %v12236
    %v12311 = vunpack.c.l.b16 %v12237
    %v12312 = vunpack.c.l.b16 %v12238
    %v12313 = vunpack.c.l.b16 %v12239
    %v12314 = vunpack.c.l.b16 %v12240
    %v12315 = vunpack.c.l.b16 %v12241
    %v12316 = vunpack.c.l.b16 %v12242
    %v12317 = vunpack.c.l.b16 %v12243
    %v12318 = vunpack.c.l.b16 %v12244
    %v12319 = vunpack.c.l.b16 %v12245
    %v12320 = vunpack.c.l.b16 %v12246
    %v12321 = vunpack.c.l.b16 %v12247
    %v12322 = vunpack.c.l.b16 %v12248
    %v12323 = vunpack.c.l.b16 %v12249
    %v12324 = vunpack.c.l.b16 %v12250
    %v12325 = vunpack.c.l.b16 %v12251
    %v12326 = vunpack.c.l.b16 %v12252
    %v12327 = vunpack.c.l.b16 %v12253
    %v12328 = vunpack.c.l.b16 %v12254
    %v12329 = vunpack.c.l.b16 %v12255
    %v12330 = vunpack.c.l.b16 %v12256
    %v12331 = vunpack.c.l.b16 %v12257
    %v12332 = vunpack.c.l.b16 %v12258
    %v12333 = vunpack.c.l.b16 %v12259
    %v12334 = vunpack.c.l.b16 %v12260
    %v12335 = vunpack.c.l.b16 %v12261
    %v12336 = vunpack.c.l.b16 %v12262
    %v12337 = vunpack.c.l.b16 %v12263
    %v12338 = vunpack.c.l.b16 %v12264
    %v12339 = vunpack.c.l.b16 %v12265
    %v12340 = vunpack.c.l.b16 %v12266
    %v12341 = vpack.c.b16 %v12310, %v12309
    %v12342 = vpack.c.b16 %v12312, %v12311
    %v12343 = vpack.c.b16 %v12314, %v12313
    %v12344 = vpack.c.b16 %v12316, %v12315
    %v12345 = vpack.c.b16 %v12318, %v12317
    %v12346 = vpack.c.b16 %v12320, %v12319
    %v12347 = vpack.c.b16 %v12322, %v12321
    %v12348 = vpack.c.b16 %v12324, %v12323
    %v12349 = vpack.c.b16 %v12326, %v12325
    %v12350 = vpack.c.b16 %v12328, %v12327
    %v12351 = vpack.c.b16 %v12330, %v12329
    %v12352 = vpack.c.b16 %v12332, %v12331
    %v12353 = vpack.c.b16 %v12334, %v12333
    %v12354 = vpack.c.b16 %v12336, %v12335
    %v12355 = vpack.c.b16 %v12338, %v12337
    %v12356 = vpack.c.b16 %v12340, %v12339
    %12373 = vmatpush.bf16.msra.mxu0 %v12348
    %12374 = vmatpush.bf16.msra.mxu0 %v12347
    %12375 = vmatpush.bf16.msra.mxu0 %v12346
    %12376 = vmatpush.bf16.msra.mxu0 %v12345
    %12377 = vmatpush.bf16.msra.mxu0 %v12344
    %12378 = vmatpush.bf16.msra.mxu0 %v12343
    %12379 = vmatpush.bf16.msra.mxu0 %v12342
    %12380 = vmatpush.bf16.msra.mxu0 %v12341
    %12381 = vmatmul.bf16.gmra.mxu0 %v11304
    %v12382 = vpop.f32.mrf.mxu0
    %v12383 = vadd.f32 0.0, %v12382
    %v12384 = vpop.f32.mrf.mxu0
    %v12385 = vadd.f32 0.0, %v12384
    %12386 = vmatmul.bf16.gmra.mxu0 %v11306
    %v12387 = vpop.f32.mrf.mxu0
    %v12388 = vadd.f32 0.0, %v12387
    %v12389 = vpop.f32.mrf.mxu0
    %v12390 = vadd.f32 0.0, %v12389
    %12391 = vmatmul.bf16.gmra.mxu0 %v11308
    %v12392 = vpop.f32.mrf.mxu0
    %v12393 = vadd.f32 0.0, %v12392
    %v12394 = vpop.f32.mrf.mxu0
    %v12395 = vadd.f32 0.0, %v12394
    %12396 = vmatmul.bf16.gmra.mxu0 %v11310
    %v12397 = vpop.f32.mrf.mxu0
    %v12398 = vadd.f32 0.0, %v12397
    %v12399 = vpop.f32.mrf.mxu0
    %v12400 = vadd.f32 0.0, %v12399
    %12401 = vmatmul.bf16.gmra.mxu0 %v11312
    %v12402 = vpop.f32.mrf.mxu0
    %v12403 = vadd.f32 0.0, %v12402
    %v12404 = vpop.f32.mrf.mxu0
    %v12405 = vadd.f32 0.0, %v12404
    %12406 = vmatmul.bf16.gmra.mxu0 %v11767
    %v12407 = vpop.f32.mrf.mxu0
    %v12408 = vadd.f32 0.0, %v12407
    %v12409 = vpop.f32.mrf.mxu0
    %v12410 = vadd.f32 0.0, %v12409
    %12411 = vmatmul.bf16.gmra.mxu0 %v12020
    %v12412 = vpop.f32.mrf.mxu0
    %v12413 = vadd.f32 0.0, %v12412
    %v12414 = vpop.f32.mrf.mxu0
    %v12415 = vadd.f32 0.0, %v12414
    %12416 = vmatmul.bf16.gmra.mxu0 %v12273
    %v12417 = vpop.f32.mrf.mxu0
    %v12418 = vadd.f32 0.0, %v12417
    %v12419 = vpop.f32.mrf.mxu0
    %v12420 = vadd.f32 0.0, %v12419
    %12421 = vdwg.mxu0
    %12422 = vmatpush.bf16.msra.mxu0 %v12356
    %12423 = vmatpush.bf16.msra.mxu0 %v12355
    %12424 = vmatpush.bf16.msra.mxu0 %v12354
    %12425 = vmatpush.bf16.msra.mxu0 %v12353
    %12426 = vmatpush.bf16.msra.mxu0 %v12352
    %12427 = vmatpush.bf16.msra.mxu0 %v12351
    %12428 = vmatpush.bf16.msra.mxu0 %v12350
    %12429 = vmatpush.bf16.msra.mxu0 %v12349
    %12430 = vmatmul.bf16.gmra.mxu0 %v11305
    %v12431 = vpop.f32.mrf.mxu0
    %v12432 = vadd.f32 %v12383, %v12431
    %v12433 = vpop.f32.mrf.mxu0
    %v12434 = vadd.f32 %v12385, %v12433
    %12435 = vmatmul.bf16.gmra.mxu0 %v11307
    %v12436 = vpop.f32.mrf.mxu0
    %v12437 = vadd.f32 %v12388, %v12436
    %v12438 = vpop.f32.mrf.mxu0
    %v12439 = vadd.f32 %v12390, %v12438
    %12440 = vmatmul.bf16.gmra.mxu0 %v11309
    %v12441 = vpop.f32.mrf.mxu0
    %v12442 = vadd.f32 %v12393, %v12441
    %v12443 = vpop.f32.mrf.mxu0
    %v12444 = vadd.f32 %v12395, %v12443
    %12445 = vmatmul.bf16.gmra.mxu0 %v11311
    %v12446 = vpop.f32.mrf.mxu0
    %v12447 = vadd.f32 %v12398, %v12446
    %v12448 = vpop.f32.mrf.mxu0
    %v12449 = vadd.f32 %v12400, %v12448
    %12450 = vmatmul.bf16.gmra.mxu0 %v11313
    %v12451 = vpop.f32.mrf.mxu0
    %v12452 = vadd.f32 %v12403, %v12451
    %v12453 = vpop.f32.mrf.mxu0
    %v12454 = vadd.f32 %v12405, %v12453
    %12455 = vmatmul.bf16.gmra.mxu0 %v11768
    %v12456 = vpop.f32.mrf.mxu0
    %v12457 = vadd.f32 %v12408, %v12456
    %v12458 = vpop.f32.mrf.mxu0
    %v12459 = vadd.f32 %v12410, %v12458
    %12460 = vmatmul.bf16.gmra.mxu0 %v12021
    %v12461 = vpop.f32.mrf.mxu0
    %v12462 = vadd.f32 %v12413, %v12461
    %v12463 = vpop.f32.mrf.mxu0
    %v12464 = vadd.f32 %v12415, %v12463
    %12465 = vmatmul.bf16.gmra.mxu0 %v12274
    %v12466 = vpop.f32.mrf.mxu0
    %v12467 = vadd.f32 %v12418, %v12466
    %v12468 = vpop.f32.mrf.mxu0
    %v12469 = vadd.f32 %v12420, %v12468
    %12470 = vdwg.mxu0
    %v12471 = vadd.f32 %v12218, %v12432
    %v12472 = vadd.f32 %v12219, %v12434
    %v12473 = vadd.f32 %v12220, %v12437
    %v12474 = vadd.f32 %v12221, %v12439
    %v12475 = vadd.f32 %v12222, %v12442
    %v12476 = vadd.f32 %v12223, %v12444
    %v12477 = vadd.f32 %v12224, %v12447
    %v12478 = vadd.f32 %v12225, %v12449
    %v12479 = vadd.f32 %v12226, %v12452
    %v12480 = vadd.f32 %v12227, %v12454
    %v12481 = vadd.f32 %v12228, %v12457
    %v12482 = vadd.f32 %v12229, %v12459
    %v12483 = vadd.f32 %v12230, %v12462
    %v12484 = vadd.f32 %v12231, %v12464
    %v12485 = vadd.f32 %v12232, %v12467
    %v12486 = vadd.f32 %v12233, %v12469
    %v12487 = vld [vmem:[%s10] sm:$0x1]
    %v12489 = vperm.slane %v12487, 0
    %v12491 = vadd.f32 %v12471, %v12489
    %v12492 = vadd.f32 %v12472, %v12489
    %v12493 = vadd.f32 %v12473, %v12489
    %v12494 = vadd.f32 %v12474, %v12489
    %v12495 = vadd.f32 %v12475, %v12489
    %v12496 = vadd.f32 %v12476, %v12489
    %v12497 = vadd.f32 %v12477, %v12489
    %v12498 = vadd.f32 %v12478, %v12489
    %v12499 = vadd.f32 %v12479, %v12489
    %v12500 = vadd.f32 %v12480, %v12489
    %v12501 = vadd.f32 %v12481, %v12489
    %v12502 = vadd.f32 %v12482, %v12489
    %v12503 = vadd.f32 %v12483, %v12489
    %v12504 = vadd.f32 %v12484, %v12489
    %v12505 = vadd.f32 %v12485, %v12489
    %v12506 = vadd.f32 %v12486, %v12489
    %vm12507 = vcmp.ge.f32.partialorder %v12491, 0.0
    %vm12508 = vcmp.ge.f32.partialorder %v12492, 0.0
    %vm12509 = vcmp.ge.f32.partialorder %v12493, 0.0
    %vm12510 = vcmp.ge.f32.partialorder %v12494, 0.0
    %vm12511 = vcmp.ge.f32.partialorder %v12495, 0.0
    %vm12512 = vcmp.ge.f32.partialorder %v12496, 0.0
    %vm12513 = vcmp.ge.f32.partialorder %v12497, 0.0
    %vm12514 = vcmp.ge.f32.partialorder %v12498, 0.0
    %vm12515 = vcmp.ge.f32.partialorder %v12499, 0.0
    %vm12516 = vcmp.ge.f32.partialorder %v12500, 0.0
    %vm12517 = vcmp.ge.f32.partialorder %v12501, 0.0
    %vm12518 = vcmp.ge.f32.partialorder %v12502, 0.0
    %vm12519 = vcmp.ge.f32.partialorder %v12503, 0.0
    %vm12520 = vcmp.ge.f32.partialorder %v12504, 0.0
    %vm12521 = vcmp.ge.f32.partialorder %v12505, 0.0
    %vm12522 = vcmp.ge.f32.partialorder %v12506, 0.0
    %v12523 = vmul.f32 %v12491, 0.3
    %v12524 = vmul.f32 %v12492, 0.3
    %v12525 = vmul.f32 %v12493, 0.3
    %v12526 = vmul.f32 %v12494, 0.3
    %v12527 = vmul.f32 %v12495, 0.3
    %v12528 = vmul.f32 %v12496, 0.3
    %v12529 = vmul.f32 %v12497, 0.3
    %v12530 = vmul.f32 %v12498, 0.3
    %v12531 = vmul.f32 %v12499, 0.3
    %v12532 = vmul.f32 %v12500, 0.3
    %v12533 = vmul.f32 %v12501, 0.3
    %v12534 = vmul.f32 %v12502, 0.3
    %v12535 = vmul.f32 %v12503, 0.3
    %v12536 = vmul.f32 %v12504, 0.3
    %v12537 = vmul.f32 %v12505, 0.3
    %v12538 = vmul.f32 %v12506, 0.3
    %v12539 = vsel %vm12507, %v12491, %v12523
    %v12540 = vsel %vm12508, %v12492, %v12524
    %v12541 = vsel %vm12509, %v12493, %v12525
    %v12542 = vsel %vm12510, %v12494, %v12526
    %v12543 = vsel %vm12511, %v12495, %v12527
    %v12544 = vsel %vm12512, %v12496, %v12528
    %v12545 = vsel %vm12513, %v12497, %v12529
    %v12546 = vsel %vm12514, %v12498, %v12530
    %v12547 = vsel %vm12515, %v12499, %v12531
    %v12548 = vsel %vm12516, %v12500, %v12532
    %v12549 = vsel %vm12517, %v12501, %v12533
    %v12550 = vsel %vm12518, %v12502, %v12534
    %v12551 = vsel %vm12519, %v12503, %v12535
    %v12552 = vsel %vm12520, %v12504, %v12536
    %v12553 = vsel %vm12521, %v12505, %v12537
    %v12554 = vsel %vm12522, %v12506, %v12538
    %v12555 = vadd.f32 %v12539, %v12541
    %v12556 = vadd.f32 %v12555, %v12543
    %v12557 = vadd.f32 %v12556, %v12545
    %v12558 = vadd.f32 %v12557, %v12547
    %v12559 = vadd.f32 %v12558, %v12549
    %v12560 = vadd.f32 %v12559, %v12551
    %v12561 = vadd.f32 %v12560, %v12553
    %v12562 = vadd.f32 %v12540, %v12542
    %v12563 = vadd.f32 %v12562, %v12544
    %v12564 = vadd.f32 %v12563, %v12546
    %v12565 = vadd.f32 %v12564, %v12548
    %v12566 = vadd.f32 %v12565, %v12550
    %v12567 = vadd.f32 %v12566, %v12552
    %v12568 = vadd.f32 %v12567, %v12554
    %v12569 = vld [vmem:[%s11] sm:$0xff]
    %v12570 = vld [vmem:[%s11 + $0x8] sm:$0xff]
    %v12571 = vld [vmem:[%s11 + $0x10] sm:$0xff]
    %v12572 = vld [vmem:[%s11 + $0x18] sm:$0xff]
    %v12573 = vld [vmem:[%s11 + $0x20] sm:$0xff]
    %v12574 = vld [vmem:[%s11 + $0x28] sm:$0xff]
    %v12575 = vld [vmem:[%s11 + $0x30] sm:$0xff]
    %v12576 = vld [vmem:[%s11 + $0x38] sm:$0xff]
    %v12577 = vld [vmem:[%s11 + $0x40] sm:$0xff]
    %v12578 = vld [vmem:[%s11 + $0x48] sm:$0xff]
    %v12579 = vld [vmem:[%s11 + $0x50] sm:$0xff]
    %v12580 = vld [vmem:[%s11 + $0x58] sm:$0xff]
    %v12581 = vld [vmem:[%s11 + $0x60] sm:$0xff]
    %v12582 = vld [vmem:[%s11 + $0x68] sm:$0xff]
    %v12583 = vld [vmem:[%s11 + $0x70] sm:$0xff]
    %v12584 = vld [vmem:[%s11 + $0x78] sm:$0xff]
    %v12585 = vld [vmem:[%s12] sm:$0x1]
    %v12587 = vperm.slane %v12585, 0
    %12589 = vmatpush.msra.mxu0 %v12584
    %12590 = vmatpush.msra.mxu0 %v12583
    %12591 = vmatpush.msra.mxu0 %v12582
    %12592 = vmatpush.msra.mxu0 %v12581
    %12593 = vmatpush.msra.mxu0 %v12580
    %12594 = vmatpush.msra.mxu0 %v12579
    %12595 = vmatpush.msra.mxu0 %v12578
    %12596 = vmatpush.msra.mxu0 %v12577
    %12597 = vmatpush.msra.mxu0 %v12576
    %12598 = vmatpush.msra.mxu0 %v12575
    %12599 = vmatpush.msra.mxu0 %v12574
    %12600 = vmatpush.msra.mxu0 %v12573
    %12601 = vmatpush.msra.mxu0 %v12572
    %12602 = vmatpush.msra.mxu0 %v12571
    %12603 = vmatpush.msra.mxu0 %v12570
    %12604 = vmatpush.msra.mxu0 %v12569
    %12605 = vmatmul.f32.gmra.mxu0 %v12561
    %v12606 = vpop.f32.mrf.mxu0
    %v12607 = vadd.f32 %v12587, %v12606
    %12608 = vmatmul.f32.gmra.mxu0 %v12568
    %v12609 = vpop.f32.mrf.mxu0
    %v12610 = vadd.f32 %v12587, %v12609
    %12611 = vdwg.mxu0
    %vm12612 = vcmp.ge.f32.partialorder %v12607, 0.0
    %vm12613 = vcmp.ge.f32.partialorder %v12610, 0.0
    %v12614 = vmul.f32 %v12607, 0.3
    %v12615 = vmul.f32 %v12610, 0.3
    %v12616 = vsel %vm12612, %v12607, %v12614
    %v12617 = vsel %vm12613, %v12610, %v12615
    %v12618 = vld [vmem:[#allocation7] sm:$0xff]
    %v12619 = vld [vmem:[#allocation7 + $0x8] sm:$0xff]
    %v12620 = vld [vmem:[#allocation7 + $0x10] sm:$0xff]
    %v12621 = vld [vmem:[#allocation7 + $0x18] sm:$0xff]
    %v12622 = vld [vmem:[#allocation7 + $0x20] sm:$0xff]
    %v12623 = vld [vmem:[#allocation7 + $0x28] sm:$0xff]
    %v12624 = vld [vmem:[#allocation7 + $0x30] sm:$0xff]
    %v12625 = vld [vmem:[#allocation7 + $0x38] sm:$0xff]
    %v12626 = vld [vmem:[#allocation7 + $0x40] sm:$0xff]
    %v12627 = vld [vmem:[#allocation7 + $0x48] sm:$0xff]
    %v12628 = vld [vmem:[#allocation7 + $0x50] sm:$0xff]
    %v12629 = vld [vmem:[#allocation7 + $0x58] sm:$0xff]
    %v12630 = vld [vmem:[#allocation7 + $0x60] sm:$0xff]
    %v12631 = vld [vmem:[#allocation7 + $0x68] sm:$0xff]
    %v12632 = vld [vmem:[#allocation7 + $0x70] sm:$0xff]
    %v12633 = vld [vmem:[#allocation7 + $0x78] sm:$0xff]
    %v12634 = vld [vmem:[%s14] sm:$0x1]
    %v12636 = vperm.slane %v12634, 0
    %12638 = vmatpush.msra.mxu0 %v12633
    %12639 = vmatpush.msra.mxu0 %v12632
    %12640 = vmatpush.msra.mxu0 %v12631
    %12641 = vmatpush.msra.mxu0 %v12630
    %12642 = vmatpush.msra.mxu0 %v12629
    %12643 = vmatpush.msra.mxu0 %v12628
    %12644 = vmatpush.msra.mxu0 %v12627
    %12645 = vmatpush.msra.mxu0 %v12626
    %12646 = vmatpush.msra.mxu0 %v12625
    %12647 = vmatpush.msra.mxu0 %v12624
    %12648 = vmatpush.msra.mxu0 %v12623
    %12649 = vmatpush.msra.mxu0 %v12622
    %12650 = vmatpush.msra.mxu0 %v12621
    %12651 = vmatpush.msra.mxu0 %v12620
    %12652 = vmatpush.msra.mxu0 %v12619
    %12653 = vmatpush.msra.mxu0 %v12618
    %12654 = vmatmul.f32.gmra.mxu0 %v12616
    %v12655 = vpop.f32.mrf.mxu0
    %v12656 = vadd.f32 %v12636, %v12655
    %12657 = vmatmul.f32.gmra.mxu0 %v12617
    %v12658 = vpop.f32.mrf.mxu0
    %v12659 = vadd.f32 %v12636, %v12658
    %12660 = vdwg.mxu0
    %vm12661 = vcmp.ge.f32.partialorder %v12656, 0.0
    %vm12662 = vcmp.ge.f32.partialorder %v12659, 0.0
    %v12663 = vmul.f32 %v12656, 0.3
    %v12664 = vmul.f32 %v12659, 0.3
    %v12665 = vsel %vm12661, %v12656, %v12663
    %v12666 = vsel %vm12662, %v12659, %v12664
    %v12667 = vld [vmem:[#allocation9] sm:$0xff]
    %v12668 = vld [vmem:[#allocation9 + $0x8] sm:$0xff]
    %v12669 = vld [vmem:[#allocation9 + $0x10] sm:$0xff]
    %v12670 = vld [vmem:[#allocation9 + $0x18] sm:$0xff]
    %v12671 = vld [vmem:[#allocation9 + $0x20] sm:$0xff]
    %v12672 = vld [vmem:[#allocation9 + $0x28] sm:$0xff]
    %v12673 = vld [vmem:[#allocation9 + $0x30] sm:$0xff]
    %v12674 = vld [vmem:[#allocation9 + $0x38] sm:$0xff]
    %v12675 = vld [vmem:[#allocation9 + $0x40] sm:$0xff]
    %v12676 = vld [vmem:[#allocation9 + $0x48] sm:$0xff]
    %v12677 = vld [vmem:[#allocation9 + $0x50] sm:$0xff]
    %v12678 = vld [vmem:[#allocation9 + $0x58] sm:$0xff]
    %v12679 = vld [vmem:[#allocation9 + $0x60] sm:$0xff]
    %v12680 = vld [vmem:[#allocation9 + $0x68] sm:$0xff]
    %v12681 = vld [vmem:[#allocation9 + $0x70] sm:$0xff]
    %v12682 = vld [vmem:[#allocation9 + $0x78] sm:$0xff]
    %v12683 = vld [vmem:[%s16] sm:$0x1]
    %v12685 = vperm.slane %v12683, 0
    %12687 = vmatpush.msra.mxu0 %v12682
    %12688 = vmatpush.msra.mxu0 %v12681
    %12689 = vmatpush.msra.mxu0 %v12680
    %12690 = vmatpush.msra.mxu0 %v12679
    %12691 = vmatpush.msra.mxu0 %v12678
    %12692 = vmatpush.msra.mxu0 %v12677
    %12693 = vmatpush.msra.mxu0 %v12676
    %12694 = vmatpush.msra.mxu0 %v12675
    %12695 = vmatpush.msra.mxu0 %v12674
    %12696 = vmatpush.msra.mxu0 %v12673
    %12697 = vmatpush.msra.mxu0 %v12672
    %12698 = vmatpush.msra.mxu0 %v12671
    %12699 = vmatpush.msra.mxu0 %v12670
    %12700 = vmatpush.msra.mxu0 %v12669
    %12701 = vmatpush.msra.mxu0 %v12668
    %12702 = vmatpush.msra.mxu0 %v12667
    %12703 = vmatmul.f32.gmra.mxu0 %v12665
    %v12704 = vpop.f32.mrf.mxu0
    %v12705 = vadd.f32 %v12685, %v12704
    %12706 = vmatmul.f32.gmra.mxu0 %v12666
    %v12707 = vpop.f32.mrf.mxu0
    %v12708 = vadd.f32 %v12685, %v12707
    %12709 = vdwg.mxu0
    %12710 = vst [vmem:[%s17] sm:$0xff] %v12705
    %12711 = vst [vmem:[%s17 + $0x8] sm:$0xff] %v12708
    // Predicated region
    $region90: #{metric_discriminator_forward.1} parent=1 // pred_check
      _
    $region91: #{metric_discriminator_forward.1} parent=1 // pred_check_branch
      %12713 = sbr.rel (0) target = $region93
    $region92: #{metric_discriminator_forward.1} parent=1 // pred_region
      _
    $region93: #{metric_discriminator_forward.1} parent=1 // pred_fallthru
      _
    // Predicated region
    $region94: #{metric_discriminator_forward.1} parent=1 // pred_check
      _
    $region95: #{metric_discriminator_forward.1} parent=1 // pred_check_branch
      %12715 = sbr.rel (0) target = $region97
    $region96: #{metric_discriminator_forward.1} parent=1 // pred_region
      _
    $region97: #{metric_discriminator_forward.1} parent=1 // pred_fallthru
      _
    %12716 = vsyncpa [#allocation3], 1
    %12717 = vsyncpa [#allocation5], 1
    %12718 = vsyncpa [#allocation8], 1

</llo_original>
